<compile_context>
chip_gen: v5e
topology: v5e:2x2
jax: 0.10.0
libtpu: 0.0.40
codegen_flags: <defaults>
</compile_context>

<pallas_src>
import functools

import jax
import jax.numpy as jnp
from jax.experimental import pallas as pl
from jax.experimental.pallas import tpu as pltpu


# ----------------------------------------------------------------------------
# Pallas kernels (MXU matmul with fused epilogues)
# ----------------------------------------------------------------------------
def _mm_bias_kernel(x_ref, w_ref, b_ref, o_ref, *, swish):
    """out = x @ w + b, optionally followed by Swish. f32 accumulate."""
    acc = jnp.dot(x_ref[...], w_ref[...], preferred_element_type=jnp.float32)
    acc = acc + b_ref[...].astype(jnp.float32)
    if swish:
        acc = acc * jax.nn.sigmoid(acc)
    o_ref[...] = acc.astype(o_ref.dtype)


def _mm_res_kernel(x_ref, r0_ref, r1_ref, r2_ref, r3_ref, w_ref, b_ref, o_ref):
    """out = swish( (x @ w + b) + avgpool2x2(residual) ), residual given as the
    four strided views of the block input (same row order as the matmul)."""
    acc = jnp.dot(x_ref[...], w_ref[...], preferred_element_type=jnp.float32)
    acc = acc + b_ref[...].astype(jnp.float32)
    res = (r0_ref[...].astype(jnp.float32) + r1_ref[...].astype(jnp.float32)
           + r2_ref[...].astype(jnp.float32) + r3_ref[...].astype(jnp.float32)) * 0.25
    s = acc + res
    o_ref[...] = (s * jax.nn.sigmoid(s)).astype(o_ref.dtype)


def _mm_res_proj_kernel(x_ref, r0_ref, r1_ref, r2_ref, r3_ref,
                        w_ref, b_ref, wr_ref, br_ref, o_ref):
    """out = swish( (x @ w + b) + (avgpool2x2(residual) @ wr + br) )."""
    acc = jnp.dot(x_ref[...], w_ref[...], preferred_element_type=jnp.float32)
    acc = acc + b_ref[...].astype(jnp.float32)
    pool = (r0_ref[...].astype(jnp.float32) + r1_ref[...].astype(jnp.float32)
            + r2_ref[...].astype(jnp.float32) + r3_ref[...].astype(jnp.float32)) * 0.25
    res = jnp.dot(pool.astype(wr_ref.dtype), wr_ref[...],
                  preferred_element_type=jnp.float32)
    res = res + br_ref[...].astype(jnp.float32)
    s = acc + res
    o_ref[...] = (s * jax.nn.sigmoid(s)).astype(o_ref.dtype)


# ----------------------------------------------------------------------------
# Generic launcher: M-tiled inputs + broadcast (weight/bias) inputs
# ----------------------------------------------------------------------------
def _launch(kernel, m_inputs, const_inputs, n_out, out_dtype):
    """m_inputs: list of (M, K_i) arrays tiled along M together with the output.
       const_inputs: 2-D arrays replicated to every grid step (weights/biases)."""
    m = m_inputs[0].shape[0]
    # Single full-size block (everything fits VMEM); split only very large M
    # into two parallel tiles so both v7x TensorCores get a grid step.
    tm = m if m <= 1024 else 1024
    grid_m = pl.cdiv(m, tm)
    mp = grid_m * tm
    if mp != m:
        m_inputs = [jnp.pad(a, ((0, mp - m), (0, 0))) for a in m_inputs]

    in_specs = [pl.BlockSpec((tm, a.shape[1]), lambda i: (i, 0)) for a in m_inputs]
    in_specs += [pl.BlockSpec(cst.shape, lambda i: (0, 0)) for cst in const_inputs]

    out = pl.pallas_call(
        kernel,
        out_shape=jax.ShapeDtypeStruct((mp, n_out), out_dtype),
        grid=(grid_m,),
        in_specs=in_specs,
        out_specs=pl.BlockSpec((tm, n_out), lambda i: (i, 0)),
        compiler_params=pltpu.CompilerParams(
            dimension_semantics=("parallel",)),
    )(*m_inputs, *const_inputs)
    return out[:m] if mp != m else out


# ----------------------------------------------------------------------------
# Conv lowering: im2col (XLA glue on bf16) + fused Pallas matmul
# ----------------------------------------------------------------------------
def _im2col(x, ksize, stride, padding):
    """x: NHWC -> (N*Ho*Wo, ksize*ksize*C) with (kh, kw, cin) K-ordering."""
    n, h, w, c = x.shape
    if padding > 0:
        x = jnp.pad(x, ((0, 0), (padding, padding), (padding, padding), (0, 0)))
    ho = (h + 2 * padding - ksize) // stride + 1
    wo = (w + 2 * padding - ksize) // stride + 1
    patches = []
    for kh in range(ksize):
        for kw in range(ksize):
            patches.append(
                x[:, kh:kh + stride * ho:stride, kw:kw + stride * wo:stride, :])
    cols = jnp.concatenate(patches, axis=-1)           # (N, Ho, Wo, k*k*C)
    return cols.reshape(n * ho * wo, ksize * ksize * c), ho, wo


def _pad_cols(cols, kp):
    k = cols.shape[1]
    if k < kp:                                         # K padded to multiple of 8
        cols = jnp.pad(cols, ((0, 0), (0, kp - k)))
    return cols


def conv2d(x, w2d, b, *, ksize, stride, padding, swish, out_dtype=jnp.bfloat16):
    """x: NHWC bf16, w2d: prepared (Kp, Cout) bf16 weight, b: (1, Cout) f32."""
    n = x.shape[0]
    cols, ho, wo = _im2col(x, ksize, stride, padding)
    cols = _pad_cols(cols, w2d.shape[0])
    cout = w2d.shape[1]
    out = _launch(functools.partial(_mm_bias_kernel, swish=swish),
                  [cols], [w2d, b], cout, out_dtype)
    return out.reshape(n, ho, wo, cout)


def fused_resblock(x, p):
    """One ResBlock (downsample=True) in exactly two pallas_calls."""
    n, _, _, cin = x.shape
    # conv1: 3x3 stride 2 pad 1 + bias + Swish
    h = conv2d(x, p["w1"], p["b1"], ksize=3, stride=2, padding=1, swish=True)
    # conv2 (3x3 stride 1 pad 1) + AvgPool residual (+1x1 proj) + add + Swish
    cols, ho, wo = _im2col(h, 3, 1, 1)
    cols = _pad_cols(cols, p["w2"].shape[0])
    m = n * ho * wo
    r_views = [x[:, di::2, dj::2, :].reshape(m, cin)
               for di in (0, 1) for dj in (0, 1)]      # 4 taps of AvgPool2d(2)
    cout = p["w2"].shape[1]
    if "wr" in p:
        out = _launch(_mm_res_proj_kernel, [cols] + r_views,
                      [p["w2"], p["b2"], p["wr"], p["br"]], cout, jnp.bfloat16)
    else:
        out = _launch(_mm_res_kernel, [cols] + r_views,
                      [p["w2"], p["b2"]], cout, jnp.bfloat16)
    return out.reshape(n, ho, wo, cout)


# ----------------------------------------------------------------------------
# Parameters: PyTorch-layout init + one-time kernel-ready preparation
# ----------------------------------------------------------------------------
def _conv_params(key, cout, cin, ks):
    kw, kb = jax.random.split(key)
    fan_in = cin * ks * ks
    w = jax.random.normal(kw, (cout, cin, ks, ks), jnp.float32) * (2.0 / fan_in) ** 0.5
    b = jax.random.normal(kb, (cout,), jnp.float32) * 0.01
    return w, b


def init_params(key, in_channels, width=1):
    w1 = 2 ** (width + 4)
    w2 = 2 ** (width + 5)
    keys = jax.random.split(key, 10)
    params = {}
    params["enc_w"], params["enc_b"] = _conv_params(keys[0], w1, in_channels, 3)

    b1 = {}
    b1["w1"], b1["b1"] = _conv_params(keys[1], w1, w1, 3)
    b1["w2"], b1["b2"] = _conv_params(keys[2], w1, w1, 3)
    params["block1"] = b1

    b2 = {}
    b2["w1"], b2["b1"] = _conv_params(keys[3], w2, w1, 3)
    b2["w2"], b2["b2"] = _conv_params(keys[4], w2, w2, 3)
    b2["wr"], b2["br"] = _conv_params(keys[5], w2, w1, 1)   # 1x1 projection
    params["block2"] = b2

    b3 = {}
    b3["w1"], b3["b1"] = _conv_params(keys[6], w2, w2, 3)
    b3["w2"], b3["b2"] = _conv_params(keys[7], w2, w2, 3)
    params["block3"] = b3

    in_feat = w2 * 4 * 4
    params["lin_w"] = jax.random.normal(
        keys[8], (256, in_feat), jnp.float32) * (1.0 / in_feat) ** 0.5  # (out, in)
    params["lin_b"] = jax.random.normal(keys[9], (256,), jnp.float32) * 0.01
    return params


def _prep_conv(w_oihw, b):
    """(Cout,Cin,KH,KW) -> (Kp, Cout) bf16 with K padded to a multiple of 8,
    plus (1, Cout) f32 bias.  K-ordering (kh,kw,cin) matches _im2col."""
    cout, cin, kh, kw = w_oihw.shape
    w2d = jnp.transpose(w_oihw, (2, 3, 1, 0)).reshape(kh * kw * cin, cout)
    k = w2d.shape[0]
    kp = ((k + 7) // 8) * 8
    if kp != k:
        w2d = jnp.pad(w2d, ((0, kp - k), (0, 0)))
    return w2d.astype(jnp.bfloat16), b.reshape(1, cout).astype(jnp.float32)


def prepare_params(params):
    """One-time (outside jit): flatten/pad/cast conv weights; permute and
    pre-transpose the Linear weight so the NHWC flatten needs no transpose."""
    prep = {}
    prep["enc_w"], prep["enc_b"] = _prep_conv(params["enc_w"], params["enc_b"])
    for name in ("block1", "block2", "block3"):
        p = params[name]
        q = {}
        q["w1"], q["b1"] = _prep_conv(p["w1"], p["b1"])
        q["w2"], q["b2"] = _prep_conv(p["w2"], p["b2"])
        if "wr" in p:
            q["wr"], q["br"] = _prep_conv(p["wr"], p["br"])
        prep[name] = q
    lw = params["lin_w"]                                   # (256, C*H*W) CHW order
    c = params["block3"]["w2"].shape[0]
    in_feat = lw.shape[1]
    hw = int(round((in_feat // c) ** 0.5))
    lw_hwc = lw.reshape(lw.shape[0], c, hw, hw).transpose(2, 3, 1, 0)
    prep["lin_w"] = lw_hwc.reshape(in_feat, lw.shape[0]).astype(jnp.bfloat16)
    prep["lin_b"] = params["lin_b"].reshape(1, -1).astype(jnp.float32)
    return prep


# ----------------------------------------------------------------------------
# Forward (Pallas) and pure-JAX reference
# ----------------------------------------------------------------------------
def resnet_forward(prep, x_nchw):
    # NCHW (PyTorch) -> NHWC bf16 internal layout; 8 pallas_calls total.
    x = jnp.transpose(x_nchw, (0, 2, 3, 1)).astype(jnp.bfloat16)
    x = conv2d(x, prep["enc_w"], prep["enc_b"], ksize=3, stride=2, padding=1,
               swish=False)
    x = fused_resblock(x, prep["block1"])
    x = fused_resblock(x, prep["block2"])
    x = fused_resblock(x, prep["block3"])
    n, hh, ww, cc = x.shape
    flat = x.reshape(n, hh * ww * cc)        # (H,W,C) order matches permuted lin_w
    out = _launch(functools.partial(_mm_bias_kernel, swish=True),
                  [flat], [prep["lin_w"], prep["lin_b"]],
                  prep["lin_w"].shape[1], jnp.float32)
    return out
# TODO(synk): whole-network single-pallas_call fusion (in-kernel im2col with all
# weights VMEM-resident) would remove the remaining 7 inter-stage HBM hops.


def _ref_swish(x):
    return x * jax.nn.sigmoid(x)


def _ref_conv(x_nhwc, w_oihw, b, stride, padding):
    out = jax.lax.conv_general_dilated(
        x_nhwc, jnp.transpose(w_oihw, (2, 3, 1, 0)),
        window_strides=(stride, stride),
        padding=((padding, padding), (padding, padding)),
        dimension_numbers=("NHWC", "HWIO", "NHWC"))
    return out + b.reshape(1, 1, 1, -1)


def _ref_avgpool(x):
    return (x[:, 0::2, 0::2] + x[:, 0::2, 1::2]
            + x[:, 1::2, 0::2] + x[:, 1::2, 1::2]) * 0.25


def resnet_reference(params, x_nchw):
    x = jnp.transpose(x_nchw, (0, 2, 3, 1)).astype(jnp.float32)
    x = _ref_conv(x, params["enc_w"], params["enc_b"], 2, 1)
    for name in ("block1", "block2", "block3"):
        p = params[name]
        h = _ref_swish(_ref_conv(x, p["w1"], p["b1"], 2, 1))
        h = _ref_conv(h, p["w2"], p["b2"], 1, 1)
        r = _ref_avgpool(x)
        if "wr" in p:
            r = _ref_conv(r, p["wr"], p["br"], 1, 0)
        x = _ref_swish(h + r)
    n = x.shape[0]
    flat = jnp.transpose(x, (0, 3, 1, 2)).reshape(n, -1)   # PyTorch NCHW flatten
    return _ref_swish(flat @ params["lin_w"].T + params["lin_b"])


if __name__ == "__main__":
    in_channels, width, batch = 3, 1, 2
    key = jax.random.PRNGKey(0)
    kp_, kx_ = jax.random.split(key)
    params = init_params(kp_, in_channels, width)
    prep = prepare_params(params)
    # Spatial must be 64x64 so the final feature map is 4x4 (Linear expects w2*4*4).
    x = jax.random.normal(kx_, (batch, in_channels, 64, 64), jnp.float32)

    y = jax.block_until_ready(jax.jit(resnet_forward)(prep, x))

    assert y.shape == (batch, 256), y.shape
    assert bool(jnp.all(jnp.isfinite(y)))

    # Correctness vs pure-JAX f32 reference (loose tol: bf16 activations/weights).
    y_ref = jax.jit(resnet_reference)(params, x)
    err = float(jnp.max(jnp.abs(y - y_ref)) / (jnp.max(jnp.abs(y_ref)) + 1e-6))
    assert err < 0.1, f"normalized max error too high: {err}"

    print("KERNEL_OK")
</pallas_src>

<mosaic_0001>
module attributes {stable_mosaic.version = 11 : i64} {
  func.func @_mm_bias_kernel(%arg0: i32, %arg1: memref<1024x32xbf16, #tpu.memory_space<vmem>>, %arg2: memref<32x32xbf16, #tpu.memory_space<vmem>>, %arg3: memref<1x32xf32, #tpu.memory_space<vmem>>, %arg4: memref<1024x32xbf16, #tpu.memory_space<vmem>>) attributes {dimension_semantics = [#tpu.dimension_semantics<parallel>], iteration_bounds = array<i64: 2>, scalar_prefetch = 0 : i64, scratch_operands = 0 : i64, tpu.core_type = #tpu.core_type<tc>, window_params = [{transform_indices = @transform_0, window_bounds = array<i64: 1024, 32>}, {pipeline_mode = #tpu.pipeline_mode<synchronous>, transform_indices = @transform_1, window_bounds = array<i64: 32, 32>}, {pipeline_mode = #tpu.pipeline_mode<synchronous>, transform_indices = @transform_2, window_bounds = array<i64: 1, 32>}, {transform_indices = @transform_3, window_bounds = array<i64: 1024, 32>}]} {
    %c0 = arith.constant 0 : index
    %c0_0 = arith.constant 0 : index
    %0 = vector.load %arg1[%c0, %c0_0] : memref<1024x32xbf16, #tpu.memory_space<vmem>>, vector<1024x32xbf16>
    %c0_1 = arith.constant 0 : index
    %c0_2 = arith.constant 0 : index
    %1 = vector.load %arg2[%c0_1, %c0_2] : memref<32x32xbf16, #tpu.memory_space<vmem>>, vector<32x32xbf16>
    %cst = arith.constant dense<0.000000e+00> : vector<1024x32xf32>
    %2 = tpu.matmul %0, %1, %cst {dimension_numbers = #tpu.dot_dimension_numbers<[1], [0], [0], [1], [0, 0, 1, 1], [], []>} : vector<1024x32xbf16>, vector<32x32xbf16>, vector<1024x32xf32> -> vector<1024x32xf32>
    %c0_3 = arith.constant 0 : index
    %c0_4 = arith.constant 0 : index
    %3 = vector.load %arg3[%c0_3, %c0_4] : memref<1x32xf32, #tpu.memory_space<vmem>>, vector<1x32xf32>
    %4 = vector.broadcast %3 : vector<1x32xf32> to vector<1024x32xf32>
    %5 = arith.addf %2, %4 : vector<1024x32xf32>
    %6 = arith.truncf %5 : vector<1024x32xf32> to vector<1024x32xbf16>
    %c0_5 = arith.constant 0 : index
    %c0_6 = arith.constant 0 : index
    %7 = vector.load %arg4[%c0_5, %c0_6] : memref<1024x32xbf16, #tpu.memory_space<vmem>>, vector<1024x32xbf16>
    tpu.vector_store %arg4[%c0_5, %c0_6], %6 {strides = array<i32>} : memref<1024x32xbf16, #tpu.memory_space<vmem>>, vector<1024x32xbf16>,
    return
  }
  func.func @transform_0(%arg0: i32) -> (i32, i32) {
    %c0_i32 = arith.constant 0 : i32
    %c0_i32_0 = arith.constant 0 : i32
    return %arg0, %c0_i32 : i32, i32
  }
  func.func @transform_1(%arg0: i32) -> (i32, i32) {
    %c0_i32 = arith.constant 0 : i32
    %c0_i32_0 = arith.constant 0 : i32
    %c0_i32_1 = arith.constant 0 : i32
    return %c0_i32, %c0_i32_0 : i32, i32
  }
  func.func @transform_2(%arg0: i32) -> (i32, i32) {
    %c0_i32 = arith.constant 0 : i32
    %c0_i32_0 = arith.constant 0 : i32
    %c0_i32_1 = arith.constant 0 : i32
    return %c0_i32, %c0_i32_0 : i32, i32
  }
  func.func @transform_3(%arg0: i32) -> (i32, i32) {
    %c0_i32 = arith.constant 0 : i32
    %c0_i32_0 = arith.constant 0 : i32
    return %arg0, %c0_i32 : i32, i32
  }
}

module attributes {stable_mosaic.version = 11 : i64} {
  func.func @_mm_bias_kernel(%arg0: i32, %arg1: memref<512x288xbf16, #tpu.memory_space<vmem>>, %arg2: memref<288x32xbf16, #tpu.memory_space<vmem>>, %arg3: memref<1x32xf32, #tpu.memory_space<vmem>>, %arg4: memref<512x32xbf16, #tpu.memory_space<vmem>>) attributes {dimension_semantics = [#tpu.dimension_semantics<parallel>], iteration_bounds = array<i64: 1>, scalar_prefetch = 0 : i64, scratch_operands = 0 : i64, tpu.core_type = #tpu.core_type<tc>, window_params = [{transform_indices = @transform_0, window_bounds = array<i64: 512, 288>}, {pipeline_mode = #tpu.pipeline_mode<synchronous>, transform_indices = @transform_1, window_bounds = array<i64: 288, 32>}, {pipeline_mode = #tpu.pipeline_mode<synchronous>, transform_indices = @transform_2, window_bounds = array<i64: 1, 32>}, {transform_indices = @transform_3, window_bounds = array<i64: 512, 32>}]} {
    %c0 = arith.constant 0 : index
    %c0_0 = arith.constant 0 : index
    %0 = vector.load %arg1[%c0, %c0_0] : memref<512x288xbf16, #tpu.memory_space<vmem>>, vector<512x288xbf16>
    %c0_1 = arith.constant 0 : index
    %c0_2 = arith.constant 0 : index
    %1 = vector.load %arg2[%c0_1, %c0_2] : memref<288x32xbf16, #tpu.memory_space<vmem>>, vector<288x32xbf16>
    %cst = arith.constant dense<0.000000e+00> : vector<512x32xf32>
    %2 = tpu.matmul %0, %1, %cst {dimension_numbers = #tpu.dot_dimension_numbers<[1], [0], [0], [1], [0, 0, 1, 1], [], []>} : vector<512x288xbf16>, vector<288x32xbf16>, vector<512x32xf32> -> vector<512x32xf32>
    %c0_3 = arith.constant 0 : index
    %c0_4 = arith.constant 0 : index
    %3 = vector.load %arg3[%c0_3, %c0_4] : memref<1x32xf32, #tpu.memory_space<vmem>>, vector<1x32xf32>
    %4 = vector.broadcast %3 : vector<1x32xf32> to vector<512x32xf32>
    %5 = arith.addf %2, %4 : vector<512x32xf32>
    %6 = arith.negf %5 : vector<512x32xf32>
    %7 = math.exp %6 : vector<512x32xf32>
    %cst_5 = arith.constant 1.000000e+00 : f32
    %8 = vector.broadcast %cst_5 : f32 to vector<512x32xf32>
    %9 = arith.addf %8, %7 : vector<512x32xf32>
    %10 = arith.divf %8, %9 : vector<512x32xf32>
    %11 = arith.mulf %5, %10 : vector<512x32xf32>
    %12 = arith.truncf %11 : vector<512x32xf32> to vector<512x32xbf16>
    %c0_6 = arith.constant 0 : index
    %c0_7 = arith.constant 0 : index
    %13 = vector.load %arg4[%c0_6, %c0_7] : memref<512x32xbf16, #tpu.memory_space<vmem>>, vector<512x32xbf16>
    tpu.vector_store %arg4[%c0_6, %c0_7], %12 {strides = array<i32>} : memref<512x32xbf16, #tpu.memory_space<vmem>>, vector<512x32xbf16>,
    return
  }
  func.func @transform_0(%arg0: i32) -> (i32, i32) {
    %c0_i32 = arith.constant 0 : i32
    %c0_i32_0 = arith.constant 0 : i32
    return %arg0, %c0_i32 : i32, i32
  }
  func.func @transform_1(%arg0: i32) -> (i32, i32) {
    %c0_i32 = arith.constant 0 : i32
    %c0_i32_0 = arith.constant 0 : i32
    %c0_i32_1 = arith.constant 0 : i32
    return %c0_i32, %c0_i32_0 : i32, i32
  }
  func.func @transform_2(%arg0: i32) -> (i32, i32) {
    %c0_i32 = arith.constant 0 : i32
    %c0_i32_0 = arith.constant 0 : i32
    %c0_i32_1 = arith.constant 0 : i32
    return %c0_i32, %c0_i32_0 : i32, i32
  }
  func.func @transform_3(%arg0: i32) -> (i32, i32) {
    %c0_i32 = arith.constant 0 : i32
    %c0_i32_0 = arith.constant 0 : i32
    return %arg0, %c0_i32 : i32, i32
  }
}

module attributes {stable_mosaic.version = 11 : i64} {
  func.func @_mm_res_kernel(%arg0: i32, %arg1: memref<512x288xbf16, #tpu.memory_space<vmem>>, %arg2: memref<512x32xbf16, #tpu.memory_space<vmem>>, %arg3: memref<512x32xbf16, #tpu.memory_space<vmem>>, %arg4: memref<512x32xbf16, #tpu.memory_space<vmem>>, %arg5: memref<512x32xbf16, #tpu.memory_space<vmem>>, %arg6: memref<288x32xbf16, #tpu.memory_space<vmem>>, %arg7: memref<1x32xf32, #tpu.memory_space<vmem>>, %arg8: memref<512x32xbf16, #tpu.memory_space<vmem>>) attributes {dimension_semantics = [#tpu.dimension_semantics<parallel>], iteration_bounds = array<i64: 1>, scalar_prefetch = 0 : i64, scratch_operands = 0 : i64, tpu.core_type = #tpu.core_type<tc>, window_params = [{transform_indices = @transform_0, window_bounds = array<i64: 512, 288>}, {transform_indices = @transform_1, window_bounds = array<i64: 512, 32>}, {transform_indices = @transform_2, window_bounds = array<i64: 512, 32>}, {transform_indices = @transform_3, window_bounds = array<i64: 512, 32>}, {transform_indices = @transform_4, window_bounds = array<i64: 512, 32>}, {pipeline_mode = #tpu.pipeline_mode<synchronous>, transform_indices = @transform_5, window_bounds = array<i64: 288, 32>}, {pipeline_mode = #tpu.pipeline_mode<synchronous>, transform_indices = @transform_6, window_bounds = array<i64: 1, 32>}, {transform_indices = @transform_7, window_bounds = array<i64: 512, 32>}]} {
    %c0 = arith.constant 0 : index
    %c0_0 = arith.constant 0 : index
    %0 = vector.load %arg1[%c0, %c0_0] : memref<512x288xbf16, #tpu.memory_space<vmem>>, vector<512x288xbf16>
    %c0_1 = arith.constant 0 : index
    %c0_2 = arith.constant 0 : index
    %1 = vector.load %arg6[%c0_1, %c0_2] : memref<288x32xbf16, #tpu.memory_space<vmem>>, vector<288x32xbf16>
    %cst = arith.constant dense<0.000000e+00> : vector<512x32xf32>
    %2 = tpu.matmul %0, %1, %cst {dimension_numbers = #tpu.dot_dimension_numbers<[1], [0], [0], [1], [0, 0, 1, 1], [], []>} : vector<512x288xbf16>, vector<288x32xbf16>, vector<512x32xf32> -> vector<512x32xf32>
    %c0_3 = arith.constant 0 : index
    %c0_4 = arith.constant 0 : index
    %3 = vector.load %arg7[%c0_3, %c0_4] : memref<1x32xf32, #tpu.memory_space<vmem>>, vector<1x32xf32>
    %4 = vector.broadcast %3 : vector<1x32xf32> to vector<512x32xf32>
    %5 = arith.addf %2, %4 : vector<512x32xf32>
    %c0_5 = arith.constant 0 : index
    %c0_6 = arith.constant 0 : index
    %6 = vector.load %arg2[%c0_5, %c0_6] : memref<512x32xbf16, #tpu.memory_space<vmem>>, vector<512x32xbf16>
    %7 = arith.extf %6 : vector<512x32xbf16> to vector<512x32xf32>
    %c0_7 = arith.constant 0 : index
    %c0_8 = arith.constant 0 : index
    %8 = vector.load %arg3[%c0_7, %c0_8] : memref<512x32xbf16, #tpu.memory_space<vmem>>, vector<512x32xbf16>
    %9 = arith.extf %8 : vector<512x32xbf16> to vector<512x32xf32>
    %10 = arith.addf %7, %9 : vector<512x32xf32>
    %c0_9 = arith.constant 0 : index
    %c0_10 = arith.constant 0 : index
    %11 = vector.load %arg4[%c0_9, %c0_10] : memref<512x32xbf16, #tpu.memory_space<vmem>>, vector<512x32xbf16>
    %12 = arith.extf %11 : vector<512x32xbf16> to vector<512x32xf32>
    %13 = arith.addf %10, %12 : vector<512x32xf32>
    %c0_11 = arith.constant 0 : index
    %c0_12 = arith.constant 0 : index
    %14 = vector.load %arg5[%c0_11, %c0_12] : memref<512x32xbf16, #tpu.memory_space<vmem>>, vector<512x32xbf16>
    %15 = arith.extf %14 : vector<512x32xbf16> to vector<512x32xf32>
    %16 = arith.addf %13, %15 : vector<512x32xf32>
    %cst_13 = arith.constant 2.500000e-01 : f32
    %17 = vector.broadcast %cst_13 : f32 to vector<512x32xf32>
    %18 = arith.mulf %16, %17 : vector<512x32xf32>
    %19 = arith.addf %5, %18 : vector<512x32xf32>
    %20 = arith.negf %19 : vector<512x32xf32>
    %21 = math.exp %20 : vector<512x32xf32>
    %cst_14 = arith.constant 1.000000e+00 : f32
    %22 = vector.broadcast %cst_14 : f32 to vector<512x32xf32>
    %23 = arith.addf %22, %21 : vector<512x32xf32>
    %24 = arith.divf %22, %23 : vector<512x32xf32>
    %25 = arith.mulf %19, %24 : vector<512x32xf32>
    %26 = arith.truncf %25 : vector<512x32xf32> to vector<512x32xbf16>
    %c0_15 = arith.constant 0 : index
    %c0_16 = arith.constant 0 : index
    %27 = vector.load %arg8[%c0_15, %c0_16] : memref<512x32xbf16, #tpu.memory_space<vmem>>, vector<512x32xbf16>
    tpu.vector_store %arg8[%c0_15, %c0_16], %26 {strides = array<i32>} : memref<512x32xbf16, #tpu.memory_space<vmem>>, vector<512x32xbf16>,
    return
  }
  func.func @transform_0(%arg0: i32) -> (i32, i32) {
    %c0_i32 = arith.constant 0 : i32
    %c0_i32_0 = arith.constant 0 : i32
    return %arg0, %c0_i32 : i32, i32
  }
  func.func @transform_1(%arg0: i32) -> (i32, i32) {
    %c0_i32 = arith.constant 0 : i32
    %c0_i32_0 = arith.constant 0 : i32
    return %arg0, %c0_i32 : i32, i32
  }
  func.func @transform_2(%arg0: i32) -> (i32, i32) {
    %c0_i32 = arith.constant 0 : i32
    %c0_i32_0 = arith.constant 0 : i32
    return %arg0, %c0_i32 : i32, i32
  }
  func.func @transform_3(%arg0: i32) -> (i32, i32) {
    %c0_i32 = arith.constant 0 : i32
    %c0_i32_0 = arith.constant 0 : i32
    return %arg0, %c0_i32 : i32, i32
  }
  func.func @transform_4(%arg0: i32) -> (i32, i32) {
    %c0_i32 = arith.constant 0 : i32
    %c0_i32_0 = arith.constant 0 : i32
    return %arg0, %c0_i32 : i32, i32
  }
  func.func @transform_5(%arg0: i32) -> (i32, i32) {
    %c0_i32 = arith.constant 0 : i32
    %c0_i32_0 = arith.constant 0 : i32
    %c0_i32_1 = arith.constant 0 : i32
    return %c0_i32, %c0_i32_0 : i32, i32
  }
  func.func @transform_6(%arg0: i32) -> (i32, i32) {
    %c0_i32 = arith.constant 0 : i32
    %c0_i32_0 = arith.constant 0 : i32
    %c0_i32_1 = arith.constant 0 : i32
    return %c0_i32, %c0_i32_0 : i32, i32
  }
  func.func @transform_7(%arg0: i32) -> (i32, i32) {
    %c0_i32 = arith.constant 0 : i32
    %c0_i32_0 = arith.constant 0 : i32
    return %arg0, %c0_i32 : i32, i32
  }
}

module attributes {stable_mosaic.version = 11 : i64} {
  func.func @_mm_bias_kernel(%arg0: i32, %arg1: memref<128x288xbf16, #tpu.memory_space<vmem>>, %arg2: memref<288x64xbf16, #tpu.memory_space<vmem>>, %arg3: memref<1x64xf32, #tpu.memory_space<vmem>>, %arg4: memref<128x64xbf16, #tpu.memory_space<vmem>>) attributes {dimension_semantics = [#tpu.dimension_semantics<parallel>], iteration_bounds = array<i64: 1>, scalar_prefetch = 0 : i64, scratch_operands = 0 : i64, tpu.core_type = #tpu.core_type<tc>, window_params = [{transform_indices = @transform_0, window_bounds = array<i64: 128, 288>}, {pipeline_mode = #tpu.pipeline_mode<synchronous>, transform_indices = @transform_1, window_bounds = array<i64: 288, 64>}, {pipeline_mode = #tpu.pipeline_mode<synchronous>, transform_indices = @transform_2, window_bounds = array<i64: 1, 64>}, {transform_indices = @transform_3, window_bounds = array<i64: 128, 64>}]} {
    %c0 = arith.constant 0 : index
    %c0_0 = arith.constant 0 : index
    %0 = vector.load %arg1[%c0, %c0_0] : memref<128x288xbf16, #tpu.memory_space<vmem>>, vector<128x288xbf16>
    %c0_1 = arith.constant 0 : index
    %c0_2 = arith.constant 0 : index
    %1 = vector.load %arg2[%c0_1, %c0_2] : memref<288x64xbf16, #tpu.memory_space<vmem>>, vector<288x64xbf16>
    %cst = arith.constant dense<0.000000e+00> : vector<128x64xf32>
    %2 = tpu.matmul %0, %1, %cst {dimension_numbers = #tpu.dot_dimension_numbers<[1], [0], [0], [1], [0, 0, 1, 1], [], []>} : vector<128x288xbf16>, vector<288x64xbf16>, vector<128x64xf32> -> vector<128x64xf32>
    %c0_3 = arith.constant 0 : index
    %c0_4 = arith.constant 0 : index
    %3 = vector.load %arg3[%c0_3, %c0_4] : memref<1x64xf32, #tpu.memory_space<vmem>>, vector<1x64xf32>
    %4 = vector.broadcast %3 : vector<1x64xf32> to vector<128x64xf32>
    %5 = arith.addf %2, %4 : vector<128x64xf32>
    %6 = arith.negf %5 : vector<128x64xf32>
    %7 = math.exp %6 : vector<128x64xf32>
    %cst_5 = arith.constant 1.000000e+00 : f32
    %8 = vector.broadcast %cst_5 : f32 to vector<128x64xf32>
    %9 = arith.addf %8, %7 : vector<128x64xf32>
    %10 = arith.divf %8, %9 : vector<128x64xf32>
    %11 = arith.mulf %5, %10 : vector<128x64xf32>
    %12 = arith.truncf %11 : vector<128x64xf32> to vector<128x64xbf16>
    %c0_6 = arith.constant 0 : index
    %c0_7 = arith.constant 0 : index
    %13 = vector.load %arg4[%c0_6, %c0_7] : memref<128x64xbf16, #tpu.memory_space<vmem>>, vector<128x64xbf16>
    tpu.vector_store %arg4[%c0_6, %c0_7], %12 {strides = array<i32>} : memref<128x64xbf16, #tpu.memory_space<vmem>>, vector<128x64xbf16>,
    return
  }
  func.func @transform_0(%arg0: i32) -> (i32, i32) {
    %c0_i32 = arith.constant 0 : i32
    %c0_i32_0 = arith.constant 0 : i32
    return %arg0, %c0_i32 : i32, i32
  }
  func.func @transform_1(%arg0: i32) -> (i32, i32) {
    %c0_i32 = arith.constant 0 : i32
    %c0_i32_0 = arith.constant 0 : i32
    %c0_i32_1 = arith.constant 0 : i32
    return %c0_i32, %c0_i32_0 : i32, i32
  }
  func.func @transform_2(%arg0: i32) -> (i32, i32) {
    %c0_i32 = arith.constant 0 : i32
    %c0_i32_0 = arith.constant 0 : i32
    %c0_i32_1 = arith.constant 0 : i32
    return %c0_i32, %c0_i32_0 : i32, i32
  }
  func.func @transform_3(%arg0: i32) -> (i32, i32) {
    %c0_i32 = arith.constant 0 : i32
    %c0_i32_0 = arith.constant 0 : i32
    return %arg0, %c0_i32 : i32, i32
  }
}

module attributes {stable_mosaic.version = 11 : i64} {
  func.func @_mm_res_proj_kernel(%arg0: i32, %arg1: memref<128x576xbf16, #tpu.memory_space<vmem>>, %arg2: memref<128x32xbf16, #tpu.memory_space<vmem>>, %arg3: memref<128x32xbf16, #tpu.memory_space<vmem>>, %arg4: memref<128x32xbf16, #tpu.memory_space<vmem>>, %arg5: memref<128x32xbf16, #tpu.memory_space<vmem>>, %arg6: memref<576x64xbf16, #tpu.memory_space<vmem>>, %arg7: memref<1x64xf32, #tpu.memory_space<vmem>>, %arg8: memref<32x64xbf16, #tpu.memory_space<vmem>>, %arg9: memref<1x64xf32, #tpu.memory_space<vmem>>, %arg10: memref<128x64xbf16, #tpu.memory_space<vmem>>) attributes {dimension_semantics = [#tpu.dimension_semantics<parallel>], iteration_bounds = array<i64: 1>, scalar_prefetch = 0 : i64, scratch_operands = 0 : i64, tpu.core_type = #tpu.core_type<tc>, window_params = [{transform_indices = @transform_0, window_bounds = array<i64: 128, 576>}, {transform_indices = @transform_1, window_bounds = array<i64: 128, 32>}, {transform_indices = @transform_2, window_bounds = array<i64: 128, 32>}, {transform_indices = @transform_3, window_bounds = array<i64: 128, 32>}, {transform_indices = @transform_4, window_bounds = array<i64: 128, 32>}, {pipeline_mode = #tpu.pipeline_mode<synchronous>, transform_indices = @transform_5, window_bounds = array<i64: 576, 64>}, {pipeline_mode = #tpu.pipeline_mode<synchronous>, transform_indices = @transform_6, window_bounds = array<i64: 1, 64>}, {pipeline_mode = #tpu.pipeline_mode<synchronous>, transform_indices = @transform_7, window_bounds = array<i64: 32, 64>}, {pipeline_mode = #tpu.pipeline_mode<synchronous>, transform_indices = @transform_8, window_bounds = array<i64: 1, 64>}, {transform_indices = @transform_9, window_bounds = array<i64: 128, 64>}]} {
    %c0 = arith.constant 0 : index
    %c0_0 = arith.constant 0 : index
    %0 = vector.load %arg1[%c0, %c0_0] : memref<128x576xbf16, #tpu.memory_space<vmem>>, vector<128x576xbf16>
    %c0_1 = arith.constant 0 : index
    %c0_2 = arith.constant 0 : index
    %1 = vector.load %arg6[%c0_1, %c0_2] : memref<576x64xbf16, #tpu.memory_space<vmem>>, vector<576x64xbf16>
    %cst = arith.constant dense<0.000000e+00> : vector<128x64xf32>
    %2 = tpu.matmul %0, %1, %cst {dimension_numbers = #tpu.dot_dimension_numbers<[1], [0], [0], [1], [0, 0, 1, 1], [], []>} : vector<128x576xbf16>, vector<576x64xbf16>, vector<128x64xf32> -> vector<128x64xf32>
    %c0_3 = arith.constant 0 : index
    %c0_4 = arith.constant 0 : index
    %3 = vector.load %arg7[%c0_3, %c0_4] : memref<1x64xf32, #tpu.memory_space<vmem>>, vector<1x64xf32>
    %4 = vector.broadcast %3 : vector<1x64xf32> to vector<128x64xf32>
    %5 = arith.addf %2, %4 : vector<128x64xf32>
    %c0_5 = arith.constant 0 : index
    %c0_6 = arith.constant 0 : index
    %6 = vector.load %arg2[%c0_5, %c0_6] : memref<128x32xbf16, #tpu.memory_space<vmem>>, vector<128x32xbf16>
    %7 = arith.extf %6 : vector<128x32xbf16> to vector<128x32xf32>
    %c0_7 = arith.constant 0 : index
    %c0_8 = arith.constant 0 : index
    %8 = vector.load %arg3[%c0_7, %c0_8] : memref<128x32xbf16, #tpu.memory_space<vmem>>, vector<128x32xbf16>
    %9 = arith.extf %8 : vector<128x32xbf16> to vector<128x32xf32>
    %10 = arith.addf %7, %9 : vector<128x32xf32>
    %c0_9 = arith.constant 0 : index
    %c0_10 = arith.constant 0 : index
    %11 = vector.load %arg4[%c0_9, %c0_10] : memref<128x32xbf16, #tpu.memory_space<vmem>>, vector<128x32xbf16>
    %12 = arith.extf %11 : vector<128x32xbf16> to vector<128x32xf32>
    %13 = arith.addf %10, %12 : vector<128x32xf32>
    %c0_11 = arith.constant 0 : index
    %c0_12 = arith.constant 0 : index
    %14 = vector.load %arg5[%c0_11, %c0_12] : memref<128x32xbf16, #tpu.memory_space<vmem>>, vector<128x32xbf16>
    %15 = arith.extf %14 : vector<128x32xbf16> to vector<128x32xf32>
    %16 = arith.addf %13, %15 : vector<128x32xf32>
    %cst_13 = arith.constant 2.500000e-01 : f32
    %17 = vector.broadcast %cst_13 : f32 to vector<128x32xf32>
    %18 = arith.mulf %16, %17 : vector<128x32xf32>
    %19 = arith.truncf %18 : vector<128x32xf32> to vector<128x32xbf16>
    %c0_14 = arith.constant 0 : index
    %c0_15 = arith.constant 0 : index
    %20 = vector.load %arg8[%c0_14, %c0_15] : memref<32x64xbf16, #tpu.memory_space<vmem>>, vector<32x64xbf16>
    %cst_16 = arith.constant dense<0.000000e+00> : vector<128x64xf32>
    %21 = tpu.matmul %19, %20, %cst_16 {dimension_numbers = #tpu.dot_dimension_numbers<[1], [0], [0], [1], [0, 0, 1, 1], [], []>} : vector<128x32xbf16>, vector<32x64xbf16>, vector<128x64xf32> -> vector<128x64xf32>
    %c0_17 = arith.constant 0 : index
    %c0_18 = arith.constant 0 : index
    %22 = vector.load %arg9[%c0_17, %c0_18] : memref<1x64xf32, #tpu.memory_space<vmem>>, vector<1x64xf32>
    %23 = vector.broadcast %22 : vector<1x64xf32> to vector<128x64xf32>
    %24 = arith.addf %21, %23 : vector<128x64xf32>
    %25 = arith.addf %5, %24 : vector<128x64xf32>
    %26 = arith.negf %25 : vector<128x64xf32>
    %27 = math.exp %26 : vector<128x64xf32>
    %cst_19 = arith.constant 1.000000e+00 : f32
    %28 = vector.broadcast %cst_19 : f32 to vector<128x64xf32>
    %29 = arith.addf %28, %27 : vector<128x64xf32>
    %30 = arith.divf %28, %29 : vector<128x64xf32>
    %31 = arith.mulf %25, %30 : vector<128x64xf32>
    %32 = arith.truncf %31 : vector<128x64xf32> to vector<128x64xbf16>
    %c0_20 = arith.constant 0 : index
    %c0_21 = arith.constant 0 : index
    %33 = vector.load %arg10[%c0_20, %c0_21] : memref<128x64xbf16, #tpu.memory_space<vmem>>, vector<128x64xbf16>
    tpu.vector_store %arg10[%c0_20, %c0_21], %32 {strides = array<i32>} : memref<128x64xbf16, #tpu.memory_space<vmem>>, vector<128x64xbf16>,
    return
  }
  func.func @transform_0(%arg0: i32) -> (i32, i32) {
    %c0_i32 = arith.constant 0 : i32
    %c0_i32_0 = arith.constant 0 : i32
    return %arg0, %c0_i32 : i32, i32
  }
  func.func @transform_1(%arg0: i32) -> (i32, i32) {
    %c0_i32 = arith.constant 0 : i32
    %c0_i32_0 = arith.constant 0 : i32
    return %arg0, %c0_i32 : i32, i32
  }
  func.func @transform_2(%arg0: i32) -> (i32, i32) {
    %c0_i32 = arith.constant 0 : i32
    %c0_i32_0 = arith.constant 0 : i32
    return %arg0, %c0_i32 : i32, i32
  }
  func.func @transform_3(%arg0: i32) -> (i32, i32) {
    %c0_i32 = arith.constant 0 : i32
    %c0_i32_0 = arith.constant 0 : i32
    return %arg0, %c0_i32 : i32, i32
  }
  func.func @transform_4(%arg0: i32) -> (i32, i32) {
    %c0_i32 = arith.constant 0 : i32
    %c0_i32_0 = arith.constant 0 : i32
    return %arg0, %c0_i32 : i32, i32
  }
  func.func @transform_5(%arg0: i32) -> (i32, i32) {
    %c0_i32 = arith.constant 0 : i32
    %c0_i32_0 = arith.constant 0 : i32
    %c0_i32_1 = arith.constant 0 : i32
    return %c0_i32, %c0_i32_0 : i32, i32
  }
  func.func @transform_6(%arg0: i32) -> (i32, i32) {
    %c0_i32 = arith.constant 0 : i32
    %c0_i32_0 = arith.constant 0 : i32
    %c0_i32_1 = arith.constant 0 : i32
    return %c0_i32, %c0_i32_0 : i32, i32
  }
  func.func @transform_7(%arg0: i32) -> (i32, i32) {
    %c0_i32 = arith.constant 0 : i32
    %c0_i32_0 = arith.constant 0 : i32
    %c0_i32_1 = arith.constant 0 : i32
    return %c0_i32, %c0_i32_0 : i32, i32
  }
  func.func @transform_8(%arg0: i32) -> (i32, i32) {
    %c0_i32 = arith.constant 0 : i32
    %c0_i32_0 = arith.constant 0 : i32
    %c0_i32_1 = arith.constant 0 : i32
    return %c0_i32, %c0_i32_0 : i32, i32
  }
  func.func @transform_9(%arg0: i32) -> (i32, i32) {
    %c0_i32 = arith.constant 0 : i32
    %c0_i32_0 = arith.constant 0 : i32
    return %arg0, %c0_i32 : i32, i32
  }
}

module attributes {stable_mosaic.version = 11 : i64} {
  func.func @_mm_bias_kernel(%arg0: i32, %arg1: memref<32x576xbf16, #tpu.memory_space<vmem>>, %arg2: memref<576x64xbf16, #tpu.memory_space<vmem>>, %arg3: memref<1x64xf32, #tpu.memory_space<vmem>>, %arg4: memref<32x64xbf16, #tpu.memory_space<vmem>>) attributes {dimension_semantics = [#tpu.dimension_semantics<parallel>], iteration_bounds = array<i64: 1>, scalar_prefetch = 0 : i64, scratch_operands = 0 : i64, tpu.core_type = #tpu.core_type<tc>, window_params = [{transform_indices = @transform_0, window_bounds = array<i64: 32, 576>}, {pipeline_mode = #tpu.pipeline_mode<synchronous>, transform_indices = @transform_1, window_bounds = array<i64: 576, 64>}, {pipeline_mode = #tpu.pipeline_mode<synchronous>, transform_indices = @transform_2, window_bounds = array<i64: 1, 64>}, {transform_indices = @transform_3, window_bounds = array<i64: 32, 64>}]} {
    %c0 = arith.constant 0 : index
    %c0_0 = arith.constant 0 : index
    %0 = vector.load %arg1[%c0, %c0_0] : memref<32x576xbf16, #tpu.memory_space<vmem>>, vector<32x576xbf16>
    %c0_1 = arith.constant 0 : index
    %c0_2 = arith.constant 0 : index
    %1 = vector.load %arg2[%c0_1, %c0_2] : memref<576x64xbf16, #tpu.memory_space<vmem>>, vector<576x64xbf16>
    %cst = arith.constant dense<0.000000e+00> : vector<32x64xf32>
    %2 = tpu.matmul %0, %1, %cst {dimension_numbers = #tpu.dot_dimension_numbers<[1], [0], [0], [1], [0, 0, 1, 1], [], []>} : vector<32x576xbf16>, vector<576x64xbf16>, vector<32x64xf32> -> vector<32x64xf32>
    %c0_3 = arith.constant 0 : index
    %c0_4 = arith.constant 0 : index
    %3 = vector.load %arg3[%c0_3, %c0_4] : memref<1x64xf32, #tpu.memory_space<vmem>>, vector<1x64xf32>
    %4 = vector.broadcast %3 : vector<1x64xf32> to vector<32x64xf32>
    %5 = arith.addf %2, %4 : vector<32x64xf32>
    %6 = arith.negf %5 : vector<32x64xf32>
    %7 = math.exp %6 : vector<32x64xf32>
    %cst_5 = arith.constant 1.000000e+00 : f32
    %8 = vector.broadcast %cst_5 : f32 to vector<32x64xf32>
    %9 = arith.addf %8, %7 : vector<32x64xf32>
    %10 = arith.divf %8, %9 : vector<32x64xf32>
    %11 = arith.mulf %5, %10 : vector<32x64xf32>
    %12 = arith.truncf %11 : vector<32x64xf32> to vector<32x64xbf16>
    %c0_6 = arith.constant 0 : index
    %c0_7 = arith.constant 0 : index
    %13 = vector.load %arg4[%c0_6, %c0_7] : memref<32x64xbf16, #tpu.memory_space<vmem>>, vector<32x64xbf16>
    tpu.vector_store %arg4[%c0_6, %c0_7], %12 {strides = array<i32>} : memref<32x64xbf16, #tpu.memory_space<vmem>>, vector<32x64xbf16>,
    return
  }
  func.func @transform_0(%arg0: i32) -> (i32, i32) {
    %c0_i32 = arith.constant 0 : i32
    %c0_i32_0 = arith.constant 0 : i32
    return %arg0, %c0_i32 : i32, i32
  }
  func.func @transform_1(%arg0: i32) -> (i32, i32) {
    %c0_i32 = arith.constant 0 : i32
    %c0_i32_0 = arith.constant 0 : i32
    %c0_i32_1 = arith.constant 0 : i32
    return %c0_i32, %c0_i32_0 : i32, i32
  }
  func.func @transform_2(%arg0: i32) -> (i32, i32) {
    %c0_i32 = arith.constant 0 : i32
    %c0_i32_0 = arith.constant 0 : i32
    %c0_i32_1 = arith.constant 0 : i32
    return %c0_i32, %c0_i32_0 : i32, i32
  }
  func.func @transform_3(%arg0: i32) -> (i32, i32) {
    %c0_i32 = arith.constant 0 : i32
    %c0_i32_0 = arith.constant 0 : i32
    return %arg0, %c0_i32 : i32, i32
  }
}

module attributes {stable_mosaic.version = 11 : i64} {
  func.func @_mm_bias_kernel(%arg0: i32, %arg1: memref<2x1024xbf16, #tpu.memory_space<vmem>>, %arg2: memref<1024x256xbf16, #tpu.memory_space<vmem>>, %arg3: memref<1x256xf32, #tpu.memory_space<vmem>>, %arg4: memref<2x256xf32, #tpu.memory_space<vmem>>) attributes {dimension_semantics = [#tpu.dimension_semantics<parallel>], iteration_bounds = array<i64: 1>, scalar_prefetch = 0 : i64, scratch_operands = 0 : i64, tpu.core_type = #tpu.core_type<tc>, window_params = [{transform_indices = @transform_0, window_bounds = array<i64: 2, 1024>}, {pipeline_mode = #tpu.pipeline_mode<synchronous>, transform_indices = @transform_1, window_bounds = array<i64: 1024, 256>}, {pipeline_mode = #tpu.pipeline_mode<synchronous>, transform_indices = @transform_2, window_bounds = array<i64: 1, 256>}, {transform_indices = @transform_3, window_bounds = array<i64: 2, 256>}]} {
    %c0 = arith.constant 0 : index
    %c0_0 = arith.constant 0 : index
    %0 = vector.load %arg1[%c0, %c0_0] : memref<2x1024xbf16, #tpu.memory_space<vmem>>, vector<2x1024xbf16>
    %c0_1 = arith.constant 0 : index
    %c0_2 = arith.constant 0 : index
    %1 = vector.load %arg2[%c0_1, %c0_2] : memref<1024x256xbf16, #tpu.memory_space<vmem>>, vector<1024x256xbf16>
    %cst = arith.constant dense<0.000000e+00> : vector<2x256xf32>
    %2 = tpu.matmul %0, %1, %cst {dimension_numbers = #tpu.dot_dimension_numbers<[1], [0], [0], [1], [0, 0, 1, 1], [], []>} : vector<2x1024xbf16>, vector<1024x256xbf16>, vector<2x256xf32> -> vector<2x256xf32>
    %c0_3 = arith.constant 0 : index
    %c0_4 = arith.constant 0 : index
    %3 = vector.load %arg3[%c0_3, %c0_4] : memref<1x256xf32, #tpu.memory_space<vmem>>, vector<1x256xf32>
    %4 = vector.broadcast %3 : vector<1x256xf32> to vector<2x256xf32>
    %5 = arith.addf %2, %4 : vector<2x256xf32>
    %6 = arith.negf %5 : vector<2x256xf32>
    %7 = math.exp %6 : vector<2x256xf32>
    %cst_5 = arith.constant 1.000000e+00 : f32
    %8 = vector.broadcast %cst_5 : f32 to vector<2x256xf32>
    %9 = arith.addf %8, %7 : vector<2x256xf32>
    %10 = arith.divf %8, %9 : vector<2x256xf32>
    %11 = arith.mulf %5, %10 : vector<2x256xf32>
    %c0_6 = arith.constant 0 : index
    %c0_7 = arith.constant 0 : index
    %12 = vector.load %arg4[%c0_6, %c0_7] : memref<2x256xf32, #tpu.memory_space<vmem>>, vector<2x256xf32>
    tpu.vector_store %arg4[%c0_6, %c0_7], %11 {strides = array<i32>} : memref<2x256xf32, #tpu.memory_space<vmem>>, vector<2x256xf32>,
    return
  }
  func.func @transform_0(%arg0: i32) -> (i32, i32) {
    %c0_i32 = arith.constant 0 : i32
    %c0_i32_0 = arith.constant 0 : i32
    return %arg0, %c0_i32 : i32, i32
  }
  func.func @transform_1(%arg0: i32) -> (i32, i32) {
    %c0_i32 = arith.constant 0 : i32
    %c0_i32_0 = arith.constant 0 : i32
    %c0_i32_1 = arith.constant 0 : i32
    return %c0_i32, %c0_i32_0 : i32, i32
  }
  func.func @transform_2(%arg0: i32) -> (i32, i32) {
    %c0_i32 = arith.constant 0 : i32
    %c0_i32_0 = arith.constant 0 : i32
    %c0_i32_1 = arith.constant 0 : i32
    return %c0_i32, %c0_i32_0 : i32, i32
  }
  func.func @transform_3(%arg0: i32) -> (i32, i32) {
    %c0_i32 = arith.constant 0 : i32
    %c0_i32_0 = arith.constant 0 : i32
    return %arg0, %c0_i32 : i32, i32
  }
}

module attributes {stable_mosaic.version = 11 : i64} {
  func.func @_mm_res_kernel(%arg0: i32, %arg1: memref<32x576xbf16, #tpu.memory_space<vmem>>, %arg2: memref<32x64xbf16, #tpu.memory_space<vmem>>, %arg3: memref<32x64xbf16, #tpu.memory_space<vmem>>, %arg4: memref<32x64xbf16, #tpu.memory_space<vmem>>, %arg5: memref<32x64xbf16, #tpu.memory_space<vmem>>, %arg6: memref<576x64xbf16, #tpu.memory_space<vmem>>, %arg7: memref<1x64xf32, #tpu.memory_space<vmem>>, %arg8: memref<32x64xbf16, #tpu.memory_space<vmem>>) attributes {dimension_semantics = [#tpu.dimension_semantics<parallel>], iteration_bounds = array<i64: 1>, scalar_prefetch = 0 : i64, scratch_operands = 0 : i64, tpu.core_type = #tpu.core_type<tc>, window_params = [{transform_indices = @transform_0, window_bounds = array<i64: 32, 576>}, {transform_indices = @transform_1, window_bounds = array<i64: 32, 64>}, {transform_indices = @transform_2, window_bounds = array<i64: 32, 64>}, {transform_indices = @transform_3, window_bounds = array<i64: 32, 64>}, {transform_indices = @transform_4, window_bounds = array<i64: 32, 64>}, {pipeline_mode = #tpu.pipeline_mode<synchronous>, transform_indices = @transform_5, window_bounds = array<i64: 576, 64>}, {pipeline_mode = #tpu.pipeline_mode<synchronous>, transform_indices = @transform_6, window_bounds = array<i64: 1, 64>}, {transform_indices = @transform_7, window_bounds = array<i64: 32, 64>}]} {
    %c0 = arith.constant 0 : index
    %c0_0 = arith.constant 0 : index
    %0 = vector.load %arg1[%c0, %c0_0] : memref<32x576xbf16, #tpu.memory_space<vmem>>, vector<32x576xbf16>
    %c0_1 = arith.constant 0 : index
    %c0_2 = arith.constant 0 : index
    %1 = vector.load %arg6[%c0_1, %c0_2] : memref<576x64xbf16, #tpu.memory_space<vmem>>, vector<576x64xbf16>
    %cst = arith.constant dense<0.000000e+00> : vector<32x64xf32>
    %2 = tpu.matmul %0, %1, %cst {dimension_numbers = #tpu.dot_dimension_numbers<[1], [0], [0], [1], [0, 0, 1, 1], [], []>} : vector<32x576xbf16>, vector<576x64xbf16>, vector<32x64xf32> -> vector<32x64xf32>
    %c0_3 = arith.constant 0 : index
    %c0_4 = arith.constant 0 : index
    %3 = vector.load %arg7[%c0_3, %c0_4] : memref<1x64xf32, #tpu.memory_space<vmem>>, vector<1x64xf32>
    %4 = vector.broadcast %3 : vector<1x64xf32> to vector<32x64xf32>
    %5 = arith.addf %2, %4 : vector<32x64xf32>
    %c0_5 = arith.constant 0 : index
    %c0_6 = arith.constant 0 : index
    %6 = vector.load %arg2[%c0_5, %c0_6] : memref<32x64xbf16, #tpu.memory_space<vmem>>, vector<32x64xbf16>
    %7 = arith.extf %6 : vector<32x64xbf16> to vector<32x64xf32>
    %c0_7 = arith.constant 0 : index
    %c0_8 = arith.constant 0 : index
    %8 = vector.load %arg3[%c0_7, %c0_8] : memref<32x64xbf16, #tpu.memory_space<vmem>>, vector<32x64xbf16>
    %9 = arith.extf %8 : vector<32x64xbf16> to vector<32x64xf32>
    %10 = arith.addf %7, %9 : vector<32x64xf32>
    %c0_9 = arith.constant 0 : index
    %c0_10 = arith.constant 0 : index
    %11 = vector.load %arg4[%c0_9, %c0_10] : memref<32x64xbf16, #tpu.memory_space<vmem>>, vector<32x64xbf16>
    %12 = arith.extf %11 : vector<32x64xbf16> to vector<32x64xf32>
    %13 = arith.addf %10, %12 : vector<32x64xf32>
    %c0_11 = arith.constant 0 : index
    %c0_12 = arith.constant 0 : index
    %14 = vector.load %arg5[%c0_11, %c0_12] : memref<32x64xbf16, #tpu.memory_space<vmem>>, vector<32x64xbf16>
    %15 = arith.extf %14 : vector<32x64xbf16> to vector<32x64xf32>
    %16 = arith.addf %13, %15 : vector<32x64xf32>
    %cst_13 = arith.constant 2.500000e-01 : f32
    %17 = vector.broadcast %cst_13 : f32 to vector<32x64xf32>
    %18 = arith.mulf %16, %17 : vector<32x64xf32>
    %19 = arith.addf %5, %18 : vector<32x64xf32>
    %20 = arith.negf %19 : vector<32x64xf32>
    %21 = math.exp %20 : vector<32x64xf32>
    %cst_14 = arith.constant 1.000000e+00 : f32
    %22 = vector.broadcast %cst_14 : f32 to vector<32x64xf32>
    %23 = arith.addf %22, %21 : vector<32x64xf32>
    %24 = arith.divf %22, %23 : vector<32x64xf32>
    %25 = arith.mulf %19, %24 : vector<32x64xf32>
    %26 = arith.truncf %25 : vector<32x64xf32> to vector<32x64xbf16>
    %c0_15 = arith.constant 0 : index
    %c0_16 = arith.constant 0 : index
    %27 = vector.load %arg8[%c0_15, %c0_16] : memref<32x64xbf16, #tpu.memory_space<vmem>>, vector<32x64xbf16>
    tpu.vector_store %arg8[%c0_15, %c0_16], %26 {strides = array<i32>} : memref<32x64xbf16, #tpu.memory_space<vmem>>, vector<32x64xbf16>,
    return
  }
  func.func @transform_0(%arg0: i32) -> (i32, i32) {
    %c0_i32 = arith.constant 0 : i32
    %c0_i32_0 = arith.constant 0 : i32
    return %arg0, %c0_i32 : i32, i32
  }
  func.func @transform_1(%arg0: i32) -> (i32, i32) {
    %c0_i32 = arith.constant 0 : i32
    %c0_i32_0 = arith.constant 0 : i32
    return %arg0, %c0_i32 : i32, i32
  }
  func.func @transform_2(%arg0: i32) -> (i32, i32) {
    %c0_i32 = arith.constant 0 : i32
    %c0_i32_0 = arith.constant 0 : i32
    return %arg0, %c0_i32 : i32, i32
  }
  func.func @transform_3(%arg0: i32) -> (i32, i32) {
    %c0_i32 = arith.constant 0 : i32
    %c0_i32_0 = arith.constant 0 : i32
    return %arg0, %c0_i32 : i32, i32
  }
  func.func @transform_4(%arg0: i32) -> (i32, i32) {
    %c0_i32 = arith.constant 0 : i32
    %c0_i32_0 = arith.constant 0 : i32
    return %arg0, %c0_i32 : i32, i32
  }
  func.func @transform_5(%arg0: i32) -> (i32, i32) {
    %c0_i32 = arith.constant 0 : i32
    %c0_i32_0 = arith.constant 0 : i32
    %c0_i32_1 = arith.constant 0 : i32
    return %c0_i32, %c0_i32_0 : i32, i32
  }
  func.func @transform_6(%arg0: i32) -> (i32, i32) {
    %c0_i32 = arith.constant 0 : i32
    %c0_i32_0 = arith.constant 0 : i32
    %c0_i32_1 = arith.constant 0 : i32
    return %c0_i32, %c0_i32_0 : i32, i32
  }
  func.func @transform_7(%arg0: i32) -> (i32, i32) {
    %c0_i32 = arith.constant 0 : i32
    %c0_i32_0 = arith.constant 0 : i32
    return %arg0, %c0_i32 : i32, i32
  }
}

</mosaic_0001>

<llo_original>
// kernel: resnet_forward.8
$region0: #{resnet_forward.8}
  #allocation0 [shape = 'u32[]', space=smem, size = 0x4, offset = 0x4, fixed_abs, tag = 'smem constant byte address 0x4 - core index']
  #allocation1 [shape = 'u32[72,128]{1,0:T(1,128)}', space=vmem, size = 0x9000, scoped, tag = 'internal scratch']
  %s0 = inlined_call_operand.vmem [shape: bf16[2048,32], index: 0, kind: input, shape index: {}]
  %s1 = inlined_call_operand.vmem [shape: bf16[32,32], index: 1, kind: input, shape index: {}]
  %s2 = inlined_call_operand.vmem [shape: f32[1,32], index: 2, kind: input, shape index: {}]
  %s3 = inlined_call_operand.vmem [shape: bf16[2048,32], index: 3, kind: output, shape index: {}]
  %s4 = sld [smem:[#allocation0]]
  $region45: #{resnet_forward.8} parent=0
    _
  %s6 = ssub.s32 1, %s4
  %s7 = scalar_select 0, %s6, %s4
  loop: start=0, step=1, limit=4
  $region2: #{resnet_forward.8} parent=0 // loop_pre_header
    _
  $region3: #{resnet_forward.8} parent=0 // loop_header
    %s9 = sphi 0, %s13
    %p10 = scmp.ge.s32.totalorder %s9, 4
    %s19 = sphi 0, %s21
    %s22 = sphi 0, %s19
    %s23 = sphi 0, %s22
    %s39 = sphi 0, %s23
    %s43 = sphi 0, %s43
    %s45 = sphi 0, %s43
    %s46 = sphi 0, %s45
    %s60 = sphi 0, %s46
    %s64 = sphi 0, %s64
    %s66 = sphi 0, %s64
    %s67 = sphi 0, %s66
    %s81 = sphi 0, %s67
    %s87 = sphi 0, %s89
    %s90 = sphi 0, %s87
    %s91 = sphi 0, %s90
    %s107 = sphi 0, %s91
  $region4: #{resnet_forward.8} parent=0 // loop_header_branch
    %12 = sbr.rel (%p10) target = $region8
  $region5: #{resnet_forward.8} parent=0 // loop_body
    %s14 = ssub.s32 %s9, 1
    %s15 = ssub.s32 %s9, 2
    %s16 = sadd.s32 %s9, 1
    %s17 = ssub.s32 %s9, %s16
    %p18 = scmp.eq.s32.totalorder %s17, 0
    %s20 = sadd.s32 %s19, 1
    %s21 = scalar_select %p18, %s19, %s20
    %p24 = pneg %p18
    %p25 = scmp.eq.s32.totalorder %s9, 1
    %p26 = por %p24, %p25
    %p27 = scmp.ne.s32.totalorder %s19, %s22
    %p28 = scmp.eq.s32.totalorder %s9, 0
    %p29 = por %p27, %p28
    %p30 = scmp.ne.s32.totalorder %s19, %s22
    %p31 = scmp.eq.s32.totalorder %s14, 1
    %p32 = por %p30, %p31
    %p33 = scmp.ne.s32.totalorder %s22, %s23
    %p34 = scmp.eq.s32.totalorder %s14, 0
    %p35 = por %p33, %p34
    %p36 = scmp.ne.s32.totalorder %s22, %s23
    %p37 = scmp.eq.s32.totalorder %s15, 1
    %p38 = por %p36, %p37
    %p40 = scmp.ne.s32.totalorder %s23, %s39
    %p41 = scmp.eq.s32.totalorder %s15, 0
    %p42 = por %p40, %p41
    %s44 = sadd.s32 %s43, 1
    %p47 = scmp.eq.s32.totalorder %s9, 1
    %p48 = scmp.ne.s32.totalorder %s43, %s45
    %p49 = scmp.eq.s32.totalorder %s9, 0
    %p50 = por %p48, %p49
    %p51 = scmp.ne.s32.totalorder %s43, %s45
    %p52 = scmp.eq.s32.totalorder %s14, 1
    %p53 = por %p51, %p52
    %p54 = scmp.ne.s32.totalorder %s45, %s46
    %p55 = scmp.eq.s32.totalorder %s14, 0
    %p56 = por %p54, %p55
    %p57 = scmp.ne.s32.totalorder %s45, %s46
    %p58 = scmp.eq.s32.totalorder %s15, 1
    %p59 = por %p57, %p58
    %p61 = scmp.ne.s32.totalorder %s46, %s60
    %p62 = scmp.eq.s32.totalorder %s15, 0
    %p63 = por %p61, %p62
    %s65 = sadd.s32 %s64, 1
    %p68 = scmp.eq.s32.totalorder %s9, 1
    %p69 = scmp.ne.s32.totalorder %s64, %s66
    %p70 = scmp.eq.s32.totalorder %s9, 0
    %p71 = por %p69, %p70
    %p72 = scmp.ne.s32.totalorder %s64, %s66
    %p73 = scmp.eq.s32.totalorder %s14, 1
    %p74 = por %p72, %p73
    %p75 = scmp.ne.s32.totalorder %s66, %s67
    %p76 = scmp.eq.s32.totalorder %s14, 0
    %p77 = por %p75, %p76
    %p78 = scmp.ne.s32.totalorder %s66, %s67
    %p79 = scmp.eq.s32.totalorder %s15, 1
    %p80 = por %p78, %p79
    %p82 = scmp.ne.s32.totalorder %s67, %s81
    %p83 = scmp.eq.s32.totalorder %s15, 0
    %p84 = por %p82, %p83
    %s85 = ssub.s32 %s9, %s16
    %p86 = scmp.eq.s32.totalorder %s85, 0
    %s88 = sadd.s32 %s87, 1
    %s89 = scalar_select %p86, %s87, %s88
    %p92 = pneg %p86
    %p93 = scmp.eq.s32.totalorder %s9, 1
    %p94 = por %p92, %p93
    %p95 = scmp.ne.s32.totalorder %s87, %s90
    %p96 = scmp.eq.s32.totalorder %s9, 0
    %p97 = por %p95, %p96
    %p98 = scmp.ne.s32.totalorder %s87, %s90
    %p99 = scmp.eq.s32.totalorder %s14, 1
    %p100 = por %p98, %p99
    %p101 = scmp.ne.s32.totalorder %s90, %s91
    %p102 = scmp.eq.s32.totalorder %s14, 0
    %p103 = por %p101, %p102
    %p104 = scmp.ne.s32.totalorder %s90, %s91
    %p105 = scmp.eq.s32.totalorder %s15, 1
    %p106 = por %p104, %p105
    %p108 = scmp.ne.s32.totalorder %s91, %s107
    %p109 = scmp.eq.s32.totalorder %s15, 0
    %p110 = por %p108, %p109
    %p111 = scmp.le.s32.totalorder 1, %s9
    %p112 = scmp.lt.s32.totalorder %s9, 3
    %p113 = pnand %p111, %p112
    %p114 = pneg %p113
    // Predicated region
    $region9: #{resnet_forward.8} parent=5 // pred_check
      _
    $region10: #{resnet_forward.8} parent=5 // pred_check_branch
      %116 = sbr.rel (%p113) target = $region12
    $region11: #{resnet_forward.8} parent=5 // pred_region
      %s117 = ssub.s32 %s9, 1
      // Predicated region
      $region13: #{resnet_forward.8} parent=11 // pred_check
        %p118 = pneg %p56
      $region14: #{resnet_forward.8} parent=11 // pred_check_branch
        %120 = sbr.rel (%p118) target = $region16
      $region15: #{resnet_forward.8} parent=11 // pred_region
        _
      $region16: #{resnet_forward.8} parent=11 // pred_fallthru
        _
      // Predicated region
      $region17: #{resnet_forward.8} parent=11 // pred_check
        %p121 = pneg %p77
      $region18: #{resnet_forward.8} parent=11 // pred_check_branch
        %123 = sbr.rel (%p121) target = $region20
      $region19: #{resnet_forward.8} parent=11 // pred_region
        _
      $region20: #{resnet_forward.8} parent=11 // pred_fallthru
        _
    $region12: #{resnet_forward.8} parent=5 // pred_fallthru
      _
    %p124 = scmp.lt.s32.totalorder %s9, 2
    // Predicated region
    $region21: #{resnet_forward.8} parent=5 // pred_check
      %p125 = pneg %p124
    $region22: #{resnet_forward.8} parent=5 // pred_check_branch
      %127 = sbr.rel (%p125) target = $region24
    $region23: #{resnet_forward.8} parent=5 // pred_region
      // Predicated region
      $region25: #{resnet_forward.8} parent=23 // pred_check
        %p128 = pneg %p29
      $region26: #{resnet_forward.8} parent=23 // pred_check_branch
        %130 = sbr.rel (%p128) target = $region28
      $region27: #{resnet_forward.8} parent=23 // pred_region
        %s131 = smul.u32 128, %s9
        %p132 = scmp.lt.s32.totalorder %s131, 255
        %s133 = scalar_select %p132, %s131, 255
        %s134 = smul.addr %s133, 4
        %s135 = scalar_lea.vmem %s0, %s134
        %s136 = smul.u32 128, %s9
      $region28: #{resnet_forward.8} parent=23 // pred_fallthru
        _
    $region24: #{resnet_forward.8} parent=5 // pred_fallthru
      _
    %p137 = scmp.le.s32.totalorder 1, %s9
    %p138 = scmp.lt.s32.totalorder %s9, 3
    %p139 = pnand %p137, %p138
    %p140 = pneg %p139
    // Predicated region
    $region29: #{resnet_forward.8} parent=5 // pred_check
      _
    $region30: #{resnet_forward.8} parent=5 // pred_check_branch
      %142 = sbr.rel (%p139) target = $region32
    $region31: #{resnet_forward.8} parent=5 // pred_region
      %s143 = ssub.s32 %s9, 1
      %s144 = smul.u32 128, %s14
      %p145 = scmp.lt.s32.totalorder %s144, 255
      %s146 = scalar_select %p145, %s144, 255
      %s147 = smul.addr %s146, 4
      %s148 = scalar_lea.vmem %s0, %s147
      %p149 = pneg %p35
      %p150 = pneg %p32
      %p151 = pneg %p56
      %p152 = pneg %p53
      %p153 = pneg %p77
      %p154 = pneg %p74
      %p155 = pneg %p103
      %p156 = pneg %p100
      %s157 = smul.u32 128, %s14
      %p158 = scmp.lt.s32.totalorder %s157, 255
      %s159 = scalar_select %p158, %s157, 255
      %s160 = smul.addr %s159, 4
      %s161 = scalar_lea.vmem %s3, %s160
      %s162 = smul.u32 128, %s14
      %p163 = scmp.lt.s32.totalorder %s162, 255
      %s164 = scalar_select %p163, %s162, 255
      %s165 = smul.addr %s164, 4
      %s166 = scalar_lea.vmem %s0, %s165
      %s167 = smul.u32 128, %s14
      %s168 = smul.u32 128, %s14
      %p169 = scmp.lt.s32.totalorder %s168, 255
      %s170 = scalar_select %p169, %s168, 255
      %s171 = smul.addr %s170, 4
      %s172 = scalar_lea.vmem %s3, %s171
      %s173 = smul.u32 128, %s14
      %v175 = vld [vmem:[%s166] sm:$0xf]
      %v176 = vld [vmem:[%s166 + $0x4] sm:$0xf]
      %v177 = vld [vmem:[%s166 + $0x8] sm:$0xf]
      %v178 = vld [vmem:[%s166 + $0xc] sm:$0xf]
      %v179 = vld [vmem:[%s166 + $0x10] sm:$0xf]
      %v180 = vld [vmem:[%s166 + $0x14] sm:$0xf]
      %v181 = vld [vmem:[%s166 + $0x18] sm:$0xf]
      %v182 = vld [vmem:[%s166 + $0x1c] sm:$0xf]
      %v183 = vld [vmem:[%s166 + $0x20] sm:$0xf]
      %v184 = vld [vmem:[%s166 + $0x24] sm:$0xf]
      %v185 = vld [vmem:[%s166 + $0x28] sm:$0xf]
      %v186 = vld [vmem:[%s166 + $0x2c] sm:$0xf]
      %v187 = vld [vmem:[%s166 + $0x30] sm:$0xf]
      %v188 = vld [vmem:[%s166 + $0x34] sm:$0xf]
      %v189 = vld [vmem:[%s166 + $0x38] sm:$0xf]
      %v190 = vld [vmem:[%s166 + $0x3c] sm:$0xf]
      %v191 = vld [vmem:[%s166 + $0x40] sm:$0xf]
      %v192 = vld [vmem:[%s166 + $0x44] sm:$0xf]
      %v193 = vld [vmem:[%s166 + $0x48] sm:$0xf]
      %v194 = vld [vmem:[%s166 + $0x4c] sm:$0xf]
      %v195 = vld [vmem:[%s166 + $0x50] sm:$0xf]
      %v196 = vld [vmem:[%s166 + $0x54] sm:$0xf]
      %v197 = vld [vmem:[%s166 + $0x58] sm:$0xf]
      %v198 = vld [vmem:[%s166 + $0x5c] sm:$0xf]
      %v199 = vld [vmem:[%s166 + $0x60] sm:$0xf]
      %v200 = vld [vmem:[%s166 + $0x64] sm:$0xf]
      %v201 = vld [vmem:[%s166 + $0x68] sm:$0xf]
      %v202 = vld [vmem:[%s166 + $0x6c] sm:$0xf]
      %v203 = vld [vmem:[%s166 + $0x70] sm:$0xf]
      %v204 = vld [vmem:[%s166 + $0x74] sm:$0xf]
      %v205 = vld [vmem:[%s166 + $0x78] sm:$0xf]
      %v206 = vld [vmem:[%s166 + $0x7c] sm:$0xf]
      %v207 = vld [vmem:[%s166 + $0x80] sm:$0xf]
      %v208 = vld [vmem:[%s166 + $0x84] sm:$0xf]
      %v209 = vld [vmem:[%s166 + $0x88] sm:$0xf]
      %v210 = vld [vmem:[%s166 + $0x8c] sm:$0xf]
      %v211 = vld [vmem:[%s166 + $0x90] sm:$0xf]
      %v212 = vld [vmem:[%s166 + $0x94] sm:$0xf]
      %v213 = vld [vmem:[%s166 + $0x98] sm:$0xf]
      %v214 = vld [vmem:[%s166 + $0x9c] sm:$0xf]
      %v215 = vld [vmem:[%s166 + $0xa0] sm:$0xf]
      %v216 = vld [vmem:[%s166 + $0xa4] sm:$0xf]
      %v217 = vld [vmem:[%s166 + $0xa8] sm:$0xf]
      %v218 = vld [vmem:[%s166 + $0xac] sm:$0xf]
      %v219 = vld [vmem:[%s166 + $0xb0] sm:$0xf]
      %v220 = vld [vmem:[%s166 + $0xb4] sm:$0xf]
      %v221 = vld [vmem:[%s166 + $0xb8] sm:$0xf]
      %v222 = vld [vmem:[%s166 + $0xbc] sm:$0xf]
      %v223 = vld [vmem:[%s166 + $0xc0] sm:$0xf]
      %v224 = vld [vmem:[%s166 + $0xc4] sm:$0xf]
      %v225 = vld [vmem:[%s166 + $0xc8] sm:$0xf]
      %v226 = vld [vmem:[%s166 + $0xcc] sm:$0xf]
      %v227 = vld [vmem:[%s166 + $0xd0] sm:$0xf]
      %v228 = vld [vmem:[%s166 + $0xd4] sm:$0xf]
      %v229 = vld [vmem:[%s166 + $0xd8] sm:$0xf]
      %v230 = vld [vmem:[%s166 + $0xdc] sm:$0xf]
      %v231 = vld [vmem:[%s166 + $0xe0] sm:$0xf]
      %v232 = vld [vmem:[%s166 + $0xe4] sm:$0xf]
      %v233 = vld [vmem:[%s166 + $0xe8] sm:$0xf]
      %v234 = vld [vmem:[%s166 + $0xec] sm:$0xf]
      %v235 = vld [vmem:[%s166 + $0xf0] sm:$0xf]
      %v236 = vld [vmem:[%s166 + $0xf4] sm:$0xf]
      %v237 = vld [vmem:[%s166 + $0xf8] sm:$0xf]
      %v238 = vld [vmem:[%s166 + $0xfc] sm:$0xf]
      %v239 = vld [vmem:[%s166 + $0x100] sm:$0xf]
      %v240 = vld [vmem:[%s166 + $0x104] sm:$0xf]
      %v241 = vld [vmem:[%s166 + $0x108] sm:$0xf]
      %v242 = vld [vmem:[%s166 + $0x10c] sm:$0xf]
      %v243 = vld [vmem:[%s166 + $0x110] sm:$0xf]
      %v244 = vld [vmem:[%s166 + $0x114] sm:$0xf]
      %v245 = vld [vmem:[%s166 + $0x118] sm:$0xf]
      %v246 = vld [vmem:[%s166 + $0x11c] sm:$0xf]
      %v247 = vld [vmem:[%s166 + $0x120] sm:$0xf]
      %v248 = vld [vmem:[%s166 + $0x124] sm:$0xf]
      %v249 = vld [vmem:[%s166 + $0x128] sm:$0xf]
      %v250 = vld [vmem:[%s166 + $0x12c] sm:$0xf]
      %v251 = vld [vmem:[%s166 + $0x130] sm:$0xf]
      %v252 = vld [vmem:[%s166 + $0x134] sm:$0xf]
      %v253 = vld [vmem:[%s166 + $0x138] sm:$0xf]
      %v254 = vld [vmem:[%s166 + $0x13c] sm:$0xf]
      %v255 = vld [vmem:[%s166 + $0x140] sm:$0xf]
      %v256 = vld [vmem:[%s166 + $0x144] sm:$0xf]
      %v257 = vld [vmem:[%s166 + $0x148] sm:$0xf]
      %v258 = vld [vmem:[%s166 + $0x14c] sm:$0xf]
      %v259 = vld [vmem:[%s166 + $0x150] sm:$0xf]
      %v260 = vld [vmem:[%s166 + $0x154] sm:$0xf]
      %v261 = vld [vmem:[%s166 + $0x158] sm:$0xf]
      %v262 = vld [vmem:[%s166 + $0x15c] sm:$0xf]
      %v263 = vld [vmem:[%s166 + $0x160] sm:$0xf]
      %v264 = vld [vmem:[%s166 + $0x164] sm:$0xf]
      %v265 = vld [vmem:[%s166 + $0x168] sm:$0xf]
      %v266 = vld [vmem:[%s166 + $0x16c] sm:$0xf]
      %v267 = vld [vmem:[%s166 + $0x170] sm:$0xf]
      %v268 = vld [vmem:[%s166 + $0x174] sm:$0xf]
      %v269 = vld [vmem:[%s166 + $0x178] sm:$0xf]
      %v270 = vld [vmem:[%s166 + $0x17c] sm:$0xf]
      %v271 = vld [vmem:[%s166 + $0x180] sm:$0xf]
      %v272 = vld [vmem:[%s166 + $0x184] sm:$0xf]
      %v273 = vld [vmem:[%s166 + $0x188] sm:$0xf]
      %v274 = vld [vmem:[%s166 + $0x18c] sm:$0xf]
      %v275 = vld [vmem:[%s166 + $0x190] sm:$0xf]
      %v276 = vld [vmem:[%s166 + $0x194] sm:$0xf]
      %v277 = vld [vmem:[%s166 + $0x198] sm:$0xf]
      %v278 = vld [vmem:[%s166 + $0x19c] sm:$0xf]
      %v279 = vld [vmem:[%s166 + $0x1a0] sm:$0xf]
      %v280 = vld [vmem:[%s166 + $0x1a4] sm:$0xf]
      %v281 = vld [vmem:[%s166 + $0x1a8] sm:$0xf]
      %v282 = vld [vmem:[%s166 + $0x1ac] sm:$0xf]
      %v283 = vld [vmem:[%s166 + $0x1b0] sm:$0xf]
      %v284 = vld [vmem:[%s166 + $0x1b4] sm:$0xf]
      %v285 = vld [vmem:[%s166 + $0x1b8] sm:$0xf]
      %v286 = vld [vmem:[%s166 + $0x1bc] sm:$0xf]
      %v287 = vld [vmem:[%s166 + $0x1c0] sm:$0xf]
      %v288 = vld [vmem:[%s166 + $0x1c4] sm:$0xf]
      %v289 = vld [vmem:[%s166 + $0x1c8] sm:$0xf]
      %v290 = vld [vmem:[%s166 + $0x1cc] sm:$0xf]
      %v291 = vld [vmem:[%s166 + $0x1d0] sm:$0xf]
      %v292 = vld [vmem:[%s166 + $0x1d4] sm:$0xf]
      %v293 = vld [vmem:[%s166 + $0x1d8] sm:$0xf]
      %v294 = vld [vmem:[%s166 + $0x1dc] sm:$0xf]
      %v295 = vld [vmem:[%s166 + $0x1e0] sm:$0xf]
      %v296 = vld [vmem:[%s166 + $0x1e4] sm:$0xf]
      %v297 = vld [vmem:[%s166 + $0x1e8] sm:$0xf]
      %v298 = vld [vmem:[%s166 + $0x1ec] sm:$0xf]
      %v299 = vld [vmem:[%s166 + $0x1f0] sm:$0xf]
      %v300 = vld [vmem:[%s166 + $0x1f4] sm:$0xf]
      %v301 = vld [vmem:[%s166 + $0x1f8] sm:$0xf]
      %v302 = vld [vmem:[%s166 + $0x1fc] sm:$0xf]
      %v303 = vld [vmem:[%s1] sm:$0xf]
      %v304 = vld [vmem:[%s1 + $0x4] sm:$0xf]
      %v305 = vld [vmem:[%s1 + $0x8] sm:$0xf]
      %v306 = vld [vmem:[%s1 + $0xc] sm:$0xf]
      %v307 = vld [vmem:[%s2] sm:$0x1]
      %v309 = vperm.slane %v307, 0
      %v439 = vunpack.c.l.b16 %v175
      %v440 = vunpack.c.l.b16 %v176
      %v441 = vunpack.c.l.b16 %v177
      %v442 = vunpack.c.l.b16 %v178
      %v443 = vunpack.c.l.b16 %v179
      %v444 = vunpack.c.l.b16 %v180
      %v445 = vunpack.c.l.b16 %v181
      %v446 = vunpack.c.l.b16 %v182
      %v447 = vunpack.c.l.b16 %v183
      %v448 = vunpack.c.l.b16 %v184
      %v449 = vunpack.c.l.b16 %v185
      %v450 = vunpack.c.l.b16 %v186
      %v451 = vunpack.c.l.b16 %v187
      %v452 = vunpack.c.l.b16 %v188
      %v453 = vunpack.c.l.b16 %v189
      %v454 = vunpack.c.l.b16 %v190
      %v455 = vunpack.c.l.b16 %v191
      %v456 = vunpack.c.l.b16 %v192
      %v457 = vunpack.c.l.b16 %v193
      %v458 = vunpack.c.l.b16 %v194
      %v459 = vunpack.c.l.b16 %v195
      %v460 = vunpack.c.l.b16 %v196
      %v461 = vunpack.c.l.b16 %v197
      %v462 = vunpack.c.l.b16 %v198
      %v463 = vunpack.c.l.b16 %v199
      %v464 = vunpack.c.l.b16 %v200
      %v465 = vunpack.c.l.b16 %v201
      %v466 = vunpack.c.l.b16 %v202
      %v467 = vunpack.c.l.b16 %v203
      %v468 = vunpack.c.l.b16 %v204
      %v469 = vunpack.c.l.b16 %v205
      %v470 = vunpack.c.l.b16 %v206
      %v471 = vunpack.c.l.b16 %v207
      %v472 = vunpack.c.l.b16 %v208
      %v473 = vunpack.c.l.b16 %v209
      %v474 = vunpack.c.l.b16 %v210
      %v475 = vunpack.c.l.b16 %v211
      %v476 = vunpack.c.l.b16 %v212
      %v477 = vunpack.c.l.b16 %v213
      %v478 = vunpack.c.l.b16 %v214
      %v479 = vunpack.c.l.b16 %v215
      %v480 = vunpack.c.l.b16 %v216
      %v481 = vunpack.c.l.b16 %v217
      %v482 = vunpack.c.l.b16 %v218
      %v483 = vunpack.c.l.b16 %v219
      %v484 = vunpack.c.l.b16 %v220
      %v485 = vunpack.c.l.b16 %v221
      %v486 = vunpack.c.l.b16 %v222
      %v487 = vunpack.c.l.b16 %v223
      %v488 = vunpack.c.l.b16 %v224
      %v489 = vunpack.c.l.b16 %v225
      %v490 = vunpack.c.l.b16 %v226
      %v491 = vunpack.c.l.b16 %v227
      %v492 = vunpack.c.l.b16 %v228
      %v493 = vunpack.c.l.b16 %v229
      %v494 = vunpack.c.l.b16 %v230
      %v495 = vunpack.c.l.b16 %v231
      %v496 = vunpack.c.l.b16 %v232
      %v497 = vunpack.c.l.b16 %v233
      %v498 = vunpack.c.l.b16 %v234
      %v499 = vunpack.c.l.b16 %v235
      %v500 = vunpack.c.l.b16 %v236
      %v501 = vunpack.c.l.b16 %v237
      %v502 = vunpack.c.l.b16 %v238
      %v503 = vunpack.c.l.b16 %v239
      %v504 = vunpack.c.l.b16 %v240
      %v505 = vunpack.c.l.b16 %v241
      %v506 = vunpack.c.l.b16 %v242
      %v507 = vunpack.c.l.b16 %v243
      %v508 = vunpack.c.l.b16 %v244
      %v509 = vunpack.c.l.b16 %v245
      %v510 = vunpack.c.l.b16 %v246
      %v511 = vunpack.c.l.b16 %v247
      %v512 = vunpack.c.l.b16 %v248
      %v513 = vunpack.c.l.b16 %v249
      %v514 = vunpack.c.l.b16 %v250
      %v515 = vunpack.c.l.b16 %v251
      %v516 = vunpack.c.l.b16 %v252
      %v517 = vunpack.c.l.b16 %v253
      %v518 = vunpack.c.l.b16 %v254
      %v519 = vunpack.c.l.b16 %v255
      %v520 = vunpack.c.l.b16 %v256
      %v521 = vunpack.c.l.b16 %v257
      %v522 = vunpack.c.l.b16 %v258
      %v523 = vunpack.c.l.b16 %v259
      %v524 = vunpack.c.l.b16 %v260
      %v525 = vunpack.c.l.b16 %v261
      %v526 = vunpack.c.l.b16 %v262
      %v527 = vunpack.c.l.b16 %v263
      %v528 = vunpack.c.l.b16 %v264
      %v529 = vunpack.c.l.b16 %v265
      %v530 = vunpack.c.l.b16 %v266
      %v531 = vunpack.c.l.b16 %v267
      %v532 = vunpack.c.l.b16 %v268
      %v533 = vunpack.c.l.b16 %v269
      %v534 = vunpack.c.l.b16 %v270
      %v535 = vunpack.c.l.b16 %v271
      %v536 = vunpack.c.l.b16 %v272
      %v537 = vunpack.c.l.b16 %v273
      %v538 = vunpack.c.l.b16 %v274
      %v539 = vunpack.c.l.b16 %v275
      %v540 = vunpack.c.l.b16 %v276
      %v541 = vunpack.c.l.b16 %v277
      %v542 = vunpack.c.l.b16 %v278
      %v543 = vunpack.c.l.b16 %v279
      %v544 = vunpack.c.l.b16 %v280
      %v545 = vunpack.c.l.b16 %v281
      %v546 = vunpack.c.l.b16 %v282
      %v547 = vunpack.c.l.b16 %v283
      %v548 = vunpack.c.l.b16 %v284
      %v549 = vunpack.c.l.b16 %v285
      %v550 = vunpack.c.l.b16 %v286
      %v551 = vunpack.c.l.b16 %v287
      %v552 = vunpack.c.l.b16 %v288
      %v553 = vunpack.c.l.b16 %v289
      %v554 = vunpack.c.l.b16 %v290
      %v555 = vunpack.c.l.b16 %v291
      %v556 = vunpack.c.l.b16 %v292
      %v557 = vunpack.c.l.b16 %v293
      %v558 = vunpack.c.l.b16 %v294
      %v559 = vunpack.c.l.b16 %v295
      %v560 = vunpack.c.l.b16 %v296
      %v561 = vunpack.c.l.b16 %v297
      %v562 = vunpack.c.l.b16 %v298
      %v563 = vunpack.c.l.b16 %v299
      %v564 = vunpack.c.l.b16 %v300
      %v565 = vunpack.c.l.b16 %v301
      %v566 = vunpack.c.l.b16 %v302
      %v567 = vpack.c.b16 %v440, %v439
      %v568 = vpack.c.b16 %v442, %v441
      %v569 = vpack.c.b16 %v444, %v443
      %v570 = vpack.c.b16 %v446, %v445
      %v571 = vpack.c.b16 %v448, %v447
      %v572 = vpack.c.b16 %v450, %v449
      %v573 = vpack.c.b16 %v452, %v451
      %v574 = vpack.c.b16 %v454, %v453
      %v575 = vpack.c.b16 %v456, %v455
      %v576 = vpack.c.b16 %v458, %v457
      %v577 = vpack.c.b16 %v460, %v459
      %v578 = vpack.c.b16 %v462, %v461
      %v579 = vpack.c.b16 %v464, %v463
      %v580 = vpack.c.b16 %v466, %v465
      %v581 = vpack.c.b16 %v468, %v467
      %v582 = vpack.c.b16 %v470, %v469
      %v583 = vpack.c.b16 %v472, %v471
      %v584 = vpack.c.b16 %v474, %v473
      %v585 = vpack.c.b16 %v476, %v475
      %v586 = vpack.c.b16 %v478, %v477
      %v587 = vpack.c.b16 %v480, %v479
      %v588 = vpack.c.b16 %v482, %v481
      %v589 = vpack.c.b16 %v484, %v483
      %v590 = vpack.c.b16 %v486, %v485
      %v591 = vpack.c.b16 %v488, %v487
      %v592 = vpack.c.b16 %v490, %v489
      %v593 = vpack.c.b16 %v492, %v491
      %v594 = vpack.c.b16 %v494, %v493
      %v595 = vpack.c.b16 %v496, %v495
      %v596 = vpack.c.b16 %v498, %v497
      %v597 = vpack.c.b16 %v500, %v499
      %v598 = vpack.c.b16 %v502, %v501
      %v599 = vpack.c.b16 %v504, %v503
      %v600 = vpack.c.b16 %v506, %v505
      %v601 = vpack.c.b16 %v508, %v507
      %v602 = vpack.c.b16 %v510, %v509
      %v603 = vpack.c.b16 %v512, %v511
      %v604 = vpack.c.b16 %v514, %v513
      %v605 = vpack.c.b16 %v516, %v515
      %v606 = vpack.c.b16 %v518, %v517
      %v607 = vpack.c.b16 %v520, %v519
      %v608 = vpack.c.b16 %v522, %v521
      %v609 = vpack.c.b16 %v524, %v523
      %v610 = vpack.c.b16 %v526, %v525
      %v611 = vpack.c.b16 %v528, %v527
      %v612 = vpack.c.b16 %v530, %v529
      %v613 = vpack.c.b16 %v532, %v531
      %v614 = vpack.c.b16 %v534, %v533
      %v615 = vpack.c.b16 %v536, %v535
      %v616 = vpack.c.b16 %v538, %v537
      %v617 = vpack.c.b16 %v540, %v539
      %v618 = vpack.c.b16 %v542, %v541
      %v619 = vpack.c.b16 %v544, %v543
      %v620 = vpack.c.b16 %v546, %v545
      %v621 = vpack.c.b16 %v548, %v547
      %v622 = vpack.c.b16 %v550, %v549
      %v623 = vpack.c.b16 %v552, %v551
      %v624 = vpack.c.b16 %v554, %v553
      %v625 = vpack.c.b16 %v556, %v555
      %v626 = vpack.c.b16 %v558, %v557
      %v627 = vpack.c.b16 %v560, %v559
      %v628 = vpack.c.b16 %v562, %v561
      %v629 = vpack.c.b16 %v564, %v563
      %v630 = vpack.c.b16 %v566, %v565
      %v635 = vunpack.c.l.b16 %v303
      %v636 = vunpack.c.l.b16 %v304
      %v637 = vunpack.c.l.b16 %v305
      %v638 = vunpack.c.l.b16 %v306
      %v639 = vpack.c.b16 %v636, %v635
      %v640 = vpack.c.b16 %v638, %v637
      %vm643 = vcmask 261120
      %v645 = vsel %vm643, %v567, 0
      %v648 = vsel %vm643, %v568, 0
      %v651 = vsel %vm643, %v569, 0
      %v654 = vsel %vm643, %v570, 0
      %v657 = vsel %vm643, %v571, 0
      %v660 = vsel %vm643, %v572, 0
      %v663 = vsel %vm643, %v573, 0
      %v666 = vsel %vm643, %v574, 0
      %v669 = vsel %vm643, %v575, 0
      %v672 = vsel %vm643, %v576, 0
      %v675 = vsel %vm643, %v577, 0
      %v678 = vsel %vm643, %v578, 0
      %v681 = vsel %vm643, %v579, 0
      %v684 = vsel %vm643, %v580, 0
      %v687 = vsel %vm643, %v581, 0
      %v690 = vsel %vm643, %v582, 0
      %v693 = vsel %vm643, %v583, 0
      %v696 = vsel %vm643, %v584, 0
      %v699 = vsel %vm643, %v585, 0
      %v702 = vsel %vm643, %v586, 0
      %v705 = vsel %vm643, %v587, 0
      %v708 = vsel %vm643, %v588, 0
      %v711 = vsel %vm643, %v589, 0
      %v714 = vsel %vm643, %v590, 0
      %v717 = vsel %vm643, %v591, 0
      %v720 = vsel %vm643, %v592, 0
      %v723 = vsel %vm643, %v593, 0
      %v726 = vsel %vm643, %v594, 0
      %v729 = vsel %vm643, %v595, 0
      %v732 = vsel %vm643, %v596, 0
      %v735 = vsel %vm643, %v597, 0
      %v738 = vsel %vm643, %v598, 0
      %v741 = vsel %vm643, %v599, 0
      %v744 = vsel %vm643, %v600, 0
      %v747 = vsel %vm643, %v601, 0
      %v750 = vsel %vm643, %v602, 0
      %v753 = vsel %vm643, %v603, 0
      %v756 = vsel %vm643, %v604, 0
      %v759 = vsel %vm643, %v605, 0
      %v762 = vsel %vm643, %v606, 0
      %v765 = vsel %vm643, %v607, 0
      %v768 = vsel %vm643, %v608, 0
      %v771 = vsel %vm643, %v609, 0
      %v774 = vsel %vm643, %v610, 0
      %v777 = vsel %vm643, %v611, 0
      %v780 = vsel %vm643, %v612, 0
      %v783 = vsel %vm643, %v613, 0
      %v786 = vsel %vm643, %v614, 0
      %v789 = vsel %vm643, %v615, 0
      %v792 = vsel %vm643, %v616, 0
      %v795 = vsel %vm643, %v617, 0
      %v798 = vsel %vm643, %v618, 0
      %v801 = vsel %vm643, %v619, 0
      %v804 = vsel %vm643, %v620, 0
      %v807 = vsel %vm643, %v621, 0
      %v810 = vsel %vm643, %v622, 0
      %v813 = vsel %vm643, %v623, 0
      %v816 = vsel %vm643, %v624, 0
      %v819 = vsel %vm643, %v625, 0
      %v822 = vsel %vm643, %v626, 0
      %v825 = vsel %vm643, %v627, 0
      %v828 = vsel %vm643, %v628, 0
      %v831 = vsel %vm643, %v629, 0
      %v834 = vsel %vm643, %v630, 0
      %836 = vmatpush.bf16.msra.mxu0 0
      %837 = vmatpush.bf16.msra.mxu0 0
      %838 = vmatpush.bf16.msra.mxu0 0
      %839 = vmatpush.bf16.msra.mxu0 0
      %840 = vmatpush.bf16.msra.mxu0 0
      %841 = vmatpush.bf16.msra.mxu0 0
      %842 = vmatpush.bf16.msra.mxu0 %v640
      %843 = vmatpush.bf16.msra.mxu0 %v639
      %844 = vmatmul.bf16.gmra.mxu0 %v645
      %v845 = vpop.f32.mrf.mxu0
      %v846 = vadd.f32 %v309, %v845
      %v847 = vpop.f32.mrf.mxu0
      %v848 = vadd.f32 %v309, %v847
      %849 = vmatmul.bf16.gmra.mxu0 %v648
      %v850 = vpop.f32.mrf.mxu0
      %v851 = vadd.f32 %v309, %v850
      %v852 = vpop.f32.mrf.mxu0
      %v853 = vadd.f32 %v309, %v852
      %854 = vmatmul.bf16.gmra.mxu0 %v651
      %v855 = vpop.f32.mrf.mxu0
      %v856 = vadd.f32 %v309, %v855
      %v857 = vpop.f32.mrf.mxu0
      %v858 = vadd.f32 %v309, %v857
      %859 = vmatmul.bf16.gmra.mxu0 %v654
      %v860 = vpop.f32.mrf.mxu0
      %v861 = vadd.f32 %v309, %v860
      %v862 = vpop.f32.mrf.mxu0
      %v863 = vadd.f32 %v309, %v862
      %864 = vmatmul.bf16.gmra.mxu0 %v657
      %v865 = vpop.f32.mrf.mxu0
      %v866 = vadd.f32 %v309, %v865
      %v867 = vpop.f32.mrf.mxu0
      %v868 = vadd.f32 %v309, %v867
      %869 = vmatmul.bf16.gmra.mxu0 %v660
      %v870 = vpop.f32.mrf.mxu0
      %v871 = vadd.f32 %v309, %v870
      %v872 = vpop.f32.mrf.mxu0
      %v873 = vadd.f32 %v309, %v872
      %874 = vmatmul.bf16.gmra.mxu0 %v663
      %v875 = vpop.f32.mrf.mxu0
      %v876 = vadd.f32 %v309, %v875
      %v877 = vpop.f32.mrf.mxu0
      %v878 = vadd.f32 %v309, %v877
      %879 = vmatmul.bf16.gmra.mxu0 %v666
      %v880 = vpop.f32.mrf.mxu0
      %v881 = vadd.f32 %v309, %v880
      %v882 = vpop.f32.mrf.mxu0
      %v883 = vadd.f32 %v309, %v882
      %884 = vmatmul.bf16.gmra.mxu0 %v669
      %v885 = vpop.f32.mrf.mxu0
      %v886 = vadd.f32 %v309, %v885
      %v887 = vpop.f32.mrf.mxu0
      %v888 = vadd.f32 %v309, %v887
      %889 = vmatmul.bf16.gmra.mxu0 %v672
      %v890 = vpop.f32.mrf.mxu0
      %v891 = vadd.f32 %v309, %v890
      %v892 = vpop.f32.mrf.mxu0
      %v893 = vadd.f32 %v309, %v892
      %894 = vmatmul.bf16.gmra.mxu0 %v675
      %v895 = vpop.f32.mrf.mxu0
      %v896 = vadd.f32 %v309, %v895
      %v897 = vpop.f32.mrf.mxu0
      %v898 = vadd.f32 %v309, %v897
      %899 = vmatmul.bf16.gmra.mxu0 %v678
      %v900 = vpop.f32.mrf.mxu0
      %v901 = vadd.f32 %v309, %v900
      %v902 = vpop.f32.mrf.mxu0
      %v903 = vadd.f32 %v309, %v902
      %904 = vmatmul.bf16.gmra.mxu0 %v681
      %v905 = vpop.f32.mrf.mxu0
      %v906 = vadd.f32 %v309, %v905
      %v907 = vpop.f32.mrf.mxu0
      %v908 = vadd.f32 %v309, %v907
      %909 = vmatmul.bf16.gmra.mxu0 %v684
      %v910 = vpop.f32.mrf.mxu0
      %v911 = vadd.f32 %v309, %v910
      %v912 = vpop.f32.mrf.mxu0
      %v913 = vadd.f32 %v309, %v912
      %914 = vmatmul.bf16.gmra.mxu0 %v687
      %v915 = vpop.f32.mrf.mxu0
      %v916 = vadd.f32 %v309, %v915
      %v917 = vpop.f32.mrf.mxu0
      %v918 = vadd.f32 %v309, %v917
      %919 = vmatmul.bf16.gmra.mxu0 %v690
      %v920 = vpop.f32.mrf.mxu0
      %v921 = vadd.f32 %v309, %v920
      %v922 = vpop.f32.mrf.mxu0
      %v923 = vadd.f32 %v309, %v922
      %924 = vmatmul.bf16.gmra.mxu0 %v693
      %v925 = vpop.f32.mrf.mxu0
      %v926 = vadd.f32 %v309, %v925
      %v927 = vpop.f32.mrf.mxu0
      %v928 = vadd.f32 %v309, %v927
      %929 = vmatmul.bf16.gmra.mxu0 %v696
      %v930 = vpop.f32.mrf.mxu0
      %v931 = vadd.f32 %v309, %v930
      %v932 = vpop.f32.mrf.mxu0
      %v933 = vadd.f32 %v309, %v932
      %934 = vmatmul.bf16.gmra.mxu0 %v699
      %v935 = vpop.f32.mrf.mxu0
      %v936 = vadd.f32 %v309, %v935
      %v937 = vpop.f32.mrf.mxu0
      %v938 = vadd.f32 %v309, %v937
      %939 = vmatmul.bf16.gmra.mxu0 %v702
      %v940 = vpop.f32.mrf.mxu0
      %v941 = vadd.f32 %v309, %v940
      %v942 = vpop.f32.mrf.mxu0
      %v943 = vadd.f32 %v309, %v942
      %944 = vmatmul.bf16.gmra.mxu0 %v705
      %v945 = vpop.f32.mrf.mxu0
      %v946 = vadd.f32 %v309, %v945
      %v947 = vpop.f32.mrf.mxu0
      %v948 = vadd.f32 %v309, %v947
      %949 = vmatmul.bf16.gmra.mxu0 %v708
      %v950 = vpop.f32.mrf.mxu0
      %v951 = vadd.f32 %v309, %v950
      %v952 = vpop.f32.mrf.mxu0
      %v953 = vadd.f32 %v309, %v952
      %954 = vmatmul.bf16.gmra.mxu0 %v711
      %v955 = vpop.f32.mrf.mxu0
      %v956 = vadd.f32 %v309, %v955
      %v957 = vpop.f32.mrf.mxu0
      %v958 = vadd.f32 %v309, %v957
      %959 = vmatmul.bf16.gmra.mxu0 %v714
      %v960 = vpop.f32.mrf.mxu0
      %v961 = vadd.f32 %v309, %v960
      %v962 = vpop.f32.mrf.mxu0
      %v963 = vadd.f32 %v309, %v962
      %964 = vmatmul.bf16.gmra.mxu0 %v717
      %v965 = vpop.f32.mrf.mxu0
      %v966 = vadd.f32 %v309, %v965
      %v967 = vpop.f32.mrf.mxu0
      %v968 = vadd.f32 %v309, %v967
      %969 = vmatmul.bf16.gmra.mxu0 %v720
      %v970 = vpop.f32.mrf.mxu0
      %v971 = vadd.f32 %v309, %v970
      %v972 = vpop.f32.mrf.mxu0
      %v973 = vadd.f32 %v309, %v972
      %974 = vmatmul.bf16.gmra.mxu0 %v723
      %v975 = vpop.f32.mrf.mxu0
      %v976 = vadd.f32 %v309, %v975
      %v977 = vpop.f32.mrf.mxu0
      %v978 = vadd.f32 %v309, %v977
      %979 = vmatmul.bf16.gmra.mxu0 %v726
      %v980 = vpop.f32.mrf.mxu0
      %v981 = vadd.f32 %v309, %v980
      %v982 = vpop.f32.mrf.mxu0
      %v983 = vadd.f32 %v309, %v982
      %984 = vmatmul.bf16.gmra.mxu0 %v729
      %v985 = vpop.f32.mrf.mxu0
      %v986 = vadd.f32 %v309, %v985
      %v987 = vpop.f32.mrf.mxu0
      %v988 = vadd.f32 %v309, %v987
      %989 = vmatmul.bf16.gmra.mxu0 %v732
      %v990 = vpop.f32.mrf.mxu0
      %v991 = vadd.f32 %v309, %v990
      %v992 = vpop.f32.mrf.mxu0
      %v993 = vadd.f32 %v309, %v992
      %994 = vmatmul.bf16.gmra.mxu0 %v735
      %v995 = vpop.f32.mrf.mxu0
      %v996 = vadd.f32 %v309, %v995
      %v997 = vpop.f32.mrf.mxu0
      %v998 = vadd.f32 %v309, %v997
      %999 = vmatmul.bf16.gmra.mxu0 %v738
      %v1000 = vpop.f32.mrf.mxu0
      %v1001 = vadd.f32 %v309, %v1000
      %v1002 = vpop.f32.mrf.mxu0
      %v1003 = vadd.f32 %v309, %v1002
      %1004 = vmatmul.bf16.gmra.mxu0 %v741
      %v1005 = vpop.f32.mrf.mxu0
      %v1006 = vadd.f32 %v309, %v1005
      %v1007 = vpop.f32.mrf.mxu0
      %v1008 = vadd.f32 %v309, %v1007
      %1009 = vmatmul.bf16.gmra.mxu0 %v744
      %v1010 = vpop.f32.mrf.mxu0
      %v1011 = vadd.f32 %v309, %v1010
      %v1012 = vpop.f32.mrf.mxu0
      %v1013 = vadd.f32 %v309, %v1012
      %1014 = vmatmul.bf16.gmra.mxu0 %v747
      %v1015 = vpop.f32.mrf.mxu0
      %v1016 = vadd.f32 %v309, %v1015
      %v1017 = vpop.f32.mrf.mxu0
      %v1018 = vadd.f32 %v309, %v1017
      %1019 = vmatmul.bf16.gmra.mxu0 %v750
      %v1020 = vpop.f32.mrf.mxu0
      %v1021 = vadd.f32 %v309, %v1020
      %v1022 = vpop.f32.mrf.mxu0
      %v1023 = vadd.f32 %v309, %v1022
      %1024 = vmatmul.bf16.gmra.mxu0 %v753
      %v1025 = vpop.f32.mrf.mxu0
      %v1026 = vadd.f32 %v309, %v1025
      %v1027 = vpop.f32.mrf.mxu0
      %v1028 = vadd.f32 %v309, %v1027
      %1029 = vmatmul.bf16.gmra.mxu0 %v756
      %v1030 = vpop.f32.mrf.mxu0
      %v1031 = vadd.f32 %v309, %v1030
      %v1032 = vpop.f32.mrf.mxu0
      %v1033 = vadd.f32 %v309, %v1032
      %1034 = vmatmul.bf16.gmra.mxu0 %v759
      %v1035 = vpop.f32.mrf.mxu0
      %v1036 = vadd.f32 %v309, %v1035
      %v1037 = vpop.f32.mrf.mxu0
      %v1038 = vadd.f32 %v309, %v1037
      %1039 = vmatmul.bf16.gmra.mxu0 %v762
      %v1040 = vpop.f32.mrf.mxu0
      %v1041 = vadd.f32 %v309, %v1040
      %v1042 = vpop.f32.mrf.mxu0
      %v1043 = vadd.f32 %v309, %v1042
      %1044 = vmatmul.bf16.gmra.mxu0 %v765
      %v1045 = vpop.f32.mrf.mxu0
      %v1046 = vadd.f32 %v309, %v1045
      %v1047 = vpop.f32.mrf.mxu0
      %v1048 = vadd.f32 %v309, %v1047
      %1049 = vmatmul.bf16.gmra.mxu0 %v768
      %v1050 = vpop.f32.mrf.mxu0
      %v1051 = vadd.f32 %v309, %v1050
      %v1052 = vpop.f32.mrf.mxu0
      %v1053 = vadd.f32 %v309, %v1052
      %1054 = vmatmul.bf16.gmra.mxu0 %v771
      %v1055 = vpop.f32.mrf.mxu0
      %v1056 = vadd.f32 %v309, %v1055
      %v1057 = vpop.f32.mrf.mxu0
      %v1058 = vadd.f32 %v309, %v1057
      %1059 = vmatmul.bf16.gmra.mxu0 %v774
      %v1060 = vpop.f32.mrf.mxu0
      %v1061 = vadd.f32 %v309, %v1060
      %v1062 = vpop.f32.mrf.mxu0
      %v1063 = vadd.f32 %v309, %v1062
      %1064 = vmatmul.bf16.gmra.mxu0 %v777
      %v1065 = vpop.f32.mrf.mxu0
      %v1066 = vadd.f32 %v309, %v1065
      %v1067 = vpop.f32.mrf.mxu0
      %v1068 = vadd.f32 %v309, %v1067
      %1069 = vmatmul.bf16.gmra.mxu0 %v780
      %v1070 = vpop.f32.mrf.mxu0
      %v1071 = vadd.f32 %v309, %v1070
      %v1072 = vpop.f32.mrf.mxu0
      %v1073 = vadd.f32 %v309, %v1072
      %1074 = vmatmul.bf16.gmra.mxu0 %v783
      %v1075 = vpop.f32.mrf.mxu0
      %v1076 = vadd.f32 %v309, %v1075
      %v1077 = vpop.f32.mrf.mxu0
      %v1078 = vadd.f32 %v309, %v1077
      %1079 = vmatmul.bf16.gmra.mxu0 %v786
      %v1080 = vpop.f32.mrf.mxu0
      %v1081 = vadd.f32 %v309, %v1080
      %v1082 = vpop.f32.mrf.mxu0
      %v1083 = vadd.f32 %v309, %v1082
      %1084 = vmatmul.bf16.gmra.mxu0 %v789
      %v1085 = vpop.f32.mrf.mxu0
      %v1086 = vadd.f32 %v309, %v1085
      %v1087 = vpop.f32.mrf.mxu0
      %v1088 = vadd.f32 %v309, %v1087
      %1089 = vmatmul.bf16.gmra.mxu0 %v792
      %v1090 = vpop.f32.mrf.mxu0
      %v1091 = vadd.f32 %v309, %v1090
      %v1092 = vpop.f32.mrf.mxu0
      %v1093 = vadd.f32 %v309, %v1092
      %1094 = vmatmul.bf16.gmra.mxu0 %v795
      %v1095 = vpop.f32.mrf.mxu0
      %v1096 = vadd.f32 %v309, %v1095
      %v1097 = vpop.f32.mrf.mxu0
      %v1098 = vadd.f32 %v309, %v1097
      %1099 = vmatmul.bf16.gmra.mxu0 %v798
      %v1100 = vpop.f32.mrf.mxu0
      %v1101 = vadd.f32 %v309, %v1100
      %v1102 = vpop.f32.mrf.mxu0
      %v1103 = vadd.f32 %v309, %v1102
      %1104 = vmatmul.bf16.gmra.mxu0 %v801
      %v1105 = vpop.f32.mrf.mxu0
      %v1106 = vadd.f32 %v309, %v1105
      %v1107 = vpop.f32.mrf.mxu0
      %v1108 = vadd.f32 %v309, %v1107
      %1109 = vmatmul.bf16.gmra.mxu0 %v804
      %v1110 = vpop.f32.mrf.mxu0
      %v1111 = vadd.f32 %v309, %v1110
      %v1112 = vpop.f32.mrf.mxu0
      %v1113 = vadd.f32 %v309, %v1112
      %1114 = vmatmul.bf16.gmra.mxu0 %v807
      %v1115 = vpop.f32.mrf.mxu0
      %v1116 = vadd.f32 %v309, %v1115
      %v1117 = vpop.f32.mrf.mxu0
      %v1118 = vadd.f32 %v309, %v1117
      %1119 = vmatmul.bf16.gmra.mxu0 %v810
      %v1120 = vpop.f32.mrf.mxu0
      %v1121 = vadd.f32 %v309, %v1120
      %v1122 = vpop.f32.mrf.mxu0
      %v1123 = vadd.f32 %v309, %v1122
      %1124 = vmatmul.bf16.gmra.mxu0 %v813
      %v1125 = vpop.f32.mrf.mxu0
      %v1126 = vadd.f32 %v309, %v1125
      %v1127 = vpop.f32.mrf.mxu0
      %v1128 = vadd.f32 %v309, %v1127
      %1129 = vmatmul.bf16.gmra.mxu0 %v816
      %v1130 = vpop.f32.mrf.mxu0
      %v1131 = vadd.f32 %v309, %v1130
      %v1132 = vpop.f32.mrf.mxu0
      %v1133 = vadd.f32 %v309, %v1132
      %1134 = vmatmul.bf16.gmra.mxu0 %v819
      %v1135 = vpop.f32.mrf.mxu0
      %v1136 = vadd.f32 %v309, %v1135
      %v1137 = vpop.f32.mrf.mxu0
      %v1138 = vadd.f32 %v309, %v1137
      %1139 = vmatmul.bf16.gmra.mxu0 %v822
      %v1140 = vpop.f32.mrf.mxu0
      %v1141 = vadd.f32 %v309, %v1140
      %v1142 = vpop.f32.mrf.mxu0
      %v1143 = vadd.f32 %v309, %v1142
      %1144 = vmatmul.bf16.gmra.mxu0 %v825
      %v1145 = vpop.f32.mrf.mxu0
      %v1146 = vadd.f32 %v309, %v1145
      %v1147 = vpop.f32.mrf.mxu0
      %v1148 = vadd.f32 %v309, %v1147
      %1149 = vmatmul.bf16.gmra.mxu0 %v828
      %v1150 = vpop.f32.mrf.mxu0
      %v1151 = vadd.f32 %v309, %v1150
      %v1152 = vpop.f32.mrf.mxu0
      %v1153 = vadd.f32 %v309, %v1152
      %1154 = vmatmul.bf16.gmra.mxu0 %v831
      %v1155 = vpop.f32.mrf.mxu0
      %v1156 = vadd.f32 %v309, %v1155
      %v1157 = vpop.f32.mrf.mxu0
      %v1158 = vadd.f32 %v309, %v1157
      %1159 = vmatmul.bf16.gmra.mxu0 %v834
      %v1160 = vpop.f32.mrf.mxu0
      %v1161 = vadd.f32 %v309, %v1160
      %v1162 = vpop.f32.mrf.mxu0
      %v1163 = vadd.f32 %v309, %v1162
      %1164 = vdwg.mxu0
      %v1165 = vpack.c.bf16 %v846, %v846
      %v1166 = vpack.c.bf16 %v848, %v848
      %v1167 = vpack.c.bf16 %v851, %v851
      %v1168 = vpack.c.bf16 %v853, %v853
      %v1169 = vpack.c.bf16 %v856, %v856
      %v1170 = vpack.c.bf16 %v858, %v858
      %v1171 = vpack.c.bf16 %v861, %v861
      %v1172 = vpack.c.bf16 %v863, %v863
      %v1173 = vpack.c.bf16 %v866, %v866
      %v1174 = vpack.c.bf16 %v868, %v868
      %v1175 = vpack.c.bf16 %v871, %v871
      %v1176 = vpack.c.bf16 %v873, %v873
      %v1177 = vpack.c.bf16 %v876, %v876
      %v1178 = vpack.c.bf16 %v878, %v878
      %v1179 = vpack.c.bf16 %v881, %v881
      %v1180 = vpack.c.bf16 %v883, %v883
      %v1181 = vpack.c.bf16 %v886, %v886
      %v1182 = vpack.c.bf16 %v888, %v888
      %v1183 = vpack.c.bf16 %v891, %v891
      %v1184 = vpack.c.bf16 %v893, %v893
      %v1185 = vpack.c.bf16 %v896, %v896
      %v1186 = vpack.c.bf16 %v898, %v898
      %v1187 = vpack.c.bf16 %v901, %v901
      %v1188 = vpack.c.bf16 %v903, %v903
      %v1189 = vpack.c.bf16 %v906, %v906
      %v1190 = vpack.c.bf16 %v908, %v908
      %v1191 = vpack.c.bf16 %v911, %v911
      %v1192 = vpack.c.bf16 %v913, %v913
      %v1193 = vpack.c.bf16 %v916, %v916
      %v1194 = vpack.c.bf16 %v918, %v918
      %v1195 = vpack.c.bf16 %v921, %v921
      %v1196 = vpack.c.bf16 %v923, %v923
      %v1197 = vpack.c.bf16 %v926, %v926
      %v1198 = vpack.c.bf16 %v928, %v928
      %v1199 = vpack.c.bf16 %v931, %v931
      %v1200 = vpack.c.bf16 %v933, %v933
      %v1201 = vpack.c.bf16 %v936, %v936
      %v1202 = vpack.c.bf16 %v938, %v938
      %v1203 = vpack.c.bf16 %v941, %v941
      %v1204 = vpack.c.bf16 %v943, %v943
      %v1205 = vpack.c.bf16 %v946, %v946
      %v1206 = vpack.c.bf16 %v948, %v948
      %v1207 = vpack.c.bf16 %v951, %v951
      %v1208 = vpack.c.bf16 %v953, %v953
      %v1209 = vpack.c.bf16 %v956, %v956
      %v1210 = vpack.c.bf16 %v958, %v958
      %v1211 = vpack.c.bf16 %v961, %v961
      %v1212 = vpack.c.bf16 %v963, %v963
      %v1213 = vpack.c.bf16 %v966, %v966
      %v1214 = vpack.c.bf16 %v968, %v968
      %v1215 = vpack.c.bf16 %v971, %v971
      %v1216 = vpack.c.bf16 %v973, %v973
      %v1217 = vpack.c.bf16 %v976, %v976
      %v1218 = vpack.c.bf16 %v978, %v978
      %v1219 = vpack.c.bf16 %v981, %v981
      %v1220 = vpack.c.bf16 %v983, %v983
      %v1221 = vpack.c.bf16 %v986, %v986
      %v1222 = vpack.c.bf16 %v988, %v988
      %v1223 = vpack.c.bf16 %v991, %v991
      %v1224 = vpack.c.bf16 %v993, %v993
      %v1225 = vpack.c.bf16 %v996, %v996
      %v1226 = vpack.c.bf16 %v998, %v998
      %v1227 = vpack.c.bf16 %v1001, %v1001
      %v1228 = vpack.c.bf16 %v1003, %v1003
      %v1229 = vpack.c.bf16 %v1006, %v1006
      %v1230 = vpack.c.bf16 %v1008, %v1008
      %v1231 = vpack.c.bf16 %v1011, %v1011
      %v1232 = vpack.c.bf16 %v1013, %v1013
      %v1233 = vpack.c.bf16 %v1016, %v1016
      %v1234 = vpack.c.bf16 %v1018, %v1018
      %v1235 = vpack.c.bf16 %v1021, %v1021
      %v1236 = vpack.c.bf16 %v1023, %v1023
      %v1237 = vpack.c.bf16 %v1026, %v1026
      %v1238 = vpack.c.bf16 %v1028, %v1028
      %v1239 = vpack.c.bf16 %v1031, %v1031
      %v1240 = vpack.c.bf16 %v1033, %v1033
      %v1241 = vpack.c.bf16 %v1036, %v1036
      %v1242 = vpack.c.bf16 %v1038, %v1038
      %v1243 = vpack.c.bf16 %v1041, %v1041
      %v1244 = vpack.c.bf16 %v1043, %v1043
      %v1245 = vpack.c.bf16 %v1046, %v1046
      %v1246 = vpack.c.bf16 %v1048, %v1048
      %v1247 = vpack.c.bf16 %v1051, %v1051
      %v1248 = vpack.c.bf16 %v1053, %v1053
      %v1249 = vpack.c.bf16 %v1056, %v1056
      %v1250 = vpack.c.bf16 %v1058, %v1058
      %v1251 = vpack.c.bf16 %v1061, %v1061
      %v1252 = vpack.c.bf16 %v1063, %v1063
      %v1253 = vpack.c.bf16 %v1066, %v1066
      %v1254 = vpack.c.bf16 %v1068, %v1068
      %v1255 = vpack.c.bf16 %v1071, %v1071
      %v1256 = vpack.c.bf16 %v1073, %v1073
      %v1257 = vpack.c.bf16 %v1076, %v1076
      %v1258 = vpack.c.bf16 %v1078, %v1078
      %v1259 = vpack.c.bf16 %v1081, %v1081
      %v1260 = vpack.c.bf16 %v1083, %v1083
      %v1261 = vpack.c.bf16 %v1086, %v1086
      %v1262 = vpack.c.bf16 %v1088, %v1088
      %v1263 = vpack.c.bf16 %v1091, %v1091
      %v1264 = vpack.c.bf16 %v1093, %v1093
      %v1265 = vpack.c.bf16 %v1096, %v1096
      %v1266 = vpack.c.bf16 %v1098, %v1098
      %v1267 = vpack.c.bf16 %v1101, %v1101
      %v1268 = vpack.c.bf16 %v1103, %v1103
      %v1269 = vpack.c.bf16 %v1106, %v1106
      %v1270 = vpack.c.bf16 %v1108, %v1108
      %v1271 = vpack.c.bf16 %v1111, %v1111
      %v1272 = vpack.c.bf16 %v1113, %v1113
      %v1273 = vpack.c.bf16 %v1116, %v1116
      %v1274 = vpack.c.bf16 %v1118, %v1118
      %v1275 = vpack.c.bf16 %v1121, %v1121
      %v1276 = vpack.c.bf16 %v1123, %v1123
      %v1277 = vpack.c.bf16 %v1126, %v1126
      %v1278 = vpack.c.bf16 %v1128, %v1128
      %v1279 = vpack.c.bf16 %v1131, %v1131
      %v1280 = vpack.c.bf16 %v1133, %v1133
      %v1281 = vpack.c.bf16 %v1136, %v1136
      %v1282 = vpack.c.bf16 %v1138, %v1138
      %v1283 = vpack.c.bf16 %v1141, %v1141
      %v1284 = vpack.c.bf16 %v1143, %v1143
      %v1285 = vpack.c.bf16 %v1146, %v1146
      %v1286 = vpack.c.bf16 %v1148, %v1148
      %v1287 = vpack.c.bf16 %v1151, %v1151
      %v1288 = vpack.c.bf16 %v1153, %v1153
      %v1289 = vpack.c.bf16 %v1156, %v1156
      %v1290 = vpack.c.bf16 %v1158, %v1158
      %v1291 = vpack.c.bf16 %v1161, %v1161
      %v1292 = vpack.c.bf16 %v1163, %v1163
      %vm1293 = vcmask 257024
      %1294 = vst.msk [vmem:[%s172] sm:$0xf] %vm1293, %v1165
      %1295 = vst.msk [vmem:[%s172 + $0x4] sm:$0xf] %vm1293, %v1166
      %1296 = vst.msk [vmem:[%s172 + $0x8] sm:$0xf] %vm1293, %v1167
      %1297 = vst.msk [vmem:[%s172 + $0xc] sm:$0xf] %vm1293, %v1168
      %1298 = vst.msk [vmem:[%s172 + $0x10] sm:$0xf] %vm1293, %v1169
      %1299 = vst.msk [vmem:[%s172 + $0x14] sm:$0xf] %vm1293, %v1170
      %1300 = vst.msk [vmem:[%s172 + $0x18] sm:$0xf] %vm1293, %v1171
      %1301 = vst.msk [vmem:[%s172 + $0x1c] sm:$0xf] %vm1293, %v1172
      %1302 = vst.msk [vmem:[%s172 + $0x20] sm:$0xf] %vm1293, %v1173
      %1303 = vst.msk [vmem:[%s172 + $0x24] sm:$0xf] %vm1293, %v1174
      %1304 = vst.msk [vmem:[%s172 + $0x28] sm:$0xf] %vm1293, %v1175
      %1305 = vst.msk [vmem:[%s172 + $0x2c] sm:$0xf] %vm1293, %v1176
      %1306 = vst.msk [vmem:[%s172 + $0x30] sm:$0xf] %vm1293, %v1177
      %1307 = vst.msk [vmem:[%s172 + $0x34] sm:$0xf] %vm1293, %v1178
      %1308 = vst.msk [vmem:[%s172 + $0x38] sm:$0xf] %vm1293, %v1179
      %1309 = vst.msk [vmem:[%s172 + $0x3c] sm:$0xf] %vm1293, %v1180
      %1310 = vst.msk [vmem:[%s172 + $0x40] sm:$0xf] %vm1293, %v1181
      %1311 = vst.msk [vmem:[%s172 + $0x44] sm:$0xf] %vm1293, %v1182
      %1312 = vst.msk [vmem:[%s172 + $0x48] sm:$0xf] %vm1293, %v1183
      %1313 = vst.msk [vmem:[%s172 + $0x4c] sm:$0xf] %vm1293, %v1184
      %1314 = vst.msk [vmem:[%s172 + $0x50] sm:$0xf] %vm1293, %v1185
      %1315 = vst.msk [vmem:[%s172 + $0x54] sm:$0xf] %vm1293, %v1186
      %1316 = vst.msk [vmem:[%s172 + $0x58] sm:$0xf] %vm1293, %v1187
      %1317 = vst.msk [vmem:[%s172 + $0x5c] sm:$0xf] %vm1293, %v1188
      %1318 = vst.msk [vmem:[%s172 + $0x60] sm:$0xf] %vm1293, %v1189
      %1319 = vst.msk [vmem:[%s172 + $0x64] sm:$0xf] %vm1293, %v1190
      %1320 = vst.msk [vmem:[%s172 + $0x68] sm:$0xf] %vm1293, %v1191
      %1321 = vst.msk [vmem:[%s172 + $0x6c] sm:$0xf] %vm1293, %v1192
      %1322 = vst.msk [vmem:[%s172 + $0x70] sm:$0xf] %vm1293, %v1193
      %1323 = vst.msk [vmem:[%s172 + $0x74] sm:$0xf] %vm1293, %v1194
      %1324 = vst.msk [vmem:[%s172 + $0x78] sm:$0xf] %vm1293, %v1195
      %1325 = vst.msk [vmem:[%s172 + $0x7c] sm:$0xf] %vm1293, %v1196
      %1326 = vst.msk [vmem:[%s172 + $0x80] sm:$0xf] %vm1293, %v1197
      %1327 = vst.msk [vmem:[%s172 + $0x84] sm:$0xf] %vm1293, %v1198
      %1328 = vst.msk [vmem:[%s172 + $0x88] sm:$0xf] %vm1293, %v1199
      %1329 = vst.msk [vmem:[%s172 + $0x8c] sm:$0xf] %vm1293, %v1200
      %1330 = vst.msk [vmem:[%s172 + $0x90] sm:$0xf] %vm1293, %v1201
      %1331 = vst.msk [vmem:[%s172 + $0x94] sm:$0xf] %vm1293, %v1202
      %1332 = vst.msk [vmem:[%s172 + $0x98] sm:$0xf] %vm1293, %v1203
      %1333 = vst.msk [vmem:[%s172 + $0x9c] sm:$0xf] %vm1293, %v1204
      %1334 = vst.msk [vmem:[%s172 + $0xa0] sm:$0xf] %vm1293, %v1205
      %1335 = vst.msk [vmem:[%s172 + $0xa4] sm:$0xf] %vm1293, %v1206
      %1336 = vst.msk [vmem:[%s172 + $0xa8] sm:$0xf] %vm1293, %v1207
      %1337 = vst.msk [vmem:[%s172 + $0xac] sm:$0xf] %vm1293, %v1208
      %1338 = vst.msk [vmem:[%s172 + $0xb0] sm:$0xf] %vm1293, %v1209
      %1339 = vst.msk [vmem:[%s172 + $0xb4] sm:$0xf] %vm1293, %v1210
      %1340 = vst.msk [vmem:[%s172 + $0xb8] sm:$0xf] %vm1293, %v1211
      %1341 = vst.msk [vmem:[%s172 + $0xbc] sm:$0xf] %vm1293, %v1212
      %1342 = vst.msk [vmem:[%s172 + $0xc0] sm:$0xf] %vm1293, %v1213
      %1343 = vst.msk [vmem:[%s172 + $0xc4] sm:$0xf] %vm1293, %v1214
      %1344 = vst.msk [vmem:[%s172 + $0xc8] sm:$0xf] %vm1293, %v1215
      %1345 = vst.msk [vmem:[%s172 + $0xcc] sm:$0xf] %vm1293, %v1216
      %1346 = vst.msk [vmem:[%s172 + $0xd0] sm:$0xf] %vm1293, %v1217
      %1347 = vst.msk [vmem:[%s172 + $0xd4] sm:$0xf] %vm1293, %v1218
      %1348 = vst.msk [vmem:[%s172 + $0xd8] sm:$0xf] %vm1293, %v1219
      %1349 = vst.msk [vmem:[%s172 + $0xdc] sm:$0xf] %vm1293, %v1220
      %1350 = vst.msk [vmem:[%s172 + $0xe0] sm:$0xf] %vm1293, %v1221
      %1351 = vst.msk [vmem:[%s172 + $0xe4] sm:$0xf] %vm1293, %v1222
      %1352 = vst.msk [vmem:[%s172 + $0xe8] sm:$0xf] %vm1293, %v1223
      %1353 = vst.msk [vmem:[%s172 + $0xec] sm:$0xf] %vm1293, %v1224
      %1354 = vst.msk [vmem:[%s172 + $0xf0] sm:$0xf] %vm1293, %v1225
      %1355 = vst.msk [vmem:[%s172 + $0xf4] sm:$0xf] %vm1293, %v1226
      %1356 = vst.msk [vmem:[%s172 + $0xf8] sm:$0xf] %vm1293, %v1227
      %1357 = vst.msk [vmem:[%s172 + $0xfc] sm:$0xf] %vm1293, %v1228
      %1358 = vst.msk [vmem:[%s172 + $0x100] sm:$0xf] %vm1293, %v1229
      %1359 = vst.msk [vmem:[%s172 + $0x104] sm:$0xf] %vm1293, %v1230
      %1360 = vst.msk [vmem:[%s172 + $0x108] sm:$0xf] %vm1293, %v1231
      %1361 = vst.msk [vmem:[%s172 + $0x10c] sm:$0xf] %vm1293, %v1232
      %1362 = vst.msk [vmem:[%s172 + $0x110] sm:$0xf] %vm1293, %v1233
      %1363 = vst.msk [vmem:[%s172 + $0x114] sm:$0xf] %vm1293, %v1234
      %1364 = vst.msk [vmem:[%s172 + $0x118] sm:$0xf] %vm1293, %v1235
      %1365 = vst.msk [vmem:[%s172 + $0x11c] sm:$0xf] %vm1293, %v1236
      %1366 = vst.msk [vmem:[%s172 + $0x120] sm:$0xf] %vm1293, %v1237
      %1367 = vst.msk [vmem:[%s172 + $0x124] sm:$0xf] %vm1293, %v1238
      %1368 = vst.msk [vmem:[%s172 + $0x128] sm:$0xf] %vm1293, %v1239
      %1369 = vst.msk [vmem:[%s172 + $0x12c] sm:$0xf] %vm1293, %v1240
      %1370 = vst.msk [vmem:[%s172 + $0x130] sm:$0xf] %vm1293, %v1241
      %1371 = vst.msk [vmem:[%s172 + $0x134] sm:$0xf] %vm1293, %v1242
      %1372 = vst.msk [vmem:[%s172 + $0x138] sm:$0xf] %vm1293, %v1243
      %1373 = vst.msk [vmem:[%s172 + $0x13c] sm:$0xf] %vm1293, %v1244
      %1374 = vst.msk [vmem:[%s172 + $0x140] sm:$0xf] %vm1293, %v1245
      %1375 = vst.msk [vmem:[%s172 + $0x144] sm:$0xf] %vm1293, %v1246
      %1376 = vst.msk [vmem:[%s172 + $0x148] sm:$0xf] %vm1293, %v1247
      %1377 = vst.msk [vmem:[%s172 + $0x14c] sm:$0xf] %vm1293, %v1248
      %1378 = vst.msk [vmem:[%s172 + $0x150] sm:$0xf] %vm1293, %v1249
      %1379 = vst.msk [vmem:[%s172 + $0x154] sm:$0xf] %vm1293, %v1250
      %1380 = vst.msk [vmem:[%s172 + $0x158] sm:$0xf] %vm1293, %v1251
      %1381 = vst.msk [vmem:[%s172 + $0x15c] sm:$0xf] %vm1293, %v1252
      %1382 = vst.msk [vmem:[%s172 + $0x160] sm:$0xf] %vm1293, %v1253
      %1383 = vst.msk [vmem:[%s172 + $0x164] sm:$0xf] %vm1293, %v1254
      %1384 = vst.msk [vmem:[%s172 + $0x168] sm:$0xf] %vm1293, %v1255
      %1385 = vst.msk [vmem:[%s172 + $0x16c] sm:$0xf] %vm1293, %v1256
      %1386 = vst.msk [vmem:[%s172 + $0x170] sm:$0xf] %vm1293, %v1257
      %1387 = vst.msk [vmem:[%s172 + $0x174] sm:$0xf] %vm1293, %v1258
      %1388 = vst.msk [vmem:[%s172 + $0x178] sm:$0xf] %vm1293, %v1259
      %1389 = vst.msk [vmem:[%s172 + $0x17c] sm:$0xf] %vm1293, %v1260
      %1390 = vst.msk [vmem:[%s172 + $0x180] sm:$0xf] %vm1293, %v1261
      %1391 = vst.msk [vmem:[%s172 + $0x184] sm:$0xf] %vm1293, %v1262
      %1392 = vst.msk [vmem:[%s172 + $0x188] sm:$0xf] %vm1293, %v1263
      %1393 = vst.msk [vmem:[%s172 + $0x18c] sm:$0xf] %vm1293, %v1264
      %1394 = vst.msk [vmem:[%s172 + $0x190] sm:$0xf] %vm1293, %v1265
      %1395 = vst.msk [vmem:[%s172 + $0x194] sm:$0xf] %vm1293, %v1266
      %1396 = vst.msk [vmem:[%s172 + $0x198] sm:$0xf] %vm1293, %v1267
      %1397 = vst.msk [vmem:[%s172 + $0x19c] sm:$0xf] %vm1293, %v1268
      %1398 = vst.msk [vmem:[%s172 + $0x1a0] sm:$0xf] %vm1293, %v1269
      %1399 = vst.msk [vmem:[%s172 + $0x1a4] sm:$0xf] %vm1293, %v1270
      %1400 = vst.msk [vmem:[%s172 + $0x1a8] sm:$0xf] %vm1293, %v1271
      %1401 = vst.msk [vmem:[%s172 + $0x1ac] sm:$0xf] %vm1293, %v1272
      %1402 = vst.msk [vmem:[%s172 + $0x1b0] sm:$0xf] %vm1293, %v1273
      %1403 = vst.msk [vmem:[%s172 + $0x1b4] sm:$0xf] %vm1293, %v1274
      %1404 = vst.msk [vmem:[%s172 + $0x1b8] sm:$0xf] %vm1293, %v1275
      %1405 = vst.msk [vmem:[%s172 + $0x1bc] sm:$0xf] %vm1293, %v1276
      %1406 = vst.msk [vmem:[%s172 + $0x1c0] sm:$0xf] %vm1293, %v1277
      %1407 = vst.msk [vmem:[%s172 + $0x1c4] sm:$0xf] %vm1293, %v1278
      %1408 = vst.msk [vmem:[%s172 + $0x1c8] sm:$0xf] %vm1293, %v1279
      %1409 = vst.msk [vmem:[%s172 + $0x1cc] sm:$0xf] %vm1293, %v1280
      %1410 = vst.msk [vmem:[%s172 + $0x1d0] sm:$0xf] %vm1293, %v1281
      %1411 = vst.msk [vmem:[%s172 + $0x1d4] sm:$0xf] %vm1293, %v1282
      %1412 = vst.msk [vmem:[%s172 + $0x1d8] sm:$0xf] %vm1293, %v1283
      %1413 = vst.msk [vmem:[%s172 + $0x1dc] sm:$0xf] %vm1293, %v1284
      %1414 = vst.msk [vmem:[%s172 + $0x1e0] sm:$0xf] %vm1293, %v1285
      %1415 = vst.msk [vmem:[%s172 + $0x1e4] sm:$0xf] %vm1293, %v1286
      %1416 = vst.msk [vmem:[%s172 + $0x1e8] sm:$0xf] %vm1293, %v1287
      %1417 = vst.msk [vmem:[%s172 + $0x1ec] sm:$0xf] %vm1293, %v1288
      %1418 = vst.msk [vmem:[%s172 + $0x1f0] sm:$0xf] %vm1293, %v1289
      %1419 = vst.msk [vmem:[%s172 + $0x1f4] sm:$0xf] %vm1293, %v1290
      %1420 = vst.msk [vmem:[%s172 + $0x1f8] sm:$0xf] %vm1293, %v1291
      %1421 = vst.msk [vmem:[%s172 + $0x1fc] sm:$0xf] %vm1293, %v1292
      %s1422 = smul.u32 128, %s14
      %p1423 = scmp.lt.s32.totalorder %s1422, 255
      %s1424 = scalar_select %p1423, %s1422, 255
      %s1425 = smul.addr %s1424, 4
      %s1426 = scalar_lea.vmem %s3, %s1425
      // Predicated region
      $region33: #{resnet_forward.8} parent=31 // pred_check
        %p1427 = pneg %p100
      $region34: #{resnet_forward.8} parent=31 // pred_check_branch
        %1429 = sbr.rel (%p1427) target = $region36
      $region35: #{resnet_forward.8} parent=31 // pred_region
        %s1430 = smul.u32 128, %s14
      $region36: #{resnet_forward.8} parent=31 // pred_fallthru
        _
    $region32: #{resnet_forward.8} parent=5 // pred_fallthru
      _
    %p1431 = scmp.le.s32.totalorder 2, %s9
    // Predicated region
    $region37: #{resnet_forward.8} parent=5 // pred_check
      %p1432 = pneg %p1431
    $region38: #{resnet_forward.8} parent=5 // pred_check_branch
      %1434 = sbr.rel (%p1432) target = $region40
    $region39: #{resnet_forward.8} parent=5 // pred_region
      %s1435 = ssub.s32 %s9, 2
      // Predicated region
      $region41: #{resnet_forward.8} parent=39 // pred_check
        %p1436 = pneg %p106
      $region42: #{resnet_forward.8} parent=39 // pred_check_branch
        %1438 = sbr.rel (%p1436) target = $region44
      $region43: #{resnet_forward.8} parent=39 // pred_region
        %s1439 = smul.u32 128, %s15
        %p1440 = scmp.lt.s32.totalorder %s1439, 255
        %s1441 = scalar_select %p1440, %s1439, 255
        %s1442 = smul.addr %s1441, 4
        %s1443 = scalar_lea.vmem %s3, %s1442
      $region44: #{resnet_forward.8} parent=39 // pred_fallthru
        _
    $region40: #{resnet_forward.8} parent=5 // pred_fallthru
      _
  $region6: #{resnet_forward.8} parent=0 // loop_footer
    %s13 = sadd.s32 1, %s9
  $region7: #{resnet_forward.8} parent=0 // loop_footer_branch
    %8 = sbr.rel target = $region3
  $region8: #{resnet_forward.8} parent=0 // loop_exit
    _

// kernel: resnet_forward.9
$region0: #{resnet_forward.9}
  #allocation0 [shape = 'u32[]', space=smem, size = 0x4, offset = 0x4, fixed_abs, tag = 'smem constant byte address 0x4 - core index']
  #allocation1 [shape = 'u32[72,128]{1,0:T(1,128)}', space=vmem, size = 0x9000, scoped, tag = 'internal scratch']
  %s0 = inlined_call_operand.vmem [shape: bf16[512,288], index: 0, kind: input, shape index: {}]
  %s1 = inlined_call_operand.vmem [shape: bf16[288,32], index: 1, kind: input, shape index: {}]
  %s2 = inlined_call_operand.vmem [shape: f32[1,32], index: 2, kind: input, shape index: {}]
  %s3 = inlined_call_operand.vmem [shape: bf16[512,32], index: 3, kind: output, shape index: {}]
  %s4 = sld [smem:[#allocation0]]
  $region22: #{resnet_forward.9} parent=0
    _
  %s6 = ssub.s32 1, %s4
  %s7 = scalar_select 0, %s6, %s4
  // Predicated region
  $region2: #{resnet_forward.9} parent=0 // pred_check
    _
  $region3: #{resnet_forward.9} parent=0 // pred_check_branch
    %9 = sbr.rel (0) target = $region5
  $region4: #{resnet_forward.9} parent=0 // pred_region
    _
  $region5: #{resnet_forward.9} parent=0 // pred_fallthru
    _
  // Predicated region
  $region6: #{resnet_forward.9} parent=0 // pred_check
    _
  $region7: #{resnet_forward.9} parent=0 // pred_check_branch
    %11 = sbr.rel (0) target = $region9
  $region8: #{resnet_forward.9} parent=0 // pred_region
    _
  $region9: #{resnet_forward.9} parent=0 // pred_fallthru
    _
  // Predicated region
  $region10: #{resnet_forward.9} parent=0 // pred_check
    _
  $region11: #{resnet_forward.9} parent=0 // pred_check_branch
    %13 = sbr.rel (0) target = $region13
  $region12: #{resnet_forward.9} parent=0 // pred_region
    _
  $region13: #{resnet_forward.9} parent=0 // pred_fallthru
    _
  %v15 = vld [vmem:[%s0] sm:$0xff]
  %v16 = vld [vmem:[%s0 + $0x8] sm:$0xf]
  %v17 = vld [vmem:[%s0 + $0xc] sm:$0xff]
  %v18 = vld [vmem:[%s0 + $0x14] sm:$0xf]
  %v19 = vld [vmem:[%s0 + $0x18] sm:$0xff]
  %v20 = vld [vmem:[%s0 + $0x20] sm:$0xf]
  %v21 = vld [vmem:[%s0 + $0x24] sm:$0xff]
  %v22 = vld [vmem:[%s0 + $0x2c] sm:$0xf]
  %v23 = vld [vmem:[%s0 + $0x30] sm:$0xff]
  %v24 = vld [vmem:[%s0 + $0x38] sm:$0xf]
  %v25 = vld [vmem:[%s0 + $0x3c] sm:$0xff]
  %v26 = vld [vmem:[%s0 + $0x44] sm:$0xf]
  %v27 = vld [vmem:[%s0 + $0x48] sm:$0xff]
  %v28 = vld [vmem:[%s0 + $0x50] sm:$0xf]
  %v29 = vld [vmem:[%s0 + $0x54] sm:$0xff]
  %v30 = vld [vmem:[%s0 + $0x5c] sm:$0xf]
  %v31 = vld [vmem:[%s0 + $0x60] sm:$0xff]
  %v32 = vld [vmem:[%s0 + $0x68] sm:$0xf]
  %v33 = vld [vmem:[%s0 + $0x6c] sm:$0xff]
  %v34 = vld [vmem:[%s0 + $0x74] sm:$0xf]
  %v35 = vld [vmem:[%s0 + $0x78] sm:$0xff]
  %v36 = vld [vmem:[%s0 + $0x80] sm:$0xf]
  %v37 = vld [vmem:[%s0 + $0x84] sm:$0xff]
  %v38 = vld [vmem:[%s0 + $0x8c] sm:$0xf]
  %v39 = vld [vmem:[%s0 + $0x90] sm:$0xff]
  %v40 = vld [vmem:[%s0 + $0x98] sm:$0xf]
  %v41 = vld [vmem:[%s0 + $0x9c] sm:$0xff]
  %v42 = vld [vmem:[%s0 + $0xa4] sm:$0xf]
  %v43 = vld [vmem:[%s0 + $0xa8] sm:$0xff]
  %v44 = vld [vmem:[%s0 + $0xb0] sm:$0xf]
  %v45 = vld [vmem:[%s0 + $0xb4] sm:$0xff]
  %v46 = vld [vmem:[%s0 + $0xbc] sm:$0xf]
  %v47 = vld [vmem:[%s0 + $0xc0] sm:$0xff]
  %v48 = vld [vmem:[%s0 + $0xc8] sm:$0xf]
  %v49 = vld [vmem:[%s0 + $0xcc] sm:$0xff]
  %v50 = vld [vmem:[%s0 + $0xd4] sm:$0xf]
  %v51 = vld [vmem:[%s0 + $0xd8] sm:$0xff]
  %v52 = vld [vmem:[%s0 + $0xe0] sm:$0xf]
  %v53 = vld [vmem:[%s0 + $0xe4] sm:$0xff]
  %v54 = vld [vmem:[%s0 + $0xec] sm:$0xf]
  %v55 = vld [vmem:[%s0 + $0xf0] sm:$0xff]
  %v56 = vld [vmem:[%s0 + $0xf8] sm:$0xf]
  %v57 = vld [vmem:[%s0 + $0xfc] sm:$0xff]
  %v58 = vld [vmem:[%s0 + $0x104] sm:$0xf]
  %v59 = vld [vmem:[%s0 + $0x108] sm:$0xff]
  %v60 = vld [vmem:[%s0 + $0x110] sm:$0xf]
  %v61 = vld [vmem:[%s0 + $0x114] sm:$0xff]
  %v62 = vld [vmem:[%s0 + $0x11c] sm:$0xf]
  %v63 = vld [vmem:[%s0 + $0x120] sm:$0xff]
  %v64 = vld [vmem:[%s0 + $0x128] sm:$0xf]
  %v65 = vld [vmem:[%s0 + $0x12c] sm:$0xff]
  %v66 = vld [vmem:[%s0 + $0x134] sm:$0xf]
  %v67 = vld [vmem:[%s0 + $0x138] sm:$0xff]
  %v68 = vld [vmem:[%s0 + $0x140] sm:$0xf]
  %v69 = vld [vmem:[%s0 + $0x144] sm:$0xff]
  %v70 = vld [vmem:[%s0 + $0x14c] sm:$0xf]
  %v71 = vld [vmem:[%s0 + $0x150] sm:$0xff]
  %v72 = vld [vmem:[%s0 + $0x158] sm:$0xf]
  %v73 = vld [vmem:[%s0 + $0x15c] sm:$0xff]
  %v74 = vld [vmem:[%s0 + $0x164] sm:$0xf]
  %v75 = vld [vmem:[%s0 + $0x168] sm:$0xff]
  %v76 = vld [vmem:[%s0 + $0x170] sm:$0xf]
  %v77 = vld [vmem:[%s0 + $0x174] sm:$0xff]
  %v78 = vld [vmem:[%s0 + $0x17c] sm:$0xf]
  %v79 = vld [vmem:[%s0 + $0x180] sm:$0xff]
  %v80 = vld [vmem:[%s0 + $0x188] sm:$0xf]
  %v81 = vld [vmem:[%s0 + $0x18c] sm:$0xff]
  %v82 = vld [vmem:[%s0 + $0x194] sm:$0xf]
  %v83 = vld [vmem:[%s0 + $0x198] sm:$0xff]
  %v84 = vld [vmem:[%s0 + $0x1a0] sm:$0xf]
  %v85 = vld [vmem:[%s0 + $0x1a4] sm:$0xff]
  %v86 = vld [vmem:[%s0 + $0x1ac] sm:$0xf]
  %v87 = vld [vmem:[%s0 + $0x1b0] sm:$0xff]
  %v88 = vld [vmem:[%s0 + $0x1b8] sm:$0xf]
  %v89 = vld [vmem:[%s0 + $0x1bc] sm:$0xff]
  %v90 = vld [vmem:[%s0 + $0x1c4] sm:$0xf]
  %v91 = vld [vmem:[%s0 + $0x1c8] sm:$0xff]
  %v92 = vld [vmem:[%s0 + $0x1d0] sm:$0xf]
  %v93 = vld [vmem:[%s0 + $0x1d4] sm:$0xff]
  %v94 = vld [vmem:[%s0 + $0x1dc] sm:$0xf]
  %v95 = vld [vmem:[%s0 + $0x1e0] sm:$0xff]
  %v96 = vld [vmem:[%s0 + $0x1e8] sm:$0xf]
  %v97 = vld [vmem:[%s0 + $0x1ec] sm:$0xff]
  %v98 = vld [vmem:[%s0 + $0x1f4] sm:$0xf]
  %v99 = vld [vmem:[%s0 + $0x1f8] sm:$0xff]
  %v100 = vld [vmem:[%s0 + $0x200] sm:$0xf]
  %v101 = vld [vmem:[%s0 + $0x204] sm:$0xff]
  %v102 = vld [vmem:[%s0 + $0x20c] sm:$0xf]
  %v103 = vld [vmem:[%s0 + $0x210] sm:$0xff]
  %v104 = vld [vmem:[%s0 + $0x218] sm:$0xf]
  %v105 = vld [vmem:[%s0 + $0x21c] sm:$0xff]
  %v106 = vld [vmem:[%s0 + $0x224] sm:$0xf]
  %v107 = vld [vmem:[%s0 + $0x228] sm:$0xff]
  %v108 = vld [vmem:[%s0 + $0x230] sm:$0xf]
  %v109 = vld [vmem:[%s0 + $0x234] sm:$0xff]
  %v110 = vld [vmem:[%s0 + $0x23c] sm:$0xf]
  %v111 = vld [vmem:[%s0 + $0x240] sm:$0xff]
  %v112 = vld [vmem:[%s0 + $0x248] sm:$0xf]
  %v113 = vld [vmem:[%s0 + $0x24c] sm:$0xff]
  %v114 = vld [vmem:[%s0 + $0x254] sm:$0xf]
  %v115 = vld [vmem:[%s0 + $0x258] sm:$0xff]
  %v116 = vld [vmem:[%s0 + $0x260] sm:$0xf]
  %v117 = vld [vmem:[%s0 + $0x264] sm:$0xff]
  %v118 = vld [vmem:[%s0 + $0x26c] sm:$0xf]
  %v119 = vld [vmem:[%s0 + $0x270] sm:$0xff]
  %v120 = vld [vmem:[%s0 + $0x278] sm:$0xf]
  %v121 = vld [vmem:[%s0 + $0x27c] sm:$0xff]
  %v122 = vld [vmem:[%s0 + $0x284] sm:$0xf]
  %v123 = vld [vmem:[%s0 + $0x288] sm:$0xff]
  %v124 = vld [vmem:[%s0 + $0x290] sm:$0xf]
  %v125 = vld [vmem:[%s0 + $0x294] sm:$0xff]
  %v126 = vld [vmem:[%s0 + $0x29c] sm:$0xf]
  %v127 = vld [vmem:[%s0 + $0x2a0] sm:$0xff]
  %v128 = vld [vmem:[%s0 + $0x2a8] sm:$0xf]
  %v129 = vld [vmem:[%s0 + $0x2ac] sm:$0xff]
  %v130 = vld [vmem:[%s0 + $0x2b4] sm:$0xf]
  %v131 = vld [vmem:[%s0 + $0x2b8] sm:$0xff]
  %v132 = vld [vmem:[%s0 + $0x2c0] sm:$0xf]
  %v133 = vld [vmem:[%s0 + $0x2c4] sm:$0xff]
  %v134 = vld [vmem:[%s0 + $0x2cc] sm:$0xf]
  %v135 = vld [vmem:[%s0 + $0x2d0] sm:$0xff]
  %v136 = vld [vmem:[%s0 + $0x2d8] sm:$0xf]
  %v137 = vld [vmem:[%s0 + $0x2dc] sm:$0xff]
  %v138 = vld [vmem:[%s0 + $0x2e4] sm:$0xf]
  %v139 = vld [vmem:[%s0 + $0x2e8] sm:$0xff]
  %v140 = vld [vmem:[%s0 + $0x2f0] sm:$0xf]
  %v141 = vld [vmem:[%s0 + $0x2f4] sm:$0xff]
  %v142 = vld [vmem:[%s0 + $0x2fc] sm:$0xf]
  %v143 = vld [vmem:[%s1] sm:$0xf]
  %v144 = vld [vmem:[%s1 + $0x4] sm:$0xf]
  %v145 = vld [vmem:[%s1 + $0x8] sm:$0xf]
  %v146 = vld [vmem:[%s1 + $0xc] sm:$0xf]
  %v147 = vld [vmem:[%s1 + $0x10] sm:$0xf]
  %v148 = vld [vmem:[%s1 + $0x14] sm:$0xf]
  %v149 = vld [vmem:[%s1 + $0x18] sm:$0xf]
  %v150 = vld [vmem:[%s1 + $0x1c] sm:$0xf]
  %v151 = vld [vmem:[%s1 + $0x20] sm:$0xf]
  %v152 = vld [vmem:[%s1 + $0x24] sm:$0xf]
  %v153 = vld [vmem:[%s1 + $0x28] sm:$0xf]
  %v154 = vld [vmem:[%s1 + $0x2c] sm:$0xf]
  %v155 = vld [vmem:[%s1 + $0x30] sm:$0xf]
  %v156 = vld [vmem:[%s1 + $0x34] sm:$0xf]
  %v157 = vld [vmem:[%s1 + $0x38] sm:$0xf]
  %v158 = vld [vmem:[%s1 + $0x3c] sm:$0xf]
  %v159 = vld [vmem:[%s1 + $0x40] sm:$0xf]
  %v160 = vld [vmem:[%s1 + $0x44] sm:$0xf]
  %v161 = vld [vmem:[%s1 + $0x48] sm:$0xf]
  %v162 = vld [vmem:[%s1 + $0x4c] sm:$0xf]
  %v163 = vld [vmem:[%s1 + $0x50] sm:$0xf]
  %v164 = vld [vmem:[%s1 + $0x54] sm:$0xf]
  %v165 = vld [vmem:[%s1 + $0x58] sm:$0xf]
  %v166 = vld [vmem:[%s1 + $0x5c] sm:$0xf]
  %v167 = vld [vmem:[%s1 + $0x60] sm:$0xf]
  %v168 = vld [vmem:[%s1 + $0x64] sm:$0xf]
  %v169 = vld [vmem:[%s1 + $0x68] sm:$0xf]
  %v170 = vld [vmem:[%s1 + $0x6c] sm:$0xf]
  %v171 = vld [vmem:[%s1 + $0x70] sm:$0xf]
  %v172 = vld [vmem:[%s1 + $0x74] sm:$0xf]
  %v173 = vld [vmem:[%s1 + $0x78] sm:$0xf]
  %v174 = vld [vmem:[%s1 + $0x7c] sm:$0xf]
  %v175 = vld [vmem:[%s1 + $0x80] sm:$0xf]
  %v176 = vld [vmem:[%s1 + $0x84] sm:$0xf]
  %v177 = vld [vmem:[%s1 + $0x88] sm:$0xf]
  %v178 = vld [vmem:[%s1 + $0x8c] sm:$0xf]
  %v179 = vld [vmem:[%s2] sm:$0x1]
  %v181 = vperm.slane %v179, 0
  %v311 = vunpack.c.l.b16 %v15
  %v312 = vunpack.c.h.b16 %v15
  %v313 = vunpack.c.l.b16 %v16
  %v314 = vunpack.c.l.b16 %v17
  %v315 = vunpack.c.h.b16 %v17
  %v316 = vunpack.c.l.b16 %v18
  %v317 = vunpack.c.l.b16 %v19
  %v318 = vunpack.c.h.b16 %v19
  %v319 = vunpack.c.l.b16 %v20
  %v320 = vunpack.c.l.b16 %v21
  %v321 = vunpack.c.h.b16 %v21
  %v322 = vunpack.c.l.b16 %v22
  %v323 = vunpack.c.l.b16 %v23
  %v324 = vunpack.c.h.b16 %v23
  %v325 = vunpack.c.l.b16 %v24
  %v326 = vunpack.c.l.b16 %v25
  %v327 = vunpack.c.h.b16 %v25
  %v328 = vunpack.c.l.b16 %v26
  %v329 = vunpack.c.l.b16 %v27
  %v330 = vunpack.c.h.b16 %v27
  %v331 = vunpack.c.l.b16 %v28
  %v332 = vunpack.c.l.b16 %v29
  %v333 = vunpack.c.h.b16 %v29
  %v334 = vunpack.c.l.b16 %v30
  %v335 = vunpack.c.l.b16 %v31
  %v336 = vunpack.c.h.b16 %v31
  %v337 = vunpack.c.l.b16 %v32
  %v338 = vunpack.c.l.b16 %v33
  %v339 = vunpack.c.h.b16 %v33
  %v340 = vunpack.c.l.b16 %v34
  %v341 = vunpack.c.l.b16 %v35
  %v342 = vunpack.c.h.b16 %v35
  %v343 = vunpack.c.l.b16 %v36
  %v344 = vunpack.c.l.b16 %v37
  %v345 = vunpack.c.h.b16 %v37
  %v346 = vunpack.c.l.b16 %v38
  %v347 = vunpack.c.l.b16 %v39
  %v348 = vunpack.c.h.b16 %v39
  %v349 = vunpack.c.l.b16 %v40
  %v350 = vunpack.c.l.b16 %v41
  %v351 = vunpack.c.h.b16 %v41
  %v352 = vunpack.c.l.b16 %v42
  %v353 = vunpack.c.l.b16 %v43
  %v354 = vunpack.c.h.b16 %v43
  %v355 = vunpack.c.l.b16 %v44
  %v356 = vunpack.c.l.b16 %v45
  %v357 = vunpack.c.h.b16 %v45
  %v358 = vunpack.c.l.b16 %v46
  %v359 = vunpack.c.l.b16 %v47
  %v360 = vunpack.c.h.b16 %v47
  %v361 = vunpack.c.l.b16 %v48
  %v362 = vunpack.c.l.b16 %v49
  %v363 = vunpack.c.h.b16 %v49
  %v364 = vunpack.c.l.b16 %v50
  %v365 = vunpack.c.l.b16 %v51
  %v366 = vunpack.c.h.b16 %v51
  %v367 = vunpack.c.l.b16 %v52
  %v368 = vunpack.c.l.b16 %v53
  %v369 = vunpack.c.h.b16 %v53
  %v370 = vunpack.c.l.b16 %v54
  %v371 = vunpack.c.l.b16 %v55
  %v372 = vunpack.c.h.b16 %v55
  %v373 = vunpack.c.l.b16 %v56
  %v374 = vunpack.c.l.b16 %v57
  %v375 = vunpack.c.h.b16 %v57
  %v376 = vunpack.c.l.b16 %v58
  %v377 = vunpack.c.l.b16 %v59
  %v378 = vunpack.c.h.b16 %v59
  %v379 = vunpack.c.l.b16 %v60
  %v380 = vunpack.c.l.b16 %v61
  %v381 = vunpack.c.h.b16 %v61
  %v382 = vunpack.c.l.b16 %v62
  %v383 = vunpack.c.l.b16 %v63
  %v384 = vunpack.c.h.b16 %v63
  %v385 = vunpack.c.l.b16 %v64
  %v386 = vunpack.c.l.b16 %v65
  %v387 = vunpack.c.h.b16 %v65
  %v388 = vunpack.c.l.b16 %v66
  %v389 = vunpack.c.l.b16 %v67
  %v390 = vunpack.c.h.b16 %v67
  %v391 = vunpack.c.l.b16 %v68
  %v392 = vunpack.c.l.b16 %v69
  %v393 = vunpack.c.h.b16 %v69
  %v394 = vunpack.c.l.b16 %v70
  %v395 = vunpack.c.l.b16 %v71
  %v396 = vunpack.c.h.b16 %v71
  %v397 = vunpack.c.l.b16 %v72
  %v398 = vunpack.c.l.b16 %v73
  %v399 = vunpack.c.h.b16 %v73
  %v400 = vunpack.c.l.b16 %v74
  %v401 = vunpack.c.l.b16 %v75
  %v402 = vunpack.c.h.b16 %v75
  %v403 = vunpack.c.l.b16 %v76
  %v404 = vunpack.c.l.b16 %v77
  %v405 = vunpack.c.h.b16 %v77
  %v406 = vunpack.c.l.b16 %v78
  %v407 = vunpack.c.l.b16 %v79
  %v408 = vunpack.c.h.b16 %v79
  %v409 = vunpack.c.l.b16 %v80
  %v410 = vunpack.c.l.b16 %v81
  %v411 = vunpack.c.h.b16 %v81
  %v412 = vunpack.c.l.b16 %v82
  %v413 = vunpack.c.l.b16 %v83
  %v414 = vunpack.c.h.b16 %v83
  %v415 = vunpack.c.l.b16 %v84
  %v416 = vunpack.c.l.b16 %v85
  %v417 = vunpack.c.h.b16 %v85
  %v418 = vunpack.c.l.b16 %v86
  %v419 = vunpack.c.l.b16 %v87
  %v420 = vunpack.c.h.b16 %v87
  %v421 = vunpack.c.l.b16 %v88
  %v422 = vunpack.c.l.b16 %v89
  %v423 = vunpack.c.h.b16 %v89
  %v424 = vunpack.c.l.b16 %v90
  %v425 = vunpack.c.l.b16 %v91
  %v426 = vunpack.c.h.b16 %v91
  %v427 = vunpack.c.l.b16 %v92
  %v428 = vunpack.c.l.b16 %v93
  %v429 = vunpack.c.h.b16 %v93
  %v430 = vunpack.c.l.b16 %v94
  %v431 = vunpack.c.l.b16 %v95
  %v432 = vunpack.c.h.b16 %v95
  %v433 = vunpack.c.l.b16 %v96
  %v434 = vunpack.c.l.b16 %v97
  %v435 = vunpack.c.h.b16 %v97
  %v436 = vunpack.c.l.b16 %v98
  %v437 = vunpack.c.l.b16 %v99
  %v438 = vunpack.c.h.b16 %v99
  %v439 = vunpack.c.l.b16 %v100
  %v440 = vunpack.c.l.b16 %v101
  %v441 = vunpack.c.h.b16 %v101
  %v442 = vunpack.c.l.b16 %v102
  %v443 = vunpack.c.l.b16 %v103
  %v444 = vunpack.c.h.b16 %v103
  %v445 = vunpack.c.l.b16 %v104
  %v446 = vunpack.c.l.b16 %v105
  %v447 = vunpack.c.h.b16 %v105
  %v448 = vunpack.c.l.b16 %v106
  %v449 = vunpack.c.l.b16 %v107
  %v450 = vunpack.c.h.b16 %v107
  %v451 = vunpack.c.l.b16 %v108
  %v452 = vunpack.c.l.b16 %v109
  %v453 = vunpack.c.h.b16 %v109
  %v454 = vunpack.c.l.b16 %v110
  %v455 = vunpack.c.l.b16 %v111
  %v456 = vunpack.c.h.b16 %v111
  %v457 = vunpack.c.l.b16 %v112
  %v458 = vunpack.c.l.b16 %v113
  %v459 = vunpack.c.h.b16 %v113
  %v460 = vunpack.c.l.b16 %v114
  %v461 = vunpack.c.l.b16 %v115
  %v462 = vunpack.c.h.b16 %v115
  %v463 = vunpack.c.l.b16 %v116
  %v464 = vunpack.c.l.b16 %v117
  %v465 = vunpack.c.h.b16 %v117
  %v466 = vunpack.c.l.b16 %v118
  %v467 = vunpack.c.l.b16 %v119
  %v468 = vunpack.c.h.b16 %v119
  %v469 = vunpack.c.l.b16 %v120
  %v470 = vunpack.c.l.b16 %v121
  %v471 = vunpack.c.h.b16 %v121
  %v472 = vunpack.c.l.b16 %v122
  %v473 = vunpack.c.l.b16 %v123
  %v474 = vunpack.c.h.b16 %v123
  %v475 = vunpack.c.l.b16 %v124
  %v476 = vunpack.c.l.b16 %v125
  %v477 = vunpack.c.h.b16 %v125
  %v478 = vunpack.c.l.b16 %v126
  %v479 = vunpack.c.l.b16 %v127
  %v480 = vunpack.c.h.b16 %v127
  %v481 = vunpack.c.l.b16 %v128
  %v482 = vunpack.c.l.b16 %v129
  %v483 = vunpack.c.h.b16 %v129
  %v484 = vunpack.c.l.b16 %v130
  %v485 = vunpack.c.l.b16 %v131
  %v486 = vunpack.c.h.b16 %v131
  %v487 = vunpack.c.l.b16 %v132
  %v488 = vunpack.c.l.b16 %v133
  %v489 = vunpack.c.h.b16 %v133
  %v490 = vunpack.c.l.b16 %v134
  %v491 = vunpack.c.l.b16 %v135
  %v492 = vunpack.c.h.b16 %v135
  %v493 = vunpack.c.l.b16 %v136
  %v494 = vunpack.c.l.b16 %v137
  %v495 = vunpack.c.h.b16 %v137
  %v496 = vunpack.c.l.b16 %v138
  %v497 = vunpack.c.l.b16 %v139
  %v498 = vunpack.c.h.b16 %v139
  %v499 = vunpack.c.l.b16 %v140
  %v500 = vunpack.c.l.b16 %v141
  %v501 = vunpack.c.h.b16 %v141
  %v502 = vunpack.c.l.b16 %v142
  %v503 = vpack.c.b16 %v314, %v311
  %v504 = vpack.c.b16 %v315, %v312
  %v505 = vpack.c.b16 %v316, %v313
  %v506 = vpack.c.b16 %v320, %v317
  %v507 = vpack.c.b16 %v321, %v318
  %v508 = vpack.c.b16 %v322, %v319
  %v509 = vpack.c.b16 %v326, %v323
  %v510 = vpack.c.b16 %v327, %v324
  %v511 = vpack.c.b16 %v328, %v325
  %v512 = vpack.c.b16 %v332, %v329
  %v513 = vpack.c.b16 %v333, %v330
  %v514 = vpack.c.b16 %v334, %v331
  %v515 = vpack.c.b16 %v338, %v335
  %v516 = vpack.c.b16 %v339, %v336
  %v517 = vpack.c.b16 %v340, %v337
  %v518 = vpack.c.b16 %v344, %v341
  %v519 = vpack.c.b16 %v345, %v342
  %v520 = vpack.c.b16 %v346, %v343
  %v521 = vpack.c.b16 %v350, %v347
  %v522 = vpack.c.b16 %v351, %v348
  %v523 = vpack.c.b16 %v352, %v349
  %v524 = vpack.c.b16 %v356, %v353
  %v525 = vpack.c.b16 %v357, %v354
  %v526 = vpack.c.b16 %v358, %v355
  %v527 = vpack.c.b16 %v362, %v359
  %v528 = vpack.c.b16 %v363, %v360
  %v529 = vpack.c.b16 %v364, %v361
  %v530 = vpack.c.b16 %v368, %v365
  %v531 = vpack.c.b16 %v369, %v366
  %v532 = vpack.c.b16 %v370, %v367
  %v533 = vpack.c.b16 %v374, %v371
  %v534 = vpack.c.b16 %v375, %v372
  %v535 = vpack.c.b16 %v376, %v373
  %v536 = vpack.c.b16 %v380, %v377
  %v537 = vpack.c.b16 %v381, %v378
  %v538 = vpack.c.b16 %v382, %v379
  %v539 = vpack.c.b16 %v386, %v383
  %v540 = vpack.c.b16 %v387, %v384
  %v541 = vpack.c.b16 %v388, %v385
  %v542 = vpack.c.b16 %v392, %v389
  %v543 = vpack.c.b16 %v393, %v390
  %v544 = vpack.c.b16 %v394, %v391
  %v545 = vpack.c.b16 %v398, %v395
  %v546 = vpack.c.b16 %v399, %v396
  %v547 = vpack.c.b16 %v400, %v397
  %v548 = vpack.c.b16 %v404, %v401
  %v549 = vpack.c.b16 %v405, %v402
  %v550 = vpack.c.b16 %v406, %v403
  %v551 = vpack.c.b16 %v410, %v407
  %v552 = vpack.c.b16 %v411, %v408
  %v553 = vpack.c.b16 %v412, %v409
  %v554 = vpack.c.b16 %v416, %v413
  %v555 = vpack.c.b16 %v417, %v414
  %v556 = vpack.c.b16 %v418, %v415
  %v557 = vpack.c.b16 %v422, %v419
  %v558 = vpack.c.b16 %v423, %v420
  %v559 = vpack.c.b16 %v424, %v421
  %v560 = vpack.c.b16 %v428, %v425
  %v561 = vpack.c.b16 %v429, %v426
  %v562 = vpack.c.b16 %v430, %v427
  %v563 = vpack.c.b16 %v434, %v431
  %v564 = vpack.c.b16 %v435, %v432
  %v565 = vpack.c.b16 %v436, %v433
  %v566 = vpack.c.b16 %v440, %v437
  %v567 = vpack.c.b16 %v441, %v438
  %v568 = vpack.c.b16 %v442, %v439
  %v569 = vpack.c.b16 %v446, %v443
  %v570 = vpack.c.b16 %v447, %v444
  %v571 = vpack.c.b16 %v448, %v445
  %v572 = vpack.c.b16 %v452, %v449
  %v573 = vpack.c.b16 %v453, %v450
  %v574 = vpack.c.b16 %v454, %v451
  %v575 = vpack.c.b16 %v458, %v455
  %v576 = vpack.c.b16 %v459, %v456
  %v577 = vpack.c.b16 %v460, %v457
  %v578 = vpack.c.b16 %v464, %v461
  %v579 = vpack.c.b16 %v465, %v462
  %v580 = vpack.c.b16 %v466, %v463
  %v581 = vpack.c.b16 %v470, %v467
  %v582 = vpack.c.b16 %v471, %v468
  %v583 = vpack.c.b16 %v472, %v469
  %v584 = vpack.c.b16 %v476, %v473
  %v585 = vpack.c.b16 %v477, %v474
  %v586 = vpack.c.b16 %v478, %v475
  %v587 = vpack.c.b16 %v482, %v479
  %v588 = vpack.c.b16 %v483, %v480
  %v589 = vpack.c.b16 %v484, %v481
  %v590 = vpack.c.b16 %v488, %v485
  %v591 = vpack.c.b16 %v489, %v486
  %v592 = vpack.c.b16 %v490, %v487
  %v593 = vpack.c.b16 %v494, %v491
  %v594 = vpack.c.b16 %v495, %v492
  %v595 = vpack.c.b16 %v496, %v493
  %v596 = vpack.c.b16 %v500, %v497
  %v597 = vpack.c.b16 %v501, %v498
  %v598 = vpack.c.b16 %v502, %v499
  %v699 = vunpack.c.l.b16 %v143
  %v700 = vunpack.c.l.b16 %v144
  %v701 = vunpack.c.l.b16 %v145
  %v702 = vunpack.c.l.b16 %v146
  %v703 = vunpack.c.l.b16 %v147
  %v704 = vunpack.c.l.b16 %v148
  %v705 = vunpack.c.l.b16 %v149
  %v706 = vunpack.c.l.b16 %v150
  %v707 = vunpack.c.l.b16 %v151
  %v708 = vunpack.c.l.b16 %v152
  %v709 = vunpack.c.l.b16 %v153
  %v710 = vunpack.c.l.b16 %v154
  %v711 = vunpack.c.l.b16 %v155
  %v712 = vunpack.c.l.b16 %v156
  %v713 = vunpack.c.l.b16 %v157
  %v714 = vunpack.c.l.b16 %v158
  %v715 = vunpack.c.l.b16 %v159
  %v716 = vunpack.c.l.b16 %v160
  %v717 = vunpack.c.l.b16 %v161
  %v718 = vunpack.c.l.b16 %v162
  %v719 = vunpack.c.l.b16 %v163
  %v720 = vunpack.c.l.b16 %v164
  %v721 = vunpack.c.l.b16 %v165
  %v722 = vunpack.c.l.b16 %v166
  %v723 = vunpack.c.l.b16 %v167
  %v724 = vunpack.c.l.b16 %v168
  %v725 = vunpack.c.l.b16 %v169
  %v726 = vunpack.c.l.b16 %v170
  %v727 = vunpack.c.l.b16 %v171
  %v728 = vunpack.c.l.b16 %v172
  %v729 = vunpack.c.l.b16 %v173
  %v730 = vunpack.c.l.b16 %v174
  %v731 = vunpack.c.l.b16 %v175
  %v732 = vunpack.c.l.b16 %v176
  %v733 = vunpack.c.l.b16 %v177
  %v734 = vunpack.c.l.b16 %v178
  %v735 = vpack.c.b16 %v700, %v699
  %v736 = vpack.c.b16 %v702, %v701
  %v737 = vpack.c.b16 %v704, %v703
  %v738 = vpack.c.b16 %v706, %v705
  %v739 = vpack.c.b16 %v708, %v707
  %v740 = vpack.c.b16 %v710, %v709
  %v741 = vpack.c.b16 %v712, %v711
  %v742 = vpack.c.b16 %v714, %v713
  %v743 = vpack.c.b16 %v716, %v715
  %v744 = vpack.c.b16 %v718, %v717
  %v745 = vpack.c.b16 %v720, %v719
  %v746 = vpack.c.b16 %v722, %v721
  %v747 = vpack.c.b16 %v724, %v723
  %v748 = vpack.c.b16 %v726, %v725
  %v749 = vpack.c.b16 %v728, %v727
  %v750 = vpack.c.b16 %v730, %v729
  %v751 = vpack.c.b16 %v732, %v731
  %v752 = vpack.c.b16 %v734, %v733
  %vm771 = vcmask 261120
  %v773 = vsel %vm771, %v505, 0
  %v776 = vsel %vm771, %v508, 0
  %v779 = vsel %vm771, %v511, 0
  %v782 = vsel %vm771, %v514, 0
  %v785 = vsel %vm771, %v517, 0
  %v788 = vsel %vm771, %v520, 0
  %v791 = vsel %vm771, %v523, 0
  %v794 = vsel %vm771, %v526, 0
  %v797 = vsel %vm771, %v529, 0
  %v800 = vsel %vm771, %v532, 0
  %v803 = vsel %vm771, %v535, 0
  %v806 = vsel %vm771, %v538, 0
  %v809 = vsel %vm771, %v541, 0
  %v812 = vsel %vm771, %v544, 0
  %v815 = vsel %vm771, %v547, 0
  %v818 = vsel %vm771, %v550, 0
  %v821 = vsel %vm771, %v553, 0
  %v824 = vsel %vm771, %v556, 0
  %v827 = vsel %vm771, %v559, 0
  %v830 = vsel %vm771, %v562, 0
  %v833 = vsel %vm771, %v565, 0
  %v836 = vsel %vm771, %v568, 0
  %v839 = vsel %vm771, %v571, 0
  %v842 = vsel %vm771, %v574, 0
  %v845 = vsel %vm771, %v577, 0
  %v848 = vsel %vm771, %v580, 0
  %v851 = vsel %vm771, %v583, 0
  %v854 = vsel %vm771, %v586, 0
  %v857 = vsel %vm771, %v589, 0
  %v860 = vsel %vm771, %v592, 0
  %v863 = vsel %vm771, %v595, 0
  %v866 = vsel %vm771, %v598, 0
  %868 = vmatpush.bf16.msra.mxu0 %v742
  %869 = vmatpush.bf16.msra.mxu0 %v741
  %870 = vmatpush.bf16.msra.mxu0 %v740
  %871 = vmatpush.bf16.msra.mxu0 %v739
  %872 = vmatpush.bf16.msra.mxu0 %v738
  %873 = vmatpush.bf16.msra.mxu0 %v737
  %874 = vmatpush.bf16.msra.mxu0 %v736
  %875 = vmatpush.bf16.msra.mxu0 %v735
  %876 = vmatmul.bf16.gmra.mxu0 %v503
  %v877 = vpop.f32.mrf.mxu0
  %v878 = vadd.f32 %v181, %v877
  %v879 = vpop.f32.mrf.mxu0
  %v880 = vadd.f32 %v181, %v879
  %881 = vmatmul.bf16.gmra.mxu0 %v506
  %v882 = vpop.f32.mrf.mxu0
  %v883 = vadd.f32 %v181, %v882
  %v884 = vpop.f32.mrf.mxu0
  %v885 = vadd.f32 %v181, %v884
  %886 = vmatmul.bf16.gmra.mxu0 %v509
  %v887 = vpop.f32.mrf.mxu0
  %v888 = vadd.f32 %v181, %v887
  %v889 = vpop.f32.mrf.mxu0
  %v890 = vadd.f32 %v181, %v889
  %891 = vmatmul.bf16.gmra.mxu0 %v512
  %v892 = vpop.f32.mrf.mxu0
  %v893 = vadd.f32 %v181, %v892
  %v894 = vpop.f32.mrf.mxu0
  %v895 = vadd.f32 %v181, %v894
  %896 = vmatmul.bf16.gmra.mxu0 %v515
  %v897 = vpop.f32.mrf.mxu0
  %v898 = vadd.f32 %v181, %v897
  %v899 = vpop.f32.mrf.mxu0
  %v900 = vadd.f32 %v181, %v899
  %901 = vmatmul.bf16.gmra.mxu0 %v518
  %v902 = vpop.f32.mrf.mxu0
  %v903 = vadd.f32 %v181, %v902
  %v904 = vpop.f32.mrf.mxu0
  %v905 = vadd.f32 %v181, %v904
  %906 = vmatmul.bf16.gmra.mxu0 %v521
  %v907 = vpop.f32.mrf.mxu0
  %v908 = vadd.f32 %v181, %v907
  %v909 = vpop.f32.mrf.mxu0
  %v910 = vadd.f32 %v181, %v909
  %911 = vmatmul.bf16.gmra.mxu0 %v524
  %v912 = vpop.f32.mrf.mxu0
  %v913 = vadd.f32 %v181, %v912
  %v914 = vpop.f32.mrf.mxu0
  %v915 = vadd.f32 %v181, %v914
  %916 = vmatmul.bf16.gmra.mxu0 %v527
  %v917 = vpop.f32.mrf.mxu0
  %v918 = vadd.f32 %v181, %v917
  %v919 = vpop.f32.mrf.mxu0
  %v920 = vadd.f32 %v181, %v919
  %921 = vmatmul.bf16.gmra.mxu0 %v530
  %v922 = vpop.f32.mrf.mxu0
  %v923 = vadd.f32 %v181, %v922
  %v924 = vpop.f32.mrf.mxu0
  %v925 = vadd.f32 %v181, %v924
  %926 = vmatmul.bf16.gmra.mxu0 %v533
  %v927 = vpop.f32.mrf.mxu0
  %v928 = vadd.f32 %v181, %v927
  %v929 = vpop.f32.mrf.mxu0
  %v930 = vadd.f32 %v181, %v929
  %931 = vmatmul.bf16.gmra.mxu0 %v536
  %v932 = vpop.f32.mrf.mxu0
  %v933 = vadd.f32 %v181, %v932
  %v934 = vpop.f32.mrf.mxu0
  %v935 = vadd.f32 %v181, %v934
  %936 = vmatmul.bf16.gmra.mxu0 %v539
  %v937 = vpop.f32.mrf.mxu0
  %v938 = vadd.f32 %v181, %v937
  %v939 = vpop.f32.mrf.mxu0
  %v940 = vadd.f32 %v181, %v939
  %941 = vmatmul.bf16.gmra.mxu0 %v542
  %v942 = vpop.f32.mrf.mxu0
  %v943 = vadd.f32 %v181, %v942
  %v944 = vpop.f32.mrf.mxu0
  %v945 = vadd.f32 %v181, %v944
  %946 = vmatmul.bf16.gmra.mxu0 %v545
  %v947 = vpop.f32.mrf.mxu0
  %v948 = vadd.f32 %v181, %v947
  %v949 = vpop.f32.mrf.mxu0
  %v950 = vadd.f32 %v181, %v949
  %951 = vmatmul.bf16.gmra.mxu0 %v548
  %v952 = vpop.f32.mrf.mxu0
  %v953 = vadd.f32 %v181, %v952
  %v954 = vpop.f32.mrf.mxu0
  %v955 = vadd.f32 %v181, %v954
  %956 = vmatmul.bf16.gmra.mxu0 %v551
  %v957 = vpop.f32.mrf.mxu0
  %v958 = vadd.f32 %v181, %v957
  %v959 = vpop.f32.mrf.mxu0
  %v960 = vadd.f32 %v181, %v959
  %961 = vmatmul.bf16.gmra.mxu0 %v554
  %v962 = vpop.f32.mrf.mxu0
  %v963 = vadd.f32 %v181, %v962
  %v964 = vpop.f32.mrf.mxu0
  %v965 = vadd.f32 %v181, %v964
  %966 = vmatmul.bf16.gmra.mxu0 %v557
  %v967 = vpop.f32.mrf.mxu0
  %v968 = vadd.f32 %v181, %v967
  %v969 = vpop.f32.mrf.mxu0
  %v970 = vadd.f32 %v181, %v969
  %971 = vmatmul.bf16.gmra.mxu0 %v560
  %v972 = vpop.f32.mrf.mxu0
  %v973 = vadd.f32 %v181, %v972
  %v974 = vpop.f32.mrf.mxu0
  %v975 = vadd.f32 %v181, %v974
  %976 = vmatmul.bf16.gmra.mxu0 %v563
  %v977 = vpop.f32.mrf.mxu0
  %v978 = vadd.f32 %v181, %v977
  %v979 = vpop.f32.mrf.mxu0
  %v980 = vadd.f32 %v181, %v979
  %981 = vmatmul.bf16.gmra.mxu0 %v566
  %v982 = vpop.f32.mrf.mxu0
  %v983 = vadd.f32 %v181, %v982
  %v984 = vpop.f32.mrf.mxu0
  %v985 = vadd.f32 %v181, %v984
  %986 = vmatmul.bf16.gmra.mxu0 %v569
  %v987 = vpop.f32.mrf.mxu0
  %v988 = vadd.f32 %v181, %v987
  %v989 = vpop.f32.mrf.mxu0
  %v990 = vadd.f32 %v181, %v989
  %991 = vmatmul.bf16.gmra.mxu0 %v572
  %v992 = vpop.f32.mrf.mxu0
  %v993 = vadd.f32 %v181, %v992
  %v994 = vpop.f32.mrf.mxu0
  %v995 = vadd.f32 %v181, %v994
  %996 = vmatmul.bf16.gmra.mxu0 %v575
  %v997 = vpop.f32.mrf.mxu0
  %v998 = vadd.f32 %v181, %v997
  %v999 = vpop.f32.mrf.mxu0
  %v1000 = vadd.f32 %v181, %v999
  %1001 = vmatmul.bf16.gmra.mxu0 %v578
  %v1002 = vpop.f32.mrf.mxu0
  %v1003 = vadd.f32 %v181, %v1002
  %v1004 = vpop.f32.mrf.mxu0
  %v1005 = vadd.f32 %v181, %v1004
  %1006 = vmatmul.bf16.gmra.mxu0 %v581
  %v1007 = vpop.f32.mrf.mxu0
  %v1008 = vadd.f32 %v181, %v1007
  %v1009 = vpop.f32.mrf.mxu0
  %v1010 = vadd.f32 %v181, %v1009
  %1011 = vmatmul.bf16.gmra.mxu0 %v584
  %v1012 = vpop.f32.mrf.mxu0
  %v1013 = vadd.f32 %v181, %v1012
  %v1014 = vpop.f32.mrf.mxu0
  %v1015 = vadd.f32 %v181, %v1014
  %1016 = vmatmul.bf16.gmra.mxu0 %v587
  %v1017 = vpop.f32.mrf.mxu0
  %v1018 = vadd.f32 %v181, %v1017
  %v1019 = vpop.f32.mrf.mxu0
  %v1020 = vadd.f32 %v181, %v1019
  %1021 = vmatmul.bf16.gmra.mxu0 %v590
  %v1022 = vpop.f32.mrf.mxu0
  %v1023 = vadd.f32 %v181, %v1022
  %v1024 = vpop.f32.mrf.mxu0
  %v1025 = vadd.f32 %v181, %v1024
  %1026 = vmatmul.bf16.gmra.mxu0 %v593
  %v1027 = vpop.f32.mrf.mxu0
  %v1028 = vadd.f32 %v181, %v1027
  %v1029 = vpop.f32.mrf.mxu0
  %v1030 = vadd.f32 %v181, %v1029
  %1031 = vmatmul.bf16.gmra.mxu0 %v596
  %v1032 = vpop.f32.mrf.mxu0
  %v1033 = vadd.f32 %v181, %v1032
  %v1034 = vpop.f32.mrf.mxu0
  %v1035 = vadd.f32 %v181, %v1034
  %1036 = vdwg.mxu0
  %1037 = vmatpush.bf16.msra.mxu0 %v750
  %1038 = vmatpush.bf16.msra.mxu0 %v749
  %1039 = vmatpush.bf16.msra.mxu0 %v748
  %1040 = vmatpush.bf16.msra.mxu0 %v747
  %1041 = vmatpush.bf16.msra.mxu0 %v746
  %1042 = vmatpush.bf16.msra.mxu0 %v745
  %1043 = vmatpush.bf16.msra.mxu0 %v744
  %1044 = vmatpush.bf16.msra.mxu0 %v743
  %1045 = vmatmul.bf16.gmra.mxu0 %v504
  %v1046 = vpop.f32.mrf.mxu0
  %v1047 = vadd.f32 %v878, %v1046
  %v1048 = vpop.f32.mrf.mxu0
  %v1049 = vadd.f32 %v880, %v1048
  %1050 = vmatmul.bf16.gmra.mxu0 %v507
  %v1051 = vpop.f32.mrf.mxu0
  %v1052 = vadd.f32 %v883, %v1051
  %v1053 = vpop.f32.mrf.mxu0
  %v1054 = vadd.f32 %v885, %v1053
  %1055 = vmatmul.bf16.gmra.mxu0 %v510
  %v1056 = vpop.f32.mrf.mxu0
  %v1057 = vadd.f32 %v888, %v1056
  %v1058 = vpop.f32.mrf.mxu0
  %v1059 = vadd.f32 %v890, %v1058
  %1060 = vmatmul.bf16.gmra.mxu0 %v513
  %v1061 = vpop.f32.mrf.mxu0
  %v1062 = vadd.f32 %v893, %v1061
  %v1063 = vpop.f32.mrf.mxu0
  %v1064 = vadd.f32 %v895, %v1063
  %1065 = vmatmul.bf16.gmra.mxu0 %v516
  %v1066 = vpop.f32.mrf.mxu0
  %v1067 = vadd.f32 %v898, %v1066
  %v1068 = vpop.f32.mrf.mxu0
  %v1069 = vadd.f32 %v900, %v1068
  %1070 = vmatmul.bf16.gmra.mxu0 %v519
  %v1071 = vpop.f32.mrf.mxu0
  %v1072 = vadd.f32 %v903, %v1071
  %v1073 = vpop.f32.mrf.mxu0
  %v1074 = vadd.f32 %v905, %v1073
  %1075 = vmatmul.bf16.gmra.mxu0 %v522
  %v1076 = vpop.f32.mrf.mxu0
  %v1077 = vadd.f32 %v908, %v1076
  %v1078 = vpop.f32.mrf.mxu0
  %v1079 = vadd.f32 %v910, %v1078
  %1080 = vmatmul.bf16.gmra.mxu0 %v525
  %v1081 = vpop.f32.mrf.mxu0
  %v1082 = vadd.f32 %v913, %v1081
  %v1083 = vpop.f32.mrf.mxu0
  %v1084 = vadd.f32 %v915, %v1083
  %1085 = vmatmul.bf16.gmra.mxu0 %v528
  %v1086 = vpop.f32.mrf.mxu0
  %v1087 = vadd.f32 %v918, %v1086
  %v1088 = vpop.f32.mrf.mxu0
  %v1089 = vadd.f32 %v920, %v1088
  %1090 = vmatmul.bf16.gmra.mxu0 %v531
  %v1091 = vpop.f32.mrf.mxu0
  %v1092 = vadd.f32 %v923, %v1091
  %v1093 = vpop.f32.mrf.mxu0
  %v1094 = vadd.f32 %v925, %v1093
  %1095 = vmatmul.bf16.gmra.mxu0 %v534
  %v1096 = vpop.f32.mrf.mxu0
  %v1097 = vadd.f32 %v928, %v1096
  %v1098 = vpop.f32.mrf.mxu0
  %v1099 = vadd.f32 %v930, %v1098
  %1100 = vmatmul.bf16.gmra.mxu0 %v537
  %v1101 = vpop.f32.mrf.mxu0
  %v1102 = vadd.f32 %v933, %v1101
  %v1103 = vpop.f32.mrf.mxu0
  %v1104 = vadd.f32 %v935, %v1103
  %1105 = vmatmul.bf16.gmra.mxu0 %v540
  %v1106 = vpop.f32.mrf.mxu0
  %v1107 = vadd.f32 %v938, %v1106
  %v1108 = vpop.f32.mrf.mxu0
  %v1109 = vadd.f32 %v940, %v1108
  %1110 = vmatmul.bf16.gmra.mxu0 %v543
  %v1111 = vpop.f32.mrf.mxu0
  %v1112 = vadd.f32 %v943, %v1111
  %v1113 = vpop.f32.mrf.mxu0
  %v1114 = vadd.f32 %v945, %v1113
  %1115 = vmatmul.bf16.gmra.mxu0 %v546
  %v1116 = vpop.f32.mrf.mxu0
  %v1117 = vadd.f32 %v948, %v1116
  %v1118 = vpop.f32.mrf.mxu0
  %v1119 = vadd.f32 %v950, %v1118
  %1120 = vmatmul.bf16.gmra.mxu0 %v549
  %v1121 = vpop.f32.mrf.mxu0
  %v1122 = vadd.f32 %v953, %v1121
  %v1123 = vpop.f32.mrf.mxu0
  %v1124 = vadd.f32 %v955, %v1123
  %1125 = vmatmul.bf16.gmra.mxu0 %v552
  %v1126 = vpop.f32.mrf.mxu0
  %v1127 = vadd.f32 %v958, %v1126
  %v1128 = vpop.f32.mrf.mxu0
  %v1129 = vadd.f32 %v960, %v1128
  %1130 = vmatmul.bf16.gmra.mxu0 %v555
  %v1131 = vpop.f32.mrf.mxu0
  %v1132 = vadd.f32 %v963, %v1131
  %v1133 = vpop.f32.mrf.mxu0
  %v1134 = vadd.f32 %v965, %v1133
  %1135 = vmatmul.bf16.gmra.mxu0 %v558
  %v1136 = vpop.f32.mrf.mxu0
  %v1137 = vadd.f32 %v968, %v1136
  %v1138 = vpop.f32.mrf.mxu0
  %v1139 = vadd.f32 %v970, %v1138
  %1140 = vmatmul.bf16.gmra.mxu0 %v561
  %v1141 = vpop.f32.mrf.mxu0
  %v1142 = vadd.f32 %v973, %v1141
  %v1143 = vpop.f32.mrf.mxu0
  %v1144 = vadd.f32 %v975, %v1143
  %1145 = vmatmul.bf16.gmra.mxu0 %v564
  %v1146 = vpop.f32.mrf.mxu0
  %v1147 = vadd.f32 %v978, %v1146
  %v1148 = vpop.f32.mrf.mxu0
  %v1149 = vadd.f32 %v980, %v1148
  %1150 = vmatmul.bf16.gmra.mxu0 %v567
  %v1151 = vpop.f32.mrf.mxu0
  %v1152 = vadd.f32 %v983, %v1151
  %v1153 = vpop.f32.mrf.mxu0
  %v1154 = vadd.f32 %v985, %v1153
  %1155 = vmatmul.bf16.gmra.mxu0 %v570
  %v1156 = vpop.f32.mrf.mxu0
  %v1157 = vadd.f32 %v988, %v1156
  %v1158 = vpop.f32.mrf.mxu0
  %v1159 = vadd.f32 %v990, %v1158
  %1160 = vmatmul.bf16.gmra.mxu0 %v573
  %v1161 = vpop.f32.mrf.mxu0
  %v1162 = vadd.f32 %v993, %v1161
  %v1163 = vpop.f32.mrf.mxu0
  %v1164 = vadd.f32 %v995, %v1163
  %1165 = vmatmul.bf16.gmra.mxu0 %v576
  %v1166 = vpop.f32.mrf.mxu0
  %v1167 = vadd.f32 %v998, %v1166
  %v1168 = vpop.f32.mrf.mxu0
  %v1169 = vadd.f32 %v1000, %v1168
  %1170 = vmatmul.bf16.gmra.mxu0 %v579
  %v1171 = vpop.f32.mrf.mxu0
  %v1172 = vadd.f32 %v1003, %v1171
  %v1173 = vpop.f32.mrf.mxu0
  %v1174 = vadd.f32 %v1005, %v1173
  %1175 = vmatmul.bf16.gmra.mxu0 %v582
  %v1176 = vpop.f32.mrf.mxu0
  %v1177 = vadd.f32 %v1008, %v1176
  %v1178 = vpop.f32.mrf.mxu0
  %v1179 = vadd.f32 %v1010, %v1178
  %1180 = vmatmul.bf16.gmra.mxu0 %v585
  %v1181 = vpop.f32.mrf.mxu0
  %v1182 = vadd.f32 %v1013, %v1181
  %v1183 = vpop.f32.mrf.mxu0
  %v1184 = vadd.f32 %v1015, %v1183
  %1185 = vmatmul.bf16.gmra.mxu0 %v588
  %v1186 = vpop.f32.mrf.mxu0
  %v1187 = vadd.f32 %v1018, %v1186
  %v1188 = vpop.f32.mrf.mxu0
  %v1189 = vadd.f32 %v1020, %v1188
  %1190 = vmatmul.bf16.gmra.mxu0 %v591
  %v1191 = vpop.f32.mrf.mxu0
  %v1192 = vadd.f32 %v1023, %v1191
  %v1193 = vpop.f32.mrf.mxu0
  %v1194 = vadd.f32 %v1025, %v1193
  %1195 = vmatmul.bf16.gmra.mxu0 %v594
  %v1196 = vpop.f32.mrf.mxu0
  %v1197 = vadd.f32 %v1028, %v1196
  %v1198 = vpop.f32.mrf.mxu0
  %v1199 = vadd.f32 %v1030, %v1198
  %1200 = vmatmul.bf16.gmra.mxu0 %v597
  %v1201 = vpop.f32.mrf.mxu0
  %v1202 = vadd.f32 %v1033, %v1201
  %v1203 = vpop.f32.mrf.mxu0
  %v1204 = vadd.f32 %v1035, %v1203
  %1205 = vdwg.mxu0
  %1206 = vmatpush.bf16.msra.mxu0 0
  %1207 = vmatpush.bf16.msra.mxu0 0
  %1208 = vmatpush.bf16.msra.mxu0 0
  %1209 = vmatpush.bf16.msra.mxu0 0
  %1210 = vmatpush.bf16.msra.mxu0 0
  %1211 = vmatpush.bf16.msra.mxu0 0
  %1212 = vmatpush.bf16.msra.mxu0 %v752
  %1213 = vmatpush.bf16.msra.mxu0 %v751
  %1214 = vmatmul.bf16.gmra.mxu0 %v773
  %v1215 = vpop.f32.mrf.mxu0
  %v1216 = vadd.f32 %v1047, %v1215
  %v1217 = vpop.f32.mrf.mxu0
  %v1218 = vadd.f32 %v1049, %v1217
  %1219 = vmatmul.bf16.gmra.mxu0 %v776
  %v1220 = vpop.f32.mrf.mxu0
  %v1221 = vadd.f32 %v1052, %v1220
  %v1222 = vpop.f32.mrf.mxu0
  %v1223 = vadd.f32 %v1054, %v1222
  %1224 = vmatmul.bf16.gmra.mxu0 %v779
  %v1225 = vpop.f32.mrf.mxu0
  %v1226 = vadd.f32 %v1057, %v1225
  %v1227 = vpop.f32.mrf.mxu0
  %v1228 = vadd.f32 %v1059, %v1227
  %1229 = vmatmul.bf16.gmra.mxu0 %v782
  %v1230 = vpop.f32.mrf.mxu0
  %v1231 = vadd.f32 %v1062, %v1230
  %v1232 = vpop.f32.mrf.mxu0
  %v1233 = vadd.f32 %v1064, %v1232
  %1234 = vmatmul.bf16.gmra.mxu0 %v785
  %v1235 = vpop.f32.mrf.mxu0
  %v1236 = vadd.f32 %v1067, %v1235
  %v1237 = vpop.f32.mrf.mxu0
  %v1238 = vadd.f32 %v1069, %v1237
  %1239 = vmatmul.bf16.gmra.mxu0 %v788
  %v1240 = vpop.f32.mrf.mxu0
  %v1241 = vadd.f32 %v1072, %v1240
  %v1242 = vpop.f32.mrf.mxu0
  %v1243 = vadd.f32 %v1074, %v1242
  %1244 = vmatmul.bf16.gmra.mxu0 %v791
  %v1245 = vpop.f32.mrf.mxu0
  %v1246 = vadd.f32 %v1077, %v1245
  %v1247 = vpop.f32.mrf.mxu0
  %v1248 = vadd.f32 %v1079, %v1247
  %1249 = vmatmul.bf16.gmra.mxu0 %v794
  %v1250 = vpop.f32.mrf.mxu0
  %v1251 = vadd.f32 %v1082, %v1250
  %v1252 = vpop.f32.mrf.mxu0
  %v1253 = vadd.f32 %v1084, %v1252
  %1254 = vmatmul.bf16.gmra.mxu0 %v797
  %v1255 = vpop.f32.mrf.mxu0
  %v1256 = vadd.f32 %v1087, %v1255
  %v1257 = vpop.f32.mrf.mxu0
  %v1258 = vadd.f32 %v1089, %v1257
  %1259 = vmatmul.bf16.gmra.mxu0 %v800
  %v1260 = vpop.f32.mrf.mxu0
  %v1261 = vadd.f32 %v1092, %v1260
  %v1262 = vpop.f32.mrf.mxu0
  %v1263 = vadd.f32 %v1094, %v1262
  %1264 = vmatmul.bf16.gmra.mxu0 %v803
  %v1265 = vpop.f32.mrf.mxu0
  %v1266 = vadd.f32 %v1097, %v1265
  %v1267 = vpop.f32.mrf.mxu0
  %v1268 = vadd.f32 %v1099, %v1267
  %1269 = vmatmul.bf16.gmra.mxu0 %v806
  %v1270 = vpop.f32.mrf.mxu0
  %v1271 = vadd.f32 %v1102, %v1270
  %v1272 = vpop.f32.mrf.mxu0
  %v1273 = vadd.f32 %v1104, %v1272
  %1274 = vmatmul.bf16.gmra.mxu0 %v809
  %v1275 = vpop.f32.mrf.mxu0
  %v1276 = vadd.f32 %v1107, %v1275
  %v1277 = vpop.f32.mrf.mxu0
  %v1278 = vadd.f32 %v1109, %v1277
  %1279 = vmatmul.bf16.gmra.mxu0 %v812
  %v1280 = vpop.f32.mrf.mxu0
  %v1281 = vadd.f32 %v1112, %v1280
  %v1282 = vpop.f32.mrf.mxu0
  %v1283 = vadd.f32 %v1114, %v1282
  %1284 = vmatmul.bf16.gmra.mxu0 %v815
  %v1285 = vpop.f32.mrf.mxu0
  %v1286 = vadd.f32 %v1117, %v1285
  %v1287 = vpop.f32.mrf.mxu0
  %v1288 = vadd.f32 %v1119, %v1287
  %1289 = vmatmul.bf16.gmra.mxu0 %v818
  %v1290 = vpop.f32.mrf.mxu0
  %v1291 = vadd.f32 %v1122, %v1290
  %v1292 = vpop.f32.mrf.mxu0
  %v1293 = vadd.f32 %v1124, %v1292
  %1294 = vmatmul.bf16.gmra.mxu0 %v821
  %v1295 = vpop.f32.mrf.mxu0
  %v1296 = vadd.f32 %v1127, %v1295
  %v1297 = vpop.f32.mrf.mxu0
  %v1298 = vadd.f32 %v1129, %v1297
  %1299 = vmatmul.bf16.gmra.mxu0 %v824
  %v1300 = vpop.f32.mrf.mxu0
  %v1301 = vadd.f32 %v1132, %v1300
  %v1302 = vpop.f32.mrf.mxu0
  %v1303 = vadd.f32 %v1134, %v1302
  %1304 = vmatmul.bf16.gmra.mxu0 %v827
  %v1305 = vpop.f32.mrf.mxu0
  %v1306 = vadd.f32 %v1137, %v1305
  %v1307 = vpop.f32.mrf.mxu0
  %v1308 = vadd.f32 %v1139, %v1307
  %1309 = vmatmul.bf16.gmra.mxu0 %v830
  %v1310 = vpop.f32.mrf.mxu0
  %v1311 = vadd.f32 %v1142, %v1310
  %v1312 = vpop.f32.mrf.mxu0
  %v1313 = vadd.f32 %v1144, %v1312
  %1314 = vmatmul.bf16.gmra.mxu0 %v833
  %v1315 = vpop.f32.mrf.mxu0
  %v1316 = vadd.f32 %v1147, %v1315
  %v1317 = vpop.f32.mrf.mxu0
  %v1318 = vadd.f32 %v1149, %v1317
  %1319 = vmatmul.bf16.gmra.mxu0 %v836
  %v1320 = vpop.f32.mrf.mxu0
  %v1321 = vadd.f32 %v1152, %v1320
  %v1322 = vpop.f32.mrf.mxu0
  %v1323 = vadd.f32 %v1154, %v1322
  %1324 = vmatmul.bf16.gmra.mxu0 %v839
  %v1325 = vpop.f32.mrf.mxu0
  %v1326 = vadd.f32 %v1157, %v1325
  %v1327 = vpop.f32.mrf.mxu0
  %v1328 = vadd.f32 %v1159, %v1327
  %1329 = vmatmul.bf16.gmra.mxu0 %v842
  %v1330 = vpop.f32.mrf.mxu0
  %v1331 = vadd.f32 %v1162, %v1330
  %v1332 = vpop.f32.mrf.mxu0
  %v1333 = vadd.f32 %v1164, %v1332
  %1334 = vmatmul.bf16.gmra.mxu0 %v845
  %v1335 = vpop.f32.mrf.mxu0
  %v1336 = vadd.f32 %v1167, %v1335
  %v1337 = vpop.f32.mrf.mxu0
  %v1338 = vadd.f32 %v1169, %v1337
  %1339 = vmatmul.bf16.gmra.mxu0 %v848
  %v1340 = vpop.f32.mrf.mxu0
  %v1341 = vadd.f32 %v1172, %v1340
  %v1342 = vpop.f32.mrf.mxu0
  %v1343 = vadd.f32 %v1174, %v1342
  %1344 = vmatmul.bf16.gmra.mxu0 %v851
  %v1345 = vpop.f32.mrf.mxu0
  %v1346 = vadd.f32 %v1177, %v1345
  %v1347 = vpop.f32.mrf.mxu0
  %v1348 = vadd.f32 %v1179, %v1347
  %1349 = vmatmul.bf16.gmra.mxu0 %v854
  %v1350 = vpop.f32.mrf.mxu0
  %v1351 = vadd.f32 %v1182, %v1350
  %v1352 = vpop.f32.mrf.mxu0
  %v1353 = vadd.f32 %v1184, %v1352
  %1354 = vmatmul.bf16.gmra.mxu0 %v857
  %v1355 = vpop.f32.mrf.mxu0
  %v1356 = vadd.f32 %v1187, %v1355
  %v1357 = vpop.f32.mrf.mxu0
  %v1358 = vadd.f32 %v1189, %v1357
  %1359 = vmatmul.bf16.gmra.mxu0 %v860
  %v1360 = vpop.f32.mrf.mxu0
  %v1361 = vadd.f32 %v1192, %v1360
  %v1362 = vpop.f32.mrf.mxu0
  %v1363 = vadd.f32 %v1194, %v1362
  %1364 = vmatmul.bf16.gmra.mxu0 %v863
  %v1365 = vpop.f32.mrf.mxu0
  %v1366 = vadd.f32 %v1197, %v1365
  %v1367 = vpop.f32.mrf.mxu0
  %v1368 = vadd.f32 %v1199, %v1367
  %1369 = vmatmul.bf16.gmra.mxu0 %v866
  %v1370 = vpop.f32.mrf.mxu0
  %v1371 = vadd.f32 %v1202, %v1370
  %v1372 = vpop.f32.mrf.mxu0
  %v1373 = vadd.f32 %v1204, %v1372
  %1374 = vdwg.mxu0
  %v1375 = vxor.u32 %v1216, 2147483648
  %v1376 = vxor.u32 %v1218, 2147483648
  %v1377 = vxor.u32 %v1221, 2147483648
  %v1378 = vxor.u32 %v1223, 2147483648
  %v1379 = vxor.u32 %v1226, 2147483648
  %v1380 = vxor.u32 %v1228, 2147483648
  %v1381 = vxor.u32 %v1231, 2147483648
  %v1382 = vxor.u32 %v1233, 2147483648
  %v1383 = vxor.u32 %v1236, 2147483648
  %v1384 = vxor.u32 %v1238, 2147483648
  %v1385 = vxor.u32 %v1241, 2147483648
  %v1386 = vxor.u32 %v1243, 2147483648
  %v1387 = vxor.u32 %v1246, 2147483648
  %v1388 = vxor.u32 %v1248, 2147483648
  %v1389 = vxor.u32 %v1251, 2147483648
  %v1390 = vxor.u32 %v1253, 2147483648
  %v1391 = vxor.u32 %v1256, 2147483648
  %v1392 = vxor.u32 %v1258, 2147483648
  %v1393 = vxor.u32 %v1261, 2147483648
  %v1394 = vxor.u32 %v1263, 2147483648
  %v1395 = vxor.u32 %v1266, 2147483648
  %v1396 = vxor.u32 %v1268, 2147483648
  %v1397 = vxor.u32 %v1271, 2147483648
  %v1398 = vxor.u32 %v1273, 2147483648
  %v1399 = vxor.u32 %v1276, 2147483648
  %v1400 = vxor.u32 %v1278, 2147483648
  %v1401 = vxor.u32 %v1281, 2147483648
  %v1402 = vxor.u32 %v1283, 2147483648
  %v1403 = vxor.u32 %v1286, 2147483648
  %v1404 = vxor.u32 %v1288, 2147483648
  %v1405 = vxor.u32 %v1291, 2147483648
  %v1406 = vxor.u32 %v1293, 2147483648
  %v1407 = vxor.u32 %v1296, 2147483648
  %v1408 = vxor.u32 %v1298, 2147483648
  %v1409 = vxor.u32 %v1301, 2147483648
  %v1410 = vxor.u32 %v1303, 2147483648
  %v1411 = vxor.u32 %v1306, 2147483648
  %v1412 = vxor.u32 %v1308, 2147483648
  %v1413 = vxor.u32 %v1311, 2147483648
  %v1414 = vxor.u32 %v1313, 2147483648
  %v1415 = vxor.u32 %v1316, 2147483648
  %v1416 = vxor.u32 %v1318, 2147483648
  %v1417 = vxor.u32 %v1321, 2147483648
  %v1418 = vxor.u32 %v1323, 2147483648
  %v1419 = vxor.u32 %v1326, 2147483648
  %v1420 = vxor.u32 %v1328, 2147483648
  %v1421 = vxor.u32 %v1331, 2147483648
  %v1422 = vxor.u32 %v1333, 2147483648
  %v1423 = vxor.u32 %v1336, 2147483648
  %v1424 = vxor.u32 %v1338, 2147483648
  %v1425 = vxor.u32 %v1341, 2147483648
  %v1426 = vxor.u32 %v1343, 2147483648
  %v1427 = vxor.u32 %v1346, 2147483648
  %v1428 = vxor.u32 %v1348, 2147483648
  %v1429 = vxor.u32 %v1351, 2147483648
  %v1430 = vxor.u32 %v1353, 2147483648
  %v1431 = vxor.u32 %v1356, 2147483648
  %v1432 = vxor.u32 %v1358, 2147483648
  %v1433 = vxor.u32 %v1361, 2147483648
  %v1434 = vxor.u32 %v1363, 2147483648
  %v1435 = vxor.u32 %v1366, 2147483648
  %v1436 = vxor.u32 %v1368, 2147483648
  %v1437 = vxor.u32 %v1371, 2147483648
  %v1438 = vxor.u32 %v1373, 2147483648
  %v1439 = vmul.f32 %v1375, 1.442695
  %v1440 = vpow.pop %v1439
  %v1441 = vmul.f32 %v1376, 1.442695
  %v1442 = vpow.pop %v1441
  %v1443 = vmul.f32 %v1377, 1.442695
  %v1444 = vpow.pop %v1443
  %v1445 = vmul.f32 %v1378, 1.442695
  %v1446 = vpow.pop %v1445
  %v1447 = vmul.f32 %v1379, 1.442695
  %v1448 = vpow.pop %v1447
  %v1449 = vmul.f32 %v1380, 1.442695
  %v1450 = vpow.pop %v1449
  %v1451 = vmul.f32 %v1381, 1.442695
  %v1452 = vpow.pop %v1451
  %v1453 = vmul.f32 %v1382, 1.442695
  %v1454 = vpow.pop %v1453
  %v1455 = vmul.f32 %v1383, 1.442695
  %v1456 = vpow.pop %v1455
  %v1457 = vmul.f32 %v1384, 1.442695
  %v1458 = vpow.pop %v1457
  %v1459 = vmul.f32 %v1385, 1.442695
  %v1460 = vpow.pop %v1459
  %v1461 = vmul.f32 %v1386, 1.442695
  %v1462 = vpow.pop %v1461
  %v1463 = vmul.f32 %v1387, 1.442695
  %v1464 = vpow.pop %v1463
  %v1465 = vmul.f32 %v1388, 1.442695
  %v1466 = vpow.pop %v1465
  %v1467 = vmul.f32 %v1389, 1.442695
  %v1468 = vpow.pop %v1467
  %v1469 = vmul.f32 %v1390, 1.442695
  %v1470 = vpow.pop %v1469
  %v1471 = vmul.f32 %v1391, 1.442695
  %v1472 = vpow.pop %v1471
  %v1473 = vmul.f32 %v1392, 1.442695
  %v1474 = vpow.pop %v1473
  %v1475 = vmul.f32 %v1393, 1.442695
  %v1476 = vpow.pop %v1475
  %v1477 = vmul.f32 %v1394, 1.442695
  %v1478 = vpow.pop %v1477
  %v1479 = vmul.f32 %v1395, 1.442695
  %v1480 = vpow.pop %v1479
  %v1481 = vmul.f32 %v1396, 1.442695
  %v1482 = vpow.pop %v1481
  %v1483 = vmul.f32 %v1397, 1.442695
  %v1484 = vpow.pop %v1483
  %v1485 = vmul.f32 %v1398, 1.442695
  %v1486 = vpow.pop %v1485
  %v1487 = vmul.f32 %v1399, 1.442695
  %v1488 = vpow.pop %v1487
  %v1489 = vmul.f32 %v1400, 1.442695
  %v1490 = vpow.pop %v1489
  %v1491 = vmul.f32 %v1401, 1.442695
  %v1492 = vpow.pop %v1491
  %v1493 = vmul.f32 %v1402, 1.442695
  %v1494 = vpow.pop %v1493
  %v1495 = vmul.f32 %v1403, 1.442695
  %v1496 = vpow.pop %v1495
  %v1497 = vmul.f32 %v1404, 1.442695
  %v1498 = vpow.pop %v1497
  %v1499 = vmul.f32 %v1405, 1.442695
  %v1500 = vpow.pop %v1499
  %v1501 = vmul.f32 %v1406, 1.442695
  %v1502 = vpow.pop %v1501
  %v1503 = vmul.f32 %v1407, 1.442695
  %v1504 = vpow.pop %v1503
  %v1505 = vmul.f32 %v1408, 1.442695
  %v1506 = vpow.pop %v1505
  %v1507 = vmul.f32 %v1409, 1.442695
  %v1508 = vpow.pop %v1507
  %v1509 = vmul.f32 %v1410, 1.442695
  %v1510 = vpow.pop %v1509
  %v1511 = vmul.f32 %v1411, 1.442695
  %v1512 = vpow.pop %v1511
  %v1513 = vmul.f32 %v1412, 1.442695
  %v1514 = vpow.pop %v1513
  %v1515 = vmul.f32 %v1413, 1.442695
  %v1516 = vpow.pop %v1515
  %v1517 = vmul.f32 %v1414, 1.442695
  %v1518 = vpow.pop %v1517
  %v1519 = vmul.f32 %v1415, 1.442695
  %v1520 = vpow.pop %v1519
  %v1521 = vmul.f32 %v1416, 1.442695
  %v1522 = vpow.pop %v1521
  %v1523 = vmul.f32 %v1417, 1.442695
  %v1524 = vpow.pop %v1523
  %v1525 = vmul.f32 %v1418, 1.442695
  %v1526 = vpow.pop %v1525
  %v1527 = vmul.f32 %v1419, 1.442695
  %v1528 = vpow.pop %v1527
  %v1529 = vmul.f32 %v1420, 1.442695
  %v1530 = vpow.pop %v1529
  %v1531 = vmul.f32 %v1421, 1.442695
  %v1532 = vpow.pop %v1531
  %v1533 = vmul.f32 %v1422, 1.442695
  %v1534 = vpow.pop %v1533
  %v1535 = vmul.f32 %v1423, 1.442695
  %v1536 = vpow.pop %v1535
  %v1537 = vmul.f32 %v1424, 1.442695
  %v1538 = vpow.pop %v1537
  %v1539 = vmul.f32 %v1425, 1.442695
  %v1540 = vpow.pop %v1539
  %v1541 = vmul.f32 %v1426, 1.442695
  %v1542 = vpow.pop %v1541
  %v1543 = vmul.f32 %v1427, 1.442695
  %v1544 = vpow.pop %v1543
  %v1545 = vmul.f32 %v1428, 1.442695
  %v1546 = vpow.pop %v1545
  %v1547 = vmul.f32 %v1429, 1.442695
  %v1548 = vpow.pop %v1547
  %v1549 = vmul.f32 %v1430, 1.442695
  %v1550 = vpow.pop %v1549
  %v1551 = vmul.f32 %v1431, 1.442695
  %v1552 = vpow.pop %v1551
  %v1553 = vmul.f32 %v1432, 1.442695
  %v1554 = vpow.pop %v1553
  %v1555 = vmul.f32 %v1433, 1.442695
  %v1556 = vpow.pop %v1555
  %v1557 = vmul.f32 %v1434, 1.442695
  %v1558 = vpow.pop %v1557
  %v1559 = vmul.f32 %v1435, 1.442695
  %v1560 = vpow.pop %v1559
  %v1561 = vmul.f32 %v1436, 1.442695
  %v1562 = vpow.pop %v1561
  %v1563 = vmul.f32 %v1437, 1.442695
  %v1564 = vpow.pop %v1563
  %v1565 = vmul.f32 %v1438, 1.442695
  %v1566 = vpow.pop %v1565
  %v1567 = vadd.f32 %v1440, 1.0
  %v1568 = vadd.f32 %v1442, 1.0
  %v1569 = vadd.f32 %v1444, 1.0
  %v1570 = vadd.f32 %v1446, 1.0
  %v1571 = vadd.f32 %v1448, 1.0
  %v1572 = vadd.f32 %v1450, 1.0
  %v1573 = vadd.f32 %v1452, 1.0
  %v1574 = vadd.f32 %v1454, 1.0
  %v1575 = vadd.f32 %v1456, 1.0
  %v1576 = vadd.f32 %v1458, 1.0
  %v1577 = vadd.f32 %v1460, 1.0
  %v1578 = vadd.f32 %v1462, 1.0
  %v1579 = vadd.f32 %v1464, 1.0
  %v1580 = vadd.f32 %v1466, 1.0
  %v1581 = vadd.f32 %v1468, 1.0
  %v1582 = vadd.f32 %v1470, 1.0
  %v1583 = vadd.f32 %v1472, 1.0
  %v1584 = vadd.f32 %v1474, 1.0
  %v1585 = vadd.f32 %v1476, 1.0
  %v1586 = vadd.f32 %v1478, 1.0
  %v1587 = vadd.f32 %v1480, 1.0
  %v1588 = vadd.f32 %v1482, 1.0
  %v1589 = vadd.f32 %v1484, 1.0
  %v1590 = vadd.f32 %v1486, 1.0
  %v1591 = vadd.f32 %v1488, 1.0
  %v1592 = vadd.f32 %v1490, 1.0
  %v1593 = vadd.f32 %v1492, 1.0
  %v1594 = vadd.f32 %v1494, 1.0
  %v1595 = vadd.f32 %v1496, 1.0
  %v1596 = vadd.f32 %v1498, 1.0
  %v1597 = vadd.f32 %v1500, 1.0
  %v1598 = vadd.f32 %v1502, 1.0
  %v1599 = vadd.f32 %v1504, 1.0
  %v1600 = vadd.f32 %v1506, 1.0
  %v1601 = vadd.f32 %v1508, 1.0
  %v1602 = vadd.f32 %v1510, 1.0
  %v1603 = vadd.f32 %v1512, 1.0
  %v1604 = vadd.f32 %v1514, 1.0
  %v1605 = vadd.f32 %v1516, 1.0
  %v1606 = vadd.f32 %v1518, 1.0
  %v1607 = vadd.f32 %v1520, 1.0
  %v1608 = vadd.f32 %v1522, 1.0
  %v1609 = vadd.f32 %v1524, 1.0
  %v1610 = vadd.f32 %v1526, 1.0
  %v1611 = vadd.f32 %v1528, 1.0
  %v1612 = vadd.f32 %v1530, 1.0
  %v1613 = vadd.f32 %v1532, 1.0
  %v1614 = vadd.f32 %v1534, 1.0
  %v1615 = vadd.f32 %v1536, 1.0
  %v1616 = vadd.f32 %v1538, 1.0
  %v1617 = vadd.f32 %v1540, 1.0
  %v1618 = vadd.f32 %v1542, 1.0
  %v1619 = vadd.f32 %v1544, 1.0
  %v1620 = vadd.f32 %v1546, 1.0
  %v1621 = vadd.f32 %v1548, 1.0
  %v1622 = vadd.f32 %v1550, 1.0
  %v1623 = vadd.f32 %v1552, 1.0
  %v1624 = vadd.f32 %v1554, 1.0
  %v1625 = vadd.f32 %v1556, 1.0
  %v1626 = vadd.f32 %v1558, 1.0
  %v1627 = vadd.f32 %v1560, 1.0
  %v1628 = vadd.f32 %v1562, 1.0
  %v1629 = vadd.f32 %v1564, 1.0
  %v1630 = vadd.f32 %v1566, 1.0
  %v1631 = vrcp.pop %v1567
  %v1632 = vmul.f32 %v1567, %v1631
  %v1633 = vsub.f32 1.0, %v1632
  %v1634 = vmul.f32 %v1631, %v1633
  %v1635 = vadd.f32 %v1631, %v1634
  %vm1636 = vweird.f32 %v1567
  %vm1637 = vweird.f32 %v1631
  %vm1638 = vmor %vm1636, %vm1637
  %v1639 = vsel %vm1638, %v1631, %v1635
  %v1640 = vand.u32 2147483647, %v1567
  %vm1641 = vcmp.eq.f32.partialorder %v1640, 8.507059e+37
  %v1642 = vand.u32 %v1567, 2147483648
  %v1643 = vor.u32 1.1754944e-38, %v1642
  %v1644 = vsel %vm1641, %v1643, %v1639
  %v1645 = vmul.f32 1.0, %v1644
  %v1646 = vrcp.pop %v1568
  %v1647 = vmul.f32 %v1568, %v1646
  %v1648 = vsub.f32 1.0, %v1647
  %v1649 = vmul.f32 %v1646, %v1648
  %v1650 = vadd.f32 %v1646, %v1649
  %vm1651 = vweird.f32 %v1568
  %vm1652 = vweird.f32 %v1646
  %vm1653 = vmor %vm1651, %vm1652
  %v1654 = vsel %vm1653, %v1646, %v1650
  %v1655 = vand.u32 2147483647, %v1568
  %vm1656 = vcmp.eq.f32.partialorder %v1655, 8.507059e+37
  %v1657 = vand.u32 %v1568, 2147483648
  %v1658 = vor.u32 1.1754944e-38, %v1657
  %v1659 = vsel %vm1656, %v1658, %v1654
  %v1660 = vmul.f32 1.0, %v1659
  %v1661 = vrcp.pop %v1569
  %v1662 = vmul.f32 %v1569, %v1661
  %v1663 = vsub.f32 1.0, %v1662
  %v1664 = vmul.f32 %v1661, %v1663
  %v1665 = vadd.f32 %v1661, %v1664
  %vm1666 = vweird.f32 %v1569
  %vm1667 = vweird.f32 %v1661
  %vm1668 = vmor %vm1666, %vm1667
  %v1669 = vsel %vm1668, %v1661, %v1665
  %v1670 = vand.u32 2147483647, %v1569
  %vm1671 = vcmp.eq.f32.partialorder %v1670, 8.507059e+37
  %v1672 = vand.u32 %v1569, 2147483648
  %v1673 = vor.u32 1.1754944e-38, %v1672
  %v1674 = vsel %vm1671, %v1673, %v1669
  %v1675 = vmul.f32 1.0, %v1674
  %v1676 = vrcp.pop %v1570
  %v1677 = vmul.f32 %v1570, %v1676
  %v1678 = vsub.f32 1.0, %v1677
  %v1679 = vmul.f32 %v1676, %v1678
  %v1680 = vadd.f32 %v1676, %v1679
  %vm1681 = vweird.f32 %v1570
  %vm1682 = vweird.f32 %v1676
  %vm1683 = vmor %vm1681, %vm1682
  %v1684 = vsel %vm1683, %v1676, %v1680
  %v1685 = vand.u32 2147483647, %v1570
  %vm1686 = vcmp.eq.f32.partialorder %v1685, 8.507059e+37
  %v1687 = vand.u32 %v1570, 2147483648
  %v1688 = vor.u32 1.1754944e-38, %v1687
  %v1689 = vsel %vm1686, %v1688, %v1684
  %v1690 = vmul.f32 1.0, %v1689
  %v1691 = vrcp.pop %v1571
  %v1692 = vmul.f32 %v1571, %v1691
  %v1693 = vsub.f32 1.0, %v1692
  %v1694 = vmul.f32 %v1691, %v1693
  %v1695 = vadd.f32 %v1691, %v1694
  %vm1696 = vweird.f32 %v1571
  %vm1697 = vweird.f32 %v1691
  %vm1698 = vmor %vm1696, %vm1697
  %v1699 = vsel %vm1698, %v1691, %v1695
  %v1700 = vand.u32 2147483647, %v1571
  %vm1701 = vcmp.eq.f32.partialorder %v1700, 8.507059e+37
  %v1702 = vand.u32 %v1571, 2147483648
  %v1703 = vor.u32 1.1754944e-38, %v1702
  %v1704 = vsel %vm1701, %v1703, %v1699
  %v1705 = vmul.f32 1.0, %v1704
  %v1706 = vrcp.pop %v1572
  %v1707 = vmul.f32 %v1572, %v1706
  %v1708 = vsub.f32 1.0, %v1707
  %v1709 = vmul.f32 %v1706, %v1708
  %v1710 = vadd.f32 %v1706, %v1709
  %vm1711 = vweird.f32 %v1572
  %vm1712 = vweird.f32 %v1706
  %vm1713 = vmor %vm1711, %vm1712
  %v1714 = vsel %vm1713, %v1706, %v1710
  %v1715 = vand.u32 2147483647, %v1572
  %vm1716 = vcmp.eq.f32.partialorder %v1715, 8.507059e+37
  %v1717 = vand.u32 %v1572, 2147483648
  %v1718 = vor.u32 1.1754944e-38, %v1717
  %v1719 = vsel %vm1716, %v1718, %v1714
  %v1720 = vmul.f32 1.0, %v1719
  %v1721 = vrcp.pop %v1573
  %v1722 = vmul.f32 %v1573, %v1721
  %v1723 = vsub.f32 1.0, %v1722
  %v1724 = vmul.f32 %v1721, %v1723
  %v1725 = vadd.f32 %v1721, %v1724
  %vm1726 = vweird.f32 %v1573
  %vm1727 = vweird.f32 %v1721
  %vm1728 = vmor %vm1726, %vm1727
  %v1729 = vsel %vm1728, %v1721, %v1725
  %v1730 = vand.u32 2147483647, %v1573
  %vm1731 = vcmp.eq.f32.partialorder %v1730, 8.507059e+37
  %v1732 = vand.u32 %v1573, 2147483648
  %v1733 = vor.u32 1.1754944e-38, %v1732
  %v1734 = vsel %vm1731, %v1733, %v1729
  %v1735 = vmul.f32 1.0, %v1734
  %v1736 = vrcp.pop %v1574
  %v1737 = vmul.f32 %v1574, %v1736
  %v1738 = vsub.f32 1.0, %v1737
  %v1739 = vmul.f32 %v1736, %v1738
  %v1740 = vadd.f32 %v1736, %v1739
  %vm1741 = vweird.f32 %v1574
  %vm1742 = vweird.f32 %v1736
  %vm1743 = vmor %vm1741, %vm1742
  %v1744 = vsel %vm1743, %v1736, %v1740
  %v1745 = vand.u32 2147483647, %v1574
  %vm1746 = vcmp.eq.f32.partialorder %v1745, 8.507059e+37
  %v1747 = vand.u32 %v1574, 2147483648
  %v1748 = vor.u32 1.1754944e-38, %v1747
  %v1749 = vsel %vm1746, %v1748, %v1744
  %v1750 = vmul.f32 1.0, %v1749
  %v1751 = vrcp.pop %v1575
  %v1752 = vmul.f32 %v1575, %v1751
  %v1753 = vsub.f32 1.0, %v1752
  %v1754 = vmul.f32 %v1751, %v1753
  %v1755 = vadd.f32 %v1751, %v1754
  %vm1756 = vweird.f32 %v1575
  %vm1757 = vweird.f32 %v1751
  %vm1758 = vmor %vm1756, %vm1757
  %v1759 = vsel %vm1758, %v1751, %v1755
  %v1760 = vand.u32 2147483647, %v1575
  %vm1761 = vcmp.eq.f32.partialorder %v1760, 8.507059e+37
  %v1762 = vand.u32 %v1575, 2147483648
  %v1763 = vor.u32 1.1754944e-38, %v1762
  %v1764 = vsel %vm1761, %v1763, %v1759
  %v1765 = vmul.f32 1.0, %v1764
  %v1766 = vrcp.pop %v1576
  %v1767 = vmul.f32 %v1576, %v1766
  %v1768 = vsub.f32 1.0, %v1767
  %v1769 = vmul.f32 %v1766, %v1768
  %v1770 = vadd.f32 %v1766, %v1769
  %vm1771 = vweird.f32 %v1576
  %vm1772 = vweird.f32 %v1766
  %vm1773 = vmor %vm1771, %vm1772
  %v1774 = vsel %vm1773, %v1766, %v1770
  %v1775 = vand.u32 2147483647, %v1576
  %vm1776 = vcmp.eq.f32.partialorder %v1775, 8.507059e+37
  %v1777 = vand.u32 %v1576, 2147483648
  %v1778 = vor.u32 1.1754944e-38, %v1777
  %v1779 = vsel %vm1776, %v1778, %v1774
  %v1780 = vmul.f32 1.0, %v1779
  %v1781 = vrcp.pop %v1577
  %v1782 = vmul.f32 %v1577, %v1781
  %v1783 = vsub.f32 1.0, %v1782
  %v1784 = vmul.f32 %v1781, %v1783
  %v1785 = vadd.f32 %v1781, %v1784
  %vm1786 = vweird.f32 %v1577
  %vm1787 = vweird.f32 %v1781
  %vm1788 = vmor %vm1786, %vm1787
  %v1789 = vsel %vm1788, %v1781, %v1785
  %v1790 = vand.u32 2147483647, %v1577
  %vm1791 = vcmp.eq.f32.partialorder %v1790, 8.507059e+37
  %v1792 = vand.u32 %v1577, 2147483648
  %v1793 = vor.u32 1.1754944e-38, %v1792
  %v1794 = vsel %vm1791, %v1793, %v1789
  %v1795 = vmul.f32 1.0, %v1794
  %v1796 = vrcp.pop %v1578
  %v1797 = vmul.f32 %v1578, %v1796
  %v1798 = vsub.f32 1.0, %v1797
  %v1799 = vmul.f32 %v1796, %v1798
  %v1800 = vadd.f32 %v1796, %v1799
  %vm1801 = vweird.f32 %v1578
  %vm1802 = vweird.f32 %v1796
  %vm1803 = vmor %vm1801, %vm1802
  %v1804 = vsel %vm1803, %v1796, %v1800
  %v1805 = vand.u32 2147483647, %v1578
  %vm1806 = vcmp.eq.f32.partialorder %v1805, 8.507059e+37
  %v1807 = vand.u32 %v1578, 2147483648
  %v1808 = vor.u32 1.1754944e-38, %v1807
  %v1809 = vsel %vm1806, %v1808, %v1804
  %v1810 = vmul.f32 1.0, %v1809
  %v1811 = vrcp.pop %v1579
  %v1812 = vmul.f32 %v1579, %v1811
  %v1813 = vsub.f32 1.0, %v1812
  %v1814 = vmul.f32 %v1811, %v1813
  %v1815 = vadd.f32 %v1811, %v1814
  %vm1816 = vweird.f32 %v1579
  %vm1817 = vweird.f32 %v1811
  %vm1818 = vmor %vm1816, %vm1817
  %v1819 = vsel %vm1818, %v1811, %v1815
  %v1820 = vand.u32 2147483647, %v1579
  %vm1821 = vcmp.eq.f32.partialorder %v1820, 8.507059e+37
  %v1822 = vand.u32 %v1579, 2147483648
  %v1823 = vor.u32 1.1754944e-38, %v1822
  %v1824 = vsel %vm1821, %v1823, %v1819
  %v1825 = vmul.f32 1.0, %v1824
  %v1826 = vrcp.pop %v1580
  %v1827 = vmul.f32 %v1580, %v1826
  %v1828 = vsub.f32 1.0, %v1827
  %v1829 = vmul.f32 %v1826, %v1828
  %v1830 = vadd.f32 %v1826, %v1829
  %vm1831 = vweird.f32 %v1580
  %vm1832 = vweird.f32 %v1826
  %vm1833 = vmor %vm1831, %vm1832
  %v1834 = vsel %vm1833, %v1826, %v1830
  %v1835 = vand.u32 2147483647, %v1580
  %vm1836 = vcmp.eq.f32.partialorder %v1835, 8.507059e+37
  %v1837 = vand.u32 %v1580, 2147483648
  %v1838 = vor.u32 1.1754944e-38, %v1837
  %v1839 = vsel %vm1836, %v1838, %v1834
  %v1840 = vmul.f32 1.0, %v1839
  %v1841 = vrcp.pop %v1581
  %v1842 = vmul.f32 %v1581, %v1841
  %v1843 = vsub.f32 1.0, %v1842
  %v1844 = vmul.f32 %v1841, %v1843
  %v1845 = vadd.f32 %v1841, %v1844
  %vm1846 = vweird.f32 %v1581
  %vm1847 = vweird.f32 %v1841
  %vm1848 = vmor %vm1846, %vm1847
  %v1849 = vsel %vm1848, %v1841, %v1845
  %v1850 = vand.u32 2147483647, %v1581
  %vm1851 = vcmp.eq.f32.partialorder %v1850, 8.507059e+37
  %v1852 = vand.u32 %v1581, 2147483648
  %v1853 = vor.u32 1.1754944e-38, %v1852
  %v1854 = vsel %vm1851, %v1853, %v1849
  %v1855 = vmul.f32 1.0, %v1854
  %v1856 = vrcp.pop %v1582
  %v1857 = vmul.f32 %v1582, %v1856
  %v1858 = vsub.f32 1.0, %v1857
  %v1859 = vmul.f32 %v1856, %v1858
  %v1860 = vadd.f32 %v1856, %v1859
  %vm1861 = vweird.f32 %v1582
  %vm1862 = vweird.f32 %v1856
  %vm1863 = vmor %vm1861, %vm1862
  %v1864 = vsel %vm1863, %v1856, %v1860
  %v1865 = vand.u32 2147483647, %v1582
  %vm1866 = vcmp.eq.f32.partialorder %v1865, 8.507059e+37
  %v1867 = vand.u32 %v1582, 2147483648
  %v1868 = vor.u32 1.1754944e-38, %v1867
  %v1869 = vsel %vm1866, %v1868, %v1864
  %v1870 = vmul.f32 1.0, %v1869
  %v1871 = vrcp.pop %v1583
  %v1872 = vmul.f32 %v1583, %v1871
  %v1873 = vsub.f32 1.0, %v1872
  %v1874 = vmul.f32 %v1871, %v1873
  %v1875 = vadd.f32 %v1871, %v1874
  %vm1876 = vweird.f32 %v1583
  %vm1877 = vweird.f32 %v1871
  %vm1878 = vmor %vm1876, %vm1877
  %v1879 = vsel %vm1878, %v1871, %v1875
  %v1880 = vand.u32 2147483647, %v1583
  %vm1881 = vcmp.eq.f32.partialorder %v1880, 8.507059e+37
  %v1882 = vand.u32 %v1583, 2147483648
  %v1883 = vor.u32 1.1754944e-38, %v1882
  %v1884 = vsel %vm1881, %v1883, %v1879
  %v1885 = vmul.f32 1.0, %v1884
  %v1886 = vrcp.pop %v1584
  %v1887 = vmul.f32 %v1584, %v1886
  %v1888 = vsub.f32 1.0, %v1887
  %v1889 = vmul.f32 %v1886, %v1888
  %v1890 = vadd.f32 %v1886, %v1889
  %vm1891 = vweird.f32 %v1584
  %vm1892 = vweird.f32 %v1886
  %vm1893 = vmor %vm1891, %vm1892
  %v1894 = vsel %vm1893, %v1886, %v1890
  %v1895 = vand.u32 2147483647, %v1584
  %vm1896 = vcmp.eq.f32.partialorder %v1895, 8.507059e+37
  %v1897 = vand.u32 %v1584, 2147483648
  %v1898 = vor.u32 1.1754944e-38, %v1897
  %v1899 = vsel %vm1896, %v1898, %v1894
  %v1900 = vmul.f32 1.0, %v1899
  %v1901 = vrcp.pop %v1585
  %v1902 = vmul.f32 %v1585, %v1901
  %v1903 = vsub.f32 1.0, %v1902
  %v1904 = vmul.f32 %v1901, %v1903
  %v1905 = vadd.f32 %v1901, %v1904
  %vm1906 = vweird.f32 %v1585
  %vm1907 = vweird.f32 %v1901
  %vm1908 = vmor %vm1906, %vm1907
  %v1909 = vsel %vm1908, %v1901, %v1905
  %v1910 = vand.u32 2147483647, %v1585
  %vm1911 = vcmp.eq.f32.partialorder %v1910, 8.507059e+37
  %v1912 = vand.u32 %v1585, 2147483648
  %v1913 = vor.u32 1.1754944e-38, %v1912
  %v1914 = vsel %vm1911, %v1913, %v1909
  %v1915 = vmul.f32 1.0, %v1914
  %v1916 = vrcp.pop %v1586
  %v1917 = vmul.f32 %v1586, %v1916
  %v1918 = vsub.f32 1.0, %v1917
  %v1919 = vmul.f32 %v1916, %v1918
  %v1920 = vadd.f32 %v1916, %v1919
  %vm1921 = vweird.f32 %v1586
  %vm1922 = vweird.f32 %v1916
  %vm1923 = vmor %vm1921, %vm1922
  %v1924 = vsel %vm1923, %v1916, %v1920
  %v1925 = vand.u32 2147483647, %v1586
  %vm1926 = vcmp.eq.f32.partialorder %v1925, 8.507059e+37
  %v1927 = vand.u32 %v1586, 2147483648
  %v1928 = vor.u32 1.1754944e-38, %v1927
  %v1929 = vsel %vm1926, %v1928, %v1924
  %v1930 = vmul.f32 1.0, %v1929
  %v1931 = vrcp.pop %v1587
  %v1932 = vmul.f32 %v1587, %v1931
  %v1933 = vsub.f32 1.0, %v1932
  %v1934 = vmul.f32 %v1931, %v1933
  %v1935 = vadd.f32 %v1931, %v1934
  %vm1936 = vweird.f32 %v1587
  %vm1937 = vweird.f32 %v1931
  %vm1938 = vmor %vm1936, %vm1937
  %v1939 = vsel %vm1938, %v1931, %v1935
  %v1940 = vand.u32 2147483647, %v1587
  %vm1941 = vcmp.eq.f32.partialorder %v1940, 8.507059e+37
  %v1942 = vand.u32 %v1587, 2147483648
  %v1943 = vor.u32 1.1754944e-38, %v1942
  %v1944 = vsel %vm1941, %v1943, %v1939
  %v1945 = vmul.f32 1.0, %v1944
  %v1946 = vrcp.pop %v1588
  %v1947 = vmul.f32 %v1588, %v1946
  %v1948 = vsub.f32 1.0, %v1947
  %v1949 = vmul.f32 %v1946, %v1948
  %v1950 = vadd.f32 %v1946, %v1949
  %vm1951 = vweird.f32 %v1588
  %vm1952 = vweird.f32 %v1946
  %vm1953 = vmor %vm1951, %vm1952
  %v1954 = vsel %vm1953, %v1946, %v1950
  %v1955 = vand.u32 2147483647, %v1588
  %vm1956 = vcmp.eq.f32.partialorder %v1955, 8.507059e+37
  %v1957 = vand.u32 %v1588, 2147483648
  %v1958 = vor.u32 1.1754944e-38, %v1957
  %v1959 = vsel %vm1956, %v1958, %v1954
  %v1960 = vmul.f32 1.0, %v1959
  %v1961 = vrcp.pop %v1589
  %v1962 = vmul.f32 %v1589, %v1961
  %v1963 = vsub.f32 1.0, %v1962
  %v1964 = vmul.f32 %v1961, %v1963
  %v1965 = vadd.f32 %v1961, %v1964
  %vm1966 = vweird.f32 %v1589
  %vm1967 = vweird.f32 %v1961
  %vm1968 = vmor %vm1966, %vm1967
  %v1969 = vsel %vm1968, %v1961, %v1965
  %v1970 = vand.u32 2147483647, %v1589
  %vm1971 = vcmp.eq.f32.partialorder %v1970, 8.507059e+37
  %v1972 = vand.u32 %v1589, 2147483648
  %v1973 = vor.u32 1.1754944e-38, %v1972
  %v1974 = vsel %vm1971, %v1973, %v1969
  %v1975 = vmul.f32 1.0, %v1974
  %v1976 = vrcp.pop %v1590
  %v1977 = vmul.f32 %v1590, %v1976
  %v1978 = vsub.f32 1.0, %v1977
  %v1979 = vmul.f32 %v1976, %v1978
  %v1980 = vadd.f32 %v1976, %v1979
  %vm1981 = vweird.f32 %v1590
  %vm1982 = vweird.f32 %v1976
  %vm1983 = vmor %vm1981, %vm1982
  %v1984 = vsel %vm1983, %v1976, %v1980
  %v1985 = vand.u32 2147483647, %v1590
  %vm1986 = vcmp.eq.f32.partialorder %v1985, 8.507059e+37
  %v1987 = vand.u32 %v1590, 2147483648
  %v1988 = vor.u32 1.1754944e-38, %v1987
  %v1989 = vsel %vm1986, %v1988, %v1984
  %v1990 = vmul.f32 1.0, %v1989
  %v1991 = vrcp.pop %v1591
  %v1992 = vmul.f32 %v1591, %v1991
  %v1993 = vsub.f32 1.0, %v1992
  %v1994 = vmul.f32 %v1991, %v1993
  %v1995 = vadd.f32 %v1991, %v1994
  %vm1996 = vweird.f32 %v1591
  %vm1997 = vweird.f32 %v1991
  %vm1998 = vmor %vm1996, %vm1997
  %v1999 = vsel %vm1998, %v1991, %v1995
  %v2000 = vand.u32 2147483647, %v1591
  %vm2001 = vcmp.eq.f32.partialorder %v2000, 8.507059e+37
  %v2002 = vand.u32 %v1591, 2147483648
  %v2003 = vor.u32 1.1754944e-38, %v2002
  %v2004 = vsel %vm2001, %v2003, %v1999
  %v2005 = vmul.f32 1.0, %v2004
  %v2006 = vrcp.pop %v1592
  %v2007 = vmul.f32 %v1592, %v2006
  %v2008 = vsub.f32 1.0, %v2007
  %v2009 = vmul.f32 %v2006, %v2008
  %v2010 = vadd.f32 %v2006, %v2009
  %vm2011 = vweird.f32 %v1592
  %vm2012 = vweird.f32 %v2006
  %vm2013 = vmor %vm2011, %vm2012
  %v2014 = vsel %vm2013, %v2006, %v2010
  %v2015 = vand.u32 2147483647, %v1592
  %vm2016 = vcmp.eq.f32.partialorder %v2015, 8.507059e+37
  %v2017 = vand.u32 %v1592, 2147483648
  %v2018 = vor.u32 1.1754944e-38, %v2017
  %v2019 = vsel %vm2016, %v2018, %v2014
  %v2020 = vmul.f32 1.0, %v2019
  %v2021 = vrcp.pop %v1593
  %v2022 = vmul.f32 %v1593, %v2021
  %v2023 = vsub.f32 1.0, %v2022
  %v2024 = vmul.f32 %v2021, %v2023
  %v2025 = vadd.f32 %v2021, %v2024
  %vm2026 = vweird.f32 %v1593
  %vm2027 = vweird.f32 %v2021
  %vm2028 = vmor %vm2026, %vm2027
  %v2029 = vsel %vm2028, %v2021, %v2025
  %v2030 = vand.u32 2147483647, %v1593
  %vm2031 = vcmp.eq.f32.partialorder %v2030, 8.507059e+37
  %v2032 = vand.u32 %v1593, 2147483648
  %v2033 = vor.u32 1.1754944e-38, %v2032
  %v2034 = vsel %vm2031, %v2033, %v2029
  %v2035 = vmul.f32 1.0, %v2034
  %v2036 = vrcp.pop %v1594
  %v2037 = vmul.f32 %v1594, %v2036
  %v2038 = vsub.f32 1.0, %v2037
  %v2039 = vmul.f32 %v2036, %v2038
  %v2040 = vadd.f32 %v2036, %v2039
  %vm2041 = vweird.f32 %v1594
  %vm2042 = vweird.f32 %v2036
  %vm2043 = vmor %vm2041, %vm2042
  %v2044 = vsel %vm2043, %v2036, %v2040
  %v2045 = vand.u32 2147483647, %v1594
  %vm2046 = vcmp.eq.f32.partialorder %v2045, 8.507059e+37
  %v2047 = vand.u32 %v1594, 2147483648
  %v2048 = vor.u32 1.1754944e-38, %v2047
  %v2049 = vsel %vm2046, %v2048, %v2044
  %v2050 = vmul.f32 1.0, %v2049
  %v2051 = vrcp.pop %v1595
  %v2052 = vmul.f32 %v1595, %v2051
  %v2053 = vsub.f32 1.0, %v2052
  %v2054 = vmul.f32 %v2051, %v2053
  %v2055 = vadd.f32 %v2051, %v2054
  %vm2056 = vweird.f32 %v1595
  %vm2057 = vweird.f32 %v2051
  %vm2058 = vmor %vm2056, %vm2057
  %v2059 = vsel %vm2058, %v2051, %v2055
  %v2060 = vand.u32 2147483647, %v1595
  %vm2061 = vcmp.eq.f32.partialorder %v2060, 8.507059e+37
  %v2062 = vand.u32 %v1595, 2147483648
  %v2063 = vor.u32 1.1754944e-38, %v2062
  %v2064 = vsel %vm2061, %v2063, %v2059
  %v2065 = vmul.f32 1.0, %v2064
  %v2066 = vrcp.pop %v1596
  %v2067 = vmul.f32 %v1596, %v2066
  %v2068 = vsub.f32 1.0, %v2067
  %v2069 = vmul.f32 %v2066, %v2068
  %v2070 = vadd.f32 %v2066, %v2069
  %vm2071 = vweird.f32 %v1596
  %vm2072 = vweird.f32 %v2066
  %vm2073 = vmor %vm2071, %vm2072
  %v2074 = vsel %vm2073, %v2066, %v2070
  %v2075 = vand.u32 2147483647, %v1596
  %vm2076 = vcmp.eq.f32.partialorder %v2075, 8.507059e+37
  %v2077 = vand.u32 %v1596, 2147483648
  %v2078 = vor.u32 1.1754944e-38, %v2077
  %v2079 = vsel %vm2076, %v2078, %v2074
  %v2080 = vmul.f32 1.0, %v2079
  %v2081 = vrcp.pop %v1597
  %v2082 = vmul.f32 %v1597, %v2081
  %v2083 = vsub.f32 1.0, %v2082
  %v2084 = vmul.f32 %v2081, %v2083
  %v2085 = vadd.f32 %v2081, %v2084
  %vm2086 = vweird.f32 %v1597
  %vm2087 = vweird.f32 %v2081
  %vm2088 = vmor %vm2086, %vm2087
  %v2089 = vsel %vm2088, %v2081, %v2085
  %v2090 = vand.u32 2147483647, %v1597
  %vm2091 = vcmp.eq.f32.partialorder %v2090, 8.507059e+37
  %v2092 = vand.u32 %v1597, 2147483648
  %v2093 = vor.u32 1.1754944e-38, %v2092
  %v2094 = vsel %vm2091, %v2093, %v2089
  %v2095 = vmul.f32 1.0, %v2094
  %v2096 = vrcp.pop %v1598
  %v2097 = vmul.f32 %v1598, %v2096
  %v2098 = vsub.f32 1.0, %v2097
  %v2099 = vmul.f32 %v2096, %v2098
  %v2100 = vadd.f32 %v2096, %v2099
  %vm2101 = vweird.f32 %v1598
  %vm2102 = vweird.f32 %v2096
  %vm2103 = vmor %vm2101, %vm2102
  %v2104 = vsel %vm2103, %v2096, %v2100
  %v2105 = vand.u32 2147483647, %v1598
  %vm2106 = vcmp.eq.f32.partialorder %v2105, 8.507059e+37
  %v2107 = vand.u32 %v1598, 2147483648
  %v2108 = vor.u32 1.1754944e-38, %v2107
  %v2109 = vsel %vm2106, %v2108, %v2104
  %v2110 = vmul.f32 1.0, %v2109
  %v2111 = vrcp.pop %v1599
  %v2112 = vmul.f32 %v1599, %v2111
  %v2113 = vsub.f32 1.0, %v2112
  %v2114 = vmul.f32 %v2111, %v2113
  %v2115 = vadd.f32 %v2111, %v2114
  %vm2116 = vweird.f32 %v1599
  %vm2117 = vweird.f32 %v2111
  %vm2118 = vmor %vm2116, %vm2117
  %v2119 = vsel %vm2118, %v2111, %v2115
  %v2120 = vand.u32 2147483647, %v1599
  %vm2121 = vcmp.eq.f32.partialorder %v2120, 8.507059e+37
  %v2122 = vand.u32 %v1599, 2147483648
  %v2123 = vor.u32 1.1754944e-38, %v2122
  %v2124 = vsel %vm2121, %v2123, %v2119
  %v2125 = vmul.f32 1.0, %v2124
  %v2126 = vrcp.pop %v1600
  %v2127 = vmul.f32 %v1600, %v2126
  %v2128 = vsub.f32 1.0, %v2127
  %v2129 = vmul.f32 %v2126, %v2128
  %v2130 = vadd.f32 %v2126, %v2129
  %vm2131 = vweird.f32 %v1600
  %vm2132 = vweird.f32 %v2126
  %vm2133 = vmor %vm2131, %vm2132
  %v2134 = vsel %vm2133, %v2126, %v2130
  %v2135 = vand.u32 2147483647, %v1600
  %vm2136 = vcmp.eq.f32.partialorder %v2135, 8.507059e+37
  %v2137 = vand.u32 %v1600, 2147483648
  %v2138 = vor.u32 1.1754944e-38, %v2137
  %v2139 = vsel %vm2136, %v2138, %v2134
  %v2140 = vmul.f32 1.0, %v2139
  %v2141 = vrcp.pop %v1601
  %v2142 = vmul.f32 %v1601, %v2141
  %v2143 = vsub.f32 1.0, %v2142
  %v2144 = vmul.f32 %v2141, %v2143
  %v2145 = vadd.f32 %v2141, %v2144
  %vm2146 = vweird.f32 %v1601
  %vm2147 = vweird.f32 %v2141
  %vm2148 = vmor %vm2146, %vm2147
  %v2149 = vsel %vm2148, %v2141, %v2145
  %v2150 = vand.u32 2147483647, %v1601
  %vm2151 = vcmp.eq.f32.partialorder %v2150, 8.507059e+37
  %v2152 = vand.u32 %v1601, 2147483648
  %v2153 = vor.u32 1.1754944e-38, %v2152
  %v2154 = vsel %vm2151, %v2153, %v2149
  %v2155 = vmul.f32 1.0, %v2154
  %v2156 = vrcp.pop %v1602
  %v2157 = vmul.f32 %v1602, %v2156
  %v2158 = vsub.f32 1.0, %v2157
  %v2159 = vmul.f32 %v2156, %v2158
  %v2160 = vadd.f32 %v2156, %v2159
  %vm2161 = vweird.f32 %v1602
  %vm2162 = vweird.f32 %v2156
  %vm2163 = vmor %vm2161, %vm2162
  %v2164 = vsel %vm2163, %v2156, %v2160
  %v2165 = vand.u32 2147483647, %v1602
  %vm2166 = vcmp.eq.f32.partialorder %v2165, 8.507059e+37
  %v2167 = vand.u32 %v1602, 2147483648
  %v2168 = vor.u32 1.1754944e-38, %v2167
  %v2169 = vsel %vm2166, %v2168, %v2164
  %v2170 = vmul.f32 1.0, %v2169
  %v2171 = vrcp.pop %v1603
  %v2172 = vmul.f32 %v1603, %v2171
  %v2173 = vsub.f32 1.0, %v2172
  %v2174 = vmul.f32 %v2171, %v2173
  %v2175 = vadd.f32 %v2171, %v2174
  %vm2176 = vweird.f32 %v1603
  %vm2177 = vweird.f32 %v2171
  %vm2178 = vmor %vm2176, %vm2177
  %v2179 = vsel %vm2178, %v2171, %v2175
  %v2180 = vand.u32 2147483647, %v1603
  %vm2181 = vcmp.eq.f32.partialorder %v2180, 8.507059e+37
  %v2182 = vand.u32 %v1603, 2147483648
  %v2183 = vor.u32 1.1754944e-38, %v2182
  %v2184 = vsel %vm2181, %v2183, %v2179
  %v2185 = vmul.f32 1.0, %v2184
  %v2186 = vrcp.pop %v1604
  %v2187 = vmul.f32 %v1604, %v2186
  %v2188 = vsub.f32 1.0, %v2187
  %v2189 = vmul.f32 %v2186, %v2188
  %v2190 = vadd.f32 %v2186, %v2189
  %vm2191 = vweird.f32 %v1604
  %vm2192 = vweird.f32 %v2186
  %vm2193 = vmor %vm2191, %vm2192
  %v2194 = vsel %vm2193, %v2186, %v2190
  %v2195 = vand.u32 2147483647, %v1604
  %vm2196 = vcmp.eq.f32.partialorder %v2195, 8.507059e+37
  %v2197 = vand.u32 %v1604, 2147483648
  %v2198 = vor.u32 1.1754944e-38, %v2197
  %v2199 = vsel %vm2196, %v2198, %v2194
  %v2200 = vmul.f32 1.0, %v2199
  %v2201 = vrcp.pop %v1605
  %v2202 = vmul.f32 %v1605, %v2201
  %v2203 = vsub.f32 1.0, %v2202
  %v2204 = vmul.f32 %v2201, %v2203
  %v2205 = vadd.f32 %v2201, %v2204
  %vm2206 = vweird.f32 %v1605
  %vm2207 = vweird.f32 %v2201
  %vm2208 = vmor %vm2206, %vm2207
  %v2209 = vsel %vm2208, %v2201, %v2205
  %v2210 = vand.u32 2147483647, %v1605
  %vm2211 = vcmp.eq.f32.partialorder %v2210, 8.507059e+37
  %v2212 = vand.u32 %v1605, 2147483648
  %v2213 = vor.u32 1.1754944e-38, %v2212
  %v2214 = vsel %vm2211, %v2213, %v2209
  %v2215 = vmul.f32 1.0, %v2214
  %v2216 = vrcp.pop %v1606
  %v2217 = vmul.f32 %v1606, %v2216
  %v2218 = vsub.f32 1.0, %v2217
  %v2219 = vmul.f32 %v2216, %v2218
  %v2220 = vadd.f32 %v2216, %v2219
  %vm2221 = vweird.f32 %v1606
  %vm2222 = vweird.f32 %v2216
  %vm2223 = vmor %vm2221, %vm2222
  %v2224 = vsel %vm2223, %v2216, %v2220
  %v2225 = vand.u32 2147483647, %v1606
  %vm2226 = vcmp.eq.f32.partialorder %v2225, 8.507059e+37
  %v2227 = vand.u32 %v1606, 2147483648
  %v2228 = vor.u32 1.1754944e-38, %v2227
  %v2229 = vsel %vm2226, %v2228, %v2224
  %v2230 = vmul.f32 1.0, %v2229
  %v2231 = vrcp.pop %v1607
  %v2232 = vmul.f32 %v1607, %v2231
  %v2233 = vsub.f32 1.0, %v2232
  %v2234 = vmul.f32 %v2231, %v2233
  %v2235 = vadd.f32 %v2231, %v2234
  %vm2236 = vweird.f32 %v1607
  %vm2237 = vweird.f32 %v2231
  %vm2238 = vmor %vm2236, %vm2237
  %v2239 = vsel %vm2238, %v2231, %v2235
  %v2240 = vand.u32 2147483647, %v1607
  %vm2241 = vcmp.eq.f32.partialorder %v2240, 8.507059e+37
  %v2242 = vand.u32 %v1607, 2147483648
  %v2243 = vor.u32 1.1754944e-38, %v2242
  %v2244 = vsel %vm2241, %v2243, %v2239
  %v2245 = vmul.f32 1.0, %v2244
  %v2246 = vrcp.pop %v1608
  %v2247 = vmul.f32 %v1608, %v2246
  %v2248 = vsub.f32 1.0, %v2247
  %v2249 = vmul.f32 %v2246, %v2248
  %v2250 = vadd.f32 %v2246, %v2249
  %vm2251 = vweird.f32 %v1608
  %vm2252 = vweird.f32 %v2246
  %vm2253 = vmor %vm2251, %vm2252
  %v2254 = vsel %vm2253, %v2246, %v2250
  %v2255 = vand.u32 2147483647, %v1608
  %vm2256 = vcmp.eq.f32.partialorder %v2255, 8.507059e+37
  %v2257 = vand.u32 %v1608, 2147483648
  %v2258 = vor.u32 1.1754944e-38, %v2257
  %v2259 = vsel %vm2256, %v2258, %v2254
  %v2260 = vmul.f32 1.0, %v2259
  %v2261 = vrcp.pop %v1609
  %v2262 = vmul.f32 %v1609, %v2261
  %v2263 = vsub.f32 1.0, %v2262
  %v2264 = vmul.f32 %v2261, %v2263
  %v2265 = vadd.f32 %v2261, %v2264
  %vm2266 = vweird.f32 %v1609
  %vm2267 = vweird.f32 %v2261
  %vm2268 = vmor %vm2266, %vm2267
  %v2269 = vsel %vm2268, %v2261, %v2265
  %v2270 = vand.u32 2147483647, %v1609
  %vm2271 = vcmp.eq.f32.partialorder %v2270, 8.507059e+37
  %v2272 = vand.u32 %v1609, 2147483648
  %v2273 = vor.u32 1.1754944e-38, %v2272
  %v2274 = vsel %vm2271, %v2273, %v2269
  %v2275 = vmul.f32 1.0, %v2274
  %v2276 = vrcp.pop %v1610
  %v2277 = vmul.f32 %v1610, %v2276
  %v2278 = vsub.f32 1.0, %v2277
  %v2279 = vmul.f32 %v2276, %v2278
  %v2280 = vadd.f32 %v2276, %v2279
  %vm2281 = vweird.f32 %v1610
  %vm2282 = vweird.f32 %v2276
  %vm2283 = vmor %vm2281, %vm2282
  %v2284 = vsel %vm2283, %v2276, %v2280
  %v2285 = vand.u32 2147483647, %v1610
  %vm2286 = vcmp.eq.f32.partialorder %v2285, 8.507059e+37
  %v2287 = vand.u32 %v1610, 2147483648
  %v2288 = vor.u32 1.1754944e-38, %v2287
  %v2289 = vsel %vm2286, %v2288, %v2284
  %v2290 = vmul.f32 1.0, %v2289
  %v2291 = vrcp.pop %v1611
  %v2292 = vmul.f32 %v1611, %v2291
  %v2293 = vsub.f32 1.0, %v2292
  %v2294 = vmul.f32 %v2291, %v2293
  %v2295 = vadd.f32 %v2291, %v2294
  %vm2296 = vweird.f32 %v1611
  %vm2297 = vweird.f32 %v2291
  %vm2298 = vmor %vm2296, %vm2297
  %v2299 = vsel %vm2298, %v2291, %v2295
  %v2300 = vand.u32 2147483647, %v1611
  %vm2301 = vcmp.eq.f32.partialorder %v2300, 8.507059e+37
  %v2302 = vand.u32 %v1611, 2147483648
  %v2303 = vor.u32 1.1754944e-38, %v2302
  %v2304 = vsel %vm2301, %v2303, %v2299
  %v2305 = vmul.f32 1.0, %v2304
  %v2306 = vrcp.pop %v1612
  %v2307 = vmul.f32 %v1612, %v2306
  %v2308 = vsub.f32 1.0, %v2307
  %v2309 = vmul.f32 %v2306, %v2308
  %v2310 = vadd.f32 %v2306, %v2309
  %vm2311 = vweird.f32 %v1612
  %vm2312 = vweird.f32 %v2306
  %vm2313 = vmor %vm2311, %vm2312
  %v2314 = vsel %vm2313, %v2306, %v2310
  %v2315 = vand.u32 2147483647, %v1612
  %vm2316 = vcmp.eq.f32.partialorder %v2315, 8.507059e+37
  %v2317 = vand.u32 %v1612, 2147483648
  %v2318 = vor.u32 1.1754944e-38, %v2317
  %v2319 = vsel %vm2316, %v2318, %v2314
  %v2320 = vmul.f32 1.0, %v2319
  %v2321 = vrcp.pop %v1613
  %v2322 = vmul.f32 %v1613, %v2321
  %v2323 = vsub.f32 1.0, %v2322
  %v2324 = vmul.f32 %v2321, %v2323
  %v2325 = vadd.f32 %v2321, %v2324
  %vm2326 = vweird.f32 %v1613
  %vm2327 = vweird.f32 %v2321
  %vm2328 = vmor %vm2326, %vm2327
  %v2329 = vsel %vm2328, %v2321, %v2325
  %v2330 = vand.u32 2147483647, %v1613
  %vm2331 = vcmp.eq.f32.partialorder %v2330, 8.507059e+37
  %v2332 = vand.u32 %v1613, 2147483648
  %v2333 = vor.u32 1.1754944e-38, %v2332
  %v2334 = vsel %vm2331, %v2333, %v2329
  %v2335 = vmul.f32 1.0, %v2334
  %v2336 = vrcp.pop %v1614
  %v2337 = vmul.f32 %v1614, %v2336
  %v2338 = vsub.f32 1.0, %v2337
  %v2339 = vmul.f32 %v2336, %v2338
  %v2340 = vadd.f32 %v2336, %v2339
  %vm2341 = vweird.f32 %v1614
  %vm2342 = vweird.f32 %v2336
  %vm2343 = vmor %vm2341, %vm2342
  %v2344 = vsel %vm2343, %v2336, %v2340
  %v2345 = vand.u32 2147483647, %v1614
  %vm2346 = vcmp.eq.f32.partialorder %v2345, 8.507059e+37
  %v2347 = vand.u32 %v1614, 2147483648
  %v2348 = vor.u32 1.1754944e-38, %v2347
  %v2349 = vsel %vm2346, %v2348, %v2344
  %v2350 = vmul.f32 1.0, %v2349
  %v2351 = vrcp.pop %v1615
  %v2352 = vmul.f32 %v1615, %v2351
  %v2353 = vsub.f32 1.0, %v2352
  %v2354 = vmul.f32 %v2351, %v2353
  %v2355 = vadd.f32 %v2351, %v2354
  %vm2356 = vweird.f32 %v1615
  %vm2357 = vweird.f32 %v2351
  %vm2358 = vmor %vm2356, %vm2357
  %v2359 = vsel %vm2358, %v2351, %v2355
  %v2360 = vand.u32 2147483647, %v1615
  %vm2361 = vcmp.eq.f32.partialorder %v2360, 8.507059e+37
  %v2362 = vand.u32 %v1615, 2147483648
  %v2363 = vor.u32 1.1754944e-38, %v2362
  %v2364 = vsel %vm2361, %v2363, %v2359
  %v2365 = vmul.f32 1.0, %v2364
  %v2366 = vrcp.pop %v1616
  %v2367 = vmul.f32 %v1616, %v2366
  %v2368 = vsub.f32 1.0, %v2367
  %v2369 = vmul.f32 %v2366, %v2368
  %v2370 = vadd.f32 %v2366, %v2369
  %vm2371 = vweird.f32 %v1616
  %vm2372 = vweird.f32 %v2366
  %vm2373 = vmor %vm2371, %vm2372
  %v2374 = vsel %vm2373, %v2366, %v2370
  %v2375 = vand.u32 2147483647, %v1616
  %vm2376 = vcmp.eq.f32.partialorder %v2375, 8.507059e+37
  %v2377 = vand.u32 %v1616, 2147483648
  %v2378 = vor.u32 1.1754944e-38, %v2377
  %v2379 = vsel %vm2376, %v2378, %v2374
  %v2380 = vmul.f32 1.0, %v2379
  %v2381 = vrcp.pop %v1617
  %v2382 = vmul.f32 %v1617, %v2381
  %v2383 = vsub.f32 1.0, %v2382
  %v2384 = vmul.f32 %v2381, %v2383
  %v2385 = vadd.f32 %v2381, %v2384
  %vm2386 = vweird.f32 %v1617
  %vm2387 = vweird.f32 %v2381
  %vm2388 = vmor %vm2386, %vm2387
  %v2389 = vsel %vm2388, %v2381, %v2385
  %v2390 = vand.u32 2147483647, %v1617
  %vm2391 = vcmp.eq.f32.partialorder %v2390, 8.507059e+37
  %v2392 = vand.u32 %v1617, 2147483648
  %v2393 = vor.u32 1.1754944e-38, %v2392
  %v2394 = vsel %vm2391, %v2393, %v2389
  %v2395 = vmul.f32 1.0, %v2394
  %v2396 = vrcp.pop %v1618
  %v2397 = vmul.f32 %v1618, %v2396
  %v2398 = vsub.f32 1.0, %v2397
  %v2399 = vmul.f32 %v2396, %v2398
  %v2400 = vadd.f32 %v2396, %v2399
  %vm2401 = vweird.f32 %v1618
  %vm2402 = vweird.f32 %v2396
  %vm2403 = vmor %vm2401, %vm2402
  %v2404 = vsel %vm2403, %v2396, %v2400
  %v2405 = vand.u32 2147483647, %v1618
  %vm2406 = vcmp.eq.f32.partialorder %v2405, 8.507059e+37
  %v2407 = vand.u32 %v1618, 2147483648
  %v2408 = vor.u32 1.1754944e-38, %v2407
  %v2409 = vsel %vm2406, %v2408, %v2404
  %v2410 = vmul.f32 1.0, %v2409
  %v2411 = vrcp.pop %v1619
  %v2412 = vmul.f32 %v1619, %v2411
  %v2413 = vsub.f32 1.0, %v2412
  %v2414 = vmul.f32 %v2411, %v2413
  %v2415 = vadd.f32 %v2411, %v2414
  %vm2416 = vweird.f32 %v1619
  %vm2417 = vweird.f32 %v2411
  %vm2418 = vmor %vm2416, %vm2417
  %v2419 = vsel %vm2418, %v2411, %v2415
  %v2420 = vand.u32 2147483647, %v1619
  %vm2421 = vcmp.eq.f32.partialorder %v2420, 8.507059e+37
  %v2422 = vand.u32 %v1619, 2147483648
  %v2423 = vor.u32 1.1754944e-38, %v2422
  %v2424 = vsel %vm2421, %v2423, %v2419
  %v2425 = vmul.f32 1.0, %v2424
  %v2426 = vrcp.pop %v1620
  %v2427 = vmul.f32 %v1620, %v2426
  %v2428 = vsub.f32 1.0, %v2427
  %v2429 = vmul.f32 %v2426, %v2428
  %v2430 = vadd.f32 %v2426, %v2429
  %vm2431 = vweird.f32 %v1620
  %vm2432 = vweird.f32 %v2426
  %vm2433 = vmor %vm2431, %vm2432
  %v2434 = vsel %vm2433, %v2426, %v2430
  %v2435 = vand.u32 2147483647, %v1620
  %vm2436 = vcmp.eq.f32.partialorder %v2435, 8.507059e+37
  %v2437 = vand.u32 %v1620, 2147483648
  %v2438 = vor.u32 1.1754944e-38, %v2437
  %v2439 = vsel %vm2436, %v2438, %v2434
  %v2440 = vmul.f32 1.0, %v2439
  %v2441 = vrcp.pop %v1621
  %v2442 = vmul.f32 %v1621, %v2441
  %v2443 = vsub.f32 1.0, %v2442
  %v2444 = vmul.f32 %v2441, %v2443
  %v2445 = vadd.f32 %v2441, %v2444
  %vm2446 = vweird.f32 %v1621
  %vm2447 = vweird.f32 %v2441
  %vm2448 = vmor %vm2446, %vm2447
  %v2449 = vsel %vm2448, %v2441, %v2445
  %v2450 = vand.u32 2147483647, %v1621
  %vm2451 = vcmp.eq.f32.partialorder %v2450, 8.507059e+37
  %v2452 = vand.u32 %v1621, 2147483648
  %v2453 = vor.u32 1.1754944e-38, %v2452
  %v2454 = vsel %vm2451, %v2453, %v2449
  %v2455 = vmul.f32 1.0, %v2454
  %v2456 = vrcp.pop %v1622
  %v2457 = vmul.f32 %v1622, %v2456
  %v2458 = vsub.f32 1.0, %v2457
  %v2459 = vmul.f32 %v2456, %v2458
  %v2460 = vadd.f32 %v2456, %v2459
  %vm2461 = vweird.f32 %v1622
  %vm2462 = vweird.f32 %v2456
  %vm2463 = vmor %vm2461, %vm2462
  %v2464 = vsel %vm2463, %v2456, %v2460
  %v2465 = vand.u32 2147483647, %v1622
  %vm2466 = vcmp.eq.f32.partialorder %v2465, 8.507059e+37
  %v2467 = vand.u32 %v1622, 2147483648
  %v2468 = vor.u32 1.1754944e-38, %v2467
  %v2469 = vsel %vm2466, %v2468, %v2464
  %v2470 = vmul.f32 1.0, %v2469
  %v2471 = vrcp.pop %v1623
  %v2472 = vmul.f32 %v1623, %v2471
  %v2473 = vsub.f32 1.0, %v2472
  %v2474 = vmul.f32 %v2471, %v2473
  %v2475 = vadd.f32 %v2471, %v2474
  %vm2476 = vweird.f32 %v1623
  %vm2477 = vweird.f32 %v2471
  %vm2478 = vmor %vm2476, %vm2477
  %v2479 = vsel %vm2478, %v2471, %v2475
  %v2480 = vand.u32 2147483647, %v1623
  %vm2481 = vcmp.eq.f32.partialorder %v2480, 8.507059e+37
  %v2482 = vand.u32 %v1623, 2147483648
  %v2483 = vor.u32 1.1754944e-38, %v2482
  %v2484 = vsel %vm2481, %v2483, %v2479
  %v2485 = vmul.f32 1.0, %v2484
  %v2486 = vrcp.pop %v1624
  %v2487 = vmul.f32 %v1624, %v2486
  %v2488 = vsub.f32 1.0, %v2487
  %v2489 = vmul.f32 %v2486, %v2488
  %v2490 = vadd.f32 %v2486, %v2489
  %vm2491 = vweird.f32 %v1624
  %vm2492 = vweird.f32 %v2486
  %vm2493 = vmor %vm2491, %vm2492
  %v2494 = vsel %vm2493, %v2486, %v2490
  %v2495 = vand.u32 2147483647, %v1624
  %vm2496 = vcmp.eq.f32.partialorder %v2495, 8.507059e+37
  %v2497 = vand.u32 %v1624, 2147483648
  %v2498 = vor.u32 1.1754944e-38, %v2497
  %v2499 = vsel %vm2496, %v2498, %v2494
  %v2500 = vmul.f32 1.0, %v2499
  %v2501 = vrcp.pop %v1625
  %v2502 = vmul.f32 %v1625, %v2501
  %v2503 = vsub.f32 1.0, %v2502
  %v2504 = vmul.f32 %v2501, %v2503
  %v2505 = vadd.f32 %v2501, %v2504
  %vm2506 = vweird.f32 %v1625
  %vm2507 = vweird.f32 %v2501
  %vm2508 = vmor %vm2506, %vm2507
  %v2509 = vsel %vm2508, %v2501, %v2505
  %v2510 = vand.u32 2147483647, %v1625
  %vm2511 = vcmp.eq.f32.partialorder %v2510, 8.507059e+37
  %v2512 = vand.u32 %v1625, 2147483648
  %v2513 = vor.u32 1.1754944e-38, %v2512
  %v2514 = vsel %vm2511, %v2513, %v2509
  %v2515 = vmul.f32 1.0, %v2514
  %v2516 = vrcp.pop %v1626
  %v2517 = vmul.f32 %v1626, %v2516
  %v2518 = vsub.f32 1.0, %v2517
  %v2519 = vmul.f32 %v2516, %v2518
  %v2520 = vadd.f32 %v2516, %v2519
  %vm2521 = vweird.f32 %v1626
  %vm2522 = vweird.f32 %v2516
  %vm2523 = vmor %vm2521, %vm2522
  %v2524 = vsel %vm2523, %v2516, %v2520
  %v2525 = vand.u32 2147483647, %v1626
  %vm2526 = vcmp.eq.f32.partialorder %v2525, 8.507059e+37
  %v2527 = vand.u32 %v1626, 2147483648
  %v2528 = vor.u32 1.1754944e-38, %v2527
  %v2529 = vsel %vm2526, %v2528, %v2524
  %v2530 = vmul.f32 1.0, %v2529
  %v2531 = vrcp.pop %v1627
  %v2532 = vmul.f32 %v1627, %v2531
  %v2533 = vsub.f32 1.0, %v2532
  %v2534 = vmul.f32 %v2531, %v2533
  %v2535 = vadd.f32 %v2531, %v2534
  %vm2536 = vweird.f32 %v1627
  %vm2537 = vweird.f32 %v2531
  %vm2538 = vmor %vm2536, %vm2537
  %v2539 = vsel %vm2538, %v2531, %v2535
  %v2540 = vand.u32 2147483647, %v1627
  %vm2541 = vcmp.eq.f32.partialorder %v2540, 8.507059e+37
  %v2542 = vand.u32 %v1627, 2147483648
  %v2543 = vor.u32 1.1754944e-38, %v2542
  %v2544 = vsel %vm2541, %v2543, %v2539
  %v2545 = vmul.f32 1.0, %v2544
  %v2546 = vrcp.pop %v1628
  %v2547 = vmul.f32 %v1628, %v2546
  %v2548 = vsub.f32 1.0, %v2547
  %v2549 = vmul.f32 %v2546, %v2548
  %v2550 = vadd.f32 %v2546, %v2549
  %vm2551 = vweird.f32 %v1628
  %vm2552 = vweird.f32 %v2546
  %vm2553 = vmor %vm2551, %vm2552
  %v2554 = vsel %vm2553, %v2546, %v2550
  %v2555 = vand.u32 2147483647, %v1628
  %vm2556 = vcmp.eq.f32.partialorder %v2555, 8.507059e+37
  %v2557 = vand.u32 %v1628, 2147483648
  %v2558 = vor.u32 1.1754944e-38, %v2557
  %v2559 = vsel %vm2556, %v2558, %v2554
  %v2560 = vmul.f32 1.0, %v2559
  %v2561 = vrcp.pop %v1629
  %v2562 = vmul.f32 %v1629, %v2561
  %v2563 = vsub.f32 1.0, %v2562
  %v2564 = vmul.f32 %v2561, %v2563
  %v2565 = vadd.f32 %v2561, %v2564
  %vm2566 = vweird.f32 %v1629
  %vm2567 = vweird.f32 %v2561
  %vm2568 = vmor %vm2566, %vm2567
  %v2569 = vsel %vm2568, %v2561, %v2565
  %v2570 = vand.u32 2147483647, %v1629
  %vm2571 = vcmp.eq.f32.partialorder %v2570, 8.507059e+37
  %v2572 = vand.u32 %v1629, 2147483648
  %v2573 = vor.u32 1.1754944e-38, %v2572
  %v2574 = vsel %vm2571, %v2573, %v2569
  %v2575 = vmul.f32 1.0, %v2574
  %v2576 = vrcp.pop %v1630
  %v2577 = vmul.f32 %v1630, %v2576
  %v2578 = vsub.f32 1.0, %v2577
  %v2579 = vmul.f32 %v2576, %v2578
  %v2580 = vadd.f32 %v2576, %v2579
  %vm2581 = vweird.f32 %v1630
  %vm2582 = vweird.f32 %v2576
  %vm2583 = vmor %vm2581, %vm2582
  %v2584 = vsel %vm2583, %v2576, %v2580
  %v2585 = vand.u32 2147483647, %v1630
  %vm2586 = vcmp.eq.f32.partialorder %v2585, 8.507059e+37
  %v2587 = vand.u32 %v1630, 2147483648
  %v2588 = vor.u32 1.1754944e-38, %v2587
  %v2589 = vsel %vm2586, %v2588, %v2584
  %v2590 = vmul.f32 1.0, %v2589
  %v2591 = vmul.f32 %v1216, %v1645
  %v2592 = vmul.f32 %v1218, %v1660
  %v2593 = vmul.f32 %v1221, %v1675
  %v2594 = vmul.f32 %v1223, %v1690
  %v2595 = vmul.f32 %v1226, %v1705
  %v2596 = vmul.f32 %v1228, %v1720
  %v2597 = vmul.f32 %v1231, %v1735
  %v2598 = vmul.f32 %v1233, %v1750
  %v2599 = vmul.f32 %v1236, %v1765
  %v2600 = vmul.f32 %v1238, %v1780
  %v2601 = vmul.f32 %v1241, %v1795
  %v2602 = vmul.f32 %v1243, %v1810
  %v2603 = vmul.f32 %v1246, %v1825
  %v2604 = vmul.f32 %v1248, %v1840
  %v2605 = vmul.f32 %v1251, %v1855
  %v2606 = vmul.f32 %v1253, %v1870
  %v2607 = vmul.f32 %v1256, %v1885
  %v2608 = vmul.f32 %v1258, %v1900
  %v2609 = vmul.f32 %v1261, %v1915
  %v2610 = vmul.f32 %v1263, %v1930
  %v2611 = vmul.f32 %v1266, %v1945
  %v2612 = vmul.f32 %v1268, %v1960
  %v2613 = vmul.f32 %v1271, %v1975
  %v2614 = vmul.f32 %v1273, %v1990
  %v2615 = vmul.f32 %v1276, %v2005
  %v2616 = vmul.f32 %v1278, %v2020
  %v2617 = vmul.f32 %v1281, %v2035
  %v2618 = vmul.f32 %v1283, %v2050
  %v2619 = vmul.f32 %v1286, %v2065
  %v2620 = vmul.f32 %v1288, %v2080
  %v2621 = vmul.f32 %v1291, %v2095
  %v2622 = vmul.f32 %v1293, %v2110
  %v2623 = vmul.f32 %v1296, %v2125
  %v2624 = vmul.f32 %v1298, %v2140
  %v2625 = vmul.f32 %v1301, %v2155
  %v2626 = vmul.f32 %v1303, %v2170
  %v2627 = vmul.f32 %v1306, %v2185
  %v2628 = vmul.f32 %v1308, %v2200
  %v2629 = vmul.f32 %v1311, %v2215
  %v2630 = vmul.f32 %v1313, %v2230
  %v2631 = vmul.f32 %v1316, %v2245
  %v2632 = vmul.f32 %v1318, %v2260
  %v2633 = vmul.f32 %v1321, %v2275
  %v2634 = vmul.f32 %v1323, %v2290
  %v2635 = vmul.f32 %v1326, %v2305
  %v2636 = vmul.f32 %v1328, %v2320
  %v2637 = vmul.f32 %v1331, %v2335
  %v2638 = vmul.f32 %v1333, %v2350
  %v2639 = vmul.f32 %v1336, %v2365
  %v2640 = vmul.f32 %v1338, %v2380
  %v2641 = vmul.f32 %v1341, %v2395
  %v2642 = vmul.f32 %v1343, %v2410
  %v2643 = vmul.f32 %v1346, %v2425
  %v2644 = vmul.f32 %v1348, %v2440
  %v2645 = vmul.f32 %v1351, %v2455
  %v2646 = vmul.f32 %v1353, %v2470
  %v2647 = vmul.f32 %v1356, %v2485
  %v2648 = vmul.f32 %v1358, %v2500
  %v2649 = vmul.f32 %v1361, %v2515
  %v2650 = vmul.f32 %v1363, %v2530
  %v2651 = vmul.f32 %v1366, %v2545
  %v2652 = vmul.f32 %v1368, %v2560
  %v2653 = vmul.f32 %v1371, %v2575
  %v2654 = vmul.f32 %v1373, %v2590
  %v2655 = vpack.c.bf16 %v2591, %v2591
  %v2656 = vpack.c.bf16 %v2592, %v2592
  %v2657 = vpack.c.bf16 %v2593, %v2593
  %v2658 = vpack.c.bf16 %v2594, %v2594
  %v2659 = vpack.c.bf16 %v2595, %v2595
  %v2660 = vpack.c.bf16 %v2596, %v2596
  %v2661 = vpack.c.bf16 %v2597, %v2597
  %v2662 = vpack.c.bf16 %v2598, %v2598
  %v2663 = vpack.c.bf16 %v2599, %v2599
  %v2664 = vpack.c.bf16 %v2600, %v2600
  %v2665 = vpack.c.bf16 %v2601, %v2601
  %v2666 = vpack.c.bf16 %v2602, %v2602
  %v2667 = vpack.c.bf16 %v2603, %v2603
  %v2668 = vpack.c.bf16 %v2604, %v2604
  %v2669 = vpack.c.bf16 %v2605, %v2605
  %v2670 = vpack.c.bf16 %v2606, %v2606
  %v2671 = vpack.c.bf16 %v2607, %v2607
  %v2672 = vpack.c.bf16 %v2608, %v2608
  %v2673 = vpack.c.bf16 %v2609, %v2609
  %v2674 = vpack.c.bf16 %v2610, %v2610
  %v2675 = vpack.c.bf16 %v2611, %v2611
  %v2676 = vpack.c.bf16 %v2612, %v2612
  %v2677 = vpack.c.bf16 %v2613, %v2613
  %v2678 = vpack.c.bf16 %v2614, %v2614
  %v2679 = vpack.c.bf16 %v2615, %v2615
  %v2680 = vpack.c.bf16 %v2616, %v2616
  %v2681 = vpack.c.bf16 %v2617, %v2617
  %v2682 = vpack.c.bf16 %v2618, %v2618
  %v2683 = vpack.c.bf16 %v2619, %v2619
  %v2684 = vpack.c.bf16 %v2620, %v2620
  %v2685 = vpack.c.bf16 %v2621, %v2621
  %v2686 = vpack.c.bf16 %v2622, %v2622
  %v2687 = vpack.c.bf16 %v2623, %v2623
  %v2688 = vpack.c.bf16 %v2624, %v2624
  %v2689 = vpack.c.bf16 %v2625, %v2625
  %v2690 = vpack.c.bf16 %v2626, %v2626
  %v2691 = vpack.c.bf16 %v2627, %v2627
  %v2692 = vpack.c.bf16 %v2628, %v2628
  %v2693 = vpack.c.bf16 %v2629, %v2629
  %v2694 = vpack.c.bf16 %v2630, %v2630
  %v2695 = vpack.c.bf16 %v2631, %v2631
  %v2696 = vpack.c.bf16 %v2632, %v2632
  %v2697 = vpack.c.bf16 %v2633, %v2633
  %v2698 = vpack.c.bf16 %v2634, %v2634
  %v2699 = vpack.c.bf16 %v2635, %v2635
  %v2700 = vpack.c.bf16 %v2636, %v2636
  %v2701 = vpack.c.bf16 %v2637, %v2637
  %v2702 = vpack.c.bf16 %v2638, %v2638
  %v2703 = vpack.c.bf16 %v2639, %v2639
  %v2704 = vpack.c.bf16 %v2640, %v2640
  %v2705 = vpack.c.bf16 %v2641, %v2641
  %v2706 = vpack.c.bf16 %v2642, %v2642
  %v2707 = vpack.c.bf16 %v2643, %v2643
  %v2708 = vpack.c.bf16 %v2644, %v2644
  %v2709 = vpack.c.bf16 %v2645, %v2645
  %v2710 = vpack.c.bf16 %v2646, %v2646
  %v2711 = vpack.c.bf16 %v2647, %v2647
  %v2712 = vpack.c.bf16 %v2648, %v2648
  %v2713 = vpack.c.bf16 %v2649, %v2649
  %v2714 = vpack.c.bf16 %v2650, %v2650
  %v2715 = vpack.c.bf16 %v2651, %v2651
  %v2716 = vpack.c.bf16 %v2652, %v2652
  %v2717 = vpack.c.bf16 %v2653, %v2653
  %v2718 = vpack.c.bf16 %v2654, %v2654
  %vm2719 = vcmask 257024
  %2720 = vst.msk [vmem:[%s3] sm:$0xf] %vm2719, %v2655
  %2721 = vst.msk [vmem:[%s3 + $0x4] sm:$0xf] %vm2719, %v2656
  %2722 = vst.msk [vmem:[%s3 + $0x8] sm:$0xf] %vm2719, %v2657
  %2723 = vst.msk [vmem:[%s3 + $0xc] sm:$0xf] %vm2719, %v2658
  %2724 = vst.msk [vmem:[%s3 + $0x10] sm:$0xf] %vm2719, %v2659
  %2725 = vst.msk [vmem:[%s3 + $0x14] sm:$0xf] %vm2719, %v2660
  %2726 = vst.msk [vmem:[%s3 + $0x18] sm:$0xf] %vm2719, %v2661
  %2727 = vst.msk [vmem:[%s3 + $0x1c] sm:$0xf] %vm2719, %v2662
  %2728 = vst.msk [vmem:[%s3 + $0x20] sm:$0xf] %vm2719, %v2663
  %2729 = vst.msk [vmem:[%s3 + $0x24] sm:$0xf] %vm2719, %v2664
  %2730 = vst.msk [vmem:[%s3 + $0x28] sm:$0xf] %vm2719, %v2665
  %2731 = vst.msk [vmem:[%s3 + $0x2c] sm:$0xf] %vm2719, %v2666
  %2732 = vst.msk [vmem:[%s3 + $0x30] sm:$0xf] %vm2719, %v2667
  %2733 = vst.msk [vmem:[%s3 + $0x34] sm:$0xf] %vm2719, %v2668
  %2734 = vst.msk [vmem:[%s3 + $0x38] sm:$0xf] %vm2719, %v2669
  %2735 = vst.msk [vmem:[%s3 + $0x3c] sm:$0xf] %vm2719, %v2670
  %2736 = vst.msk [vmem:[%s3 + $0x40] sm:$0xf] %vm2719, %v2671
  %2737 = vst.msk [vmem:[%s3 + $0x44] sm:$0xf] %vm2719, %v2672
  %2738 = vst.msk [vmem:[%s3 + $0x48] sm:$0xf] %vm2719, %v2673
  %2739 = vst.msk [vmem:[%s3 + $0x4c] sm:$0xf] %vm2719, %v2674
  %2740 = vst.msk [vmem:[%s3 + $0x50] sm:$0xf] %vm2719, %v2675
  %2741 = vst.msk [vmem:[%s3 + $0x54] sm:$0xf] %vm2719, %v2676
  %2742 = vst.msk [vmem:[%s3 + $0x58] sm:$0xf] %vm2719, %v2677
  %2743 = vst.msk [vmem:[%s3 + $0x5c] sm:$0xf] %vm2719, %v2678
  %2744 = vst.msk [vmem:[%s3 + $0x60] sm:$0xf] %vm2719, %v2679
  %2745 = vst.msk [vmem:[%s3 + $0x64] sm:$0xf] %vm2719, %v2680
  %2746 = vst.msk [vmem:[%s3 + $0x68] sm:$0xf] %vm2719, %v2681
  %2747 = vst.msk [vmem:[%s3 + $0x6c] sm:$0xf] %vm2719, %v2682
  %2748 = vst.msk [vmem:[%s3 + $0x70] sm:$0xf] %vm2719, %v2683
  %2749 = vst.msk [vmem:[%s3 + $0x74] sm:$0xf] %vm2719, %v2684
  %2750 = vst.msk [vmem:[%s3 + $0x78] sm:$0xf] %vm2719, %v2685
  %2751 = vst.msk [vmem:[%s3 + $0x7c] sm:$0xf] %vm2719, %v2686
  %2752 = vst.msk [vmem:[%s3 + $0x80] sm:$0xf] %vm2719, %v2687
  %2753 = vst.msk [vmem:[%s3 + $0x84] sm:$0xf] %vm2719, %v2688
  %2754 = vst.msk [vmem:[%s3 + $0x88] sm:$0xf] %vm2719, %v2689
  %2755 = vst.msk [vmem:[%s3 + $0x8c] sm:$0xf] %vm2719, %v2690
  %2756 = vst.msk [vmem:[%s3 + $0x90] sm:$0xf] %vm2719, %v2691
  %2757 = vst.msk [vmem:[%s3 + $0x94] sm:$0xf] %vm2719, %v2692
  %2758 = vst.msk [vmem:[%s3 + $0x98] sm:$0xf] %vm2719, %v2693
  %2759 = vst.msk [vmem:[%s3 + $0x9c] sm:$0xf] %vm2719, %v2694
  %2760 = vst.msk [vmem:[%s3 + $0xa0] sm:$0xf] %vm2719, %v2695
  %2761 = vst.msk [vmem:[%s3 + $0xa4] sm:$0xf] %vm2719, %v2696
  %2762 = vst.msk [vmem:[%s3 + $0xa8] sm:$0xf] %vm2719, %v2697
  %2763 = vst.msk [vmem:[%s3 + $0xac] sm:$0xf] %vm2719, %v2698
  %2764 = vst.msk [vmem:[%s3 + $0xb0] sm:$0xf] %vm2719, %v2699
  %2765 = vst.msk [vmem:[%s3 + $0xb4] sm:$0xf] %vm2719, %v2700
  %2766 = vst.msk [vmem:[%s3 + $0xb8] sm:$0xf] %vm2719, %v2701
  %2767 = vst.msk [vmem:[%s3 + $0xbc] sm:$0xf] %vm2719, %v2702
  %2768 = vst.msk [vmem:[%s3 + $0xc0] sm:$0xf] %vm2719, %v2703
  %2769 = vst.msk [vmem:[%s3 + $0xc4] sm:$0xf] %vm2719, %v2704
  %2770 = vst.msk [vmem:[%s3 + $0xc8] sm:$0xf] %vm2719, %v2705
  %2771 = vst.msk [vmem:[%s3 + $0xcc] sm:$0xf] %vm2719, %v2706
  %2772 = vst.msk [vmem:[%s3 + $0xd0] sm:$0xf] %vm2719, %v2707
  %2773 = vst.msk [vmem:[%s3 + $0xd4] sm:$0xf] %vm2719, %v2708
  %2774 = vst.msk [vmem:[%s3 + $0xd8] sm:$0xf] %vm2719, %v2709
  %2775 = vst.msk [vmem:[%s3 + $0xdc] sm:$0xf] %vm2719, %v2710
  %2776 = vst.msk [vmem:[%s3 + $0xe0] sm:$0xf] %vm2719, %v2711
  %2777 = vst.msk [vmem:[%s3 + $0xe4] sm:$0xf] %vm2719, %v2712
  %2778 = vst.msk [vmem:[%s3 + $0xe8] sm:$0xf] %vm2719, %v2713
  %2779 = vst.msk [vmem:[%s3 + $0xec] sm:$0xf] %vm2719, %v2714
  %2780 = vst.msk [vmem:[%s3 + $0xf0] sm:$0xf] %vm2719, %v2715
  %2781 = vst.msk [vmem:[%s3 + $0xf4] sm:$0xf] %vm2719, %v2716
  %2782 = vst.msk [vmem:[%s3 + $0xf8] sm:$0xf] %vm2719, %v2717
  %2783 = vst.msk [vmem:[%s3 + $0xfc] sm:$0xf] %vm2719, %v2718
  // Predicated region
  $region14: #{resnet_forward.9} parent=0 // pred_check
    _
  $region15: #{resnet_forward.9} parent=0 // pred_check_branch
    %2785 = sbr.rel (0) target = $region17
  $region16: #{resnet_forward.9} parent=0 // pred_region
    _
  $region17: #{resnet_forward.9} parent=0 // pred_fallthru
    _
  // Predicated region
  $region18: #{resnet_forward.9} parent=0 // pred_check
    _
  $region19: #{resnet_forward.9} parent=0 // pred_check_branch
    %2787 = sbr.rel (0) target = $region21
  $region20: #{resnet_forward.9} parent=0 // pred_region
    _
  $region21: #{resnet_forward.9} parent=0 // pred_fallthru
    _

// kernel: resnet_forward.11
$region0: #{resnet_forward.11}
  #allocation0 [shape = 'u32[]', space=smem, size = 0x4, offset = 0x4, fixed_abs, tag = 'smem constant byte address 0x4 - core index']
  #allocation1 [shape = 'u32[72,128]{1,0:T(1,128)}', space=vmem, size = 0x9000, scoped, tag = 'internal scratch']
  %s0 = inlined_call_operand.vmem [shape: bf16[128,288], index: 0, kind: input, shape index: {}]
  %s1 = inlined_call_operand.vmem [shape: bf16[288,64], index: 1, kind: input, shape index: {}]
  %s2 = inlined_call_operand.vmem [shape: f32[1,64], index: 2, kind: input, shape index: {}]
  %s3 = inlined_call_operand.vmem [shape: bf16[128,64], index: 3, kind: output, shape index: {}]
  %s4 = sld [smem:[#allocation0]]
  $region22: #{resnet_forward.11} parent=0
    _
  %s6 = ssub.s32 1, %s4
  %s7 = scalar_select 0, %s6, %s4
  // Predicated region
  $region2: #{resnet_forward.11} parent=0 // pred_check
    _
  $region3: #{resnet_forward.11} parent=0 // pred_check_branch
    %9 = sbr.rel (0) target = $region5
  $region4: #{resnet_forward.11} parent=0 // pred_region
    _
  $region5: #{resnet_forward.11} parent=0 // pred_fallthru
    _
  // Predicated region
  $region6: #{resnet_forward.11} parent=0 // pred_check
    _
  $region7: #{resnet_forward.11} parent=0 // pred_check_branch
    %11 = sbr.rel (0) target = $region9
  $region8: #{resnet_forward.11} parent=0 // pred_region
    _
  $region9: #{resnet_forward.11} parent=0 // pred_fallthru
    _
  // Predicated region
  $region10: #{resnet_forward.11} parent=0 // pred_check
    _
  $region11: #{resnet_forward.11} parent=0 // pred_check_branch
    %13 = sbr.rel (0) target = $region13
  $region12: #{resnet_forward.11} parent=0 // pred_region
    _
  $region13: #{resnet_forward.11} parent=0 // pred_fallthru
    _
  %v15 = vld [vmem:[%s0] sm:$0xff]
  %v16 = vld [vmem:[%s0 + $0x8] sm:$0xf]
  %v17 = vld [vmem:[%s0 + $0xc] sm:$0xff]
  %v18 = vld [vmem:[%s0 + $0x14] sm:$0xf]
  %v19 = vld [vmem:[%s0 + $0x18] sm:$0xff]
  %v20 = vld [vmem:[%s0 + $0x20] sm:$0xf]
  %v21 = vld [vmem:[%s0 + $0x24] sm:$0xff]
  %v22 = vld [vmem:[%s0 + $0x2c] sm:$0xf]
  %v23 = vld [vmem:[%s0 + $0x30] sm:$0xff]
  %v24 = vld [vmem:[%s0 + $0x38] sm:$0xf]
  %v25 = vld [vmem:[%s0 + $0x3c] sm:$0xff]
  %v26 = vld [vmem:[%s0 + $0x44] sm:$0xf]
  %v27 = vld [vmem:[%s0 + $0x48] sm:$0xff]
  %v28 = vld [vmem:[%s0 + $0x50] sm:$0xf]
  %v29 = vld [vmem:[%s0 + $0x54] sm:$0xff]
  %v30 = vld [vmem:[%s0 + $0x5c] sm:$0xf]
  %v31 = vld [vmem:[%s0 + $0x60] sm:$0xff]
  %v32 = vld [vmem:[%s0 + $0x68] sm:$0xf]
  %v33 = vld [vmem:[%s0 + $0x6c] sm:$0xff]
  %v34 = vld [vmem:[%s0 + $0x74] sm:$0xf]
  %v35 = vld [vmem:[%s0 + $0x78] sm:$0xff]
  %v36 = vld [vmem:[%s0 + $0x80] sm:$0xf]
  %v37 = vld [vmem:[%s0 + $0x84] sm:$0xff]
  %v38 = vld [vmem:[%s0 + $0x8c] sm:$0xf]
  %v39 = vld [vmem:[%s0 + $0x90] sm:$0xff]
  %v40 = vld [vmem:[%s0 + $0x98] sm:$0xf]
  %v41 = vld [vmem:[%s0 + $0x9c] sm:$0xff]
  %v42 = vld [vmem:[%s0 + $0xa4] sm:$0xf]
  %v43 = vld [vmem:[%s0 + $0xa8] sm:$0xff]
  %v44 = vld [vmem:[%s0 + $0xb0] sm:$0xf]
  %v45 = vld [vmem:[%s0 + $0xb4] sm:$0xff]
  %v46 = vld [vmem:[%s0 + $0xbc] sm:$0xf]
  %v47 = vld [vmem:[%s1] sm:$0xf]
  %v48 = vld [vmem:[%s1 + $0x4] sm:$0xf]
  %v49 = vld [vmem:[%s1 + $0x8] sm:$0xf]
  %v50 = vld [vmem:[%s1 + $0xc] sm:$0xf]
  %v51 = vld [vmem:[%s1 + $0x10] sm:$0xf]
  %v52 = vld [vmem:[%s1 + $0x14] sm:$0xf]
  %v53 = vld [vmem:[%s1 + $0x18] sm:$0xf]
  %v54 = vld [vmem:[%s1 + $0x1c] sm:$0xf]
  %v55 = vld [vmem:[%s1 + $0x20] sm:$0xf]
  %v56 = vld [vmem:[%s1 + $0x24] sm:$0xf]
  %v57 = vld [vmem:[%s1 + $0x28] sm:$0xf]
  %v58 = vld [vmem:[%s1 + $0x2c] sm:$0xf]
  %v59 = vld [vmem:[%s1 + $0x30] sm:$0xf]
  %v60 = vld [vmem:[%s1 + $0x34] sm:$0xf]
  %v61 = vld [vmem:[%s1 + $0x38] sm:$0xf]
  %v62 = vld [vmem:[%s1 + $0x3c] sm:$0xf]
  %v63 = vld [vmem:[%s1 + $0x40] sm:$0xf]
  %v64 = vld [vmem:[%s1 + $0x44] sm:$0xf]
  %v65 = vld [vmem:[%s1 + $0x48] sm:$0xf]
  %v66 = vld [vmem:[%s1 + $0x4c] sm:$0xf]
  %v67 = vld [vmem:[%s1 + $0x50] sm:$0xf]
  %v68 = vld [vmem:[%s1 + $0x54] sm:$0xf]
  %v69 = vld [vmem:[%s1 + $0x58] sm:$0xf]
  %v70 = vld [vmem:[%s1 + $0x5c] sm:$0xf]
  %v71 = vld [vmem:[%s1 + $0x60] sm:$0xf]
  %v72 = vld [vmem:[%s1 + $0x64] sm:$0xf]
  %v73 = vld [vmem:[%s1 + $0x68] sm:$0xf]
  %v74 = vld [vmem:[%s1 + $0x6c] sm:$0xf]
  %v75 = vld [vmem:[%s1 + $0x70] sm:$0xf]
  %v76 = vld [vmem:[%s1 + $0x74] sm:$0xf]
  %v77 = vld [vmem:[%s1 + $0x78] sm:$0xf]
  %v78 = vld [vmem:[%s1 + $0x7c] sm:$0xf]
  %v79 = vld [vmem:[%s1 + $0x80] sm:$0xf]
  %v80 = vld [vmem:[%s1 + $0x84] sm:$0xf]
  %v81 = vld [vmem:[%s1 + $0x88] sm:$0xf]
  %v82 = vld [vmem:[%s1 + $0x8c] sm:$0xf]
  %v83 = vld [vmem:[%s2] sm:$0x1]
  %v85 = vperm.slane %v83, 0
  %v119 = vunpack.c.l.b16 %v15
  %v120 = vunpack.c.h.b16 %v15
  %v121 = vunpack.c.l.b16 %v16
  %v122 = vunpack.c.l.b16 %v17
  %v123 = vunpack.c.h.b16 %v17
  %v124 = vunpack.c.l.b16 %v18
  %v125 = vunpack.c.l.b16 %v19
  %v126 = vunpack.c.h.b16 %v19
  %v127 = vunpack.c.l.b16 %v20
  %v128 = vunpack.c.l.b16 %v21
  %v129 = vunpack.c.h.b16 %v21
  %v130 = vunpack.c.l.b16 %v22
  %v131 = vunpack.c.l.b16 %v23
  %v132 = vunpack.c.h.b16 %v23
  %v133 = vunpack.c.l.b16 %v24
  %v134 = vunpack.c.l.b16 %v25
  %v135 = vunpack.c.h.b16 %v25
  %v136 = vunpack.c.l.b16 %v26
  %v137 = vunpack.c.l.b16 %v27
  %v138 = vunpack.c.h.b16 %v27
  %v139 = vunpack.c.l.b16 %v28
  %v140 = vunpack.c.l.b16 %v29
  %v141 = vunpack.c.h.b16 %v29
  %v142 = vunpack.c.l.b16 %v30
  %v143 = vunpack.c.l.b16 %v31
  %v144 = vunpack.c.h.b16 %v31
  %v145 = vunpack.c.l.b16 %v32
  %v146 = vunpack.c.l.b16 %v33
  %v147 = vunpack.c.h.b16 %v33
  %v148 = vunpack.c.l.b16 %v34
  %v149 = vunpack.c.l.b16 %v35
  %v150 = vunpack.c.h.b16 %v35
  %v151 = vunpack.c.l.b16 %v36
  %v152 = vunpack.c.l.b16 %v37
  %v153 = vunpack.c.h.b16 %v37
  %v154 = vunpack.c.l.b16 %v38
  %v155 = vunpack.c.l.b16 %v39
  %v156 = vunpack.c.h.b16 %v39
  %v157 = vunpack.c.l.b16 %v40
  %v158 = vunpack.c.l.b16 %v41
  %v159 = vunpack.c.h.b16 %v41
  %v160 = vunpack.c.l.b16 %v42
  %v161 = vunpack.c.l.b16 %v43
  %v162 = vunpack.c.h.b16 %v43
  %v163 = vunpack.c.l.b16 %v44
  %v164 = vunpack.c.l.b16 %v45
  %v165 = vunpack.c.h.b16 %v45
  %v166 = vunpack.c.l.b16 %v46
  %v167 = vpack.c.b16 %v122, %v119
  %v168 = vpack.c.b16 %v123, %v120
  %v169 = vpack.c.b16 %v124, %v121
  %v170 = vpack.c.b16 %v128, %v125
  %v171 = vpack.c.b16 %v129, %v126
  %v172 = vpack.c.b16 %v130, %v127
  %v173 = vpack.c.b16 %v134, %v131
  %v174 = vpack.c.b16 %v135, %v132
  %v175 = vpack.c.b16 %v136, %v133
  %v176 = vpack.c.b16 %v140, %v137
  %v177 = vpack.c.b16 %v141, %v138
  %v178 = vpack.c.b16 %v142, %v139
  %v179 = vpack.c.b16 %v146, %v143
  %v180 = vpack.c.b16 %v147, %v144
  %v181 = vpack.c.b16 %v148, %v145
  %v182 = vpack.c.b16 %v152, %v149
  %v183 = vpack.c.b16 %v153, %v150
  %v184 = vpack.c.b16 %v154, %v151
  %v185 = vpack.c.b16 %v158, %v155
  %v186 = vpack.c.b16 %v159, %v156
  %v187 = vpack.c.b16 %v160, %v157
  %v188 = vpack.c.b16 %v164, %v161
  %v189 = vpack.c.b16 %v165, %v162
  %v190 = vpack.c.b16 %v166, %v163
  %v243 = vunpack.c.l.b16 %v47
  %v244 = vunpack.c.l.b16 %v48
  %v245 = vunpack.c.l.b16 %v49
  %v246 = vunpack.c.l.b16 %v50
  %v247 = vunpack.c.l.b16 %v51
  %v248 = vunpack.c.l.b16 %v52
  %v249 = vunpack.c.l.b16 %v53
  %v250 = vunpack.c.l.b16 %v54
  %v251 = vunpack.c.l.b16 %v55
  %v252 = vunpack.c.l.b16 %v56
  %v253 = vunpack.c.l.b16 %v57
  %v254 = vunpack.c.l.b16 %v58
  %v255 = vunpack.c.l.b16 %v59
  %v256 = vunpack.c.l.b16 %v60
  %v257 = vunpack.c.l.b16 %v61
  %v258 = vunpack.c.l.b16 %v62
  %v259 = vunpack.c.l.b16 %v63
  %v260 = vunpack.c.l.b16 %v64
  %v261 = vunpack.c.l.b16 %v65
  %v262 = vunpack.c.l.b16 %v66
  %v263 = vunpack.c.l.b16 %v67
  %v264 = vunpack.c.l.b16 %v68
  %v265 = vunpack.c.l.b16 %v69
  %v266 = vunpack.c.l.b16 %v70
  %v267 = vunpack.c.l.b16 %v71
  %v268 = vunpack.c.l.b16 %v72
  %v269 = vunpack.c.l.b16 %v73
  %v270 = vunpack.c.l.b16 %v74
  %v271 = vunpack.c.l.b16 %v75
  %v272 = vunpack.c.l.b16 %v76
  %v273 = vunpack.c.l.b16 %v77
  %v274 = vunpack.c.l.b16 %v78
  %v275 = vunpack.c.l.b16 %v79
  %v276 = vunpack.c.l.b16 %v80
  %v277 = vunpack.c.l.b16 %v81
  %v278 = vunpack.c.l.b16 %v82
  %v279 = vpack.c.b16 %v244, %v243
  %v280 = vpack.c.b16 %v246, %v245
  %v281 = vpack.c.b16 %v248, %v247
  %v282 = vpack.c.b16 %v250, %v249
  %v283 = vpack.c.b16 %v252, %v251
  %v284 = vpack.c.b16 %v254, %v253
  %v285 = vpack.c.b16 %v256, %v255
  %v286 = vpack.c.b16 %v258, %v257
  %v287 = vpack.c.b16 %v260, %v259
  %v288 = vpack.c.b16 %v262, %v261
  %v289 = vpack.c.b16 %v264, %v263
  %v290 = vpack.c.b16 %v266, %v265
  %v291 = vpack.c.b16 %v268, %v267
  %v292 = vpack.c.b16 %v270, %v269
  %v293 = vpack.c.b16 %v272, %v271
  %v294 = vpack.c.b16 %v274, %v273
  %v295 = vpack.c.b16 %v276, %v275
  %v296 = vpack.c.b16 %v278, %v277
  %vm315 = vcmask 261120
  %v317 = vsel %vm315, %v169, 0
  %v320 = vsel %vm315, %v172, 0
  %v323 = vsel %vm315, %v175, 0
  %v326 = vsel %vm315, %v178, 0
  %v329 = vsel %vm315, %v181, 0
  %v332 = vsel %vm315, %v184, 0
  %v335 = vsel %vm315, %v187, 0
  %v338 = vsel %vm315, %v190, 0
  %340 = vmatpush.bf16.msra.mxu0 %v286
  %341 = vmatpush.bf16.msra.mxu0 %v285
  %342 = vmatpush.bf16.msra.mxu0 %v284
  %343 = vmatpush.bf16.msra.mxu0 %v283
  %344 = vmatpush.bf16.msra.mxu0 %v282
  %345 = vmatpush.bf16.msra.mxu0 %v281
  %346 = vmatpush.bf16.msra.mxu0 %v280
  %347 = vmatpush.bf16.msra.mxu0 %v279
  %348 = vmatmul.bf16.gmra.mxu0 %v167
  %v349 = vpop.f32.mrf.mxu0
  %v350 = vadd.f32 %v85, %v349
  %v351 = vpop.f32.mrf.mxu0
  %v352 = vadd.f32 %v85, %v351
  %353 = vmatmul.bf16.gmra.mxu0 %v170
  %v354 = vpop.f32.mrf.mxu0
  %v355 = vadd.f32 %v85, %v354
  %v356 = vpop.f32.mrf.mxu0
  %v357 = vadd.f32 %v85, %v356
  %358 = vmatmul.bf16.gmra.mxu0 %v173
  %v359 = vpop.f32.mrf.mxu0
  %v360 = vadd.f32 %v85, %v359
  %v361 = vpop.f32.mrf.mxu0
  %v362 = vadd.f32 %v85, %v361
  %363 = vmatmul.bf16.gmra.mxu0 %v176
  %v364 = vpop.f32.mrf.mxu0
  %v365 = vadd.f32 %v85, %v364
  %v366 = vpop.f32.mrf.mxu0
  %v367 = vadd.f32 %v85, %v366
  %368 = vmatmul.bf16.gmra.mxu0 %v179
  %v369 = vpop.f32.mrf.mxu0
  %v370 = vadd.f32 %v85, %v369
  %v371 = vpop.f32.mrf.mxu0
  %v372 = vadd.f32 %v85, %v371
  %373 = vmatmul.bf16.gmra.mxu0 %v182
  %v374 = vpop.f32.mrf.mxu0
  %v375 = vadd.f32 %v85, %v374
  %v376 = vpop.f32.mrf.mxu0
  %v377 = vadd.f32 %v85, %v376
  %378 = vmatmul.bf16.gmra.mxu0 %v185
  %v379 = vpop.f32.mrf.mxu0
  %v380 = vadd.f32 %v85, %v379
  %v381 = vpop.f32.mrf.mxu0
  %v382 = vadd.f32 %v85, %v381
  %383 = vmatmul.bf16.gmra.mxu0 %v188
  %v384 = vpop.f32.mrf.mxu0
  %v385 = vadd.f32 %v85, %v384
  %v386 = vpop.f32.mrf.mxu0
  %v387 = vadd.f32 %v85, %v386
  %388 = vdwg.mxu0
  %389 = vmatpush.bf16.msra.mxu0 %v294
  %390 = vmatpush.bf16.msra.mxu0 %v293
  %391 = vmatpush.bf16.msra.mxu0 %v292
  %392 = vmatpush.bf16.msra.mxu0 %v291
  %393 = vmatpush.bf16.msra.mxu0 %v290
  %394 = vmatpush.bf16.msra.mxu0 %v289
  %395 = vmatpush.bf16.msra.mxu0 %v288
  %396 = vmatpush.bf16.msra.mxu0 %v287
  %397 = vmatmul.bf16.gmra.mxu0 %v168
  %v398 = vpop.f32.mrf.mxu0
  %v399 = vadd.f32 %v350, %v398
  %v400 = vpop.f32.mrf.mxu0
  %v401 = vadd.f32 %v352, %v400
  %402 = vmatmul.bf16.gmra.mxu0 %v171
  %v403 = vpop.f32.mrf.mxu0
  %v404 = vadd.f32 %v355, %v403
  %v405 = vpop.f32.mrf.mxu0
  %v406 = vadd.f32 %v357, %v405
  %407 = vmatmul.bf16.gmra.mxu0 %v174
  %v408 = vpop.f32.mrf.mxu0
  %v409 = vadd.f32 %v360, %v408
  %v410 = vpop.f32.mrf.mxu0
  %v411 = vadd.f32 %v362, %v410
  %412 = vmatmul.bf16.gmra.mxu0 %v177
  %v413 = vpop.f32.mrf.mxu0
  %v414 = vadd.f32 %v365, %v413
  %v415 = vpop.f32.mrf.mxu0
  %v416 = vadd.f32 %v367, %v415
  %417 = vmatmul.bf16.gmra.mxu0 %v180
  %v418 = vpop.f32.mrf.mxu0
  %v419 = vadd.f32 %v370, %v418
  %v420 = vpop.f32.mrf.mxu0
  %v421 = vadd.f32 %v372, %v420
  %422 = vmatmul.bf16.gmra.mxu0 %v183
  %v423 = vpop.f32.mrf.mxu0
  %v424 = vadd.f32 %v375, %v423
  %v425 = vpop.f32.mrf.mxu0
  %v426 = vadd.f32 %v377, %v425
  %427 = vmatmul.bf16.gmra.mxu0 %v186
  %v428 = vpop.f32.mrf.mxu0
  %v429 = vadd.f32 %v380, %v428
  %v430 = vpop.f32.mrf.mxu0
  %v431 = vadd.f32 %v382, %v430
  %432 = vmatmul.bf16.gmra.mxu0 %v189
  %v433 = vpop.f32.mrf.mxu0
  %v434 = vadd.f32 %v385, %v433
  %v435 = vpop.f32.mrf.mxu0
  %v436 = vadd.f32 %v387, %v435
  %437 = vdwg.mxu0
  %438 = vmatpush.bf16.msra.mxu0 0
  %439 = vmatpush.bf16.msra.mxu0 0
  %440 = vmatpush.bf16.msra.mxu0 0
  %441 = vmatpush.bf16.msra.mxu0 0
  %442 = vmatpush.bf16.msra.mxu0 0
  %443 = vmatpush.bf16.msra.mxu0 0
  %444 = vmatpush.bf16.msra.mxu0 %v296
  %445 = vmatpush.bf16.msra.mxu0 %v295
  %446 = vmatmul.bf16.gmra.mxu0 %v317
  %v447 = vpop.f32.mrf.mxu0
  %v448 = vadd.f32 %v399, %v447
  %v449 = vpop.f32.mrf.mxu0
  %v450 = vadd.f32 %v401, %v449
  %451 = vmatmul.bf16.gmra.mxu0 %v320
  %v452 = vpop.f32.mrf.mxu0
  %v453 = vadd.f32 %v404, %v452
  %v454 = vpop.f32.mrf.mxu0
  %v455 = vadd.f32 %v406, %v454
  %456 = vmatmul.bf16.gmra.mxu0 %v323
  %v457 = vpop.f32.mrf.mxu0
  %v458 = vadd.f32 %v409, %v457
  %v459 = vpop.f32.mrf.mxu0
  %v460 = vadd.f32 %v411, %v459
  %461 = vmatmul.bf16.gmra.mxu0 %v326
  %v462 = vpop.f32.mrf.mxu0
  %v463 = vadd.f32 %v414, %v462
  %v464 = vpop.f32.mrf.mxu0
  %v465 = vadd.f32 %v416, %v464
  %466 = vmatmul.bf16.gmra.mxu0 %v329
  %v467 = vpop.f32.mrf.mxu0
  %v468 = vadd.f32 %v419, %v467
  %v469 = vpop.f32.mrf.mxu0
  %v470 = vadd.f32 %v421, %v469
  %471 = vmatmul.bf16.gmra.mxu0 %v332
  %v472 = vpop.f32.mrf.mxu0
  %v473 = vadd.f32 %v424, %v472
  %v474 = vpop.f32.mrf.mxu0
  %v475 = vadd.f32 %v426, %v474
  %476 = vmatmul.bf16.gmra.mxu0 %v335
  %v477 = vpop.f32.mrf.mxu0
  %v478 = vadd.f32 %v429, %v477
  %v479 = vpop.f32.mrf.mxu0
  %v480 = vadd.f32 %v431, %v479
  %481 = vmatmul.bf16.gmra.mxu0 %v338
  %v482 = vpop.f32.mrf.mxu0
  %v483 = vadd.f32 %v434, %v482
  %v484 = vpop.f32.mrf.mxu0
  %v485 = vadd.f32 %v436, %v484
  %486 = vdwg.mxu0
  %v487 = vxor.u32 %v448, 2147483648
  %v488 = vxor.u32 %v450, 2147483648
  %v489 = vxor.u32 %v453, 2147483648
  %v490 = vxor.u32 %v455, 2147483648
  %v491 = vxor.u32 %v458, 2147483648
  %v492 = vxor.u32 %v460, 2147483648
  %v493 = vxor.u32 %v463, 2147483648
  %v494 = vxor.u32 %v465, 2147483648
  %v495 = vxor.u32 %v468, 2147483648
  %v496 = vxor.u32 %v470, 2147483648
  %v497 = vxor.u32 %v473, 2147483648
  %v498 = vxor.u32 %v475, 2147483648
  %v499 = vxor.u32 %v478, 2147483648
  %v500 = vxor.u32 %v480, 2147483648
  %v501 = vxor.u32 %v483, 2147483648
  %v502 = vxor.u32 %v485, 2147483648
  %v503 = vmul.f32 %v487, 1.442695
  %v504 = vpow.pop %v503
  %v505 = vmul.f32 %v488, 1.442695
  %v506 = vpow.pop %v505
  %v507 = vmul.f32 %v489, 1.442695
  %v508 = vpow.pop %v507
  %v509 = vmul.f32 %v490, 1.442695
  %v510 = vpow.pop %v509
  %v511 = vmul.f32 %v491, 1.442695
  %v512 = vpow.pop %v511
  %v513 = vmul.f32 %v492, 1.442695
  %v514 = vpow.pop %v513
  %v515 = vmul.f32 %v493, 1.442695
  %v516 = vpow.pop %v515
  %v517 = vmul.f32 %v494, 1.442695
  %v518 = vpow.pop %v517
  %v519 = vmul.f32 %v495, 1.442695
  %v520 = vpow.pop %v519
  %v521 = vmul.f32 %v496, 1.442695
  %v522 = vpow.pop %v521
  %v523 = vmul.f32 %v497, 1.442695
  %v524 = vpow.pop %v523
  %v525 = vmul.f32 %v498, 1.442695
  %v526 = vpow.pop %v525
  %v527 = vmul.f32 %v499, 1.442695
  %v528 = vpow.pop %v527
  %v529 = vmul.f32 %v500, 1.442695
  %v530 = vpow.pop %v529
  %v531 = vmul.f32 %v501, 1.442695
  %v532 = vpow.pop %v531
  %v533 = vmul.f32 %v502, 1.442695
  %v534 = vpow.pop %v533
  %v535 = vadd.f32 %v504, 1.0
  %v536 = vadd.f32 %v506, 1.0
  %v537 = vadd.f32 %v508, 1.0
  %v538 = vadd.f32 %v510, 1.0
  %v539 = vadd.f32 %v512, 1.0
  %v540 = vadd.f32 %v514, 1.0
  %v541 = vadd.f32 %v516, 1.0
  %v542 = vadd.f32 %v518, 1.0
  %v543 = vadd.f32 %v520, 1.0
  %v544 = vadd.f32 %v522, 1.0
  %v545 = vadd.f32 %v524, 1.0
  %v546 = vadd.f32 %v526, 1.0
  %v547 = vadd.f32 %v528, 1.0
  %v548 = vadd.f32 %v530, 1.0
  %v549 = vadd.f32 %v532, 1.0
  %v550 = vadd.f32 %v534, 1.0
  %v551 = vrcp.pop %v535
  %v552 = vmul.f32 %v535, %v551
  %v553 = vsub.f32 1.0, %v552
  %v554 = vmul.f32 %v551, %v553
  %v555 = vadd.f32 %v551, %v554
  %vm556 = vweird.f32 %v535
  %vm557 = vweird.f32 %v551
  %vm558 = vmor %vm556, %vm557
  %v559 = vsel %vm558, %v551, %v555
  %v560 = vand.u32 2147483647, %v535
  %vm561 = vcmp.eq.f32.partialorder %v560, 8.507059e+37
  %v562 = vand.u32 %v535, 2147483648
  %v563 = vor.u32 1.1754944e-38, %v562
  %v564 = vsel %vm561, %v563, %v559
  %v565 = vmul.f32 1.0, %v564
  %v566 = vrcp.pop %v536
  %v567 = vmul.f32 %v536, %v566
  %v568 = vsub.f32 1.0, %v567
  %v569 = vmul.f32 %v566, %v568
  %v570 = vadd.f32 %v566, %v569
  %vm571 = vweird.f32 %v536
  %vm572 = vweird.f32 %v566
  %vm573 = vmor %vm571, %vm572
  %v574 = vsel %vm573, %v566, %v570
  %v575 = vand.u32 2147483647, %v536
  %vm576 = vcmp.eq.f32.partialorder %v575, 8.507059e+37
  %v577 = vand.u32 %v536, 2147483648
  %v578 = vor.u32 1.1754944e-38, %v577
  %v579 = vsel %vm576, %v578, %v574
  %v580 = vmul.f32 1.0, %v579
  %v581 = vrcp.pop %v537
  %v582 = vmul.f32 %v537, %v581
  %v583 = vsub.f32 1.0, %v582
  %v584 = vmul.f32 %v581, %v583
  %v585 = vadd.f32 %v581, %v584
  %vm586 = vweird.f32 %v537
  %vm587 = vweird.f32 %v581
  %vm588 = vmor %vm586, %vm587
  %v589 = vsel %vm588, %v581, %v585
  %v590 = vand.u32 2147483647, %v537
  %vm591 = vcmp.eq.f32.partialorder %v590, 8.507059e+37
  %v592 = vand.u32 %v537, 2147483648
  %v593 = vor.u32 1.1754944e-38, %v592
  %v594 = vsel %vm591, %v593, %v589
  %v595 = vmul.f32 1.0, %v594
  %v596 = vrcp.pop %v538
  %v597 = vmul.f32 %v538, %v596
  %v598 = vsub.f32 1.0, %v597
  %v599 = vmul.f32 %v596, %v598
  %v600 = vadd.f32 %v596, %v599
  %vm601 = vweird.f32 %v538
  %vm602 = vweird.f32 %v596
  %vm603 = vmor %vm601, %vm602
  %v604 = vsel %vm603, %v596, %v600
  %v605 = vand.u32 2147483647, %v538
  %vm606 = vcmp.eq.f32.partialorder %v605, 8.507059e+37
  %v607 = vand.u32 %v538, 2147483648
  %v608 = vor.u32 1.1754944e-38, %v607
  %v609 = vsel %vm606, %v608, %v604
  %v610 = vmul.f32 1.0, %v609
  %v611 = vrcp.pop %v539
  %v612 = vmul.f32 %v539, %v611
  %v613 = vsub.f32 1.0, %v612
  %v614 = vmul.f32 %v611, %v613
  %v615 = vadd.f32 %v611, %v614
  %vm616 = vweird.f32 %v539
  %vm617 = vweird.f32 %v611
  %vm618 = vmor %vm616, %vm617
  %v619 = vsel %vm618, %v611, %v615
  %v620 = vand.u32 2147483647, %v539
  %vm621 = vcmp.eq.f32.partialorder %v620, 8.507059e+37
  %v622 = vand.u32 %v539, 2147483648
  %v623 = vor.u32 1.1754944e-38, %v622
  %v624 = vsel %vm621, %v623, %v619
  %v625 = vmul.f32 1.0, %v624
  %v626 = vrcp.pop %v540
  %v627 = vmul.f32 %v540, %v626
  %v628 = vsub.f32 1.0, %v627
  %v629 = vmul.f32 %v626, %v628
  %v630 = vadd.f32 %v626, %v629
  %vm631 = vweird.f32 %v540
  %vm632 = vweird.f32 %v626
  %vm633 = vmor %vm631, %vm632
  %v634 = vsel %vm633, %v626, %v630
  %v635 = vand.u32 2147483647, %v540
  %vm636 = vcmp.eq.f32.partialorder %v635, 8.507059e+37
  %v637 = vand.u32 %v540, 2147483648
  %v638 = vor.u32 1.1754944e-38, %v637
  %v639 = vsel %vm636, %v638, %v634
  %v640 = vmul.f32 1.0, %v639
  %v641 = vrcp.pop %v541
  %v642 = vmul.f32 %v541, %v641
  %v643 = vsub.f32 1.0, %v642
  %v644 = vmul.f32 %v641, %v643
  %v645 = vadd.f32 %v641, %v644
  %vm646 = vweird.f32 %v541
  %vm647 = vweird.f32 %v641
  %vm648 = vmor %vm646, %vm647
  %v649 = vsel %vm648, %v641, %v645
  %v650 = vand.u32 2147483647, %v541
  %vm651 = vcmp.eq.f32.partialorder %v650, 8.507059e+37
  %v652 = vand.u32 %v541, 2147483648
  %v653 = vor.u32 1.1754944e-38, %v652
  %v654 = vsel %vm651, %v653, %v649
  %v655 = vmul.f32 1.0, %v654
  %v656 = vrcp.pop %v542
  %v657 = vmul.f32 %v542, %v656
  %v658 = vsub.f32 1.0, %v657
  %v659 = vmul.f32 %v656, %v658
  %v660 = vadd.f32 %v656, %v659
  %vm661 = vweird.f32 %v542
  %vm662 = vweird.f32 %v656
  %vm663 = vmor %vm661, %vm662
  %v664 = vsel %vm663, %v656, %v660
  %v665 = vand.u32 2147483647, %v542
  %vm666 = vcmp.eq.f32.partialorder %v665, 8.507059e+37
  %v667 = vand.u32 %v542, 2147483648
  %v668 = vor.u32 1.1754944e-38, %v667
  %v669 = vsel %vm666, %v668, %v664
  %v670 = vmul.f32 1.0, %v669
  %v671 = vrcp.pop %v543
  %v672 = vmul.f32 %v543, %v671
  %v673 = vsub.f32 1.0, %v672
  %v674 = vmul.f32 %v671, %v673
  %v675 = vadd.f32 %v671, %v674
  %vm676 = vweird.f32 %v543
  %vm677 = vweird.f32 %v671
  %vm678 = vmor %vm676, %vm677
  %v679 = vsel %vm678, %v671, %v675
  %v680 = vand.u32 2147483647, %v543
  %vm681 = vcmp.eq.f32.partialorder %v680, 8.507059e+37
  %v682 = vand.u32 %v543, 2147483648
  %v683 = vor.u32 1.1754944e-38, %v682
  %v684 = vsel %vm681, %v683, %v679
  %v685 = vmul.f32 1.0, %v684
  %v686 = vrcp.pop %v544
  %v687 = vmul.f32 %v544, %v686
  %v688 = vsub.f32 1.0, %v687
  %v689 = vmul.f32 %v686, %v688
  %v690 = vadd.f32 %v686, %v689
  %vm691 = vweird.f32 %v544
  %vm692 = vweird.f32 %v686
  %vm693 = vmor %vm691, %vm692
  %v694 = vsel %vm693, %v686, %v690
  %v695 = vand.u32 2147483647, %v544
  %vm696 = vcmp.eq.f32.partialorder %v695, 8.507059e+37
  %v697 = vand.u32 %v544, 2147483648
  %v698 = vor.u32 1.1754944e-38, %v697
  %v699 = vsel %vm696, %v698, %v694
  %v700 = vmul.f32 1.0, %v699
  %v701 = vrcp.pop %v545
  %v702 = vmul.f32 %v545, %v701
  %v703 = vsub.f32 1.0, %v702
  %v704 = vmul.f32 %v701, %v703
  %v705 = vadd.f32 %v701, %v704
  %vm706 = vweird.f32 %v545
  %vm707 = vweird.f32 %v701
  %vm708 = vmor %vm706, %vm707
  %v709 = vsel %vm708, %v701, %v705
  %v710 = vand.u32 2147483647, %v545
  %vm711 = vcmp.eq.f32.partialorder %v710, 8.507059e+37
  %v712 = vand.u32 %v545, 2147483648
  %v713 = vor.u32 1.1754944e-38, %v712
  %v714 = vsel %vm711, %v713, %v709
  %v715 = vmul.f32 1.0, %v714
  %v716 = vrcp.pop %v546
  %v717 = vmul.f32 %v546, %v716
  %v718 = vsub.f32 1.0, %v717
  %v719 = vmul.f32 %v716, %v718
  %v720 = vadd.f32 %v716, %v719
  %vm721 = vweird.f32 %v546
  %vm722 = vweird.f32 %v716
  %vm723 = vmor %vm721, %vm722
  %v724 = vsel %vm723, %v716, %v720
  %v725 = vand.u32 2147483647, %v546
  %vm726 = vcmp.eq.f32.partialorder %v725, 8.507059e+37
  %v727 = vand.u32 %v546, 2147483648
  %v728 = vor.u32 1.1754944e-38, %v727
  %v729 = vsel %vm726, %v728, %v724
  %v730 = vmul.f32 1.0, %v729
  %v731 = vrcp.pop %v547
  %v732 = vmul.f32 %v547, %v731
  %v733 = vsub.f32 1.0, %v732
  %v734 = vmul.f32 %v731, %v733
  %v735 = vadd.f32 %v731, %v734
  %vm736 = vweird.f32 %v547
  %vm737 = vweird.f32 %v731
  %vm738 = vmor %vm736, %vm737
  %v739 = vsel %vm738, %v731, %v735
  %v740 = vand.u32 2147483647, %v547
  %vm741 = vcmp.eq.f32.partialorder %v740, 8.507059e+37
  %v742 = vand.u32 %v547, 2147483648
  %v743 = vor.u32 1.1754944e-38, %v742
  %v744 = vsel %vm741, %v743, %v739
  %v745 = vmul.f32 1.0, %v744
  %v746 = vrcp.pop %v548
  %v747 = vmul.f32 %v548, %v746
  %v748 = vsub.f32 1.0, %v747
  %v749 = vmul.f32 %v746, %v748
  %v750 = vadd.f32 %v746, %v749
  %vm751 = vweird.f32 %v548
  %vm752 = vweird.f32 %v746
  %vm753 = vmor %vm751, %vm752
  %v754 = vsel %vm753, %v746, %v750
  %v755 = vand.u32 2147483647, %v548
  %vm756 = vcmp.eq.f32.partialorder %v755, 8.507059e+37
  %v757 = vand.u32 %v548, 2147483648
  %v758 = vor.u32 1.1754944e-38, %v757
  %v759 = vsel %vm756, %v758, %v754
  %v760 = vmul.f32 1.0, %v759
  %v761 = vrcp.pop %v549
  %v762 = vmul.f32 %v549, %v761
  %v763 = vsub.f32 1.0, %v762
  %v764 = vmul.f32 %v761, %v763
  %v765 = vadd.f32 %v761, %v764
  %vm766 = vweird.f32 %v549
  %vm767 = vweird.f32 %v761
  %vm768 = vmor %vm766, %vm767
  %v769 = vsel %vm768, %v761, %v765
  %v770 = vand.u32 2147483647, %v549
  %vm771 = vcmp.eq.f32.partialorder %v770, 8.507059e+37
  %v772 = vand.u32 %v549, 2147483648
  %v773 = vor.u32 1.1754944e-38, %v772
  %v774 = vsel %vm771, %v773, %v769
  %v775 = vmul.f32 1.0, %v774
  %v776 = vrcp.pop %v550
  %v777 = vmul.f32 %v550, %v776
  %v778 = vsub.f32 1.0, %v777
  %v779 = vmul.f32 %v776, %v778
  %v780 = vadd.f32 %v776, %v779
  %vm781 = vweird.f32 %v550
  %vm782 = vweird.f32 %v776
  %vm783 = vmor %vm781, %vm782
  %v784 = vsel %vm783, %v776, %v780
  %v785 = vand.u32 2147483647, %v550
  %vm786 = vcmp.eq.f32.partialorder %v785, 8.507059e+37
  %v787 = vand.u32 %v550, 2147483648
  %v788 = vor.u32 1.1754944e-38, %v787
  %v789 = vsel %vm786, %v788, %v784
  %v790 = vmul.f32 1.0, %v789
  %v791 = vmul.f32 %v448, %v565
  %v792 = vmul.f32 %v450, %v580
  %v793 = vmul.f32 %v453, %v595
  %v794 = vmul.f32 %v455, %v610
  %v795 = vmul.f32 %v458, %v625
  %v796 = vmul.f32 %v460, %v640
  %v797 = vmul.f32 %v463, %v655
  %v798 = vmul.f32 %v465, %v670
  %v799 = vmul.f32 %v468, %v685
  %v800 = vmul.f32 %v470, %v700
  %v801 = vmul.f32 %v473, %v715
  %v802 = vmul.f32 %v475, %v730
  %v803 = vmul.f32 %v478, %v745
  %v804 = vmul.f32 %v480, %v760
  %v805 = vmul.f32 %v483, %v775
  %v806 = vmul.f32 %v485, %v790
  %v807 = vpack.c.bf16 %v791, %v791
  %v808 = vpack.c.bf16 %v792, %v792
  %v809 = vpack.c.bf16 %v793, %v793
  %v810 = vpack.c.bf16 %v794, %v794
  %v811 = vpack.c.bf16 %v795, %v795
  %v812 = vpack.c.bf16 %v796, %v796
  %v813 = vpack.c.bf16 %v797, %v797
  %v814 = vpack.c.bf16 %v798, %v798
  %v815 = vpack.c.bf16 %v799, %v799
  %v816 = vpack.c.bf16 %v800, %v800
  %v817 = vpack.c.bf16 %v801, %v801
  %v818 = vpack.c.bf16 %v802, %v802
  %v819 = vpack.c.bf16 %v803, %v803
  %v820 = vpack.c.bf16 %v804, %v804
  %v821 = vpack.c.bf16 %v805, %v805
  %v822 = vpack.c.bf16 %v806, %v806
  %vm823 = vcmask 519168
  %824 = vst.msk [vmem:[%s3] sm:$0xf] %vm823, %v807
  %825 = vst.msk [vmem:[%s3 + $0x4] sm:$0xf] %vm823, %v808
  %826 = vst.msk [vmem:[%s3 + $0x8] sm:$0xf] %vm823, %v809
  %827 = vst.msk [vmem:[%s3 + $0xc] sm:$0xf] %vm823, %v810
  %828 = vst.msk [vmem:[%s3 + $0x10] sm:$0xf] %vm823, %v811
  %829 = vst.msk [vmem:[%s3 + $0x14] sm:$0xf] %vm823, %v812
  %830 = vst.msk [vmem:[%s3 + $0x18] sm:$0xf] %vm823, %v813
  %831 = vst.msk [vmem:[%s3 + $0x1c] sm:$0xf] %vm823, %v814
  %832 = vst.msk [vmem:[%s3 + $0x20] sm:$0xf] %vm823, %v815
  %833 = vst.msk [vmem:[%s3 + $0x24] sm:$0xf] %vm823, %v816
  %834 = vst.msk [vmem:[%s3 + $0x28] sm:$0xf] %vm823, %v817
  %835 = vst.msk [vmem:[%s3 + $0x2c] sm:$0xf] %vm823, %v818
  %836 = vst.msk [vmem:[%s3 + $0x30] sm:$0xf] %vm823, %v819
  %837 = vst.msk [vmem:[%s3 + $0x34] sm:$0xf] %vm823, %v820
  %838 = vst.msk [vmem:[%s3 + $0x38] sm:$0xf] %vm823, %v821
  %839 = vst.msk [vmem:[%s3 + $0x3c] sm:$0xf] %vm823, %v822
  // Predicated region
  $region14: #{resnet_forward.11} parent=0 // pred_check
    _
  $region15: #{resnet_forward.11} parent=0 // pred_check_branch
    %841 = sbr.rel (0) target = $region17
  $region16: #{resnet_forward.11} parent=0 // pred_region
    _
  $region17: #{resnet_forward.11} parent=0 // pred_fallthru
    _
  // Predicated region
  $region18: #{resnet_forward.11} parent=0 // pred_check
    _
  $region19: #{resnet_forward.11} parent=0 // pred_check_branch
    %843 = sbr.rel (0) target = $region21
  $region20: #{resnet_forward.11} parent=0 // pred_region
    _
  $region21: #{resnet_forward.11} parent=0 // pred_fallthru
    _

// kernel: resnet_forward.10
$region0: #{resnet_forward.10}
  #allocation0 [shape = 'u32[]', space=smem, size = 0x4, offset = 0x4, fixed_abs, tag = 'smem constant byte address 0x4 - core index']
  #allocation1 [shape = 'u32[72,128]{1,0:T(1,128)}', space=vmem, size = 0x9000, scoped, tag = 'internal scratch']
  %s0 = inlined_call_operand.vmem [shape: bf16[512,288], index: 0, kind: input, shape index: {}]
  %s1 = inlined_call_operand.vmem [shape: bf16[512,32], index: 1, kind: input, shape index: {}]
  %s2 = inlined_call_operand.vmem [shape: bf16[512,32], index: 2, kind: input, shape index: {}]
  %s3 = inlined_call_operand.vmem [shape: bf16[512,32], index: 3, kind: input, shape index: {}]
  %s4 = inlined_call_operand.vmem [shape: bf16[512,32], index: 4, kind: input, shape index: {}]
  %s5 = inlined_call_operand.vmem [shape: bf16[288,32], index: 5, kind: input, shape index: {}]
  %s6 = inlined_call_operand.vmem [shape: f32[1,32], index: 6, kind: input, shape index: {}]
  %s7 = inlined_call_operand.vmem [shape: bf16[512,32], index: 7, kind: output, shape index: {}]
  %s8 = sld [smem:[#allocation0]]
  $region38: #{resnet_forward.10} parent=0
    _
  %s10 = ssub.s32 1, %s8
  %s11 = scalar_select 0, %s10, %s8
  // Predicated region
  $region2: #{resnet_forward.10} parent=0 // pred_check
    _
  $region3: #{resnet_forward.10} parent=0 // pred_check_branch
    %13 = sbr.rel (0) target = $region5
  $region4: #{resnet_forward.10} parent=0 // pred_region
    _
  $region5: #{resnet_forward.10} parent=0 // pred_fallthru
    _
  // Predicated region
  $region6: #{resnet_forward.10} parent=0 // pred_check
    _
  $region7: #{resnet_forward.10} parent=0 // pred_check_branch
    %15 = sbr.rel (0) target = $region9
  $region8: #{resnet_forward.10} parent=0 // pred_region
    _
  $region9: #{resnet_forward.10} parent=0 // pred_fallthru
    _
  // Predicated region
  $region10: #{resnet_forward.10} parent=0 // pred_check
    _
  $region11: #{resnet_forward.10} parent=0 // pred_check_branch
    %17 = sbr.rel (0) target = $region13
  $region12: #{resnet_forward.10} parent=0 // pred_region
    _
  $region13: #{resnet_forward.10} parent=0 // pred_fallthru
    _
  // Predicated region
  $region14: #{resnet_forward.10} parent=0 // pred_check
    _
  $region15: #{resnet_forward.10} parent=0 // pred_check_branch
    %19 = sbr.rel (0) target = $region17
  $region16: #{resnet_forward.10} parent=0 // pred_region
    _
  $region17: #{resnet_forward.10} parent=0 // pred_fallthru
    _
  // Predicated region
  $region18: #{resnet_forward.10} parent=0 // pred_check
    _
  $region19: #{resnet_forward.10} parent=0 // pred_check_branch
    %21 = sbr.rel (0) target = $region21
  $region20: #{resnet_forward.10} parent=0 // pred_region
    _
  $region21: #{resnet_forward.10} parent=0 // pred_fallthru
    _
  // Predicated region
  $region22: #{resnet_forward.10} parent=0 // pred_check
    _
  $region23: #{resnet_forward.10} parent=0 // pred_check_branch
    %23 = sbr.rel (0) target = $region25
  $region24: #{resnet_forward.10} parent=0 // pred_region
    _
  $region25: #{resnet_forward.10} parent=0 // pred_fallthru
    _
  // Predicated region
  $region26: #{resnet_forward.10} parent=0 // pred_check
    _
  $region27: #{resnet_forward.10} parent=0 // pred_check_branch
    %25 = sbr.rel (0) target = $region29
  $region28: #{resnet_forward.10} parent=0 // pred_region
    _
  $region29: #{resnet_forward.10} parent=0 // pred_fallthru
    _
  %v27 = vld [vmem:[%s0] sm:$0xff]
  %v28 = vld [vmem:[%s0 + $0x8] sm:$0xf]
  %v29 = vld [vmem:[%s0 + $0xc] sm:$0xff]
  %v30 = vld [vmem:[%s0 + $0x14] sm:$0xf]
  %v31 = vld [vmem:[%s0 + $0x18] sm:$0xff]
  %v32 = vld [vmem:[%s0 + $0x20] sm:$0xf]
  %v33 = vld [vmem:[%s0 + $0x24] sm:$0xff]
  %v34 = vld [vmem:[%s0 + $0x2c] sm:$0xf]
  %v35 = vld [vmem:[%s0 + $0x30] sm:$0xff]
  %v36 = vld [vmem:[%s0 + $0x38] sm:$0xf]
  %v37 = vld [vmem:[%s0 + $0x3c] sm:$0xff]
  %v38 = vld [vmem:[%s0 + $0x44] sm:$0xf]
  %v39 = vld [vmem:[%s0 + $0x48] sm:$0xff]
  %v40 = vld [vmem:[%s0 + $0x50] sm:$0xf]
  %v41 = vld [vmem:[%s0 + $0x54] sm:$0xff]
  %v42 = vld [vmem:[%s0 + $0x5c] sm:$0xf]
  %v43 = vld [vmem:[%s0 + $0x60] sm:$0xff]
  %v44 = vld [vmem:[%s0 + $0x68] sm:$0xf]
  %v45 = vld [vmem:[%s0 + $0x6c] sm:$0xff]
  %v46 = vld [vmem:[%s0 + $0x74] sm:$0xf]
  %v47 = vld [vmem:[%s0 + $0x78] sm:$0xff]
  %v48 = vld [vmem:[%s0 + $0x80] sm:$0xf]
  %v49 = vld [vmem:[%s0 + $0x84] sm:$0xff]
  %v50 = vld [vmem:[%s0 + $0x8c] sm:$0xf]
  %v51 = vld [vmem:[%s0 + $0x90] sm:$0xff]
  %v52 = vld [vmem:[%s0 + $0x98] sm:$0xf]
  %v53 = vld [vmem:[%s0 + $0x9c] sm:$0xff]
  %v54 = vld [vmem:[%s0 + $0xa4] sm:$0xf]
  %v55 = vld [vmem:[%s0 + $0xa8] sm:$0xff]
  %v56 = vld [vmem:[%s0 + $0xb0] sm:$0xf]
  %v57 = vld [vmem:[%s0 + $0xb4] sm:$0xff]
  %v58 = vld [vmem:[%s0 + $0xbc] sm:$0xf]
  %v59 = vld [vmem:[%s0 + $0xc0] sm:$0xff]
  %v60 = vld [vmem:[%s0 + $0xc8] sm:$0xf]
  %v61 = vld [vmem:[%s0 + $0xcc] sm:$0xff]
  %v62 = vld [vmem:[%s0 + $0xd4] sm:$0xf]
  %v63 = vld [vmem:[%s0 + $0xd8] sm:$0xff]
  %v64 = vld [vmem:[%s0 + $0xe0] sm:$0xf]
  %v65 = vld [vmem:[%s0 + $0xe4] sm:$0xff]
  %v66 = vld [vmem:[%s0 + $0xec] sm:$0xf]
  %v67 = vld [vmem:[%s0 + $0xf0] sm:$0xff]
  %v68 = vld [vmem:[%s0 + $0xf8] sm:$0xf]
  %v69 = vld [vmem:[%s0 + $0xfc] sm:$0xff]
  %v70 = vld [vmem:[%s0 + $0x104] sm:$0xf]
  %v71 = vld [vmem:[%s0 + $0x108] sm:$0xff]
  %v72 = vld [vmem:[%s0 + $0x110] sm:$0xf]
  %v73 = vld [vmem:[%s0 + $0x114] sm:$0xff]
  %v74 = vld [vmem:[%s0 + $0x11c] sm:$0xf]
  %v75 = vld [vmem:[%s0 + $0x120] sm:$0xff]
  %v76 = vld [vmem:[%s0 + $0x128] sm:$0xf]
  %v77 = vld [vmem:[%s0 + $0x12c] sm:$0xff]
  %v78 = vld [vmem:[%s0 + $0x134] sm:$0xf]
  %v79 = vld [vmem:[%s0 + $0x138] sm:$0xff]
  %v80 = vld [vmem:[%s0 + $0x140] sm:$0xf]
  %v81 = vld [vmem:[%s0 + $0x144] sm:$0xff]
  %v82 = vld [vmem:[%s0 + $0x14c] sm:$0xf]
  %v83 = vld [vmem:[%s0 + $0x150] sm:$0xff]
  %v84 = vld [vmem:[%s0 + $0x158] sm:$0xf]
  %v85 = vld [vmem:[%s0 + $0x15c] sm:$0xff]
  %v86 = vld [vmem:[%s0 + $0x164] sm:$0xf]
  %v87 = vld [vmem:[%s0 + $0x168] sm:$0xff]
  %v88 = vld [vmem:[%s0 + $0x170] sm:$0xf]
  %v89 = vld [vmem:[%s0 + $0x174] sm:$0xff]
  %v90 = vld [vmem:[%s0 + $0x17c] sm:$0xf]
  %v91 = vld [vmem:[%s0 + $0x180] sm:$0xff]
  %v92 = vld [vmem:[%s0 + $0x188] sm:$0xf]
  %v93 = vld [vmem:[%s0 + $0x18c] sm:$0xff]
  %v94 = vld [vmem:[%s0 + $0x194] sm:$0xf]
  %v95 = vld [vmem:[%s0 + $0x198] sm:$0xff]
  %v96 = vld [vmem:[%s0 + $0x1a0] sm:$0xf]
  %v97 = vld [vmem:[%s0 + $0x1a4] sm:$0xff]
  %v98 = vld [vmem:[%s0 + $0x1ac] sm:$0xf]
  %v99 = vld [vmem:[%s0 + $0x1b0] sm:$0xff]
  %v100 = vld [vmem:[%s0 + $0x1b8] sm:$0xf]
  %v101 = vld [vmem:[%s0 + $0x1bc] sm:$0xff]
  %v102 = vld [vmem:[%s0 + $0x1c4] sm:$0xf]
  %v103 = vld [vmem:[%s0 + $0x1c8] sm:$0xff]
  %v104 = vld [vmem:[%s0 + $0x1d0] sm:$0xf]
  %v105 = vld [vmem:[%s0 + $0x1d4] sm:$0xff]
  %v106 = vld [vmem:[%s0 + $0x1dc] sm:$0xf]
  %v107 = vld [vmem:[%s0 + $0x1e0] sm:$0xff]
  %v108 = vld [vmem:[%s0 + $0x1e8] sm:$0xf]
  %v109 = vld [vmem:[%s0 + $0x1ec] sm:$0xff]
  %v110 = vld [vmem:[%s0 + $0x1f4] sm:$0xf]
  %v111 = vld [vmem:[%s0 + $0x1f8] sm:$0xff]
  %v112 = vld [vmem:[%s0 + $0x200] sm:$0xf]
  %v113 = vld [vmem:[%s0 + $0x204] sm:$0xff]
  %v114 = vld [vmem:[%s0 + $0x20c] sm:$0xf]
  %v115 = vld [vmem:[%s0 + $0x210] sm:$0xff]
  %v116 = vld [vmem:[%s0 + $0x218] sm:$0xf]
  %v117 = vld [vmem:[%s0 + $0x21c] sm:$0xff]
  %v118 = vld [vmem:[%s0 + $0x224] sm:$0xf]
  %v119 = vld [vmem:[%s0 + $0x228] sm:$0xff]
  %v120 = vld [vmem:[%s0 + $0x230] sm:$0xf]
  %v121 = vld [vmem:[%s0 + $0x234] sm:$0xff]
  %v122 = vld [vmem:[%s0 + $0x23c] sm:$0xf]
  %v123 = vld [vmem:[%s0 + $0x240] sm:$0xff]
  %v124 = vld [vmem:[%s0 + $0x248] sm:$0xf]
  %v125 = vld [vmem:[%s0 + $0x24c] sm:$0xff]
  %v126 = vld [vmem:[%s0 + $0x254] sm:$0xf]
  %v127 = vld [vmem:[%s0 + $0x258] sm:$0xff]
  %v128 = vld [vmem:[%s0 + $0x260] sm:$0xf]
  %v129 = vld [vmem:[%s0 + $0x264] sm:$0xff]
  %v130 = vld [vmem:[%s0 + $0x26c] sm:$0xf]
  %v131 = vld [vmem:[%s0 + $0x270] sm:$0xff]
  %v132 = vld [vmem:[%s0 + $0x278] sm:$0xf]
  %v133 = vld [vmem:[%s0 + $0x27c] sm:$0xff]
  %v134 = vld [vmem:[%s0 + $0x284] sm:$0xf]
  %v135 = vld [vmem:[%s0 + $0x288] sm:$0xff]
  %v136 = vld [vmem:[%s0 + $0x290] sm:$0xf]
  %v137 = vld [vmem:[%s0 + $0x294] sm:$0xff]
  %v138 = vld [vmem:[%s0 + $0x29c] sm:$0xf]
  %v139 = vld [vmem:[%s0 + $0x2a0] sm:$0xff]
  %v140 = vld [vmem:[%s0 + $0x2a8] sm:$0xf]
  %v141 = vld [vmem:[%s0 + $0x2ac] sm:$0xff]
  %v142 = vld [vmem:[%s0 + $0x2b4] sm:$0xf]
  %v143 = vld [vmem:[%s0 + $0x2b8] sm:$0xff]
  %v144 = vld [vmem:[%s0 + $0x2c0] sm:$0xf]
  %v145 = vld [vmem:[%s0 + $0x2c4] sm:$0xff]
  %v146 = vld [vmem:[%s0 + $0x2cc] sm:$0xf]
  %v147 = vld [vmem:[%s0 + $0x2d0] sm:$0xff]
  %v148 = vld [vmem:[%s0 + $0x2d8] sm:$0xf]
  %v149 = vld [vmem:[%s0 + $0x2dc] sm:$0xff]
  %v150 = vld [vmem:[%s0 + $0x2e4] sm:$0xf]
  %v151 = vld [vmem:[%s0 + $0x2e8] sm:$0xff]
  %v152 = vld [vmem:[%s0 + $0x2f0] sm:$0xf]
  %v153 = vld [vmem:[%s0 + $0x2f4] sm:$0xff]
  %v154 = vld [vmem:[%s0 + $0x2fc] sm:$0xf]
  %v155 = vld [vmem:[%s5] sm:$0xf]
  %v156 = vld [vmem:[%s5 + $0x4] sm:$0xf]
  %v157 = vld [vmem:[%s5 + $0x8] sm:$0xf]
  %v158 = vld [vmem:[%s5 + $0xc] sm:$0xf]
  %v159 = vld [vmem:[%s5 + $0x10] sm:$0xf]
  %v160 = vld [vmem:[%s5 + $0x14] sm:$0xf]
  %v161 = vld [vmem:[%s5 + $0x18] sm:$0xf]
  %v162 = vld [vmem:[%s5 + $0x1c] sm:$0xf]
  %v163 = vld [vmem:[%s5 + $0x20] sm:$0xf]
  %v164 = vld [vmem:[%s5 + $0x24] sm:$0xf]
  %v165 = vld [vmem:[%s5 + $0x28] sm:$0xf]
  %v166 = vld [vmem:[%s5 + $0x2c] sm:$0xf]
  %v167 = vld [vmem:[%s5 + $0x30] sm:$0xf]
  %v168 = vld [vmem:[%s5 + $0x34] sm:$0xf]
  %v169 = vld [vmem:[%s5 + $0x38] sm:$0xf]
  %v170 = vld [vmem:[%s5 + $0x3c] sm:$0xf]
  %v171 = vld [vmem:[%s5 + $0x40] sm:$0xf]
  %v172 = vld [vmem:[%s5 + $0x44] sm:$0xf]
  %v173 = vld [vmem:[%s5 + $0x48] sm:$0xf]
  %v174 = vld [vmem:[%s5 + $0x4c] sm:$0xf]
  %v175 = vld [vmem:[%s5 + $0x50] sm:$0xf]
  %v176 = vld [vmem:[%s5 + $0x54] sm:$0xf]
  %v177 = vld [vmem:[%s5 + $0x58] sm:$0xf]
  %v178 = vld [vmem:[%s5 + $0x5c] sm:$0xf]
  %v179 = vld [vmem:[%s5 + $0x60] sm:$0xf]
  %v180 = vld [vmem:[%s5 + $0x64] sm:$0xf]
  %v181 = vld [vmem:[%s5 + $0x68] sm:$0xf]
  %v182 = vld [vmem:[%s5 + $0x6c] sm:$0xf]
  %v183 = vld [vmem:[%s5 + $0x70] sm:$0xf]
  %v184 = vld [vmem:[%s5 + $0x74] sm:$0xf]
  %v185 = vld [vmem:[%s5 + $0x78] sm:$0xf]
  %v186 = vld [vmem:[%s5 + $0x7c] sm:$0xf]
  %v187 = vld [vmem:[%s5 + $0x80] sm:$0xf]
  %v188 = vld [vmem:[%s5 + $0x84] sm:$0xf]
  %v189 = vld [vmem:[%s5 + $0x88] sm:$0xf]
  %v190 = vld [vmem:[%s5 + $0x8c] sm:$0xf]
  %v191 = vld [vmem:[%s6] sm:$0x1]
  %v193 = vperm.slane %v191, 0
  %v323 = vunpack.c.l.b16 %v27
  %v324 = vunpack.c.h.b16 %v27
  %v325 = vunpack.c.l.b16 %v28
  %v326 = vunpack.c.l.b16 %v29
  %v327 = vunpack.c.h.b16 %v29
  %v328 = vunpack.c.l.b16 %v30
  %v329 = vunpack.c.l.b16 %v31
  %v330 = vunpack.c.h.b16 %v31
  %v331 = vunpack.c.l.b16 %v32
  %v332 = vunpack.c.l.b16 %v33
  %v333 = vunpack.c.h.b16 %v33
  %v334 = vunpack.c.l.b16 %v34
  %v335 = vunpack.c.l.b16 %v35
  %v336 = vunpack.c.h.b16 %v35
  %v337 = vunpack.c.l.b16 %v36
  %v338 = vunpack.c.l.b16 %v37
  %v339 = vunpack.c.h.b16 %v37
  %v340 = vunpack.c.l.b16 %v38
  %v341 = vunpack.c.l.b16 %v39
  %v342 = vunpack.c.h.b16 %v39
  %v343 = vunpack.c.l.b16 %v40
  %v344 = vunpack.c.l.b16 %v41
  %v345 = vunpack.c.h.b16 %v41
  %v346 = vunpack.c.l.b16 %v42
  %v347 = vunpack.c.l.b16 %v43
  %v348 = vunpack.c.h.b16 %v43
  %v349 = vunpack.c.l.b16 %v44
  %v350 = vunpack.c.l.b16 %v45
  %v351 = vunpack.c.h.b16 %v45
  %v352 = vunpack.c.l.b16 %v46
  %v353 = vunpack.c.l.b16 %v47
  %v354 = vunpack.c.h.b16 %v47
  %v355 = vunpack.c.l.b16 %v48
  %v356 = vunpack.c.l.b16 %v49
  %v357 = vunpack.c.h.b16 %v49
  %v358 = vunpack.c.l.b16 %v50
  %v359 = vunpack.c.l.b16 %v51
  %v360 = vunpack.c.h.b16 %v51
  %v361 = vunpack.c.l.b16 %v52
  %v362 = vunpack.c.l.b16 %v53
  %v363 = vunpack.c.h.b16 %v53
  %v364 = vunpack.c.l.b16 %v54
  %v365 = vunpack.c.l.b16 %v55
  %v366 = vunpack.c.h.b16 %v55
  %v367 = vunpack.c.l.b16 %v56
  %v368 = vunpack.c.l.b16 %v57
  %v369 = vunpack.c.h.b16 %v57
  %v370 = vunpack.c.l.b16 %v58
  %v371 = vunpack.c.l.b16 %v59
  %v372 = vunpack.c.h.b16 %v59
  %v373 = vunpack.c.l.b16 %v60
  %v374 = vunpack.c.l.b16 %v61
  %v375 = vunpack.c.h.b16 %v61
  %v376 = vunpack.c.l.b16 %v62
  %v377 = vunpack.c.l.b16 %v63
  %v378 = vunpack.c.h.b16 %v63
  %v379 = vunpack.c.l.b16 %v64
  %v380 = vunpack.c.l.b16 %v65
  %v381 = vunpack.c.h.b16 %v65
  %v382 = vunpack.c.l.b16 %v66
  %v383 = vunpack.c.l.b16 %v67
  %v384 = vunpack.c.h.b16 %v67
  %v385 = vunpack.c.l.b16 %v68
  %v386 = vunpack.c.l.b16 %v69
  %v387 = vunpack.c.h.b16 %v69
  %v388 = vunpack.c.l.b16 %v70
  %v389 = vunpack.c.l.b16 %v71
  %v390 = vunpack.c.h.b16 %v71
  %v391 = vunpack.c.l.b16 %v72
  %v392 = vunpack.c.l.b16 %v73
  %v393 = vunpack.c.h.b16 %v73
  %v394 = vunpack.c.l.b16 %v74
  %v395 = vunpack.c.l.b16 %v75
  %v396 = vunpack.c.h.b16 %v75
  %v397 = vunpack.c.l.b16 %v76
  %v398 = vunpack.c.l.b16 %v77
  %v399 = vunpack.c.h.b16 %v77
  %v400 = vunpack.c.l.b16 %v78
  %v401 = vunpack.c.l.b16 %v79
  %v402 = vunpack.c.h.b16 %v79
  %v403 = vunpack.c.l.b16 %v80
  %v404 = vunpack.c.l.b16 %v81
  %v405 = vunpack.c.h.b16 %v81
  %v406 = vunpack.c.l.b16 %v82
  %v407 = vunpack.c.l.b16 %v83
  %v408 = vunpack.c.h.b16 %v83
  %v409 = vunpack.c.l.b16 %v84
  %v410 = vunpack.c.l.b16 %v85
  %v411 = vunpack.c.h.b16 %v85
  %v412 = vunpack.c.l.b16 %v86
  %v413 = vunpack.c.l.b16 %v87
  %v414 = vunpack.c.h.b16 %v87
  %v415 = vunpack.c.l.b16 %v88
  %v416 = vunpack.c.l.b16 %v89
  %v417 = vunpack.c.h.b16 %v89
  %v418 = vunpack.c.l.b16 %v90
  %v419 = vunpack.c.l.b16 %v91
  %v420 = vunpack.c.h.b16 %v91
  %v421 = vunpack.c.l.b16 %v92
  %v422 = vunpack.c.l.b16 %v93
  %v423 = vunpack.c.h.b16 %v93
  %v424 = vunpack.c.l.b16 %v94
  %v425 = vunpack.c.l.b16 %v95
  %v426 = vunpack.c.h.b16 %v95
  %v427 = vunpack.c.l.b16 %v96
  %v428 = vunpack.c.l.b16 %v97
  %v429 = vunpack.c.h.b16 %v97
  %v430 = vunpack.c.l.b16 %v98
  %v431 = vunpack.c.l.b16 %v99
  %v432 = vunpack.c.h.b16 %v99
  %v433 = vunpack.c.l.b16 %v100
  %v434 = vunpack.c.l.b16 %v101
  %v435 = vunpack.c.h.b16 %v101
  %v436 = vunpack.c.l.b16 %v102
  %v437 = vunpack.c.l.b16 %v103
  %v438 = vunpack.c.h.b16 %v103
  %v439 = vunpack.c.l.b16 %v104
  %v440 = vunpack.c.l.b16 %v105
  %v441 = vunpack.c.h.b16 %v105
  %v442 = vunpack.c.l.b16 %v106
  %v443 = vunpack.c.l.b16 %v107
  %v444 = vunpack.c.h.b16 %v107
  %v445 = vunpack.c.l.b16 %v108
  %v446 = vunpack.c.l.b16 %v109
  %v447 = vunpack.c.h.b16 %v109
  %v448 = vunpack.c.l.b16 %v110
  %v449 = vunpack.c.l.b16 %v111
  %v450 = vunpack.c.h.b16 %v111
  %v451 = vunpack.c.l.b16 %v112
  %v452 = vunpack.c.l.b16 %v113
  %v453 = vunpack.c.h.b16 %v113
  %v454 = vunpack.c.l.b16 %v114
  %v455 = vunpack.c.l.b16 %v115
  %v456 = vunpack.c.h.b16 %v115
  %v457 = vunpack.c.l.b16 %v116
  %v458 = vunpack.c.l.b16 %v117
  %v459 = vunpack.c.h.b16 %v117
  %v460 = vunpack.c.l.b16 %v118
  %v461 = vunpack.c.l.b16 %v119
  %v462 = vunpack.c.h.b16 %v119
  %v463 = vunpack.c.l.b16 %v120
  %v464 = vunpack.c.l.b16 %v121
  %v465 = vunpack.c.h.b16 %v121
  %v466 = vunpack.c.l.b16 %v122
  %v467 = vunpack.c.l.b16 %v123
  %v468 = vunpack.c.h.b16 %v123
  %v469 = vunpack.c.l.b16 %v124
  %v470 = vunpack.c.l.b16 %v125
  %v471 = vunpack.c.h.b16 %v125
  %v472 = vunpack.c.l.b16 %v126
  %v473 = vunpack.c.l.b16 %v127
  %v474 = vunpack.c.h.b16 %v127
  %v475 = vunpack.c.l.b16 %v128
  %v476 = vunpack.c.l.b16 %v129
  %v477 = vunpack.c.h.b16 %v129
  %v478 = vunpack.c.l.b16 %v130
  %v479 = vunpack.c.l.b16 %v131
  %v480 = vunpack.c.h.b16 %v131
  %v481 = vunpack.c.l.b16 %v132
  %v482 = vunpack.c.l.b16 %v133
  %v483 = vunpack.c.h.b16 %v133
  %v484 = vunpack.c.l.b16 %v134
  %v485 = vunpack.c.l.b16 %v135
  %v486 = vunpack.c.h.b16 %v135
  %v487 = vunpack.c.l.b16 %v136
  %v488 = vunpack.c.l.b16 %v137
  %v489 = vunpack.c.h.b16 %v137
  %v490 = vunpack.c.l.b16 %v138
  %v491 = vunpack.c.l.b16 %v139
  %v492 = vunpack.c.h.b16 %v139
  %v493 = vunpack.c.l.b16 %v140
  %v494 = vunpack.c.l.b16 %v141
  %v495 = vunpack.c.h.b16 %v141
  %v496 = vunpack.c.l.b16 %v142
  %v497 = vunpack.c.l.b16 %v143
  %v498 = vunpack.c.h.b16 %v143
  %v499 = vunpack.c.l.b16 %v144
  %v500 = vunpack.c.l.b16 %v145
  %v501 = vunpack.c.h.b16 %v145
  %v502 = vunpack.c.l.b16 %v146
  %v503 = vunpack.c.l.b16 %v147
  %v504 = vunpack.c.h.b16 %v147
  %v505 = vunpack.c.l.b16 %v148
  %v506 = vunpack.c.l.b16 %v149
  %v507 = vunpack.c.h.b16 %v149
  %v508 = vunpack.c.l.b16 %v150
  %v509 = vunpack.c.l.b16 %v151
  %v510 = vunpack.c.h.b16 %v151
  %v511 = vunpack.c.l.b16 %v152
  %v512 = vunpack.c.l.b16 %v153
  %v513 = vunpack.c.h.b16 %v153
  %v514 = vunpack.c.l.b16 %v154
  %v515 = vpack.c.b16 %v326, %v323
  %v516 = vpack.c.b16 %v327, %v324
  %v517 = vpack.c.b16 %v328, %v325
  %v518 = vpack.c.b16 %v332, %v329
  %v519 = vpack.c.b16 %v333, %v330
  %v520 = vpack.c.b16 %v334, %v331
  %v521 = vpack.c.b16 %v338, %v335
  %v522 = vpack.c.b16 %v339, %v336
  %v523 = vpack.c.b16 %v340, %v337
  %v524 = vpack.c.b16 %v344, %v341
  %v525 = vpack.c.b16 %v345, %v342
  %v526 = vpack.c.b16 %v346, %v343
  %v527 = vpack.c.b16 %v350, %v347
  %v528 = vpack.c.b16 %v351, %v348
  %v529 = vpack.c.b16 %v352, %v349
  %v530 = vpack.c.b16 %v356, %v353
  %v531 = vpack.c.b16 %v357, %v354
  %v532 = vpack.c.b16 %v358, %v355
  %v533 = vpack.c.b16 %v362, %v359
  %v534 = vpack.c.b16 %v363, %v360
  %v535 = vpack.c.b16 %v364, %v361
  %v536 = vpack.c.b16 %v368, %v365
  %v537 = vpack.c.b16 %v369, %v366
  %v538 = vpack.c.b16 %v370, %v367
  %v539 = vpack.c.b16 %v374, %v371
  %v540 = vpack.c.b16 %v375, %v372
  %v541 = vpack.c.b16 %v376, %v373
  %v542 = vpack.c.b16 %v380, %v377
  %v543 = vpack.c.b16 %v381, %v378
  %v544 = vpack.c.b16 %v382, %v379
  %v545 = vpack.c.b16 %v386, %v383
  %v546 = vpack.c.b16 %v387, %v384
  %v547 = vpack.c.b16 %v388, %v385
  %v548 = vpack.c.b16 %v392, %v389
  %v549 = vpack.c.b16 %v393, %v390
  %v550 = vpack.c.b16 %v394, %v391
  %v551 = vpack.c.b16 %v398, %v395
  %v552 = vpack.c.b16 %v399, %v396
  %v553 = vpack.c.b16 %v400, %v397
  %v554 = vpack.c.b16 %v404, %v401
  %v555 = vpack.c.b16 %v405, %v402
  %v556 = vpack.c.b16 %v406, %v403
  %v557 = vpack.c.b16 %v410, %v407
  %v558 = vpack.c.b16 %v411, %v408
  %v559 = vpack.c.b16 %v412, %v409
  %v560 = vpack.c.b16 %v416, %v413
  %v561 = vpack.c.b16 %v417, %v414
  %v562 = vpack.c.b16 %v418, %v415
  %v563 = vpack.c.b16 %v422, %v419
  %v564 = vpack.c.b16 %v423, %v420
  %v565 = vpack.c.b16 %v424, %v421
  %v566 = vpack.c.b16 %v428, %v425
  %v567 = vpack.c.b16 %v429, %v426
  %v568 = vpack.c.b16 %v430, %v427
  %v569 = vpack.c.b16 %v434, %v431
  %v570 = vpack.c.b16 %v435, %v432
  %v571 = vpack.c.b16 %v436, %v433
  %v572 = vpack.c.b16 %v440, %v437
  %v573 = vpack.c.b16 %v441, %v438
  %v574 = vpack.c.b16 %v442, %v439
  %v575 = vpack.c.b16 %v446, %v443
  %v576 = vpack.c.b16 %v447, %v444
  %v577 = vpack.c.b16 %v448, %v445
  %v578 = vpack.c.b16 %v452, %v449
  %v579 = vpack.c.b16 %v453, %v450
  %v580 = vpack.c.b16 %v454, %v451
  %v581 = vpack.c.b16 %v458, %v455
  %v582 = vpack.c.b16 %v459, %v456
  %v583 = vpack.c.b16 %v460, %v457
  %v584 = vpack.c.b16 %v464, %v461
  %v585 = vpack.c.b16 %v465, %v462
  %v586 = vpack.c.b16 %v466, %v463
  %v587 = vpack.c.b16 %v470, %v467
  %v588 = vpack.c.b16 %v471, %v468
  %v589 = vpack.c.b16 %v472, %v469
  %v590 = vpack.c.b16 %v476, %v473
  %v591 = vpack.c.b16 %v477, %v474
  %v592 = vpack.c.b16 %v478, %v475
  %v593 = vpack.c.b16 %v482, %v479
  %v594 = vpack.c.b16 %v483, %v480
  %v595 = vpack.c.b16 %v484, %v481
  %v596 = vpack.c.b16 %v488, %v485
  %v597 = vpack.c.b16 %v489, %v486
  %v598 = vpack.c.b16 %v490, %v487
  %v599 = vpack.c.b16 %v494, %v491
  %v600 = vpack.c.b16 %v495, %v492
  %v601 = vpack.c.b16 %v496, %v493
  %v602 = vpack.c.b16 %v500, %v497
  %v603 = vpack.c.b16 %v501, %v498
  %v604 = vpack.c.b16 %v502, %v499
  %v605 = vpack.c.b16 %v506, %v503
  %v606 = vpack.c.b16 %v507, %v504
  %v607 = vpack.c.b16 %v508, %v505
  %v608 = vpack.c.b16 %v512, %v509
  %v609 = vpack.c.b16 %v513, %v510
  %v610 = vpack.c.b16 %v514, %v511
  %v711 = vunpack.c.l.b16 %v155
  %v712 = vunpack.c.l.b16 %v156
  %v713 = vunpack.c.l.b16 %v157
  %v714 = vunpack.c.l.b16 %v158
  %v715 = vunpack.c.l.b16 %v159
  %v716 = vunpack.c.l.b16 %v160
  %v717 = vunpack.c.l.b16 %v161
  %v718 = vunpack.c.l.b16 %v162
  %v719 = vunpack.c.l.b16 %v163
  %v720 = vunpack.c.l.b16 %v164
  %v721 = vunpack.c.l.b16 %v165
  %v722 = vunpack.c.l.b16 %v166
  %v723 = vunpack.c.l.b16 %v167
  %v724 = vunpack.c.l.b16 %v168
  %v725 = vunpack.c.l.b16 %v169
  %v726 = vunpack.c.l.b16 %v170
  %v727 = vunpack.c.l.b16 %v171
  %v728 = vunpack.c.l.b16 %v172
  %v729 = vunpack.c.l.b16 %v173
  %v730 = vunpack.c.l.b16 %v174
  %v731 = vunpack.c.l.b16 %v175
  %v732 = vunpack.c.l.b16 %v176
  %v733 = vunpack.c.l.b16 %v177
  %v734 = vunpack.c.l.b16 %v178
  %v735 = vunpack.c.l.b16 %v179
  %v736 = vunpack.c.l.b16 %v180
  %v737 = vunpack.c.l.b16 %v181
  %v738 = vunpack.c.l.b16 %v182
  %v739 = vunpack.c.l.b16 %v183
  %v740 = vunpack.c.l.b16 %v184
  %v741 = vunpack.c.l.b16 %v185
  %v742 = vunpack.c.l.b16 %v186
  %v743 = vunpack.c.l.b16 %v187
  %v744 = vunpack.c.l.b16 %v188
  %v745 = vunpack.c.l.b16 %v189
  %v746 = vunpack.c.l.b16 %v190
  %v747 = vpack.c.b16 %v712, %v711
  %v748 = vpack.c.b16 %v714, %v713
  %v749 = vpack.c.b16 %v716, %v715
  %v750 = vpack.c.b16 %v718, %v717
  %v751 = vpack.c.b16 %v720, %v719
  %v752 = vpack.c.b16 %v722, %v721
  %v753 = vpack.c.b16 %v724, %v723
  %v754 = vpack.c.b16 %v726, %v725
  %v755 = vpack.c.b16 %v728, %v727
  %v756 = vpack.c.b16 %v730, %v729
  %v757 = vpack.c.b16 %v732, %v731
  %v758 = vpack.c.b16 %v734, %v733
  %v759 = vpack.c.b16 %v736, %v735
  %v760 = vpack.c.b16 %v738, %v737
  %v761 = vpack.c.b16 %v740, %v739
  %v762 = vpack.c.b16 %v742, %v741
  %v763 = vpack.c.b16 %v744, %v743
  %v764 = vpack.c.b16 %v746, %v745
  %vm783 = vcmask 261120
  %v785 = vsel %vm783, %v517, 0
  %v788 = vsel %vm783, %v520, 0
  %v791 = vsel %vm783, %v523, 0
  %v794 = vsel %vm783, %v526, 0
  %v797 = vsel %vm783, %v529, 0
  %v800 = vsel %vm783, %v532, 0
  %v803 = vsel %vm783, %v535, 0
  %v806 = vsel %vm783, %v538, 0
  %v809 = vsel %vm783, %v541, 0
  %v812 = vsel %vm783, %v544, 0
  %v815 = vsel %vm783, %v547, 0
  %v818 = vsel %vm783, %v550, 0
  %v821 = vsel %vm783, %v553, 0
  %v824 = vsel %vm783, %v556, 0
  %v827 = vsel %vm783, %v559, 0
  %v830 = vsel %vm783, %v562, 0
  %v833 = vsel %vm783, %v565, 0
  %v836 = vsel %vm783, %v568, 0
  %v839 = vsel %vm783, %v571, 0
  %v842 = vsel %vm783, %v574, 0
  %v845 = vsel %vm783, %v577, 0
  %v848 = vsel %vm783, %v580, 0
  %v851 = vsel %vm783, %v583, 0
  %v854 = vsel %vm783, %v586, 0
  %v857 = vsel %vm783, %v589, 0
  %v860 = vsel %vm783, %v592, 0
  %v863 = vsel %vm783, %v595, 0
  %v866 = vsel %vm783, %v598, 0
  %v869 = vsel %vm783, %v601, 0
  %v872 = vsel %vm783, %v604, 0
  %v875 = vsel %vm783, %v607, 0
  %v878 = vsel %vm783, %v610, 0
  %880 = vmatpush.bf16.msra.mxu0 %v754
  %881 = vmatpush.bf16.msra.mxu0 %v753
  %882 = vmatpush.bf16.msra.mxu0 %v752
  %883 = vmatpush.bf16.msra.mxu0 %v751
  %884 = vmatpush.bf16.msra.mxu0 %v750
  %885 = vmatpush.bf16.msra.mxu0 %v749
  %886 = vmatpush.bf16.msra.mxu0 %v748
  %887 = vmatpush.bf16.msra.mxu0 %v747
  %888 = vmatmul.bf16.gmra.mxu0 %v515
  %v889 = vpop.f32.mrf.mxu0
  %v890 = vadd.f32 %v193, %v889
  %v891 = vpop.f32.mrf.mxu0
  %v892 = vadd.f32 %v193, %v891
  %893 = vmatmul.bf16.gmra.mxu0 %v518
  %v894 = vpop.f32.mrf.mxu0
  %v895 = vadd.f32 %v193, %v894
  %v896 = vpop.f32.mrf.mxu0
  %v897 = vadd.f32 %v193, %v896
  %898 = vmatmul.bf16.gmra.mxu0 %v521
  %v899 = vpop.f32.mrf.mxu0
  %v900 = vadd.f32 %v193, %v899
  %v901 = vpop.f32.mrf.mxu0
  %v902 = vadd.f32 %v193, %v901
  %903 = vmatmul.bf16.gmra.mxu0 %v524
  %v904 = vpop.f32.mrf.mxu0
  %v905 = vadd.f32 %v193, %v904
  %v906 = vpop.f32.mrf.mxu0
  %v907 = vadd.f32 %v193, %v906
  %908 = vmatmul.bf16.gmra.mxu0 %v527
  %v909 = vpop.f32.mrf.mxu0
  %v910 = vadd.f32 %v193, %v909
  %v911 = vpop.f32.mrf.mxu0
  %v912 = vadd.f32 %v193, %v911
  %913 = vmatmul.bf16.gmra.mxu0 %v530
  %v914 = vpop.f32.mrf.mxu0
  %v915 = vadd.f32 %v193, %v914
  %v916 = vpop.f32.mrf.mxu0
  %v917 = vadd.f32 %v193, %v916
  %918 = vmatmul.bf16.gmra.mxu0 %v533
  %v919 = vpop.f32.mrf.mxu0
  %v920 = vadd.f32 %v193, %v919
  %v921 = vpop.f32.mrf.mxu0
  %v922 = vadd.f32 %v193, %v921
  %923 = vmatmul.bf16.gmra.mxu0 %v536
  %v924 = vpop.f32.mrf.mxu0
  %v925 = vadd.f32 %v193, %v924
  %v926 = vpop.f32.mrf.mxu0
  %v927 = vadd.f32 %v193, %v926
  %928 = vmatmul.bf16.gmra.mxu0 %v539
  %v929 = vpop.f32.mrf.mxu0
  %v930 = vadd.f32 %v193, %v929
  %v931 = vpop.f32.mrf.mxu0
  %v932 = vadd.f32 %v193, %v931
  %933 = vmatmul.bf16.gmra.mxu0 %v542
  %v934 = vpop.f32.mrf.mxu0
  %v935 = vadd.f32 %v193, %v934
  %v936 = vpop.f32.mrf.mxu0
  %v937 = vadd.f32 %v193, %v936
  %938 = vmatmul.bf16.gmra.mxu0 %v545
  %v939 = vpop.f32.mrf.mxu0
  %v940 = vadd.f32 %v193, %v939
  %v941 = vpop.f32.mrf.mxu0
  %v942 = vadd.f32 %v193, %v941
  %943 = vmatmul.bf16.gmra.mxu0 %v548
  %v944 = vpop.f32.mrf.mxu0
  %v945 = vadd.f32 %v193, %v944
  %v946 = vpop.f32.mrf.mxu0
  %v947 = vadd.f32 %v193, %v946
  %948 = vmatmul.bf16.gmra.mxu0 %v551
  %v949 = vpop.f32.mrf.mxu0
  %v950 = vadd.f32 %v193, %v949
  %v951 = vpop.f32.mrf.mxu0
  %v952 = vadd.f32 %v193, %v951
  %953 = vmatmul.bf16.gmra.mxu0 %v554
  %v954 = vpop.f32.mrf.mxu0
  %v955 = vadd.f32 %v193, %v954
  %v956 = vpop.f32.mrf.mxu0
  %v957 = vadd.f32 %v193, %v956
  %958 = vmatmul.bf16.gmra.mxu0 %v557
  %v959 = vpop.f32.mrf.mxu0
  %v960 = vadd.f32 %v193, %v959
  %v961 = vpop.f32.mrf.mxu0
  %v962 = vadd.f32 %v193, %v961
  %963 = vmatmul.bf16.gmra.mxu0 %v560
  %v964 = vpop.f32.mrf.mxu0
  %v965 = vadd.f32 %v193, %v964
  %v966 = vpop.f32.mrf.mxu0
  %v967 = vadd.f32 %v193, %v966
  %968 = vmatmul.bf16.gmra.mxu0 %v563
  %v969 = vpop.f32.mrf.mxu0
  %v970 = vadd.f32 %v193, %v969
  %v971 = vpop.f32.mrf.mxu0
  %v972 = vadd.f32 %v193, %v971
  %973 = vmatmul.bf16.gmra.mxu0 %v566
  %v974 = vpop.f32.mrf.mxu0
  %v975 = vadd.f32 %v193, %v974
  %v976 = vpop.f32.mrf.mxu0
  %v977 = vadd.f32 %v193, %v976
  %978 = vmatmul.bf16.gmra.mxu0 %v569
  %v979 = vpop.f32.mrf.mxu0
  %v980 = vadd.f32 %v193, %v979
  %v981 = vpop.f32.mrf.mxu0
  %v982 = vadd.f32 %v193, %v981
  %983 = vmatmul.bf16.gmra.mxu0 %v572
  %v984 = vpop.f32.mrf.mxu0
  %v985 = vadd.f32 %v193, %v984
  %v986 = vpop.f32.mrf.mxu0
  %v987 = vadd.f32 %v193, %v986
  %988 = vmatmul.bf16.gmra.mxu0 %v575
  %v989 = vpop.f32.mrf.mxu0
  %v990 = vadd.f32 %v193, %v989
  %v991 = vpop.f32.mrf.mxu0
  %v992 = vadd.f32 %v193, %v991
  %993 = vmatmul.bf16.gmra.mxu0 %v578
  %v994 = vpop.f32.mrf.mxu0
  %v995 = vadd.f32 %v193, %v994
  %v996 = vpop.f32.mrf.mxu0
  %v997 = vadd.f32 %v193, %v996
  %998 = vmatmul.bf16.gmra.mxu0 %v581
  %v999 = vpop.f32.mrf.mxu0
  %v1000 = vadd.f32 %v193, %v999
  %v1001 = vpop.f32.mrf.mxu0
  %v1002 = vadd.f32 %v193, %v1001
  %1003 = vmatmul.bf16.gmra.mxu0 %v584
  %v1004 = vpop.f32.mrf.mxu0
  %v1005 = vadd.f32 %v193, %v1004
  %v1006 = vpop.f32.mrf.mxu0
  %v1007 = vadd.f32 %v193, %v1006
  %1008 = vmatmul.bf16.gmra.mxu0 %v587
  %v1009 = vpop.f32.mrf.mxu0
  %v1010 = vadd.f32 %v193, %v1009
  %v1011 = vpop.f32.mrf.mxu0
  %v1012 = vadd.f32 %v193, %v1011
  %1013 = vmatmul.bf16.gmra.mxu0 %v590
  %v1014 = vpop.f32.mrf.mxu0
  %v1015 = vadd.f32 %v193, %v1014
  %v1016 = vpop.f32.mrf.mxu0
  %v1017 = vadd.f32 %v193, %v1016
  %1018 = vmatmul.bf16.gmra.mxu0 %v593
  %v1019 = vpop.f32.mrf.mxu0
  %v1020 = vadd.f32 %v193, %v1019
  %v1021 = vpop.f32.mrf.mxu0
  %v1022 = vadd.f32 %v193, %v1021
  %1023 = vmatmul.bf16.gmra.mxu0 %v596
  %v1024 = vpop.f32.mrf.mxu0
  %v1025 = vadd.f32 %v193, %v1024
  %v1026 = vpop.f32.mrf.mxu0
  %v1027 = vadd.f32 %v193, %v1026
  %1028 = vmatmul.bf16.gmra.mxu0 %v599
  %v1029 = vpop.f32.mrf.mxu0
  %v1030 = vadd.f32 %v193, %v1029
  %v1031 = vpop.f32.mrf.mxu0
  %v1032 = vadd.f32 %v193, %v1031
  %1033 = vmatmul.bf16.gmra.mxu0 %v602
  %v1034 = vpop.f32.mrf.mxu0
  %v1035 = vadd.f32 %v193, %v1034
  %v1036 = vpop.f32.mrf.mxu0
  %v1037 = vadd.f32 %v193, %v1036
  %1038 = vmatmul.bf16.gmra.mxu0 %v605
  %v1039 = vpop.f32.mrf.mxu0
  %v1040 = vadd.f32 %v193, %v1039
  %v1041 = vpop.f32.mrf.mxu0
  %v1042 = vadd.f32 %v193, %v1041
  %1043 = vmatmul.bf16.gmra.mxu0 %v608
  %v1044 = vpop.f32.mrf.mxu0
  %v1045 = vadd.f32 %v193, %v1044
  %v1046 = vpop.f32.mrf.mxu0
  %v1047 = vadd.f32 %v193, %v1046
  %1048 = vdwg.mxu0
  %1049 = vmatpush.bf16.msra.mxu0 %v762
  %1050 = vmatpush.bf16.msra.mxu0 %v761
  %1051 = vmatpush.bf16.msra.mxu0 %v760
  %1052 = vmatpush.bf16.msra.mxu0 %v759
  %1053 = vmatpush.bf16.msra.mxu0 %v758
  %1054 = vmatpush.bf16.msra.mxu0 %v757
  %1055 = vmatpush.bf16.msra.mxu0 %v756
  %1056 = vmatpush.bf16.msra.mxu0 %v755
  %1057 = vmatmul.bf16.gmra.mxu0 %v516
  %v1058 = vpop.f32.mrf.mxu0
  %v1059 = vadd.f32 %v890, %v1058
  %v1060 = vpop.f32.mrf.mxu0
  %v1061 = vadd.f32 %v892, %v1060
  %1062 = vmatmul.bf16.gmra.mxu0 %v519
  %v1063 = vpop.f32.mrf.mxu0
  %v1064 = vadd.f32 %v895, %v1063
  %v1065 = vpop.f32.mrf.mxu0
  %v1066 = vadd.f32 %v897, %v1065
  %1067 = vmatmul.bf16.gmra.mxu0 %v522
  %v1068 = vpop.f32.mrf.mxu0
  %v1069 = vadd.f32 %v900, %v1068
  %v1070 = vpop.f32.mrf.mxu0
  %v1071 = vadd.f32 %v902, %v1070
  %1072 = vmatmul.bf16.gmra.mxu0 %v525
  %v1073 = vpop.f32.mrf.mxu0
  %v1074 = vadd.f32 %v905, %v1073
  %v1075 = vpop.f32.mrf.mxu0
  %v1076 = vadd.f32 %v907, %v1075
  %1077 = vmatmul.bf16.gmra.mxu0 %v528
  %v1078 = vpop.f32.mrf.mxu0
  %v1079 = vadd.f32 %v910, %v1078
  %v1080 = vpop.f32.mrf.mxu0
  %v1081 = vadd.f32 %v912, %v1080
  %1082 = vmatmul.bf16.gmra.mxu0 %v531
  %v1083 = vpop.f32.mrf.mxu0
  %v1084 = vadd.f32 %v915, %v1083
  %v1085 = vpop.f32.mrf.mxu0
  %v1086 = vadd.f32 %v917, %v1085
  %1087 = vmatmul.bf16.gmra.mxu0 %v534
  %v1088 = vpop.f32.mrf.mxu0
  %v1089 = vadd.f32 %v920, %v1088
  %v1090 = vpop.f32.mrf.mxu0
  %v1091 = vadd.f32 %v922, %v1090
  %1092 = vmatmul.bf16.gmra.mxu0 %v537
  %v1093 = vpop.f32.mrf.mxu0
  %v1094 = vadd.f32 %v925, %v1093
  %v1095 = vpop.f32.mrf.mxu0
  %v1096 = vadd.f32 %v927, %v1095
  %1097 = vmatmul.bf16.gmra.mxu0 %v540
  %v1098 = vpop.f32.mrf.mxu0
  %v1099 = vadd.f32 %v930, %v1098
  %v1100 = vpop.f32.mrf.mxu0
  %v1101 = vadd.f32 %v932, %v1100
  %1102 = vmatmul.bf16.gmra.mxu0 %v543
  %v1103 = vpop.f32.mrf.mxu0
  %v1104 = vadd.f32 %v935, %v1103
  %v1105 = vpop.f32.mrf.mxu0
  %v1106 = vadd.f32 %v937, %v1105
  %1107 = vmatmul.bf16.gmra.mxu0 %v546
  %v1108 = vpop.f32.mrf.mxu0
  %v1109 = vadd.f32 %v940, %v1108
  %v1110 = vpop.f32.mrf.mxu0
  %v1111 = vadd.f32 %v942, %v1110
  %1112 = vmatmul.bf16.gmra.mxu0 %v549
  %v1113 = vpop.f32.mrf.mxu0
  %v1114 = vadd.f32 %v945, %v1113
  %v1115 = vpop.f32.mrf.mxu0
  %v1116 = vadd.f32 %v947, %v1115
  %1117 = vmatmul.bf16.gmra.mxu0 %v552
  %v1118 = vpop.f32.mrf.mxu0
  %v1119 = vadd.f32 %v950, %v1118
  %v1120 = vpop.f32.mrf.mxu0
  %v1121 = vadd.f32 %v952, %v1120
  %1122 = vmatmul.bf16.gmra.mxu0 %v555
  %v1123 = vpop.f32.mrf.mxu0
  %v1124 = vadd.f32 %v955, %v1123
  %v1125 = vpop.f32.mrf.mxu0
  %v1126 = vadd.f32 %v957, %v1125
  %1127 = vmatmul.bf16.gmra.mxu0 %v558
  %v1128 = vpop.f32.mrf.mxu0
  %v1129 = vadd.f32 %v960, %v1128
  %v1130 = vpop.f32.mrf.mxu0
  %v1131 = vadd.f32 %v962, %v1130
  %1132 = vmatmul.bf16.gmra.mxu0 %v561
  %v1133 = vpop.f32.mrf.mxu0
  %v1134 = vadd.f32 %v965, %v1133
  %v1135 = vpop.f32.mrf.mxu0
  %v1136 = vadd.f32 %v967, %v1135
  %1137 = vmatmul.bf16.gmra.mxu0 %v564
  %v1138 = vpop.f32.mrf.mxu0
  %v1139 = vadd.f32 %v970, %v1138
  %v1140 = vpop.f32.mrf.mxu0
  %v1141 = vadd.f32 %v972, %v1140
  %1142 = vmatmul.bf16.gmra.mxu0 %v567
  %v1143 = vpop.f32.mrf.mxu0
  %v1144 = vadd.f32 %v975, %v1143
  %v1145 = vpop.f32.mrf.mxu0
  %v1146 = vadd.f32 %v977, %v1145
  %1147 = vmatmul.bf16.gmra.mxu0 %v570
  %v1148 = vpop.f32.mrf.mxu0
  %v1149 = vadd.f32 %v980, %v1148
  %v1150 = vpop.f32.mrf.mxu0
  %v1151 = vadd.f32 %v982, %v1150
  %1152 = vmatmul.bf16.gmra.mxu0 %v573
  %v1153 = vpop.f32.mrf.mxu0
  %v1154 = vadd.f32 %v985, %v1153
  %v1155 = vpop.f32.mrf.mxu0
  %v1156 = vadd.f32 %v987, %v1155
  %1157 = vmatmul.bf16.gmra.mxu0 %v576
  %v1158 = vpop.f32.mrf.mxu0
  %v1159 = vadd.f32 %v990, %v1158
  %v1160 = vpop.f32.mrf.mxu0
  %v1161 = vadd.f32 %v992, %v1160
  %1162 = vmatmul.bf16.gmra.mxu0 %v579
  %v1163 = vpop.f32.mrf.mxu0
  %v1164 = vadd.f32 %v995, %v1163
  %v1165 = vpop.f32.mrf.mxu0
  %v1166 = vadd.f32 %v997, %v1165
  %1167 = vmatmul.bf16.gmra.mxu0 %v582
  %v1168 = vpop.f32.mrf.mxu0
  %v1169 = vadd.f32 %v1000, %v1168
  %v1170 = vpop.f32.mrf.mxu0
  %v1171 = vadd.f32 %v1002, %v1170
  %1172 = vmatmul.bf16.gmra.mxu0 %v585
  %v1173 = vpop.f32.mrf.mxu0
  %v1174 = vadd.f32 %v1005, %v1173
  %v1175 = vpop.f32.mrf.mxu0
  %v1176 = vadd.f32 %v1007, %v1175
  %1177 = vmatmul.bf16.gmra.mxu0 %v588
  %v1178 = vpop.f32.mrf.mxu0
  %v1179 = vadd.f32 %v1010, %v1178
  %v1180 = vpop.f32.mrf.mxu0
  %v1181 = vadd.f32 %v1012, %v1180
  %1182 = vmatmul.bf16.gmra.mxu0 %v591
  %v1183 = vpop.f32.mrf.mxu0
  %v1184 = vadd.f32 %v1015, %v1183
  %v1185 = vpop.f32.mrf.mxu0
  %v1186 = vadd.f32 %v1017, %v1185
  %1187 = vmatmul.bf16.gmra.mxu0 %v594
  %v1188 = vpop.f32.mrf.mxu0
  %v1189 = vadd.f32 %v1020, %v1188
  %v1190 = vpop.f32.mrf.mxu0
  %v1191 = vadd.f32 %v1022, %v1190
  %1192 = vmatmul.bf16.gmra.mxu0 %v597
  %v1193 = vpop.f32.mrf.mxu0
  %v1194 = vadd.f32 %v1025, %v1193
  %v1195 = vpop.f32.mrf.mxu0
  %v1196 = vadd.f32 %v1027, %v1195
  %1197 = vmatmul.bf16.gmra.mxu0 %v600
  %v1198 = vpop.f32.mrf.mxu0
  %v1199 = vadd.f32 %v1030, %v1198
  %v1200 = vpop.f32.mrf.mxu0
  %v1201 = vadd.f32 %v1032, %v1200
  %1202 = vmatmul.bf16.gmra.mxu0 %v603
  %v1203 = vpop.f32.mrf.mxu0
  %v1204 = vadd.f32 %v1035, %v1203
  %v1205 = vpop.f32.mrf.mxu0
  %v1206 = vadd.f32 %v1037, %v1205
  %1207 = vmatmul.bf16.gmra.mxu0 %v606
  %v1208 = vpop.f32.mrf.mxu0
  %v1209 = vadd.f32 %v1040, %v1208
  %v1210 = vpop.f32.mrf.mxu0
  %v1211 = vadd.f32 %v1042, %v1210
  %1212 = vmatmul.bf16.gmra.mxu0 %v609
  %v1213 = vpop.f32.mrf.mxu0
  %v1214 = vadd.f32 %v1045, %v1213
  %v1215 = vpop.f32.mrf.mxu0
  %v1216 = vadd.f32 %v1047, %v1215
  %1217 = vdwg.mxu0
  %1218 = vmatpush.bf16.msra.mxu0 0
  %1219 = vmatpush.bf16.msra.mxu0 0
  %1220 = vmatpush.bf16.msra.mxu0 0
  %1221 = vmatpush.bf16.msra.mxu0 0
  %1222 = vmatpush.bf16.msra.mxu0 0
  %1223 = vmatpush.bf16.msra.mxu0 0
  %1224 = vmatpush.bf16.msra.mxu0 %v764
  %1225 = vmatpush.bf16.msra.mxu0 %v763
  %1226 = vmatmul.bf16.gmra.mxu0 %v785
  %v1227 = vpop.f32.mrf.mxu0
  %v1228 = vadd.f32 %v1059, %v1227
  %v1229 = vpop.f32.mrf.mxu0
  %v1230 = vadd.f32 %v1061, %v1229
  %1231 = vmatmul.bf16.gmra.mxu0 %v788
  %v1232 = vpop.f32.mrf.mxu0
  %v1233 = vadd.f32 %v1064, %v1232
  %v1234 = vpop.f32.mrf.mxu0
  %v1235 = vadd.f32 %v1066, %v1234
  %1236 = vmatmul.bf16.gmra.mxu0 %v791
  %v1237 = vpop.f32.mrf.mxu0
  %v1238 = vadd.f32 %v1069, %v1237
  %v1239 = vpop.f32.mrf.mxu0
  %v1240 = vadd.f32 %v1071, %v1239
  %1241 = vmatmul.bf16.gmra.mxu0 %v794
  %v1242 = vpop.f32.mrf.mxu0
  %v1243 = vadd.f32 %v1074, %v1242
  %v1244 = vpop.f32.mrf.mxu0
  %v1245 = vadd.f32 %v1076, %v1244
  %1246 = vmatmul.bf16.gmra.mxu0 %v797
  %v1247 = vpop.f32.mrf.mxu0
  %v1248 = vadd.f32 %v1079, %v1247
  %v1249 = vpop.f32.mrf.mxu0
  %v1250 = vadd.f32 %v1081, %v1249
  %1251 = vmatmul.bf16.gmra.mxu0 %v800
  %v1252 = vpop.f32.mrf.mxu0
  %v1253 = vadd.f32 %v1084, %v1252
  %v1254 = vpop.f32.mrf.mxu0
  %v1255 = vadd.f32 %v1086, %v1254
  %1256 = vmatmul.bf16.gmra.mxu0 %v803
  %v1257 = vpop.f32.mrf.mxu0
  %v1258 = vadd.f32 %v1089, %v1257
  %v1259 = vpop.f32.mrf.mxu0
  %v1260 = vadd.f32 %v1091, %v1259
  %1261 = vmatmul.bf16.gmra.mxu0 %v806
  %v1262 = vpop.f32.mrf.mxu0
  %v1263 = vadd.f32 %v1094, %v1262
  %v1264 = vpop.f32.mrf.mxu0
  %v1265 = vadd.f32 %v1096, %v1264
  %1266 = vmatmul.bf16.gmra.mxu0 %v809
  %v1267 = vpop.f32.mrf.mxu0
  %v1268 = vadd.f32 %v1099, %v1267
  %v1269 = vpop.f32.mrf.mxu0
  %v1270 = vadd.f32 %v1101, %v1269
  %1271 = vmatmul.bf16.gmra.mxu0 %v812
  %v1272 = vpop.f32.mrf.mxu0
  %v1273 = vadd.f32 %v1104, %v1272
  %v1274 = vpop.f32.mrf.mxu0
  %v1275 = vadd.f32 %v1106, %v1274
  %1276 = vmatmul.bf16.gmra.mxu0 %v815
  %v1277 = vpop.f32.mrf.mxu0
  %v1278 = vadd.f32 %v1109, %v1277
  %v1279 = vpop.f32.mrf.mxu0
  %v1280 = vadd.f32 %v1111, %v1279
  %1281 = vmatmul.bf16.gmra.mxu0 %v818
  %v1282 = vpop.f32.mrf.mxu0
  %v1283 = vadd.f32 %v1114, %v1282
  %v1284 = vpop.f32.mrf.mxu0
  %v1285 = vadd.f32 %v1116, %v1284
  %1286 = vmatmul.bf16.gmra.mxu0 %v821
  %v1287 = vpop.f32.mrf.mxu0
  %v1288 = vadd.f32 %v1119, %v1287
  %v1289 = vpop.f32.mrf.mxu0
  %v1290 = vadd.f32 %v1121, %v1289
  %1291 = vmatmul.bf16.gmra.mxu0 %v824
  %v1292 = vpop.f32.mrf.mxu0
  %v1293 = vadd.f32 %v1124, %v1292
  %v1294 = vpop.f32.mrf.mxu0
  %v1295 = vadd.f32 %v1126, %v1294
  %1296 = vmatmul.bf16.gmra.mxu0 %v827
  %v1297 = vpop.f32.mrf.mxu0
  %v1298 = vadd.f32 %v1129, %v1297
  %v1299 = vpop.f32.mrf.mxu0
  %v1300 = vadd.f32 %v1131, %v1299
  %1301 = vmatmul.bf16.gmra.mxu0 %v830
  %v1302 = vpop.f32.mrf.mxu0
  %v1303 = vadd.f32 %v1134, %v1302
  %v1304 = vpop.f32.mrf.mxu0
  %v1305 = vadd.f32 %v1136, %v1304
  %1306 = vmatmul.bf16.gmra.mxu0 %v833
  %v1307 = vpop.f32.mrf.mxu0
  %v1308 = vadd.f32 %v1139, %v1307
  %v1309 = vpop.f32.mrf.mxu0
  %v1310 = vadd.f32 %v1141, %v1309
  %1311 = vmatmul.bf16.gmra.mxu0 %v836
  %v1312 = vpop.f32.mrf.mxu0
  %v1313 = vadd.f32 %v1144, %v1312
  %v1314 = vpop.f32.mrf.mxu0
  %v1315 = vadd.f32 %v1146, %v1314
  %1316 = vmatmul.bf16.gmra.mxu0 %v839
  %v1317 = vpop.f32.mrf.mxu0
  %v1318 = vadd.f32 %v1149, %v1317
  %v1319 = vpop.f32.mrf.mxu0
  %v1320 = vadd.f32 %v1151, %v1319
  %1321 = vmatmul.bf16.gmra.mxu0 %v842
  %v1322 = vpop.f32.mrf.mxu0
  %v1323 = vadd.f32 %v1154, %v1322
  %v1324 = vpop.f32.mrf.mxu0
  %v1325 = vadd.f32 %v1156, %v1324
  %1326 = vmatmul.bf16.gmra.mxu0 %v845
  %v1327 = vpop.f32.mrf.mxu0
  %v1328 = vadd.f32 %v1159, %v1327
  %v1329 = vpop.f32.mrf.mxu0
  %v1330 = vadd.f32 %v1161, %v1329
  %1331 = vmatmul.bf16.gmra.mxu0 %v848
  %v1332 = vpop.f32.mrf.mxu0
  %v1333 = vadd.f32 %v1164, %v1332
  %v1334 = vpop.f32.mrf.mxu0
  %v1335 = vadd.f32 %v1166, %v1334
  %1336 = vmatmul.bf16.gmra.mxu0 %v851
  %v1337 = vpop.f32.mrf.mxu0
  %v1338 = vadd.f32 %v1169, %v1337
  %v1339 = vpop.f32.mrf.mxu0
  %v1340 = vadd.f32 %v1171, %v1339
  %1341 = vmatmul.bf16.gmra.mxu0 %v854
  %v1342 = vpop.f32.mrf.mxu0
  %v1343 = vadd.f32 %v1174, %v1342
  %v1344 = vpop.f32.mrf.mxu0
  %v1345 = vadd.f32 %v1176, %v1344
  %1346 = vmatmul.bf16.gmra.mxu0 %v857
  %v1347 = vpop.f32.mrf.mxu0
  %v1348 = vadd.f32 %v1179, %v1347
  %v1349 = vpop.f32.mrf.mxu0
  %v1350 = vadd.f32 %v1181, %v1349
  %1351 = vmatmul.bf16.gmra.mxu0 %v860
  %v1352 = vpop.f32.mrf.mxu0
  %v1353 = vadd.f32 %v1184, %v1352
  %v1354 = vpop.f32.mrf.mxu0
  %v1355 = vadd.f32 %v1186, %v1354
  %1356 = vmatmul.bf16.gmra.mxu0 %v863
  %v1357 = vpop.f32.mrf.mxu0
  %v1358 = vadd.f32 %v1189, %v1357
  %v1359 = vpop.f32.mrf.mxu0
  %v1360 = vadd.f32 %v1191, %v1359
  %1361 = vmatmul.bf16.gmra.mxu0 %v866
  %v1362 = vpop.f32.mrf.mxu0
  %v1363 = vadd.f32 %v1194, %v1362
  %v1364 = vpop.f32.mrf.mxu0
  %v1365 = vadd.f32 %v1196, %v1364
  %1366 = vmatmul.bf16.gmra.mxu0 %v869
  %v1367 = vpop.f32.mrf.mxu0
  %v1368 = vadd.f32 %v1199, %v1367
  %v1369 = vpop.f32.mrf.mxu0
  %v1370 = vadd.f32 %v1201, %v1369
  %1371 = vmatmul.bf16.gmra.mxu0 %v872
  %v1372 = vpop.f32.mrf.mxu0
  %v1373 = vadd.f32 %v1204, %v1372
  %v1374 = vpop.f32.mrf.mxu0
  %v1375 = vadd.f32 %v1206, %v1374
  %1376 = vmatmul.bf16.gmra.mxu0 %v875
  %v1377 = vpop.f32.mrf.mxu0
  %v1378 = vadd.f32 %v1209, %v1377
  %v1379 = vpop.f32.mrf.mxu0
  %v1380 = vadd.f32 %v1211, %v1379
  %1381 = vmatmul.bf16.gmra.mxu0 %v878
  %v1382 = vpop.f32.mrf.mxu0
  %v1383 = vadd.f32 %v1214, %v1382
  %v1384 = vpop.f32.mrf.mxu0
  %v1385 = vadd.f32 %v1216, %v1384
  %1386 = vdwg.mxu0
  %v1387 = vld [vmem:[%s1] sm:$0xf]
  %v1388 = vld [vmem:[%s1 + $0x4] sm:$0xf]
  %v1389 = vld [vmem:[%s1 + $0x8] sm:$0xf]
  %v1390 = vld [vmem:[%s1 + $0xc] sm:$0xf]
  %v1391 = vld [vmem:[%s1 + $0x10] sm:$0xf]
  %v1392 = vld [vmem:[%s1 + $0x14] sm:$0xf]
  %v1393 = vld [vmem:[%s1 + $0x18] sm:$0xf]
  %v1394 = vld [vmem:[%s1 + $0x1c] sm:$0xf]
  %v1395 = vld [vmem:[%s1 + $0x20] sm:$0xf]
  %v1396 = vld [vmem:[%s1 + $0x24] sm:$0xf]
  %v1397 = vld [vmem:[%s1 + $0x28] sm:$0xf]
  %v1398 = vld [vmem:[%s1 + $0x2c] sm:$0xf]
  %v1399 = vld [vmem:[%s1 + $0x30] sm:$0xf]
  %v1400 = vld [vmem:[%s1 + $0x34] sm:$0xf]
  %v1401 = vld [vmem:[%s1 + $0x38] sm:$0xf]
  %v1402 = vld [vmem:[%s1 + $0x3c] sm:$0xf]
  %v1403 = vld [vmem:[%s1 + $0x40] sm:$0xf]
  %v1404 = vld [vmem:[%s1 + $0x44] sm:$0xf]
  %v1405 = vld [vmem:[%s1 + $0x48] sm:$0xf]
  %v1406 = vld [vmem:[%s1 + $0x4c] sm:$0xf]
  %v1407 = vld [vmem:[%s1 + $0x50] sm:$0xf]
  %v1408 = vld [vmem:[%s1 + $0x54] sm:$0xf]
  %v1409 = vld [vmem:[%s1 + $0x58] sm:$0xf]
  %v1410 = vld [vmem:[%s1 + $0x5c] sm:$0xf]
  %v1411 = vld [vmem:[%s1 + $0x60] sm:$0xf]
  %v1412 = vld [vmem:[%s1 + $0x64] sm:$0xf]
  %v1413 = vld [vmem:[%s1 + $0x68] sm:$0xf]
  %v1414 = vld [vmem:[%s1 + $0x6c] sm:$0xf]
  %v1415 = vld [vmem:[%s1 + $0x70] sm:$0xf]
  %v1416 = vld [vmem:[%s1 + $0x74] sm:$0xf]
  %v1417 = vld [vmem:[%s1 + $0x78] sm:$0xf]
  %v1418 = vld [vmem:[%s1 + $0x7c] sm:$0xf]
  %v1419 = vld [vmem:[%s1 + $0x80] sm:$0xf]
  %v1420 = vld [vmem:[%s1 + $0x84] sm:$0xf]
  %v1421 = vld [vmem:[%s1 + $0x88] sm:$0xf]
  %v1422 = vld [vmem:[%s1 + $0x8c] sm:$0xf]
  %v1423 = vld [vmem:[%s1 + $0x90] sm:$0xf]
  %v1424 = vld [vmem:[%s1 + $0x94] sm:$0xf]
  %v1425 = vld [vmem:[%s1 + $0x98] sm:$0xf]
  %v1426 = vld [vmem:[%s1 + $0x9c] sm:$0xf]
  %v1427 = vld [vmem:[%s1 + $0xa0] sm:$0xf]
  %v1428 = vld [vmem:[%s1 + $0xa4] sm:$0xf]
  %v1429 = vld [vmem:[%s1 + $0xa8] sm:$0xf]
  %v1430 = vld [vmem:[%s1 + $0xac] sm:$0xf]
  %v1431 = vld [vmem:[%s1 + $0xb0] sm:$0xf]
  %v1432 = vld [vmem:[%s1 + $0xb4] sm:$0xf]
  %v1433 = vld [vmem:[%s1 + $0xb8] sm:$0xf]
  %v1434 = vld [vmem:[%s1 + $0xbc] sm:$0xf]
  %v1435 = vld [vmem:[%s1 + $0xc0] sm:$0xf]
  %v1436 = vld [vmem:[%s1 + $0xc4] sm:$0xf]
  %v1437 = vld [vmem:[%s1 + $0xc8] sm:$0xf]
  %v1438 = vld [vmem:[%s1 + $0xcc] sm:$0xf]
  %v1439 = vld [vmem:[%s1 + $0xd0] sm:$0xf]
  %v1440 = vld [vmem:[%s1 + $0xd4] sm:$0xf]
  %v1441 = vld [vmem:[%s1 + $0xd8] sm:$0xf]
  %v1442 = vld [vmem:[%s1 + $0xdc] sm:$0xf]
  %v1443 = vld [vmem:[%s1 + $0xe0] sm:$0xf]
  %v1444 = vld [vmem:[%s1 + $0xe4] sm:$0xf]
  %v1445 = vld [vmem:[%s1 + $0xe8] sm:$0xf]
  %v1446 = vld [vmem:[%s1 + $0xec] sm:$0xf]
  %v1447 = vld [vmem:[%s1 + $0xf0] sm:$0xf]
  %v1448 = vld [vmem:[%s1 + $0xf4] sm:$0xf]
  %v1449 = vld [vmem:[%s1 + $0xf8] sm:$0xf]
  %v1450 = vld [vmem:[%s1 + $0xfc] sm:$0xf]
  %v1451 = vunpack.c.l.bf16 %v1387
  %v1452 = vunpack.c.l.bf16 %v1388
  %v1453 = vunpack.c.l.bf16 %v1389
  %v1454 = vunpack.c.l.bf16 %v1390
  %v1455 = vunpack.c.l.bf16 %v1391
  %v1456 = vunpack.c.l.bf16 %v1392
  %v1457 = vunpack.c.l.bf16 %v1393
  %v1458 = vunpack.c.l.bf16 %v1394
  %v1459 = vunpack.c.l.bf16 %v1395
  %v1460 = vunpack.c.l.bf16 %v1396
  %v1461 = vunpack.c.l.bf16 %v1397
  %v1462 = vunpack.c.l.bf16 %v1398
  %v1463 = vunpack.c.l.bf16 %v1399
  %v1464 = vunpack.c.l.bf16 %v1400
  %v1465 = vunpack.c.l.bf16 %v1401
  %v1466 = vunpack.c.l.bf16 %v1402
  %v1467 = vunpack.c.l.bf16 %v1403
  %v1468 = vunpack.c.l.bf16 %v1404
  %v1469 = vunpack.c.l.bf16 %v1405
  %v1470 = vunpack.c.l.bf16 %v1406
  %v1471 = vunpack.c.l.bf16 %v1407
  %v1472 = vunpack.c.l.bf16 %v1408
  %v1473 = vunpack.c.l.bf16 %v1409
  %v1474 = vunpack.c.l.bf16 %v1410
  %v1475 = vunpack.c.l.bf16 %v1411
  %v1476 = vunpack.c.l.bf16 %v1412
  %v1477 = vunpack.c.l.bf16 %v1413
  %v1478 = vunpack.c.l.bf16 %v1414
  %v1479 = vunpack.c.l.bf16 %v1415
  %v1480 = vunpack.c.l.bf16 %v1416
  %v1481 = vunpack.c.l.bf16 %v1417
  %v1482 = vunpack.c.l.bf16 %v1418
  %v1483 = vunpack.c.l.bf16 %v1419
  %v1484 = vunpack.c.l.bf16 %v1420
  %v1485 = vunpack.c.l.bf16 %v1421
  %v1486 = vunpack.c.l.bf16 %v1422
  %v1487 = vunpack.c.l.bf16 %v1423
  %v1488 = vunpack.c.l.bf16 %v1424
  %v1489 = vunpack.c.l.bf16 %v1425
  %v1490 = vunpack.c.l.bf16 %v1426
  %v1491 = vunpack.c.l.bf16 %v1427
  %v1492 = vunpack.c.l.bf16 %v1428
  %v1493 = vunpack.c.l.bf16 %v1429
  %v1494 = vunpack.c.l.bf16 %v1430
  %v1495 = vunpack.c.l.bf16 %v1431
  %v1496 = vunpack.c.l.bf16 %v1432
  %v1497 = vunpack.c.l.bf16 %v1433
  %v1498 = vunpack.c.l.bf16 %v1434
  %v1499 = vunpack.c.l.bf16 %v1435
  %v1500 = vunpack.c.l.bf16 %v1436
  %v1501 = vunpack.c.l.bf16 %v1437
  %v1502 = vunpack.c.l.bf16 %v1438
  %v1503 = vunpack.c.l.bf16 %v1439
  %v1504 = vunpack.c.l.bf16 %v1440
  %v1505 = vunpack.c.l.bf16 %v1441
  %v1506 = vunpack.c.l.bf16 %v1442
  %v1507 = vunpack.c.l.bf16 %v1443
  %v1508 = vunpack.c.l.bf16 %v1444
  %v1509 = vunpack.c.l.bf16 %v1445
  %v1510 = vunpack.c.l.bf16 %v1446
  %v1511 = vunpack.c.l.bf16 %v1447
  %v1512 = vunpack.c.l.bf16 %v1448
  %v1513 = vunpack.c.l.bf16 %v1449
  %v1514 = vunpack.c.l.bf16 %v1450
  %v1515 = vld [vmem:[%s2] sm:$0xf]
  %v1516 = vld [vmem:[%s2 + $0x4] sm:$0xf]
  %v1517 = vld [vmem:[%s2 + $0x8] sm:$0xf]
  %v1518 = vld [vmem:[%s2 + $0xc] sm:$0xf]
  %v1519 = vld [vmem:[%s2 + $0x10] sm:$0xf]
  %v1520 = vld [vmem:[%s2 + $0x14] sm:$0xf]
  %v1521 = vld [vmem:[%s2 + $0x18] sm:$0xf]
  %v1522 = vld [vmem:[%s2 + $0x1c] sm:$0xf]
  %v1523 = vld [vmem:[%s2 + $0x20] sm:$0xf]
  %v1524 = vld [vmem:[%s2 + $0x24] sm:$0xf]
  %v1525 = vld [vmem:[%s2 + $0x28] sm:$0xf]
  %v1526 = vld [vmem:[%s2 + $0x2c] sm:$0xf]
  %v1527 = vld [vmem:[%s2 + $0x30] sm:$0xf]
  %v1528 = vld [vmem:[%s2 + $0x34] sm:$0xf]
  %v1529 = vld [vmem:[%s2 + $0x38] sm:$0xf]
  %v1530 = vld [vmem:[%s2 + $0x3c] sm:$0xf]
  %v1531 = vld [vmem:[%s2 + $0x40] sm:$0xf]
  %v1532 = vld [vmem:[%s2 + $0x44] sm:$0xf]
  %v1533 = vld [vmem:[%s2 + $0x48] sm:$0xf]
  %v1534 = vld [vmem:[%s2 + $0x4c] sm:$0xf]
  %v1535 = vld [vmem:[%s2 + $0x50] sm:$0xf]
  %v1536 = vld [vmem:[%s2 + $0x54] sm:$0xf]
  %v1537 = vld [vmem:[%s2 + $0x58] sm:$0xf]
  %v1538 = vld [vmem:[%s2 + $0x5c] sm:$0xf]
  %v1539 = vld [vmem:[%s2 + $0x60] sm:$0xf]
  %v1540 = vld [vmem:[%s2 + $0x64] sm:$0xf]
  %v1541 = vld [vmem:[%s2 + $0x68] sm:$0xf]
  %v1542 = vld [vmem:[%s2 + $0x6c] sm:$0xf]
  %v1543 = vld [vmem:[%s2 + $0x70] sm:$0xf]
  %v1544 = vld [vmem:[%s2 + $0x74] sm:$0xf]
  %v1545 = vld [vmem:[%s2 + $0x78] sm:$0xf]
  %v1546 = vld [vmem:[%s2 + $0x7c] sm:$0xf]
  %v1547 = vld [vmem:[%s2 + $0x80] sm:$0xf]
  %v1548 = vld [vmem:[%s2 + $0x84] sm:$0xf]
  %v1549 = vld [vmem:[%s2 + $0x88] sm:$0xf]
  %v1550 = vld [vmem:[%s2 + $0x8c] sm:$0xf]
  %v1551 = vld [vmem:[%s2 + $0x90] sm:$0xf]
  %v1552 = vld [vmem:[%s2 + $0x94] sm:$0xf]
  %v1553 = vld [vmem:[%s2 + $0x98] sm:$0xf]
  %v1554 = vld [vmem:[%s2 + $0x9c] sm:$0xf]
  %v1555 = vld [vmem:[%s2 + $0xa0] sm:$0xf]
  %v1556 = vld [vmem:[%s2 + $0xa4] sm:$0xf]
  %v1557 = vld [vmem:[%s2 + $0xa8] sm:$0xf]
  %v1558 = vld [vmem:[%s2 + $0xac] sm:$0xf]
  %v1559 = vld [vmem:[%s2 + $0xb0] sm:$0xf]
  %v1560 = vld [vmem:[%s2 + $0xb4] sm:$0xf]
  %v1561 = vld [vmem:[%s2 + $0xb8] sm:$0xf]
  %v1562 = vld [vmem:[%s2 + $0xbc] sm:$0xf]
  %v1563 = vld [vmem:[%s2 + $0xc0] sm:$0xf]
  %v1564 = vld [vmem:[%s2 + $0xc4] sm:$0xf]
  %v1565 = vld [vmem:[%s2 + $0xc8] sm:$0xf]
  %v1566 = vld [vmem:[%s2 + $0xcc] sm:$0xf]
  %v1567 = vld [vmem:[%s2 + $0xd0] sm:$0xf]
  %v1568 = vld [vmem:[%s2 + $0xd4] sm:$0xf]
  %v1569 = vld [vmem:[%s2 + $0xd8] sm:$0xf]
  %v1570 = vld [vmem:[%s2 + $0xdc] sm:$0xf]
  %v1571 = vld [vmem:[%s2 + $0xe0] sm:$0xf]
  %v1572 = vld [vmem:[%s2 + $0xe4] sm:$0xf]
  %v1573 = vld [vmem:[%s2 + $0xe8] sm:$0xf]
  %v1574 = vld [vmem:[%s2 + $0xec] sm:$0xf]
  %v1575 = vld [vmem:[%s2 + $0xf0] sm:$0xf]
  %v1576 = vld [vmem:[%s2 + $0xf4] sm:$0xf]
  %v1577 = vld [vmem:[%s2 + $0xf8] sm:$0xf]
  %v1578 = vld [vmem:[%s2 + $0xfc] sm:$0xf]
  %v1579 = vunpack.c.l.bf16 %v1515
  %v1580 = vunpack.c.l.bf16 %v1516
  %v1581 = vunpack.c.l.bf16 %v1517
  %v1582 = vunpack.c.l.bf16 %v1518
  %v1583 = vunpack.c.l.bf16 %v1519
  %v1584 = vunpack.c.l.bf16 %v1520
  %v1585 = vunpack.c.l.bf16 %v1521
  %v1586 = vunpack.c.l.bf16 %v1522
  %v1587 = vunpack.c.l.bf16 %v1523
  %v1588 = vunpack.c.l.bf16 %v1524
  %v1589 = vunpack.c.l.bf16 %v1525
  %v1590 = vunpack.c.l.bf16 %v1526
  %v1591 = vunpack.c.l.bf16 %v1527
  %v1592 = vunpack.c.l.bf16 %v1528
  %v1593 = vunpack.c.l.bf16 %v1529
  %v1594 = vunpack.c.l.bf16 %v1530
  %v1595 = vunpack.c.l.bf16 %v1531
  %v1596 = vunpack.c.l.bf16 %v1532
  %v1597 = vunpack.c.l.bf16 %v1533
  %v1598 = vunpack.c.l.bf16 %v1534
  %v1599 = vunpack.c.l.bf16 %v1535
  %v1600 = vunpack.c.l.bf16 %v1536
  %v1601 = vunpack.c.l.bf16 %v1537
  %v1602 = vunpack.c.l.bf16 %v1538
  %v1603 = vunpack.c.l.bf16 %v1539
  %v1604 = vunpack.c.l.bf16 %v1540
  %v1605 = vunpack.c.l.bf16 %v1541
  %v1606 = vunpack.c.l.bf16 %v1542
  %v1607 = vunpack.c.l.bf16 %v1543
  %v1608 = vunpack.c.l.bf16 %v1544
  %v1609 = vunpack.c.l.bf16 %v1545
  %v1610 = vunpack.c.l.bf16 %v1546
  %v1611 = vunpack.c.l.bf16 %v1547
  %v1612 = vunpack.c.l.bf16 %v1548
  %v1613 = vunpack.c.l.bf16 %v1549
  %v1614 = vunpack.c.l.bf16 %v1550
  %v1615 = vunpack.c.l.bf16 %v1551
  %v1616 = vunpack.c.l.bf16 %v1552
  %v1617 = vunpack.c.l.bf16 %v1553
  %v1618 = vunpack.c.l.bf16 %v1554
  %v1619 = vunpack.c.l.bf16 %v1555
  %v1620 = vunpack.c.l.bf16 %v1556
  %v1621 = vunpack.c.l.bf16 %v1557
  %v1622 = vunpack.c.l.bf16 %v1558
  %v1623 = vunpack.c.l.bf16 %v1559
  %v1624 = vunpack.c.l.bf16 %v1560
  %v1625 = vunpack.c.l.bf16 %v1561
  %v1626 = vunpack.c.l.bf16 %v1562
  %v1627 = vunpack.c.l.bf16 %v1563
  %v1628 = vunpack.c.l.bf16 %v1564
  %v1629 = vunpack.c.l.bf16 %v1565
  %v1630 = vunpack.c.l.bf16 %v1566
  %v1631 = vunpack.c.l.bf16 %v1567
  %v1632 = vunpack.c.l.bf16 %v1568
  %v1633 = vunpack.c.l.bf16 %v1569
  %v1634 = vunpack.c.l.bf16 %v1570
  %v1635 = vunpack.c.l.bf16 %v1571
  %v1636 = vunpack.c.l.bf16 %v1572
  %v1637 = vunpack.c.l.bf16 %v1573
  %v1638 = vunpack.c.l.bf16 %v1574
  %v1639 = vunpack.c.l.bf16 %v1575
  %v1640 = vunpack.c.l.bf16 %v1576
  %v1641 = vunpack.c.l.bf16 %v1577
  %v1642 = vunpack.c.l.bf16 %v1578
  %v1643 = vadd.f32 %v1451, %v1579
  %v1644 = vadd.f32 %v1452, %v1580
  %v1645 = vadd.f32 %v1453, %v1581
  %v1646 = vadd.f32 %v1454, %v1582
  %v1647 = vadd.f32 %v1455, %v1583
  %v1648 = vadd.f32 %v1456, %v1584
  %v1649 = vadd.f32 %v1457, %v1585
  %v1650 = vadd.f32 %v1458, %v1586
  %v1651 = vadd.f32 %v1459, %v1587
  %v1652 = vadd.f32 %v1460, %v1588
  %v1653 = vadd.f32 %v1461, %v1589
  %v1654 = vadd.f32 %v1462, %v1590
  %v1655 = vadd.f32 %v1463, %v1591
  %v1656 = vadd.f32 %v1464, %v1592
  %v1657 = vadd.f32 %v1465, %v1593
  %v1658 = vadd.f32 %v1466, %v1594
  %v1659 = vadd.f32 %v1467, %v1595
  %v1660 = vadd.f32 %v1468, %v1596
  %v1661 = vadd.f32 %v1469, %v1597
  %v1662 = vadd.f32 %v1470, %v1598
  %v1663 = vadd.f32 %v1471, %v1599
  %v1664 = vadd.f32 %v1472, %v1600
  %v1665 = vadd.f32 %v1473, %v1601
  %v1666 = vadd.f32 %v1474, %v1602
  %v1667 = vadd.f32 %v1475, %v1603
  %v1668 = vadd.f32 %v1476, %v1604
  %v1669 = vadd.f32 %v1477, %v1605
  %v1670 = vadd.f32 %v1478, %v1606
  %v1671 = vadd.f32 %v1479, %v1607
  %v1672 = vadd.f32 %v1480, %v1608
  %v1673 = vadd.f32 %v1481, %v1609
  %v1674 = vadd.f32 %v1482, %v1610
  %v1675 = vadd.f32 %v1483, %v1611
  %v1676 = vadd.f32 %v1484, %v1612
  %v1677 = vadd.f32 %v1485, %v1613
  %v1678 = vadd.f32 %v1486, %v1614
  %v1679 = vadd.f32 %v1487, %v1615
  %v1680 = vadd.f32 %v1488, %v1616
  %v1681 = vadd.f32 %v1489, %v1617
  %v1682 = vadd.f32 %v1490, %v1618
  %v1683 = vadd.f32 %v1491, %v1619
  %v1684 = vadd.f32 %v1492, %v1620
  %v1685 = vadd.f32 %v1493, %v1621
  %v1686 = vadd.f32 %v1494, %v1622
  %v1687 = vadd.f32 %v1495, %v1623
  %v1688 = vadd.f32 %v1496, %v1624
  %v1689 = vadd.f32 %v1497, %v1625
  %v1690 = vadd.f32 %v1498, %v1626
  %v1691 = vadd.f32 %v1499, %v1627
  %v1692 = vadd.f32 %v1500, %v1628
  %v1693 = vadd.f32 %v1501, %v1629
  %v1694 = vadd.f32 %v1502, %v1630
  %v1695 = vadd.f32 %v1503, %v1631
  %v1696 = vadd.f32 %v1504, %v1632
  %v1697 = vadd.f32 %v1505, %v1633
  %v1698 = vadd.f32 %v1506, %v1634
  %v1699 = vadd.f32 %v1507, %v1635
  %v1700 = vadd.f32 %v1508, %v1636
  %v1701 = vadd.f32 %v1509, %v1637
  %v1702 = vadd.f32 %v1510, %v1638
  %v1703 = vadd.f32 %v1511, %v1639
  %v1704 = vadd.f32 %v1512, %v1640
  %v1705 = vadd.f32 %v1513, %v1641
  %v1706 = vadd.f32 %v1514, %v1642
  %v1707 = vld [vmem:[%s3] sm:$0xf]
  %v1708 = vld [vmem:[%s3 + $0x4] sm:$0xf]
  %v1709 = vld [vmem:[%s3 + $0x8] sm:$0xf]
  %v1710 = vld [vmem:[%s3 + $0xc] sm:$0xf]
  %v1711 = vld [vmem:[%s3 + $0x10] sm:$0xf]
  %v1712 = vld [vmem:[%s3 + $0x14] sm:$0xf]
  %v1713 = vld [vmem:[%s3 + $0x18] sm:$0xf]
  %v1714 = vld [vmem:[%s3 + $0x1c] sm:$0xf]
  %v1715 = vld [vmem:[%s3 + $0x20] sm:$0xf]
  %v1716 = vld [vmem:[%s3 + $0x24] sm:$0xf]
  %v1717 = vld [vmem:[%s3 + $0x28] sm:$0xf]
  %v1718 = vld [vmem:[%s3 + $0x2c] sm:$0xf]
  %v1719 = vld [vmem:[%s3 + $0x30] sm:$0xf]
  %v1720 = vld [vmem:[%s3 + $0x34] sm:$0xf]
  %v1721 = vld [vmem:[%s3 + $0x38] sm:$0xf]
  %v1722 = vld [vmem:[%s3 + $0x3c] sm:$0xf]
  %v1723 = vld [vmem:[%s3 + $0x40] sm:$0xf]
  %v1724 = vld [vmem:[%s3 + $0x44] sm:$0xf]
  %v1725 = vld [vmem:[%s3 + $0x48] sm:$0xf]
  %v1726 = vld [vmem:[%s3 + $0x4c] sm:$0xf]
  %v1727 = vld [vmem:[%s3 + $0x50] sm:$0xf]
  %v1728 = vld [vmem:[%s3 + $0x54] sm:$0xf]
  %v1729 = vld [vmem:[%s3 + $0x58] sm:$0xf]
  %v1730 = vld [vmem:[%s3 + $0x5c] sm:$0xf]
  %v1731 = vld [vmem:[%s3 + $0x60] sm:$0xf]
  %v1732 = vld [vmem:[%s3 + $0x64] sm:$0xf]
  %v1733 = vld [vmem:[%s3 + $0x68] sm:$0xf]
  %v1734 = vld [vmem:[%s3 + $0x6c] sm:$0xf]
  %v1735 = vld [vmem:[%s3 + $0x70] sm:$0xf]
  %v1736 = vld [vmem:[%s3 + $0x74] sm:$0xf]
  %v1737 = vld [vmem:[%s3 + $0x78] sm:$0xf]
  %v1738 = vld [vmem:[%s3 + $0x7c] sm:$0xf]
  %v1739 = vld [vmem:[%s3 + $0x80] sm:$0xf]
  %v1740 = vld [vmem:[%s3 + $0x84] sm:$0xf]
  %v1741 = vld [vmem:[%s3 + $0x88] sm:$0xf]
  %v1742 = vld [vmem:[%s3 + $0x8c] sm:$0xf]
  %v1743 = vld [vmem:[%s3 + $0x90] sm:$0xf]
  %v1744 = vld [vmem:[%s3 + $0x94] sm:$0xf]
  %v1745 = vld [vmem:[%s3 + $0x98] sm:$0xf]
  %v1746 = vld [vmem:[%s3 + $0x9c] sm:$0xf]
  %v1747 = vld [vmem:[%s3 + $0xa0] sm:$0xf]
  %v1748 = vld [vmem:[%s3 + $0xa4] sm:$0xf]
  %v1749 = vld [vmem:[%s3 + $0xa8] sm:$0xf]
  %v1750 = vld [vmem:[%s3 + $0xac] sm:$0xf]
  %v1751 = vld [vmem:[%s3 + $0xb0] sm:$0xf]
  %v1752 = vld [vmem:[%s3 + $0xb4] sm:$0xf]
  %v1753 = vld [vmem:[%s3 + $0xb8] sm:$0xf]
  %v1754 = vld [vmem:[%s3 + $0xbc] sm:$0xf]
  %v1755 = vld [vmem:[%s3 + $0xc0] sm:$0xf]
  %v1756 = vld [vmem:[%s3 + $0xc4] sm:$0xf]
  %v1757 = vld [vmem:[%s3 + $0xc8] sm:$0xf]
  %v1758 = vld [vmem:[%s3 + $0xcc] sm:$0xf]
  %v1759 = vld [vmem:[%s3 + $0xd0] sm:$0xf]
  %v1760 = vld [vmem:[%s3 + $0xd4] sm:$0xf]
  %v1761 = vld [vmem:[%s3 + $0xd8] sm:$0xf]
  %v1762 = vld [vmem:[%s3 + $0xdc] sm:$0xf]
  %v1763 = vld [vmem:[%s3 + $0xe0] sm:$0xf]
  %v1764 = vld [vmem:[%s3 + $0xe4] sm:$0xf]
  %v1765 = vld [vmem:[%s3 + $0xe8] sm:$0xf]
  %v1766 = vld [vmem:[%s3 + $0xec] sm:$0xf]
  %v1767 = vld [vmem:[%s3 + $0xf0] sm:$0xf]
  %v1768 = vld [vmem:[%s3 + $0xf4] sm:$0xf]
  %v1769 = vld [vmem:[%s3 + $0xf8] sm:$0xf]
  %v1770 = vld [vmem:[%s3 + $0xfc] sm:$0xf]
  %v1771 = vunpack.c.l.bf16 %v1707
  %v1772 = vunpack.c.l.bf16 %v1708
  %v1773 = vunpack.c.l.bf16 %v1709
  %v1774 = vunpack.c.l.bf16 %v1710
  %v1775 = vunpack.c.l.bf16 %v1711
  %v1776 = vunpack.c.l.bf16 %v1712
  %v1777 = vunpack.c.l.bf16 %v1713
  %v1778 = vunpack.c.l.bf16 %v1714
  %v1779 = vunpack.c.l.bf16 %v1715
  %v1780 = vunpack.c.l.bf16 %v1716
  %v1781 = vunpack.c.l.bf16 %v1717
  %v1782 = vunpack.c.l.bf16 %v1718
  %v1783 = vunpack.c.l.bf16 %v1719
  %v1784 = vunpack.c.l.bf16 %v1720
  %v1785 = vunpack.c.l.bf16 %v1721
  %v1786 = vunpack.c.l.bf16 %v1722
  %v1787 = vunpack.c.l.bf16 %v1723
  %v1788 = vunpack.c.l.bf16 %v1724
  %v1789 = vunpack.c.l.bf16 %v1725
  %v1790 = vunpack.c.l.bf16 %v1726
  %v1791 = vunpack.c.l.bf16 %v1727
  %v1792 = vunpack.c.l.bf16 %v1728
  %v1793 = vunpack.c.l.bf16 %v1729
  %v1794 = vunpack.c.l.bf16 %v1730
  %v1795 = vunpack.c.l.bf16 %v1731
  %v1796 = vunpack.c.l.bf16 %v1732
  %v1797 = vunpack.c.l.bf16 %v1733
  %v1798 = vunpack.c.l.bf16 %v1734
  %v1799 = vunpack.c.l.bf16 %v1735
  %v1800 = vunpack.c.l.bf16 %v1736
  %v1801 = vunpack.c.l.bf16 %v1737
  %v1802 = vunpack.c.l.bf16 %v1738
  %v1803 = vunpack.c.l.bf16 %v1739
  %v1804 = vunpack.c.l.bf16 %v1740
  %v1805 = vunpack.c.l.bf16 %v1741
  %v1806 = vunpack.c.l.bf16 %v1742
  %v1807 = vunpack.c.l.bf16 %v1743
  %v1808 = vunpack.c.l.bf16 %v1744
  %v1809 = vunpack.c.l.bf16 %v1745
  %v1810 = vunpack.c.l.bf16 %v1746
  %v1811 = vunpack.c.l.bf16 %v1747
  %v1812 = vunpack.c.l.bf16 %v1748
  %v1813 = vunpack.c.l.bf16 %v1749
  %v1814 = vunpack.c.l.bf16 %v1750
  %v1815 = vunpack.c.l.bf16 %v1751
  %v1816 = vunpack.c.l.bf16 %v1752
  %v1817 = vunpack.c.l.bf16 %v1753
  %v1818 = vunpack.c.l.bf16 %v1754
  %v1819 = vunpack.c.l.bf16 %v1755
  %v1820 = vunpack.c.l.bf16 %v1756
  %v1821 = vunpack.c.l.bf16 %v1757
  %v1822 = vunpack.c.l.bf16 %v1758
  %v1823 = vunpack.c.l.bf16 %v1759
  %v1824 = vunpack.c.l.bf16 %v1760
  %v1825 = vunpack.c.l.bf16 %v1761
  %v1826 = vunpack.c.l.bf16 %v1762
  %v1827 = vunpack.c.l.bf16 %v1763
  %v1828 = vunpack.c.l.bf16 %v1764
  %v1829 = vunpack.c.l.bf16 %v1765
  %v1830 = vunpack.c.l.bf16 %v1766
  %v1831 = vunpack.c.l.bf16 %v1767
  %v1832 = vunpack.c.l.bf16 %v1768
  %v1833 = vunpack.c.l.bf16 %v1769
  %v1834 = vunpack.c.l.bf16 %v1770
  %v1835 = vadd.f32 %v1643, %v1771
  %v1836 = vadd.f32 %v1644, %v1772
  %v1837 = vadd.f32 %v1645, %v1773
  %v1838 = vadd.f32 %v1646, %v1774
  %v1839 = vadd.f32 %v1647, %v1775
  %v1840 = vadd.f32 %v1648, %v1776
  %v1841 = vadd.f32 %v1649, %v1777
  %v1842 = vadd.f32 %v1650, %v1778
  %v1843 = vadd.f32 %v1651, %v1779
  %v1844 = vadd.f32 %v1652, %v1780
  %v1845 = vadd.f32 %v1653, %v1781
  %v1846 = vadd.f32 %v1654, %v1782
  %v1847 = vadd.f32 %v1655, %v1783
  %v1848 = vadd.f32 %v1656, %v1784
  %v1849 = vadd.f32 %v1657, %v1785
  %v1850 = vadd.f32 %v1658, %v1786
  %v1851 = vadd.f32 %v1659, %v1787
  %v1852 = vadd.f32 %v1660, %v1788
  %v1853 = vadd.f32 %v1661, %v1789
  %v1854 = vadd.f32 %v1662, %v1790
  %v1855 = vadd.f32 %v1663, %v1791
  %v1856 = vadd.f32 %v1664, %v1792
  %v1857 = vadd.f32 %v1665, %v1793
  %v1858 = vadd.f32 %v1666, %v1794
  %v1859 = vadd.f32 %v1667, %v1795
  %v1860 = vadd.f32 %v1668, %v1796
  %v1861 = vadd.f32 %v1669, %v1797
  %v1862 = vadd.f32 %v1670, %v1798
  %v1863 = vadd.f32 %v1671, %v1799
  %v1864 = vadd.f32 %v1672, %v1800
  %v1865 = vadd.f32 %v1673, %v1801
  %v1866 = vadd.f32 %v1674, %v1802
  %v1867 = vadd.f32 %v1675, %v1803
  %v1868 = vadd.f32 %v1676, %v1804
  %v1869 = vadd.f32 %v1677, %v1805
  %v1870 = vadd.f32 %v1678, %v1806
  %v1871 = vadd.f32 %v1679, %v1807
  %v1872 = vadd.f32 %v1680, %v1808
  %v1873 = vadd.f32 %v1681, %v1809
  %v1874 = vadd.f32 %v1682, %v1810
  %v1875 = vadd.f32 %v1683, %v1811
  %v1876 = vadd.f32 %v1684, %v1812
  %v1877 = vadd.f32 %v1685, %v1813
  %v1878 = vadd.f32 %v1686, %v1814
  %v1879 = vadd.f32 %v1687, %v1815
  %v1880 = vadd.f32 %v1688, %v1816
  %v1881 = vadd.f32 %v1689, %v1817
  %v1882 = vadd.f32 %v1690, %v1818
  %v1883 = vadd.f32 %v1691, %v1819
  %v1884 = vadd.f32 %v1692, %v1820
  %v1885 = vadd.f32 %v1693, %v1821
  %v1886 = vadd.f32 %v1694, %v1822
  %v1887 = vadd.f32 %v1695, %v1823
  %v1888 = vadd.f32 %v1696, %v1824
  %v1889 = vadd.f32 %v1697, %v1825
  %v1890 = vadd.f32 %v1698, %v1826
  %v1891 = vadd.f32 %v1699, %v1827
  %v1892 = vadd.f32 %v1700, %v1828
  %v1893 = vadd.f32 %v1701, %v1829
  %v1894 = vadd.f32 %v1702, %v1830
  %v1895 = vadd.f32 %v1703, %v1831
  %v1896 = vadd.f32 %v1704, %v1832
  %v1897 = vadd.f32 %v1705, %v1833
  %v1898 = vadd.f32 %v1706, %v1834
  %v1899 = vld [vmem:[%s4] sm:$0xf]
  %v1900 = vld [vmem:[%s4 + $0x4] sm:$0xf]
  %v1901 = vld [vmem:[%s4 + $0x8] sm:$0xf]
  %v1902 = vld [vmem:[%s4 + $0xc] sm:$0xf]
  %v1903 = vld [vmem:[%s4 + $0x10] sm:$0xf]
  %v1904 = vld [vmem:[%s4 + $0x14] sm:$0xf]
  %v1905 = vld [vmem:[%s4 + $0x18] sm:$0xf]
  %v1906 = vld [vmem:[%s4 + $0x1c] sm:$0xf]
  %v1907 = vld [vmem:[%s4 + $0x20] sm:$0xf]
  %v1908 = vld [vmem:[%s4 + $0x24] sm:$0xf]
  %v1909 = vld [vmem:[%s4 + $0x28] sm:$0xf]
  %v1910 = vld [vmem:[%s4 + $0x2c] sm:$0xf]
  %v1911 = vld [vmem:[%s4 + $0x30] sm:$0xf]
  %v1912 = vld [vmem:[%s4 + $0x34] sm:$0xf]
  %v1913 = vld [vmem:[%s4 + $0x38] sm:$0xf]
  %v1914 = vld [vmem:[%s4 + $0x3c] sm:$0xf]
  %v1915 = vld [vmem:[%s4 + $0x40] sm:$0xf]
  %v1916 = vld [vmem:[%s4 + $0x44] sm:$0xf]
  %v1917 = vld [vmem:[%s4 + $0x48] sm:$0xf]
  %v1918 = vld [vmem:[%s4 + $0x4c] sm:$0xf]
  %v1919 = vld [vmem:[%s4 + $0x50] sm:$0xf]
  %v1920 = vld [vmem:[%s4 + $0x54] sm:$0xf]
  %v1921 = vld [vmem:[%s4 + $0x58] sm:$0xf]
  %v1922 = vld [vmem:[%s4 + $0x5c] sm:$0xf]
  %v1923 = vld [vmem:[%s4 + $0x60] sm:$0xf]
  %v1924 = vld [vmem:[%s4 + $0x64] sm:$0xf]
  %v1925 = vld [vmem:[%s4 + $0x68] sm:$0xf]
  %v1926 = vld [vmem:[%s4 + $0x6c] sm:$0xf]
  %v1927 = vld [vmem:[%s4 + $0x70] sm:$0xf]
  %v1928 = vld [vmem:[%s4 + $0x74] sm:$0xf]
  %v1929 = vld [vmem:[%s4 + $0x78] sm:$0xf]
  %v1930 = vld [vmem:[%s4 + $0x7c] sm:$0xf]
  %v1931 = vld [vmem:[%s4 + $0x80] sm:$0xf]
  %v1932 = vld [vmem:[%s4 + $0x84] sm:$0xf]
  %v1933 = vld [vmem:[%s4 + $0x88] sm:$0xf]
  %v1934 = vld [vmem:[%s4 + $0x8c] sm:$0xf]
  %v1935 = vld [vmem:[%s4 + $0x90] sm:$0xf]
  %v1936 = vld [vmem:[%s4 + $0x94] sm:$0xf]
  %v1937 = vld [vmem:[%s4 + $0x98] sm:$0xf]
  %v1938 = vld [vmem:[%s4 + $0x9c] sm:$0xf]
  %v1939 = vld [vmem:[%s4 + $0xa0] sm:$0xf]
  %v1940 = vld [vmem:[%s4 + $0xa4] sm:$0xf]
  %v1941 = vld [vmem:[%s4 + $0xa8] sm:$0xf]
  %v1942 = vld [vmem:[%s4 + $0xac] sm:$0xf]
  %v1943 = vld [vmem:[%s4 + $0xb0] sm:$0xf]
  %v1944 = vld [vmem:[%s4 + $0xb4] sm:$0xf]
  %v1945 = vld [vmem:[%s4 + $0xb8] sm:$0xf]
  %v1946 = vld [vmem:[%s4 + $0xbc] sm:$0xf]
  %v1947 = vld [vmem:[%s4 + $0xc0] sm:$0xf]
  %v1948 = vld [vmem:[%s4 + $0xc4] sm:$0xf]
  %v1949 = vld [vmem:[%s4 + $0xc8] sm:$0xf]
  %v1950 = vld [vmem:[%s4 + $0xcc] sm:$0xf]
  %v1951 = vld [vmem:[%s4 + $0xd0] sm:$0xf]
  %v1952 = vld [vmem:[%s4 + $0xd4] sm:$0xf]
  %v1953 = vld [vmem:[%s4 + $0xd8] sm:$0xf]
  %v1954 = vld [vmem:[%s4 + $0xdc] sm:$0xf]
  %v1955 = vld [vmem:[%s4 + $0xe0] sm:$0xf]
  %v1956 = vld [vmem:[%s4 + $0xe4] sm:$0xf]
  %v1957 = vld [vmem:[%s4 + $0xe8] sm:$0xf]
  %v1958 = vld [vmem:[%s4 + $0xec] sm:$0xf]
  %v1959 = vld [vmem:[%s4 + $0xf0] sm:$0xf]
  %v1960 = vld [vmem:[%s4 + $0xf4] sm:$0xf]
  %v1961 = vld [vmem:[%s4 + $0xf8] sm:$0xf]
  %v1962 = vld [vmem:[%s4 + $0xfc] sm:$0xf]
  %v1963 = vunpack.c.l.bf16 %v1899
  %v1964 = vunpack.c.l.bf16 %v1900
  %v1965 = vunpack.c.l.bf16 %v1901
  %v1966 = vunpack.c.l.bf16 %v1902
  %v1967 = vunpack.c.l.bf16 %v1903
  %v1968 = vunpack.c.l.bf16 %v1904
  %v1969 = vunpack.c.l.bf16 %v1905
  %v1970 = vunpack.c.l.bf16 %v1906
  %v1971 = vunpack.c.l.bf16 %v1907
  %v1972 = vunpack.c.l.bf16 %v1908
  %v1973 = vunpack.c.l.bf16 %v1909
  %v1974 = vunpack.c.l.bf16 %v1910
  %v1975 = vunpack.c.l.bf16 %v1911
  %v1976 = vunpack.c.l.bf16 %v1912
  %v1977 = vunpack.c.l.bf16 %v1913
  %v1978 = vunpack.c.l.bf16 %v1914
  %v1979 = vunpack.c.l.bf16 %v1915
  %v1980 = vunpack.c.l.bf16 %v1916
  %v1981 = vunpack.c.l.bf16 %v1917
  %v1982 = vunpack.c.l.bf16 %v1918
  %v1983 = vunpack.c.l.bf16 %v1919
  %v1984 = vunpack.c.l.bf16 %v1920
  %v1985 = vunpack.c.l.bf16 %v1921
  %v1986 = vunpack.c.l.bf16 %v1922
  %v1987 = vunpack.c.l.bf16 %v1923
  %v1988 = vunpack.c.l.bf16 %v1924
  %v1989 = vunpack.c.l.bf16 %v1925
  %v1990 = vunpack.c.l.bf16 %v1926
  %v1991 = vunpack.c.l.bf16 %v1927
  %v1992 = vunpack.c.l.bf16 %v1928
  %v1993 = vunpack.c.l.bf16 %v1929
  %v1994 = vunpack.c.l.bf16 %v1930
  %v1995 = vunpack.c.l.bf16 %v1931
  %v1996 = vunpack.c.l.bf16 %v1932
  %v1997 = vunpack.c.l.bf16 %v1933
  %v1998 = vunpack.c.l.bf16 %v1934
  %v1999 = vunpack.c.l.bf16 %v1935
  %v2000 = vunpack.c.l.bf16 %v1936
  %v2001 = vunpack.c.l.bf16 %v1937
  %v2002 = vunpack.c.l.bf16 %v1938
  %v2003 = vunpack.c.l.bf16 %v1939
  %v2004 = vunpack.c.l.bf16 %v1940
  %v2005 = vunpack.c.l.bf16 %v1941
  %v2006 = vunpack.c.l.bf16 %v1942
  %v2007 = vunpack.c.l.bf16 %v1943
  %v2008 = vunpack.c.l.bf16 %v1944
  %v2009 = vunpack.c.l.bf16 %v1945
  %v2010 = vunpack.c.l.bf16 %v1946
  %v2011 = vunpack.c.l.bf16 %v1947
  %v2012 = vunpack.c.l.bf16 %v1948
  %v2013 = vunpack.c.l.bf16 %v1949
  %v2014 = vunpack.c.l.bf16 %v1950
  %v2015 = vunpack.c.l.bf16 %v1951
  %v2016 = vunpack.c.l.bf16 %v1952
  %v2017 = vunpack.c.l.bf16 %v1953
  %v2018 = vunpack.c.l.bf16 %v1954
  %v2019 = vunpack.c.l.bf16 %v1955
  %v2020 = vunpack.c.l.bf16 %v1956
  %v2021 = vunpack.c.l.bf16 %v1957
  %v2022 = vunpack.c.l.bf16 %v1958
  %v2023 = vunpack.c.l.bf16 %v1959
  %v2024 = vunpack.c.l.bf16 %v1960
  %v2025 = vunpack.c.l.bf16 %v1961
  %v2026 = vunpack.c.l.bf16 %v1962
  %v2027 = vadd.f32 %v1835, %v1963
  %v2028 = vadd.f32 %v1836, %v1964
  %v2029 = vadd.f32 %v1837, %v1965
  %v2030 = vadd.f32 %v1838, %v1966
  %v2031 = vadd.f32 %v1839, %v1967
  %v2032 = vadd.f32 %v1840, %v1968
  %v2033 = vadd.f32 %v1841, %v1969
  %v2034 = vadd.f32 %v1842, %v1970
  %v2035 = vadd.f32 %v1843, %v1971
  %v2036 = vadd.f32 %v1844, %v1972
  %v2037 = vadd.f32 %v1845, %v1973
  %v2038 = vadd.f32 %v1846, %v1974
  %v2039 = vadd.f32 %v1847, %v1975
  %v2040 = vadd.f32 %v1848, %v1976
  %v2041 = vadd.f32 %v1849, %v1977
  %v2042 = vadd.f32 %v1850, %v1978
  %v2043 = vadd.f32 %v1851, %v1979
  %v2044 = vadd.f32 %v1852, %v1980
  %v2045 = vadd.f32 %v1853, %v1981
  %v2046 = vadd.f32 %v1854, %v1982
  %v2047 = vadd.f32 %v1855, %v1983
  %v2048 = vadd.f32 %v1856, %v1984
  %v2049 = vadd.f32 %v1857, %v1985
  %v2050 = vadd.f32 %v1858, %v1986
  %v2051 = vadd.f32 %v1859, %v1987
  %v2052 = vadd.f32 %v1860, %v1988
  %v2053 = vadd.f32 %v1861, %v1989
  %v2054 = vadd.f32 %v1862, %v1990
  %v2055 = vadd.f32 %v1863, %v1991
  %v2056 = vadd.f32 %v1864, %v1992
  %v2057 = vadd.f32 %v1865, %v1993
  %v2058 = vadd.f32 %v1866, %v1994
  %v2059 = vadd.f32 %v1867, %v1995
  %v2060 = vadd.f32 %v1868, %v1996
  %v2061 = vadd.f32 %v1869, %v1997
  %v2062 = vadd.f32 %v1870, %v1998
  %v2063 = vadd.f32 %v1871, %v1999
  %v2064 = vadd.f32 %v1872, %v2000
  %v2065 = vadd.f32 %v1873, %v2001
  %v2066 = vadd.f32 %v1874, %v2002
  %v2067 = vadd.f32 %v1875, %v2003
  %v2068 = vadd.f32 %v1876, %v2004
  %v2069 = vadd.f32 %v1877, %v2005
  %v2070 = vadd.f32 %v1878, %v2006
  %v2071 = vadd.f32 %v1879, %v2007
  %v2072 = vadd.f32 %v1880, %v2008
  %v2073 = vadd.f32 %v1881, %v2009
  %v2074 = vadd.f32 %v1882, %v2010
  %v2075 = vadd.f32 %v1883, %v2011
  %v2076 = vadd.f32 %v1884, %v2012
  %v2077 = vadd.f32 %v1885, %v2013
  %v2078 = vadd.f32 %v1886, %v2014
  %v2079 = vadd.f32 %v1887, %v2015
  %v2080 = vadd.f32 %v1888, %v2016
  %v2081 = vadd.f32 %v1889, %v2017
  %v2082 = vadd.f32 %v1890, %v2018
  %v2083 = vadd.f32 %v1891, %v2019
  %v2084 = vadd.f32 %v1892, %v2020
  %v2085 = vadd.f32 %v1893, %v2021
  %v2086 = vadd.f32 %v1894, %v2022
  %v2087 = vadd.f32 %v1895, %v2023
  %v2088 = vadd.f32 %v1896, %v2024
  %v2089 = vadd.f32 %v1897, %v2025
  %v2090 = vadd.f32 %v1898, %v2026
  %v2091 = vmul.f32 %v2027, 0.25
  %v2092 = vmul.f32 %v2028, 0.25
  %v2093 = vmul.f32 %v2029, 0.25
  %v2094 = vmul.f32 %v2030, 0.25
  %v2095 = vmul.f32 %v2031, 0.25
  %v2096 = vmul.f32 %v2032, 0.25
  %v2097 = vmul.f32 %v2033, 0.25
  %v2098 = vmul.f32 %v2034, 0.25
  %v2099 = vmul.f32 %v2035, 0.25
  %v2100 = vmul.f32 %v2036, 0.25
  %v2101 = vmul.f32 %v2037, 0.25
  %v2102 = vmul.f32 %v2038, 0.25
  %v2103 = vmul.f32 %v2039, 0.25
  %v2104 = vmul.f32 %v2040, 0.25
  %v2105 = vmul.f32 %v2041, 0.25
  %v2106 = vmul.f32 %v2042, 0.25
  %v2107 = vmul.f32 %v2043, 0.25
  %v2108 = vmul.f32 %v2044, 0.25
  %v2109 = vmul.f32 %v2045, 0.25
  %v2110 = vmul.f32 %v2046, 0.25
  %v2111 = vmul.f32 %v2047, 0.25
  %v2112 = vmul.f32 %v2048, 0.25
  %v2113 = vmul.f32 %v2049, 0.25
  %v2114 = vmul.f32 %v2050, 0.25
  %v2115 = vmul.f32 %v2051, 0.25
  %v2116 = vmul.f32 %v2052, 0.25
  %v2117 = vmul.f32 %v2053, 0.25
  %v2118 = vmul.f32 %v2054, 0.25
  %v2119 = vmul.f32 %v2055, 0.25
  %v2120 = vmul.f32 %v2056, 0.25
  %v2121 = vmul.f32 %v2057, 0.25
  %v2122 = vmul.f32 %v2058, 0.25
  %v2123 = vmul.f32 %v2059, 0.25
  %v2124 = vmul.f32 %v2060, 0.25
  %v2125 = vmul.f32 %v2061, 0.25
  %v2126 = vmul.f32 %v2062, 0.25
  %v2127 = vmul.f32 %v2063, 0.25
  %v2128 = vmul.f32 %v2064, 0.25
  %v2129 = vmul.f32 %v2065, 0.25
  %v2130 = vmul.f32 %v2066, 0.25
  %v2131 = vmul.f32 %v2067, 0.25
  %v2132 = vmul.f32 %v2068, 0.25
  %v2133 = vmul.f32 %v2069, 0.25
  %v2134 = vmul.f32 %v2070, 0.25
  %v2135 = vmul.f32 %v2071, 0.25
  %v2136 = vmul.f32 %v2072, 0.25
  %v2137 = vmul.f32 %v2073, 0.25
  %v2138 = vmul.f32 %v2074, 0.25
  %v2139 = vmul.f32 %v2075, 0.25
  %v2140 = vmul.f32 %v2076, 0.25
  %v2141 = vmul.f32 %v2077, 0.25
  %v2142 = vmul.f32 %v2078, 0.25
  %v2143 = vmul.f32 %v2079, 0.25
  %v2144 = vmul.f32 %v2080, 0.25
  %v2145 = vmul.f32 %v2081, 0.25
  %v2146 = vmul.f32 %v2082, 0.25
  %v2147 = vmul.f32 %v2083, 0.25
  %v2148 = vmul.f32 %v2084, 0.25
  %v2149 = vmul.f32 %v2085, 0.25
  %v2150 = vmul.f32 %v2086, 0.25
  %v2151 = vmul.f32 %v2087, 0.25
  %v2152 = vmul.f32 %v2088, 0.25
  %v2153 = vmul.f32 %v2089, 0.25
  %v2154 = vmul.f32 %v2090, 0.25
  %v2155 = vadd.f32 %v1228, %v2091
  %v2156 = vadd.f32 %v1230, %v2092
  %v2157 = vadd.f32 %v1233, %v2093
  %v2158 = vadd.f32 %v1235, %v2094
  %v2159 = vadd.f32 %v1238, %v2095
  %v2160 = vadd.f32 %v1240, %v2096
  %v2161 = vadd.f32 %v1243, %v2097
  %v2162 = vadd.f32 %v1245, %v2098
  %v2163 = vadd.f32 %v1248, %v2099
  %v2164 = vadd.f32 %v1250, %v2100
  %v2165 = vadd.f32 %v1253, %v2101
  %v2166 = vadd.f32 %v1255, %v2102
  %v2167 = vadd.f32 %v1258, %v2103
  %v2168 = vadd.f32 %v1260, %v2104
  %v2169 = vadd.f32 %v1263, %v2105
  %v2170 = vadd.f32 %v1265, %v2106
  %v2171 = vadd.f32 %v1268, %v2107
  %v2172 = vadd.f32 %v1270, %v2108
  %v2173 = vadd.f32 %v1273, %v2109
  %v2174 = vadd.f32 %v1275, %v2110
  %v2175 = vadd.f32 %v1278, %v2111
  %v2176 = vadd.f32 %v1280, %v2112
  %v2177 = vadd.f32 %v1283, %v2113
  %v2178 = vadd.f32 %v1285, %v2114
  %v2179 = vadd.f32 %v1288, %v2115
  %v2180 = vadd.f32 %v1290, %v2116
  %v2181 = vadd.f32 %v1293, %v2117
  %v2182 = vadd.f32 %v1295, %v2118
  %v2183 = vadd.f32 %v1298, %v2119
  %v2184 = vadd.f32 %v1300, %v2120
  %v2185 = vadd.f32 %v1303, %v2121
  %v2186 = vadd.f32 %v1305, %v2122
  %v2187 = vadd.f32 %v1308, %v2123
  %v2188 = vadd.f32 %v1310, %v2124
  %v2189 = vadd.f32 %v1313, %v2125
  %v2190 = vadd.f32 %v1315, %v2126
  %v2191 = vadd.f32 %v1318, %v2127
  %v2192 = vadd.f32 %v1320, %v2128
  %v2193 = vadd.f32 %v1323, %v2129
  %v2194 = vadd.f32 %v1325, %v2130
  %v2195 = vadd.f32 %v1328, %v2131
  %v2196 = vadd.f32 %v1330, %v2132
  %v2197 = vadd.f32 %v1333, %v2133
  %v2198 = vadd.f32 %v1335, %v2134
  %v2199 = vadd.f32 %v1338, %v2135
  %v2200 = vadd.f32 %v1340, %v2136
  %v2201 = vadd.f32 %v1343, %v2137
  %v2202 = vadd.f32 %v1345, %v2138
  %v2203 = vadd.f32 %v1348, %v2139
  %v2204 = vadd.f32 %v1350, %v2140
  %v2205 = vadd.f32 %v1353, %v2141
  %v2206 = vadd.f32 %v1355, %v2142
  %v2207 = vadd.f32 %v1358, %v2143
  %v2208 = vadd.f32 %v1360, %v2144
  %v2209 = vadd.f32 %v1363, %v2145
  %v2210 = vadd.f32 %v1365, %v2146
  %v2211 = vadd.f32 %v1368, %v2147
  %v2212 = vadd.f32 %v1370, %v2148
  %v2213 = vadd.f32 %v1373, %v2149
  %v2214 = vadd.f32 %v1375, %v2150
  %v2215 = vadd.f32 %v1378, %v2151
  %v2216 = vadd.f32 %v1380, %v2152
  %v2217 = vadd.f32 %v1383, %v2153
  %v2218 = vadd.f32 %v1385, %v2154
  %v2219 = vxor.u32 %v2155, 2147483648
  %v2220 = vxor.u32 %v2156, 2147483648
  %v2221 = vxor.u32 %v2157, 2147483648
  %v2222 = vxor.u32 %v2158, 2147483648
  %v2223 = vxor.u32 %v2159, 2147483648
  %v2224 = vxor.u32 %v2160, 2147483648
  %v2225 = vxor.u32 %v2161, 2147483648
  %v2226 = vxor.u32 %v2162, 2147483648
  %v2227 = vxor.u32 %v2163, 2147483648
  %v2228 = vxor.u32 %v2164, 2147483648
  %v2229 = vxor.u32 %v2165, 2147483648
  %v2230 = vxor.u32 %v2166, 2147483648
  %v2231 = vxor.u32 %v2167, 2147483648
  %v2232 = vxor.u32 %v2168, 2147483648
  %v2233 = vxor.u32 %v2169, 2147483648
  %v2234 = vxor.u32 %v2170, 2147483648
  %v2235 = vxor.u32 %v2171, 2147483648
  %v2236 = vxor.u32 %v2172, 2147483648
  %v2237 = vxor.u32 %v2173, 2147483648
  %v2238 = vxor.u32 %v2174, 2147483648
  %v2239 = vxor.u32 %v2175, 2147483648
  %v2240 = vxor.u32 %v2176, 2147483648
  %v2241 = vxor.u32 %v2177, 2147483648
  %v2242 = vxor.u32 %v2178, 2147483648
  %v2243 = vxor.u32 %v2179, 2147483648
  %v2244 = vxor.u32 %v2180, 2147483648
  %v2245 = vxor.u32 %v2181, 2147483648
  %v2246 = vxor.u32 %v2182, 2147483648
  %v2247 = vxor.u32 %v2183, 2147483648
  %v2248 = vxor.u32 %v2184, 2147483648
  %v2249 = vxor.u32 %v2185, 2147483648
  %v2250 = vxor.u32 %v2186, 2147483648
  %v2251 = vxor.u32 %v2187, 2147483648
  %v2252 = vxor.u32 %v2188, 2147483648
  %v2253 = vxor.u32 %v2189, 2147483648
  %v2254 = vxor.u32 %v2190, 2147483648
  %v2255 = vxor.u32 %v2191, 2147483648
  %v2256 = vxor.u32 %v2192, 2147483648
  %v2257 = vxor.u32 %v2193, 2147483648
  %v2258 = vxor.u32 %v2194, 2147483648
  %v2259 = vxor.u32 %v2195, 2147483648
  %v2260 = vxor.u32 %v2196, 2147483648
  %v2261 = vxor.u32 %v2197, 2147483648
  %v2262 = vxor.u32 %v2198, 2147483648
  %v2263 = vxor.u32 %v2199, 2147483648
  %v2264 = vxor.u32 %v2200, 2147483648
  %v2265 = vxor.u32 %v2201, 2147483648
  %v2266 = vxor.u32 %v2202, 2147483648
  %v2267 = vxor.u32 %v2203, 2147483648
  %v2268 = vxor.u32 %v2204, 2147483648
  %v2269 = vxor.u32 %v2205, 2147483648
  %v2270 = vxor.u32 %v2206, 2147483648
  %v2271 = vxor.u32 %v2207, 2147483648
  %v2272 = vxor.u32 %v2208, 2147483648
  %v2273 = vxor.u32 %v2209, 2147483648
  %v2274 = vxor.u32 %v2210, 2147483648
  %v2275 = vxor.u32 %v2211, 2147483648
  %v2276 = vxor.u32 %v2212, 2147483648
  %v2277 = vxor.u32 %v2213, 2147483648
  %v2278 = vxor.u32 %v2214, 2147483648
  %v2279 = vxor.u32 %v2215, 2147483648
  %v2280 = vxor.u32 %v2216, 2147483648
  %v2281 = vxor.u32 %v2217, 2147483648
  %v2282 = vxor.u32 %v2218, 2147483648
  %v2283 = vmul.f32 %v2219, 1.442695
  %v2284 = vpow.pop %v2283
  %v2285 = vmul.f32 %v2220, 1.442695
  %v2286 = vpow.pop %v2285
  %v2287 = vmul.f32 %v2221, 1.442695
  %v2288 = vpow.pop %v2287
  %v2289 = vmul.f32 %v2222, 1.442695
  %v2290 = vpow.pop %v2289
  %v2291 = vmul.f32 %v2223, 1.442695
  %v2292 = vpow.pop %v2291
  %v2293 = vmul.f32 %v2224, 1.442695
  %v2294 = vpow.pop %v2293
  %v2295 = vmul.f32 %v2225, 1.442695
  %v2296 = vpow.pop %v2295
  %v2297 = vmul.f32 %v2226, 1.442695
  %v2298 = vpow.pop %v2297
  %v2299 = vmul.f32 %v2227, 1.442695
  %v2300 = vpow.pop %v2299
  %v2301 = vmul.f32 %v2228, 1.442695
  %v2302 = vpow.pop %v2301
  %v2303 = vmul.f32 %v2229, 1.442695
  %v2304 = vpow.pop %v2303
  %v2305 = vmul.f32 %v2230, 1.442695
  %v2306 = vpow.pop %v2305
  %v2307 = vmul.f32 %v2231, 1.442695
  %v2308 = vpow.pop %v2307
  %v2309 = vmul.f32 %v2232, 1.442695
  %v2310 = vpow.pop %v2309
  %v2311 = vmul.f32 %v2233, 1.442695
  %v2312 = vpow.pop %v2311
  %v2313 = vmul.f32 %v2234, 1.442695
  %v2314 = vpow.pop %v2313
  %v2315 = vmul.f32 %v2235, 1.442695
  %v2316 = vpow.pop %v2315
  %v2317 = vmul.f32 %v2236, 1.442695
  %v2318 = vpow.pop %v2317
  %v2319 = vmul.f32 %v2237, 1.442695
  %v2320 = vpow.pop %v2319
  %v2321 = vmul.f32 %v2238, 1.442695
  %v2322 = vpow.pop %v2321
  %v2323 = vmul.f32 %v2239, 1.442695
  %v2324 = vpow.pop %v2323
  %v2325 = vmul.f32 %v2240, 1.442695
  %v2326 = vpow.pop %v2325
  %v2327 = vmul.f32 %v2241, 1.442695
  %v2328 = vpow.pop %v2327
  %v2329 = vmul.f32 %v2242, 1.442695
  %v2330 = vpow.pop %v2329
  %v2331 = vmul.f32 %v2243, 1.442695
  %v2332 = vpow.pop %v2331
  %v2333 = vmul.f32 %v2244, 1.442695
  %v2334 = vpow.pop %v2333
  %v2335 = vmul.f32 %v2245, 1.442695
  %v2336 = vpow.pop %v2335
  %v2337 = vmul.f32 %v2246, 1.442695
  %v2338 = vpow.pop %v2337
  %v2339 = vmul.f32 %v2247, 1.442695
  %v2340 = vpow.pop %v2339
  %v2341 = vmul.f32 %v2248, 1.442695
  %v2342 = vpow.pop %v2341
  %v2343 = vmul.f32 %v2249, 1.442695
  %v2344 = vpow.pop %v2343
  %v2345 = vmul.f32 %v2250, 1.442695
  %v2346 = vpow.pop %v2345
  %v2347 = vmul.f32 %v2251, 1.442695
  %v2348 = vpow.pop %v2347
  %v2349 = vmul.f32 %v2252, 1.442695
  %v2350 = vpow.pop %v2349
  %v2351 = vmul.f32 %v2253, 1.442695
  %v2352 = vpow.pop %v2351
  %v2353 = vmul.f32 %v2254, 1.442695
  %v2354 = vpow.pop %v2353
  %v2355 = vmul.f32 %v2255, 1.442695
  %v2356 = vpow.pop %v2355
  %v2357 = vmul.f32 %v2256, 1.442695
  %v2358 = vpow.pop %v2357
  %v2359 = vmul.f32 %v2257, 1.442695
  %v2360 = vpow.pop %v2359
  %v2361 = vmul.f32 %v2258, 1.442695
  %v2362 = vpow.pop %v2361
  %v2363 = vmul.f32 %v2259, 1.442695
  %v2364 = vpow.pop %v2363
  %v2365 = vmul.f32 %v2260, 1.442695
  %v2366 = vpow.pop %v2365
  %v2367 = vmul.f32 %v2261, 1.442695
  %v2368 = vpow.pop %v2367
  %v2369 = vmul.f32 %v2262, 1.442695
  %v2370 = vpow.pop %v2369
  %v2371 = vmul.f32 %v2263, 1.442695
  %v2372 = vpow.pop %v2371
  %v2373 = vmul.f32 %v2264, 1.442695
  %v2374 = vpow.pop %v2373
  %v2375 = vmul.f32 %v2265, 1.442695
  %v2376 = vpow.pop %v2375
  %v2377 = vmul.f32 %v2266, 1.442695
  %v2378 = vpow.pop %v2377
  %v2379 = vmul.f32 %v2267, 1.442695
  %v2380 = vpow.pop %v2379
  %v2381 = vmul.f32 %v2268, 1.442695
  %v2382 = vpow.pop %v2381
  %v2383 = vmul.f32 %v2269, 1.442695
  %v2384 = vpow.pop %v2383
  %v2385 = vmul.f32 %v2270, 1.442695
  %v2386 = vpow.pop %v2385
  %v2387 = vmul.f32 %v2271, 1.442695
  %v2388 = vpow.pop %v2387
  %v2389 = vmul.f32 %v2272, 1.442695
  %v2390 = vpow.pop %v2389
  %v2391 = vmul.f32 %v2273, 1.442695
  %v2392 = vpow.pop %v2391
  %v2393 = vmul.f32 %v2274, 1.442695
  %v2394 = vpow.pop %v2393
  %v2395 = vmul.f32 %v2275, 1.442695
  %v2396 = vpow.pop %v2395
  %v2397 = vmul.f32 %v2276, 1.442695
  %v2398 = vpow.pop %v2397
  %v2399 = vmul.f32 %v2277, 1.442695
  %v2400 = vpow.pop %v2399
  %v2401 = vmul.f32 %v2278, 1.442695
  %v2402 = vpow.pop %v2401
  %v2403 = vmul.f32 %v2279, 1.442695
  %v2404 = vpow.pop %v2403
  %v2405 = vmul.f32 %v2280, 1.442695
  %v2406 = vpow.pop %v2405
  %v2407 = vmul.f32 %v2281, 1.442695
  %v2408 = vpow.pop %v2407
  %v2409 = vmul.f32 %v2282, 1.442695
  %v2410 = vpow.pop %v2409
  %v2411 = vadd.f32 %v2284, 1.0
  %v2412 = vadd.f32 %v2286, 1.0
  %v2413 = vadd.f32 %v2288, 1.0
  %v2414 = vadd.f32 %v2290, 1.0
  %v2415 = vadd.f32 %v2292, 1.0
  %v2416 = vadd.f32 %v2294, 1.0
  %v2417 = vadd.f32 %v2296, 1.0
  %v2418 = vadd.f32 %v2298, 1.0
  %v2419 = vadd.f32 %v2300, 1.0
  %v2420 = vadd.f32 %v2302, 1.0
  %v2421 = vadd.f32 %v2304, 1.0
  %v2422 = vadd.f32 %v2306, 1.0
  %v2423 = vadd.f32 %v2308, 1.0
  %v2424 = vadd.f32 %v2310, 1.0
  %v2425 = vadd.f32 %v2312, 1.0
  %v2426 = vadd.f32 %v2314, 1.0
  %v2427 = vadd.f32 %v2316, 1.0
  %v2428 = vadd.f32 %v2318, 1.0
  %v2429 = vadd.f32 %v2320, 1.0
  %v2430 = vadd.f32 %v2322, 1.0
  %v2431 = vadd.f32 %v2324, 1.0
  %v2432 = vadd.f32 %v2326, 1.0
  %v2433 = vadd.f32 %v2328, 1.0
  %v2434 = vadd.f32 %v2330, 1.0
  %v2435 = vadd.f32 %v2332, 1.0
  %v2436 = vadd.f32 %v2334, 1.0
  %v2437 = vadd.f32 %v2336, 1.0
  %v2438 = vadd.f32 %v2338, 1.0
  %v2439 = vadd.f32 %v2340, 1.0
  %v2440 = vadd.f32 %v2342, 1.0
  %v2441 = vadd.f32 %v2344, 1.0
  %v2442 = vadd.f32 %v2346, 1.0
  %v2443 = vadd.f32 %v2348, 1.0
  %v2444 = vadd.f32 %v2350, 1.0
  %v2445 = vadd.f32 %v2352, 1.0
  %v2446 = vadd.f32 %v2354, 1.0
  %v2447 = vadd.f32 %v2356, 1.0
  %v2448 = vadd.f32 %v2358, 1.0
  %v2449 = vadd.f32 %v2360, 1.0
  %v2450 = vadd.f32 %v2362, 1.0
  %v2451 = vadd.f32 %v2364, 1.0
  %v2452 = vadd.f32 %v2366, 1.0
  %v2453 = vadd.f32 %v2368, 1.0
  %v2454 = vadd.f32 %v2370, 1.0
  %v2455 = vadd.f32 %v2372, 1.0
  %v2456 = vadd.f32 %v2374, 1.0
  %v2457 = vadd.f32 %v2376, 1.0
  %v2458 = vadd.f32 %v2378, 1.0
  %v2459 = vadd.f32 %v2380, 1.0
  %v2460 = vadd.f32 %v2382, 1.0
  %v2461 = vadd.f32 %v2384, 1.0
  %v2462 = vadd.f32 %v2386, 1.0
  %v2463 = vadd.f32 %v2388, 1.0
  %v2464 = vadd.f32 %v2390, 1.0
  %v2465 = vadd.f32 %v2392, 1.0
  %v2466 = vadd.f32 %v2394, 1.0
  %v2467 = vadd.f32 %v2396, 1.0
  %v2468 = vadd.f32 %v2398, 1.0
  %v2469 = vadd.f32 %v2400, 1.0
  %v2470 = vadd.f32 %v2402, 1.0
  %v2471 = vadd.f32 %v2404, 1.0
  %v2472 = vadd.f32 %v2406, 1.0
  %v2473 = vadd.f32 %v2408, 1.0
  %v2474 = vadd.f32 %v2410, 1.0
  %v2475 = vrcp.pop %v2411
  %v2476 = vmul.f32 %v2411, %v2475
  %v2477 = vsub.f32 1.0, %v2476
  %v2478 = vmul.f32 %v2475, %v2477
  %v2479 = vadd.f32 %v2475, %v2478
  %vm2480 = vweird.f32 %v2411
  %vm2481 = vweird.f32 %v2475
  %vm2482 = vmor %vm2480, %vm2481
  %v2483 = vsel %vm2482, %v2475, %v2479
  %v2484 = vand.u32 2147483647, %v2411
  %vm2485 = vcmp.eq.f32.partialorder %v2484, 8.507059e+37
  %v2486 = vand.u32 %v2411, 2147483648
  %v2487 = vor.u32 1.1754944e-38, %v2486
  %v2488 = vsel %vm2485, %v2487, %v2483
  %v2489 = vmul.f32 1.0, %v2488
  %v2490 = vrcp.pop %v2412
  %v2491 = vmul.f32 %v2412, %v2490
  %v2492 = vsub.f32 1.0, %v2491
  %v2493 = vmul.f32 %v2490, %v2492
  %v2494 = vadd.f32 %v2490, %v2493
  %vm2495 = vweird.f32 %v2412
  %vm2496 = vweird.f32 %v2490
  %vm2497 = vmor %vm2495, %vm2496
  %v2498 = vsel %vm2497, %v2490, %v2494
  %v2499 = vand.u32 2147483647, %v2412
  %vm2500 = vcmp.eq.f32.partialorder %v2499, 8.507059e+37
  %v2501 = vand.u32 %v2412, 2147483648
  %v2502 = vor.u32 1.1754944e-38, %v2501
  %v2503 = vsel %vm2500, %v2502, %v2498
  %v2504 = vmul.f32 1.0, %v2503
  %v2505 = vrcp.pop %v2413
  %v2506 = vmul.f32 %v2413, %v2505
  %v2507 = vsub.f32 1.0, %v2506
  %v2508 = vmul.f32 %v2505, %v2507
  %v2509 = vadd.f32 %v2505, %v2508
  %vm2510 = vweird.f32 %v2413
  %vm2511 = vweird.f32 %v2505
  %vm2512 = vmor %vm2510, %vm2511
  %v2513 = vsel %vm2512, %v2505, %v2509
  %v2514 = vand.u32 2147483647, %v2413
  %vm2515 = vcmp.eq.f32.partialorder %v2514, 8.507059e+37
  %v2516 = vand.u32 %v2413, 2147483648
  %v2517 = vor.u32 1.1754944e-38, %v2516
  %v2518 = vsel %vm2515, %v2517, %v2513
  %v2519 = vmul.f32 1.0, %v2518
  %v2520 = vrcp.pop %v2414
  %v2521 = vmul.f32 %v2414, %v2520
  %v2522 = vsub.f32 1.0, %v2521
  %v2523 = vmul.f32 %v2520, %v2522
  %v2524 = vadd.f32 %v2520, %v2523
  %vm2525 = vweird.f32 %v2414
  %vm2526 = vweird.f32 %v2520
  %vm2527 = vmor %vm2525, %vm2526
  %v2528 = vsel %vm2527, %v2520, %v2524
  %v2529 = vand.u32 2147483647, %v2414
  %vm2530 = vcmp.eq.f32.partialorder %v2529, 8.507059e+37
  %v2531 = vand.u32 %v2414, 2147483648
  %v2532 = vor.u32 1.1754944e-38, %v2531
  %v2533 = vsel %vm2530, %v2532, %v2528
  %v2534 = vmul.f32 1.0, %v2533
  %v2535 = vrcp.pop %v2415
  %v2536 = vmul.f32 %v2415, %v2535
  %v2537 = vsub.f32 1.0, %v2536
  %v2538 = vmul.f32 %v2535, %v2537
  %v2539 = vadd.f32 %v2535, %v2538
  %vm2540 = vweird.f32 %v2415
  %vm2541 = vweird.f32 %v2535
  %vm2542 = vmor %vm2540, %vm2541
  %v2543 = vsel %vm2542, %v2535, %v2539
  %v2544 = vand.u32 2147483647, %v2415
  %vm2545 = vcmp.eq.f32.partialorder %v2544, 8.507059e+37
  %v2546 = vand.u32 %v2415, 2147483648
  %v2547 = vor.u32 1.1754944e-38, %v2546
  %v2548 = vsel %vm2545, %v2547, %v2543
  %v2549 = vmul.f32 1.0, %v2548
  %v2550 = vrcp.pop %v2416
  %v2551 = vmul.f32 %v2416, %v2550
  %v2552 = vsub.f32 1.0, %v2551
  %v2553 = vmul.f32 %v2550, %v2552
  %v2554 = vadd.f32 %v2550, %v2553
  %vm2555 = vweird.f32 %v2416
  %vm2556 = vweird.f32 %v2550
  %vm2557 = vmor %vm2555, %vm2556
  %v2558 = vsel %vm2557, %v2550, %v2554
  %v2559 = vand.u32 2147483647, %v2416
  %vm2560 = vcmp.eq.f32.partialorder %v2559, 8.507059e+37
  %v2561 = vand.u32 %v2416, 2147483648
  %v2562 = vor.u32 1.1754944e-38, %v2561
  %v2563 = vsel %vm2560, %v2562, %v2558
  %v2564 = vmul.f32 1.0, %v2563
  %v2565 = vrcp.pop %v2417
  %v2566 = vmul.f32 %v2417, %v2565
  %v2567 = vsub.f32 1.0, %v2566
  %v2568 = vmul.f32 %v2565, %v2567
  %v2569 = vadd.f32 %v2565, %v2568
  %vm2570 = vweird.f32 %v2417
  %vm2571 = vweird.f32 %v2565
  %vm2572 = vmor %vm2570, %vm2571
  %v2573 = vsel %vm2572, %v2565, %v2569
  %v2574 = vand.u32 2147483647, %v2417
  %vm2575 = vcmp.eq.f32.partialorder %v2574, 8.507059e+37
  %v2576 = vand.u32 %v2417, 2147483648
  %v2577 = vor.u32 1.1754944e-38, %v2576
  %v2578 = vsel %vm2575, %v2577, %v2573
  %v2579 = vmul.f32 1.0, %v2578
  %v2580 = vrcp.pop %v2418
  %v2581 = vmul.f32 %v2418, %v2580
  %v2582 = vsub.f32 1.0, %v2581
  %v2583 = vmul.f32 %v2580, %v2582
  %v2584 = vadd.f32 %v2580, %v2583
  %vm2585 = vweird.f32 %v2418
  %vm2586 = vweird.f32 %v2580
  %vm2587 = vmor %vm2585, %vm2586
  %v2588 = vsel %vm2587, %v2580, %v2584
  %v2589 = vand.u32 2147483647, %v2418
  %vm2590 = vcmp.eq.f32.partialorder %v2589, 8.507059e+37
  %v2591 = vand.u32 %v2418, 2147483648
  %v2592 = vor.u32 1.1754944e-38, %v2591
  %v2593 = vsel %vm2590, %v2592, %v2588
  %v2594 = vmul.f32 1.0, %v2593
  %v2595 = vrcp.pop %v2419
  %v2596 = vmul.f32 %v2419, %v2595
  %v2597 = vsub.f32 1.0, %v2596
  %v2598 = vmul.f32 %v2595, %v2597
  %v2599 = vadd.f32 %v2595, %v2598
  %vm2600 = vweird.f32 %v2419
  %vm2601 = vweird.f32 %v2595
  %vm2602 = vmor %vm2600, %vm2601
  %v2603 = vsel %vm2602, %v2595, %v2599
  %v2604 = vand.u32 2147483647, %v2419
  %vm2605 = vcmp.eq.f32.partialorder %v2604, 8.507059e+37
  %v2606 = vand.u32 %v2419, 2147483648
  %v2607 = vor.u32 1.1754944e-38, %v2606
  %v2608 = vsel %vm2605, %v2607, %v2603
  %v2609 = vmul.f32 1.0, %v2608
  %v2610 = vrcp.pop %v2420
  %v2611 = vmul.f32 %v2420, %v2610
  %v2612 = vsub.f32 1.0, %v2611
  %v2613 = vmul.f32 %v2610, %v2612
  %v2614 = vadd.f32 %v2610, %v2613
  %vm2615 = vweird.f32 %v2420
  %vm2616 = vweird.f32 %v2610
  %vm2617 = vmor %vm2615, %vm2616
  %v2618 = vsel %vm2617, %v2610, %v2614
  %v2619 = vand.u32 2147483647, %v2420
  %vm2620 = vcmp.eq.f32.partialorder %v2619, 8.507059e+37
  %v2621 = vand.u32 %v2420, 2147483648
  %v2622 = vor.u32 1.1754944e-38, %v2621
  %v2623 = vsel %vm2620, %v2622, %v2618
  %v2624 = vmul.f32 1.0, %v2623
  %v2625 = vrcp.pop %v2421
  %v2626 = vmul.f32 %v2421, %v2625
  %v2627 = vsub.f32 1.0, %v2626
  %v2628 = vmul.f32 %v2625, %v2627
  %v2629 = vadd.f32 %v2625, %v2628
  %vm2630 = vweird.f32 %v2421
  %vm2631 = vweird.f32 %v2625
  %vm2632 = vmor %vm2630, %vm2631
  %v2633 = vsel %vm2632, %v2625, %v2629
  %v2634 = vand.u32 2147483647, %v2421
  %vm2635 = vcmp.eq.f32.partialorder %v2634, 8.507059e+37
  %v2636 = vand.u32 %v2421, 2147483648
  %v2637 = vor.u32 1.1754944e-38, %v2636
  %v2638 = vsel %vm2635, %v2637, %v2633
  %v2639 = vmul.f32 1.0, %v2638
  %v2640 = vrcp.pop %v2422
  %v2641 = vmul.f32 %v2422, %v2640
  %v2642 = vsub.f32 1.0, %v2641
  %v2643 = vmul.f32 %v2640, %v2642
  %v2644 = vadd.f32 %v2640, %v2643
  %vm2645 = vweird.f32 %v2422
  %vm2646 = vweird.f32 %v2640
  %vm2647 = vmor %vm2645, %vm2646
  %v2648 = vsel %vm2647, %v2640, %v2644
  %v2649 = vand.u32 2147483647, %v2422
  %vm2650 = vcmp.eq.f32.partialorder %v2649, 8.507059e+37
  %v2651 = vand.u32 %v2422, 2147483648
  %v2652 = vor.u32 1.1754944e-38, %v2651
  %v2653 = vsel %vm2650, %v2652, %v2648
  %v2654 = vmul.f32 1.0, %v2653
  %v2655 = vrcp.pop %v2423
  %v2656 = vmul.f32 %v2423, %v2655
  %v2657 = vsub.f32 1.0, %v2656
  %v2658 = vmul.f32 %v2655, %v2657
  %v2659 = vadd.f32 %v2655, %v2658
  %vm2660 = vweird.f32 %v2423
  %vm2661 = vweird.f32 %v2655
  %vm2662 = vmor %vm2660, %vm2661
  %v2663 = vsel %vm2662, %v2655, %v2659
  %v2664 = vand.u32 2147483647, %v2423
  %vm2665 = vcmp.eq.f32.partialorder %v2664, 8.507059e+37
  %v2666 = vand.u32 %v2423, 2147483648
  %v2667 = vor.u32 1.1754944e-38, %v2666
  %v2668 = vsel %vm2665, %v2667, %v2663
  %v2669 = vmul.f32 1.0, %v2668
  %v2670 = vrcp.pop %v2424
  %v2671 = vmul.f32 %v2424, %v2670
  %v2672 = vsub.f32 1.0, %v2671
  %v2673 = vmul.f32 %v2670, %v2672
  %v2674 = vadd.f32 %v2670, %v2673
  %vm2675 = vweird.f32 %v2424
  %vm2676 = vweird.f32 %v2670
  %vm2677 = vmor %vm2675, %vm2676
  %v2678 = vsel %vm2677, %v2670, %v2674
  %v2679 = vand.u32 2147483647, %v2424
  %vm2680 = vcmp.eq.f32.partialorder %v2679, 8.507059e+37
  %v2681 = vand.u32 %v2424, 2147483648
  %v2682 = vor.u32 1.1754944e-38, %v2681
  %v2683 = vsel %vm2680, %v2682, %v2678
  %v2684 = vmul.f32 1.0, %v2683
  %v2685 = vrcp.pop %v2425
  %v2686 = vmul.f32 %v2425, %v2685
  %v2687 = vsub.f32 1.0, %v2686
  %v2688 = vmul.f32 %v2685, %v2687
  %v2689 = vadd.f32 %v2685, %v2688
  %vm2690 = vweird.f32 %v2425
  %vm2691 = vweird.f32 %v2685
  %vm2692 = vmor %vm2690, %vm2691
  %v2693 = vsel %vm2692, %v2685, %v2689
  %v2694 = vand.u32 2147483647, %v2425
  %vm2695 = vcmp.eq.f32.partialorder %v2694, 8.507059e+37
  %v2696 = vand.u32 %v2425, 2147483648
  %v2697 = vor.u32 1.1754944e-38, %v2696
  %v2698 = vsel %vm2695, %v2697, %v2693
  %v2699 = vmul.f32 1.0, %v2698
  %v2700 = vrcp.pop %v2426
  %v2701 = vmul.f32 %v2426, %v2700
  %v2702 = vsub.f32 1.0, %v2701
  %v2703 = vmul.f32 %v2700, %v2702
  %v2704 = vadd.f32 %v2700, %v2703
  %vm2705 = vweird.f32 %v2426
  %vm2706 = vweird.f32 %v2700
  %vm2707 = vmor %vm2705, %vm2706
  %v2708 = vsel %vm2707, %v2700, %v2704
  %v2709 = vand.u32 2147483647, %v2426
  %vm2710 = vcmp.eq.f32.partialorder %v2709, 8.507059e+37
  %v2711 = vand.u32 %v2426, 2147483648
  %v2712 = vor.u32 1.1754944e-38, %v2711
  %v2713 = vsel %vm2710, %v2712, %v2708
  %v2714 = vmul.f32 1.0, %v2713
  %v2715 = vrcp.pop %v2427
  %v2716 = vmul.f32 %v2427, %v2715
  %v2717 = vsub.f32 1.0, %v2716
  %v2718 = vmul.f32 %v2715, %v2717
  %v2719 = vadd.f32 %v2715, %v2718
  %vm2720 = vweird.f32 %v2427
  %vm2721 = vweird.f32 %v2715
  %vm2722 = vmor %vm2720, %vm2721
  %v2723 = vsel %vm2722, %v2715, %v2719
  %v2724 = vand.u32 2147483647, %v2427
  %vm2725 = vcmp.eq.f32.partialorder %v2724, 8.507059e+37
  %v2726 = vand.u32 %v2427, 2147483648
  %v2727 = vor.u32 1.1754944e-38, %v2726
  %v2728 = vsel %vm2725, %v2727, %v2723
  %v2729 = vmul.f32 1.0, %v2728
  %v2730 = vrcp.pop %v2428
  %v2731 = vmul.f32 %v2428, %v2730
  %v2732 = vsub.f32 1.0, %v2731
  %v2733 = vmul.f32 %v2730, %v2732
  %v2734 = vadd.f32 %v2730, %v2733
  %vm2735 = vweird.f32 %v2428
  %vm2736 = vweird.f32 %v2730
  %vm2737 = vmor %vm2735, %vm2736
  %v2738 = vsel %vm2737, %v2730, %v2734
  %v2739 = vand.u32 2147483647, %v2428
  %vm2740 = vcmp.eq.f32.partialorder %v2739, 8.507059e+37
  %v2741 = vand.u32 %v2428, 2147483648
  %v2742 = vor.u32 1.1754944e-38, %v2741
  %v2743 = vsel %vm2740, %v2742, %v2738
  %v2744 = vmul.f32 1.0, %v2743
  %v2745 = vrcp.pop %v2429
  %v2746 = vmul.f32 %v2429, %v2745
  %v2747 = vsub.f32 1.0, %v2746
  %v2748 = vmul.f32 %v2745, %v2747
  %v2749 = vadd.f32 %v2745, %v2748
  %vm2750 = vweird.f32 %v2429
  %vm2751 = vweird.f32 %v2745
  %vm2752 = vmor %vm2750, %vm2751
  %v2753 = vsel %vm2752, %v2745, %v2749
  %v2754 = vand.u32 2147483647, %v2429
  %vm2755 = vcmp.eq.f32.partialorder %v2754, 8.507059e+37
  %v2756 = vand.u32 %v2429, 2147483648
  %v2757 = vor.u32 1.1754944e-38, %v2756
  %v2758 = vsel %vm2755, %v2757, %v2753
  %v2759 = vmul.f32 1.0, %v2758
  %v2760 = vrcp.pop %v2430
  %v2761 = vmul.f32 %v2430, %v2760
  %v2762 = vsub.f32 1.0, %v2761
  %v2763 = vmul.f32 %v2760, %v2762
  %v2764 = vadd.f32 %v2760, %v2763
  %vm2765 = vweird.f32 %v2430
  %vm2766 = vweird.f32 %v2760
  %vm2767 = vmor %vm2765, %vm2766
  %v2768 = vsel %vm2767, %v2760, %v2764
  %v2769 = vand.u32 2147483647, %v2430
  %vm2770 = vcmp.eq.f32.partialorder %v2769, 8.507059e+37
  %v2771 = vand.u32 %v2430, 2147483648
  %v2772 = vor.u32 1.1754944e-38, %v2771
  %v2773 = vsel %vm2770, %v2772, %v2768
  %v2774 = vmul.f32 1.0, %v2773
  %v2775 = vrcp.pop %v2431
  %v2776 = vmul.f32 %v2431, %v2775
  %v2777 = vsub.f32 1.0, %v2776
  %v2778 = vmul.f32 %v2775, %v2777
  %v2779 = vadd.f32 %v2775, %v2778
  %vm2780 = vweird.f32 %v2431
  %vm2781 = vweird.f32 %v2775
  %vm2782 = vmor %vm2780, %vm2781
  %v2783 = vsel %vm2782, %v2775, %v2779
  %v2784 = vand.u32 2147483647, %v2431
  %vm2785 = vcmp.eq.f32.partialorder %v2784, 8.507059e+37
  %v2786 = vand.u32 %v2431, 2147483648
  %v2787 = vor.u32 1.1754944e-38, %v2786
  %v2788 = vsel %vm2785, %v2787, %v2783
  %v2789 = vmul.f32 1.0, %v2788
  %v2790 = vrcp.pop %v2432
  %v2791 = vmul.f32 %v2432, %v2790
  %v2792 = vsub.f32 1.0, %v2791
  %v2793 = vmul.f32 %v2790, %v2792
  %v2794 = vadd.f32 %v2790, %v2793
  %vm2795 = vweird.f32 %v2432
  %vm2796 = vweird.f32 %v2790
  %vm2797 = vmor %vm2795, %vm2796
  %v2798 = vsel %vm2797, %v2790, %v2794
  %v2799 = vand.u32 2147483647, %v2432
  %vm2800 = vcmp.eq.f32.partialorder %v2799, 8.507059e+37
  %v2801 = vand.u32 %v2432, 2147483648
  %v2802 = vor.u32 1.1754944e-38, %v2801
  %v2803 = vsel %vm2800, %v2802, %v2798
  %v2804 = vmul.f32 1.0, %v2803
  %v2805 = vrcp.pop %v2433
  %v2806 = vmul.f32 %v2433, %v2805
  %v2807 = vsub.f32 1.0, %v2806
  %v2808 = vmul.f32 %v2805, %v2807
  %v2809 = vadd.f32 %v2805, %v2808
  %vm2810 = vweird.f32 %v2433
  %vm2811 = vweird.f32 %v2805
  %vm2812 = vmor %vm2810, %vm2811
  %v2813 = vsel %vm2812, %v2805, %v2809
  %v2814 = vand.u32 2147483647, %v2433
  %vm2815 = vcmp.eq.f32.partialorder %v2814, 8.507059e+37
  %v2816 = vand.u32 %v2433, 2147483648
  %v2817 = vor.u32 1.1754944e-38, %v2816
  %v2818 = vsel %vm2815, %v2817, %v2813
  %v2819 = vmul.f32 1.0, %v2818
  %v2820 = vrcp.pop %v2434
  %v2821 = vmul.f32 %v2434, %v2820
  %v2822 = vsub.f32 1.0, %v2821
  %v2823 = vmul.f32 %v2820, %v2822
  %v2824 = vadd.f32 %v2820, %v2823
  %vm2825 = vweird.f32 %v2434
  %vm2826 = vweird.f32 %v2820
  %vm2827 = vmor %vm2825, %vm2826
  %v2828 = vsel %vm2827, %v2820, %v2824
  %v2829 = vand.u32 2147483647, %v2434
  %vm2830 = vcmp.eq.f32.partialorder %v2829, 8.507059e+37
  %v2831 = vand.u32 %v2434, 2147483648
  %v2832 = vor.u32 1.1754944e-38, %v2831
  %v2833 = vsel %vm2830, %v2832, %v2828
  %v2834 = vmul.f32 1.0, %v2833
  %v2835 = vrcp.pop %v2435
  %v2836 = vmul.f32 %v2435, %v2835
  %v2837 = vsub.f32 1.0, %v2836
  %v2838 = vmul.f32 %v2835, %v2837
  %v2839 = vadd.f32 %v2835, %v2838
  %vm2840 = vweird.f32 %v2435
  %vm2841 = vweird.f32 %v2835
  %vm2842 = vmor %vm2840, %vm2841
  %v2843 = vsel %vm2842, %v2835, %v2839
  %v2844 = vand.u32 2147483647, %v2435
  %vm2845 = vcmp.eq.f32.partialorder %v2844, 8.507059e+37
  %v2846 = vand.u32 %v2435, 2147483648
  %v2847 = vor.u32 1.1754944e-38, %v2846
  %v2848 = vsel %vm2845, %v2847, %v2843
  %v2849 = vmul.f32 1.0, %v2848
  %v2850 = vrcp.pop %v2436
  %v2851 = vmul.f32 %v2436, %v2850
  %v2852 = vsub.f32 1.0, %v2851
  %v2853 = vmul.f32 %v2850, %v2852
  %v2854 = vadd.f32 %v2850, %v2853
  %vm2855 = vweird.f32 %v2436
  %vm2856 = vweird.f32 %v2850
  %vm2857 = vmor %vm2855, %vm2856
  %v2858 = vsel %vm2857, %v2850, %v2854
  %v2859 = vand.u32 2147483647, %v2436
  %vm2860 = vcmp.eq.f32.partialorder %v2859, 8.507059e+37
  %v2861 = vand.u32 %v2436, 2147483648
  %v2862 = vor.u32 1.1754944e-38, %v2861
  %v2863 = vsel %vm2860, %v2862, %v2858
  %v2864 = vmul.f32 1.0, %v2863
  %v2865 = vrcp.pop %v2437
  %v2866 = vmul.f32 %v2437, %v2865
  %v2867 = vsub.f32 1.0, %v2866
  %v2868 = vmul.f32 %v2865, %v2867
  %v2869 = vadd.f32 %v2865, %v2868
  %vm2870 = vweird.f32 %v2437
  %vm2871 = vweird.f32 %v2865
  %vm2872 = vmor %vm2870, %vm2871
  %v2873 = vsel %vm2872, %v2865, %v2869
  %v2874 = vand.u32 2147483647, %v2437
  %vm2875 = vcmp.eq.f32.partialorder %v2874, 8.507059e+37
  %v2876 = vand.u32 %v2437, 2147483648
  %v2877 = vor.u32 1.1754944e-38, %v2876
  %v2878 = vsel %vm2875, %v2877, %v2873
  %v2879 = vmul.f32 1.0, %v2878
  %v2880 = vrcp.pop %v2438
  %v2881 = vmul.f32 %v2438, %v2880
  %v2882 = vsub.f32 1.0, %v2881
  %v2883 = vmul.f32 %v2880, %v2882
  %v2884 = vadd.f32 %v2880, %v2883
  %vm2885 = vweird.f32 %v2438
  %vm2886 = vweird.f32 %v2880
  %vm2887 = vmor %vm2885, %vm2886
  %v2888 = vsel %vm2887, %v2880, %v2884
  %v2889 = vand.u32 2147483647, %v2438
  %vm2890 = vcmp.eq.f32.partialorder %v2889, 8.507059e+37
  %v2891 = vand.u32 %v2438, 2147483648
  %v2892 = vor.u32 1.1754944e-38, %v2891
  %v2893 = vsel %vm2890, %v2892, %v2888
  %v2894 = vmul.f32 1.0, %v2893
  %v2895 = vrcp.pop %v2439
  %v2896 = vmul.f32 %v2439, %v2895
  %v2897 = vsub.f32 1.0, %v2896
  %v2898 = vmul.f32 %v2895, %v2897
  %v2899 = vadd.f32 %v2895, %v2898
  %vm2900 = vweird.f32 %v2439
  %vm2901 = vweird.f32 %v2895
  %vm2902 = vmor %vm2900, %vm2901
  %v2903 = vsel %vm2902, %v2895, %v2899
  %v2904 = vand.u32 2147483647, %v2439
  %vm2905 = vcmp.eq.f32.partialorder %v2904, 8.507059e+37
  %v2906 = vand.u32 %v2439, 2147483648
  %v2907 = vor.u32 1.1754944e-38, %v2906
  %v2908 = vsel %vm2905, %v2907, %v2903
  %v2909 = vmul.f32 1.0, %v2908
  %v2910 = vrcp.pop %v2440
  %v2911 = vmul.f32 %v2440, %v2910
  %v2912 = vsub.f32 1.0, %v2911
  %v2913 = vmul.f32 %v2910, %v2912
  %v2914 = vadd.f32 %v2910, %v2913
  %vm2915 = vweird.f32 %v2440
  %vm2916 = vweird.f32 %v2910
  %vm2917 = vmor %vm2915, %vm2916
  %v2918 = vsel %vm2917, %v2910, %v2914
  %v2919 = vand.u32 2147483647, %v2440
  %vm2920 = vcmp.eq.f32.partialorder %v2919, 8.507059e+37
  %v2921 = vand.u32 %v2440, 2147483648
  %v2922 = vor.u32 1.1754944e-38, %v2921
  %v2923 = vsel %vm2920, %v2922, %v2918
  %v2924 = vmul.f32 1.0, %v2923
  %v2925 = vrcp.pop %v2441
  %v2926 = vmul.f32 %v2441, %v2925
  %v2927 = vsub.f32 1.0, %v2926
  %v2928 = vmul.f32 %v2925, %v2927
  %v2929 = vadd.f32 %v2925, %v2928
  %vm2930 = vweird.f32 %v2441
  %vm2931 = vweird.f32 %v2925
  %vm2932 = vmor %vm2930, %vm2931
  %v2933 = vsel %vm2932, %v2925, %v2929
  %v2934 = vand.u32 2147483647, %v2441
  %vm2935 = vcmp.eq.f32.partialorder %v2934, 8.507059e+37
  %v2936 = vand.u32 %v2441, 2147483648
  %v2937 = vor.u32 1.1754944e-38, %v2936
  %v2938 = vsel %vm2935, %v2937, %v2933
  %v2939 = vmul.f32 1.0, %v2938
  %v2940 = vrcp.pop %v2442
  %v2941 = vmul.f32 %v2442, %v2940
  %v2942 = vsub.f32 1.0, %v2941
  %v2943 = vmul.f32 %v2940, %v2942
  %v2944 = vadd.f32 %v2940, %v2943
  %vm2945 = vweird.f32 %v2442
  %vm2946 = vweird.f32 %v2940
  %vm2947 = vmor %vm2945, %vm2946
  %v2948 = vsel %vm2947, %v2940, %v2944
  %v2949 = vand.u32 2147483647, %v2442
  %vm2950 = vcmp.eq.f32.partialorder %v2949, 8.507059e+37
  %v2951 = vand.u32 %v2442, 2147483648
  %v2952 = vor.u32 1.1754944e-38, %v2951
  %v2953 = vsel %vm2950, %v2952, %v2948
  %v2954 = vmul.f32 1.0, %v2953
  %v2955 = vrcp.pop %v2443
  %v2956 = vmul.f32 %v2443, %v2955
  %v2957 = vsub.f32 1.0, %v2956
  %v2958 = vmul.f32 %v2955, %v2957
  %v2959 = vadd.f32 %v2955, %v2958
  %vm2960 = vweird.f32 %v2443
  %vm2961 = vweird.f32 %v2955
  %vm2962 = vmor %vm2960, %vm2961
  %v2963 = vsel %vm2962, %v2955, %v2959
  %v2964 = vand.u32 2147483647, %v2443
  %vm2965 = vcmp.eq.f32.partialorder %v2964, 8.507059e+37
  %v2966 = vand.u32 %v2443, 2147483648
  %v2967 = vor.u32 1.1754944e-38, %v2966
  %v2968 = vsel %vm2965, %v2967, %v2963
  %v2969 = vmul.f32 1.0, %v2968
  %v2970 = vrcp.pop %v2444
  %v2971 = vmul.f32 %v2444, %v2970
  %v2972 = vsub.f32 1.0, %v2971
  %v2973 = vmul.f32 %v2970, %v2972
  %v2974 = vadd.f32 %v2970, %v2973
  %vm2975 = vweird.f32 %v2444
  %vm2976 = vweird.f32 %v2970
  %vm2977 = vmor %vm2975, %vm2976
  %v2978 = vsel %vm2977, %v2970, %v2974
  %v2979 = vand.u32 2147483647, %v2444
  %vm2980 = vcmp.eq.f32.partialorder %v2979, 8.507059e+37
  %v2981 = vand.u32 %v2444, 2147483648
  %v2982 = vor.u32 1.1754944e-38, %v2981
  %v2983 = vsel %vm2980, %v2982, %v2978
  %v2984 = vmul.f32 1.0, %v2983
  %v2985 = vrcp.pop %v2445
  %v2986 = vmul.f32 %v2445, %v2985
  %v2987 = vsub.f32 1.0, %v2986
  %v2988 = vmul.f32 %v2985, %v2987
  %v2989 = vadd.f32 %v2985, %v2988
  %vm2990 = vweird.f32 %v2445
  %vm2991 = vweird.f32 %v2985
  %vm2992 = vmor %vm2990, %vm2991
  %v2993 = vsel %vm2992, %v2985, %v2989
  %v2994 = vand.u32 2147483647, %v2445
  %vm2995 = vcmp.eq.f32.partialorder %v2994, 8.507059e+37
  %v2996 = vand.u32 %v2445, 2147483648
  %v2997 = vor.u32 1.1754944e-38, %v2996
  %v2998 = vsel %vm2995, %v2997, %v2993
  %v2999 = vmul.f32 1.0, %v2998
  %v3000 = vrcp.pop %v2446
  %v3001 = vmul.f32 %v2446, %v3000
  %v3002 = vsub.f32 1.0, %v3001
  %v3003 = vmul.f32 %v3000, %v3002
  %v3004 = vadd.f32 %v3000, %v3003
  %vm3005 = vweird.f32 %v2446
  %vm3006 = vweird.f32 %v3000
  %vm3007 = vmor %vm3005, %vm3006
  %v3008 = vsel %vm3007, %v3000, %v3004
  %v3009 = vand.u32 2147483647, %v2446
  %vm3010 = vcmp.eq.f32.partialorder %v3009, 8.507059e+37
  %v3011 = vand.u32 %v2446, 2147483648
  %v3012 = vor.u32 1.1754944e-38, %v3011
  %v3013 = vsel %vm3010, %v3012, %v3008
  %v3014 = vmul.f32 1.0, %v3013
  %v3015 = vrcp.pop %v2447
  %v3016 = vmul.f32 %v2447, %v3015
  %v3017 = vsub.f32 1.0, %v3016
  %v3018 = vmul.f32 %v3015, %v3017
  %v3019 = vadd.f32 %v3015, %v3018
  %vm3020 = vweird.f32 %v2447
  %vm3021 = vweird.f32 %v3015
  %vm3022 = vmor %vm3020, %vm3021
  %v3023 = vsel %vm3022, %v3015, %v3019
  %v3024 = vand.u32 2147483647, %v2447
  %vm3025 = vcmp.eq.f32.partialorder %v3024, 8.507059e+37
  %v3026 = vand.u32 %v2447, 2147483648
  %v3027 = vor.u32 1.1754944e-38, %v3026
  %v3028 = vsel %vm3025, %v3027, %v3023
  %v3029 = vmul.f32 1.0, %v3028
  %v3030 = vrcp.pop %v2448
  %v3031 = vmul.f32 %v2448, %v3030
  %v3032 = vsub.f32 1.0, %v3031
  %v3033 = vmul.f32 %v3030, %v3032
  %v3034 = vadd.f32 %v3030, %v3033
  %vm3035 = vweird.f32 %v2448
  %vm3036 = vweird.f32 %v3030
  %vm3037 = vmor %vm3035, %vm3036
  %v3038 = vsel %vm3037, %v3030, %v3034
  %v3039 = vand.u32 2147483647, %v2448
  %vm3040 = vcmp.eq.f32.partialorder %v3039, 8.507059e+37
  %v3041 = vand.u32 %v2448, 2147483648
  %v3042 = vor.u32 1.1754944e-38, %v3041
  %v3043 = vsel %vm3040, %v3042, %v3038
  %v3044 = vmul.f32 1.0, %v3043
  %v3045 = vrcp.pop %v2449
  %v3046 = vmul.f32 %v2449, %v3045
  %v3047 = vsub.f32 1.0, %v3046
  %v3048 = vmul.f32 %v3045, %v3047
  %v3049 = vadd.f32 %v3045, %v3048
  %vm3050 = vweird.f32 %v2449
  %vm3051 = vweird.f32 %v3045
  %vm3052 = vmor %vm3050, %vm3051
  %v3053 = vsel %vm3052, %v3045, %v3049
  %v3054 = vand.u32 2147483647, %v2449
  %vm3055 = vcmp.eq.f32.partialorder %v3054, 8.507059e+37
  %v3056 = vand.u32 %v2449, 2147483648
  %v3057 = vor.u32 1.1754944e-38, %v3056
  %v3058 = vsel %vm3055, %v3057, %v3053
  %v3059 = vmul.f32 1.0, %v3058
  %v3060 = vrcp.pop %v2450
  %v3061 = vmul.f32 %v2450, %v3060
  %v3062 = vsub.f32 1.0, %v3061
  %v3063 = vmul.f32 %v3060, %v3062
  %v3064 = vadd.f32 %v3060, %v3063
  %vm3065 = vweird.f32 %v2450
  %vm3066 = vweird.f32 %v3060
  %vm3067 = vmor %vm3065, %vm3066
  %v3068 = vsel %vm3067, %v3060, %v3064
  %v3069 = vand.u32 2147483647, %v2450
  %vm3070 = vcmp.eq.f32.partialorder %v3069, 8.507059e+37
  %v3071 = vand.u32 %v2450, 2147483648
  %v3072 = vor.u32 1.1754944e-38, %v3071
  %v3073 = vsel %vm3070, %v3072, %v3068
  %v3074 = vmul.f32 1.0, %v3073
  %v3075 = vrcp.pop %v2451
  %v3076 = vmul.f32 %v2451, %v3075
  %v3077 = vsub.f32 1.0, %v3076
  %v3078 = vmul.f32 %v3075, %v3077
  %v3079 = vadd.f32 %v3075, %v3078
  %vm3080 = vweird.f32 %v2451
  %vm3081 = vweird.f32 %v3075
  %vm3082 = vmor %vm3080, %vm3081
  %v3083 = vsel %vm3082, %v3075, %v3079
  %v3084 = vand.u32 2147483647, %v2451
  %vm3085 = vcmp.eq.f32.partialorder %v3084, 8.507059e+37
  %v3086 = vand.u32 %v2451, 2147483648
  %v3087 = vor.u32 1.1754944e-38, %v3086
  %v3088 = vsel %vm3085, %v3087, %v3083
  %v3089 = vmul.f32 1.0, %v3088
  %v3090 = vrcp.pop %v2452
  %v3091 = vmul.f32 %v2452, %v3090
  %v3092 = vsub.f32 1.0, %v3091
  %v3093 = vmul.f32 %v3090, %v3092
  %v3094 = vadd.f32 %v3090, %v3093
  %vm3095 = vweird.f32 %v2452
  %vm3096 = vweird.f32 %v3090
  %vm3097 = vmor %vm3095, %vm3096
  %v3098 = vsel %vm3097, %v3090, %v3094
  %v3099 = vand.u32 2147483647, %v2452
  %vm3100 = vcmp.eq.f32.partialorder %v3099, 8.507059e+37
  %v3101 = vand.u32 %v2452, 2147483648
  %v3102 = vor.u32 1.1754944e-38, %v3101
  %v3103 = vsel %vm3100, %v3102, %v3098
  %v3104 = vmul.f32 1.0, %v3103
  %v3105 = vrcp.pop %v2453
  %v3106 = vmul.f32 %v2453, %v3105
  %v3107 = vsub.f32 1.0, %v3106
  %v3108 = vmul.f32 %v3105, %v3107
  %v3109 = vadd.f32 %v3105, %v3108
  %vm3110 = vweird.f32 %v2453
  %vm3111 = vweird.f32 %v3105
  %vm3112 = vmor %vm3110, %vm3111
  %v3113 = vsel %vm3112, %v3105, %v3109
  %v3114 = vand.u32 2147483647, %v2453
  %vm3115 = vcmp.eq.f32.partialorder %v3114, 8.507059e+37
  %v3116 = vand.u32 %v2453, 2147483648
  %v3117 = vor.u32 1.1754944e-38, %v3116
  %v3118 = vsel %vm3115, %v3117, %v3113
  %v3119 = vmul.f32 1.0, %v3118
  %v3120 = vrcp.pop %v2454
  %v3121 = vmul.f32 %v2454, %v3120
  %v3122 = vsub.f32 1.0, %v3121
  %v3123 = vmul.f32 %v3120, %v3122
  %v3124 = vadd.f32 %v3120, %v3123
  %vm3125 = vweird.f32 %v2454
  %vm3126 = vweird.f32 %v3120
  %vm3127 = vmor %vm3125, %vm3126
  %v3128 = vsel %vm3127, %v3120, %v3124
  %v3129 = vand.u32 2147483647, %v2454
  %vm3130 = vcmp.eq.f32.partialorder %v3129, 8.507059e+37
  %v3131 = vand.u32 %v2454, 2147483648
  %v3132 = vor.u32 1.1754944e-38, %v3131
  %v3133 = vsel %vm3130, %v3132, %v3128
  %v3134 = vmul.f32 1.0, %v3133
  %v3135 = vrcp.pop %v2455
  %v3136 = vmul.f32 %v2455, %v3135
  %v3137 = vsub.f32 1.0, %v3136
  %v3138 = vmul.f32 %v3135, %v3137
  %v3139 = vadd.f32 %v3135, %v3138
  %vm3140 = vweird.f32 %v2455
  %vm3141 = vweird.f32 %v3135
  %vm3142 = vmor %vm3140, %vm3141
  %v3143 = vsel %vm3142, %v3135, %v3139
  %v3144 = vand.u32 2147483647, %v2455
  %vm3145 = vcmp.eq.f32.partialorder %v3144, 8.507059e+37
  %v3146 = vand.u32 %v2455, 2147483648
  %v3147 = vor.u32 1.1754944e-38, %v3146
  %v3148 = vsel %vm3145, %v3147, %v3143
  %v3149 = vmul.f32 1.0, %v3148
  %v3150 = vrcp.pop %v2456
  %v3151 = vmul.f32 %v2456, %v3150
  %v3152 = vsub.f32 1.0, %v3151
  %v3153 = vmul.f32 %v3150, %v3152
  %v3154 = vadd.f32 %v3150, %v3153
  %vm3155 = vweird.f32 %v2456
  %vm3156 = vweird.f32 %v3150
  %vm3157 = vmor %vm3155, %vm3156
  %v3158 = vsel %vm3157, %v3150, %v3154
  %v3159 = vand.u32 2147483647, %v2456
  %vm3160 = vcmp.eq.f32.partialorder %v3159, 8.507059e+37
  %v3161 = vand.u32 %v2456, 2147483648
  %v3162 = vor.u32 1.1754944e-38, %v3161
  %v3163 = vsel %vm3160, %v3162, %v3158
  %v3164 = vmul.f32 1.0, %v3163
  %v3165 = vrcp.pop %v2457
  %v3166 = vmul.f32 %v2457, %v3165
  %v3167 = vsub.f32 1.0, %v3166
  %v3168 = vmul.f32 %v3165, %v3167
  %v3169 = vadd.f32 %v3165, %v3168
  %vm3170 = vweird.f32 %v2457
  %vm3171 = vweird.f32 %v3165
  %vm3172 = vmor %vm3170, %vm3171
  %v3173 = vsel %vm3172, %v3165, %v3169
  %v3174 = vand.u32 2147483647, %v2457
  %vm3175 = vcmp.eq.f32.partialorder %v3174, 8.507059e+37
  %v3176 = vand.u32 %v2457, 2147483648
  %v3177 = vor.u32 1.1754944e-38, %v3176
  %v3178 = vsel %vm3175, %v3177, %v3173
  %v3179 = vmul.f32 1.0, %v3178
  %v3180 = vrcp.pop %v2458
  %v3181 = vmul.f32 %v2458, %v3180
  %v3182 = vsub.f32 1.0, %v3181
  %v3183 = vmul.f32 %v3180, %v3182
  %v3184 = vadd.f32 %v3180, %v3183
  %vm3185 = vweird.f32 %v2458
  %vm3186 = vweird.f32 %v3180
  %vm3187 = vmor %vm3185, %vm3186
  %v3188 = vsel %vm3187, %v3180, %v3184
  %v3189 = vand.u32 2147483647, %v2458
  %vm3190 = vcmp.eq.f32.partialorder %v3189, 8.507059e+37
  %v3191 = vand.u32 %v2458, 2147483648
  %v3192 = vor.u32 1.1754944e-38, %v3191
  %v3193 = vsel %vm3190, %v3192, %v3188
  %v3194 = vmul.f32 1.0, %v3193
  %v3195 = vrcp.pop %v2459
  %v3196 = vmul.f32 %v2459, %v3195
  %v3197 = vsub.f32 1.0, %v3196
  %v3198 = vmul.f32 %v3195, %v3197
  %v3199 = vadd.f32 %v3195, %v3198
  %vm3200 = vweird.f32 %v2459
  %vm3201 = vweird.f32 %v3195
  %vm3202 = vmor %vm3200, %vm3201
  %v3203 = vsel %vm3202, %v3195, %v3199
  %v3204 = vand.u32 2147483647, %v2459
  %vm3205 = vcmp.eq.f32.partialorder %v3204, 8.507059e+37
  %v3206 = vand.u32 %v2459, 2147483648
  %v3207 = vor.u32 1.1754944e-38, %v3206
  %v3208 = vsel %vm3205, %v3207, %v3203
  %v3209 = vmul.f32 1.0, %v3208
  %v3210 = vrcp.pop %v2460
  %v3211 = vmul.f32 %v2460, %v3210
  %v3212 = vsub.f32 1.0, %v3211
  %v3213 = vmul.f32 %v3210, %v3212
  %v3214 = vadd.f32 %v3210, %v3213
  %vm3215 = vweird.f32 %v2460
  %vm3216 = vweird.f32 %v3210
  %vm3217 = vmor %vm3215, %vm3216
  %v3218 = vsel %vm3217, %v3210, %v3214
  %v3219 = vand.u32 2147483647, %v2460
  %vm3220 = vcmp.eq.f32.partialorder %v3219, 8.507059e+37
  %v3221 = vand.u32 %v2460, 2147483648
  %v3222 = vor.u32 1.1754944e-38, %v3221
  %v3223 = vsel %vm3220, %v3222, %v3218
  %v3224 = vmul.f32 1.0, %v3223
  %v3225 = vrcp.pop %v2461
  %v3226 = vmul.f32 %v2461, %v3225
  %v3227 = vsub.f32 1.0, %v3226
  %v3228 = vmul.f32 %v3225, %v3227
  %v3229 = vadd.f32 %v3225, %v3228
  %vm3230 = vweird.f32 %v2461
  %vm3231 = vweird.f32 %v3225
  %vm3232 = vmor %vm3230, %vm3231
  %v3233 = vsel %vm3232, %v3225, %v3229
  %v3234 = vand.u32 2147483647, %v2461
  %vm3235 = vcmp.eq.f32.partialorder %v3234, 8.507059e+37
  %v3236 = vand.u32 %v2461, 2147483648
  %v3237 = vor.u32 1.1754944e-38, %v3236
  %v3238 = vsel %vm3235, %v3237, %v3233
  %v3239 = vmul.f32 1.0, %v3238
  %v3240 = vrcp.pop %v2462
  %v3241 = vmul.f32 %v2462, %v3240
  %v3242 = vsub.f32 1.0, %v3241
  %v3243 = vmul.f32 %v3240, %v3242
  %v3244 = vadd.f32 %v3240, %v3243
  %vm3245 = vweird.f32 %v2462
  %vm3246 = vweird.f32 %v3240
  %vm3247 = vmor %vm3245, %vm3246
  %v3248 = vsel %vm3247, %v3240, %v3244
  %v3249 = vand.u32 2147483647, %v2462
  %vm3250 = vcmp.eq.f32.partialorder %v3249, 8.507059e+37
  %v3251 = vand.u32 %v2462, 2147483648
  %v3252 = vor.u32 1.1754944e-38, %v3251
  %v3253 = vsel %vm3250, %v3252, %v3248
  %v3254 = vmul.f32 1.0, %v3253
  %v3255 = vrcp.pop %v2463
  %v3256 = vmul.f32 %v2463, %v3255
  %v3257 = vsub.f32 1.0, %v3256
  %v3258 = vmul.f32 %v3255, %v3257
  %v3259 = vadd.f32 %v3255, %v3258
  %vm3260 = vweird.f32 %v2463
  %vm3261 = vweird.f32 %v3255
  %vm3262 = vmor %vm3260, %vm3261
  %v3263 = vsel %vm3262, %v3255, %v3259
  %v3264 = vand.u32 2147483647, %v2463
  %vm3265 = vcmp.eq.f32.partialorder %v3264, 8.507059e+37
  %v3266 = vand.u32 %v2463, 2147483648
  %v3267 = vor.u32 1.1754944e-38, %v3266
  %v3268 = vsel %vm3265, %v3267, %v3263
  %v3269 = vmul.f32 1.0, %v3268
  %v3270 = vrcp.pop %v2464
  %v3271 = vmul.f32 %v2464, %v3270
  %v3272 = vsub.f32 1.0, %v3271
  %v3273 = vmul.f32 %v3270, %v3272
  %v3274 = vadd.f32 %v3270, %v3273
  %vm3275 = vweird.f32 %v2464
  %vm3276 = vweird.f32 %v3270
  %vm3277 = vmor %vm3275, %vm3276
  %v3278 = vsel %vm3277, %v3270, %v3274
  %v3279 = vand.u32 2147483647, %v2464
  %vm3280 = vcmp.eq.f32.partialorder %v3279, 8.507059e+37
  %v3281 = vand.u32 %v2464, 2147483648
  %v3282 = vor.u32 1.1754944e-38, %v3281
  %v3283 = vsel %vm3280, %v3282, %v3278
  %v3284 = vmul.f32 1.0, %v3283
  %v3285 = vrcp.pop %v2465
  %v3286 = vmul.f32 %v2465, %v3285
  %v3287 = vsub.f32 1.0, %v3286
  %v3288 = vmul.f32 %v3285, %v3287
  %v3289 = vadd.f32 %v3285, %v3288
  %vm3290 = vweird.f32 %v2465
  %vm3291 = vweird.f32 %v3285
  %vm3292 = vmor %vm3290, %vm3291
  %v3293 = vsel %vm3292, %v3285, %v3289
  %v3294 = vand.u32 2147483647, %v2465
  %vm3295 = vcmp.eq.f32.partialorder %v3294, 8.507059e+37
  %v3296 = vand.u32 %v2465, 2147483648
  %v3297 = vor.u32 1.1754944e-38, %v3296
  %v3298 = vsel %vm3295, %v3297, %v3293
  %v3299 = vmul.f32 1.0, %v3298
  %v3300 = vrcp.pop %v2466
  %v3301 = vmul.f32 %v2466, %v3300
  %v3302 = vsub.f32 1.0, %v3301
  %v3303 = vmul.f32 %v3300, %v3302
  %v3304 = vadd.f32 %v3300, %v3303
  %vm3305 = vweird.f32 %v2466
  %vm3306 = vweird.f32 %v3300
  %vm3307 = vmor %vm3305, %vm3306
  %v3308 = vsel %vm3307, %v3300, %v3304
  %v3309 = vand.u32 2147483647, %v2466
  %vm3310 = vcmp.eq.f32.partialorder %v3309, 8.507059e+37
  %v3311 = vand.u32 %v2466, 2147483648
  %v3312 = vor.u32 1.1754944e-38, %v3311
  %v3313 = vsel %vm3310, %v3312, %v3308
  %v3314 = vmul.f32 1.0, %v3313
  %v3315 = vrcp.pop %v2467
  %v3316 = vmul.f32 %v2467, %v3315
  %v3317 = vsub.f32 1.0, %v3316
  %v3318 = vmul.f32 %v3315, %v3317
  %v3319 = vadd.f32 %v3315, %v3318
  %vm3320 = vweird.f32 %v2467
  %vm3321 = vweird.f32 %v3315
  %vm3322 = vmor %vm3320, %vm3321
  %v3323 = vsel %vm3322, %v3315, %v3319
  %v3324 = vand.u32 2147483647, %v2467
  %vm3325 = vcmp.eq.f32.partialorder %v3324, 8.507059e+37
  %v3326 = vand.u32 %v2467, 2147483648
  %v3327 = vor.u32 1.1754944e-38, %v3326
  %v3328 = vsel %vm3325, %v3327, %v3323
  %v3329 = vmul.f32 1.0, %v3328
  %v3330 = vrcp.pop %v2468
  %v3331 = vmul.f32 %v2468, %v3330
  %v3332 = vsub.f32 1.0, %v3331
  %v3333 = vmul.f32 %v3330, %v3332
  %v3334 = vadd.f32 %v3330, %v3333
  %vm3335 = vweird.f32 %v2468
  %vm3336 = vweird.f32 %v3330
  %vm3337 = vmor %vm3335, %vm3336
  %v3338 = vsel %vm3337, %v3330, %v3334
  %v3339 = vand.u32 2147483647, %v2468
  %vm3340 = vcmp.eq.f32.partialorder %v3339, 8.507059e+37
  %v3341 = vand.u32 %v2468, 2147483648
  %v3342 = vor.u32 1.1754944e-38, %v3341
  %v3343 = vsel %vm3340, %v3342, %v3338
  %v3344 = vmul.f32 1.0, %v3343
  %v3345 = vrcp.pop %v2469
  %v3346 = vmul.f32 %v2469, %v3345
  %v3347 = vsub.f32 1.0, %v3346
  %v3348 = vmul.f32 %v3345, %v3347
  %v3349 = vadd.f32 %v3345, %v3348
  %vm3350 = vweird.f32 %v2469
  %vm3351 = vweird.f32 %v3345
  %vm3352 = vmor %vm3350, %vm3351
  %v3353 = vsel %vm3352, %v3345, %v3349
  %v3354 = vand.u32 2147483647, %v2469
  %vm3355 = vcmp.eq.f32.partialorder %v3354, 8.507059e+37
  %v3356 = vand.u32 %v2469, 2147483648
  %v3357 = vor.u32 1.1754944e-38, %v3356
  %v3358 = vsel %vm3355, %v3357, %v3353
  %v3359 = vmul.f32 1.0, %v3358
  %v3360 = vrcp.pop %v2470
  %v3361 = vmul.f32 %v2470, %v3360
  %v3362 = vsub.f32 1.0, %v3361
  %v3363 = vmul.f32 %v3360, %v3362
  %v3364 = vadd.f32 %v3360, %v3363
  %vm3365 = vweird.f32 %v2470
  %vm3366 = vweird.f32 %v3360
  %vm3367 = vmor %vm3365, %vm3366
  %v3368 = vsel %vm3367, %v3360, %v3364
  %v3369 = vand.u32 2147483647, %v2470
  %vm3370 = vcmp.eq.f32.partialorder %v3369, 8.507059e+37
  %v3371 = vand.u32 %v2470, 2147483648
  %v3372 = vor.u32 1.1754944e-38, %v3371
  %v3373 = vsel %vm3370, %v3372, %v3368
  %v3374 = vmul.f32 1.0, %v3373
  %v3375 = vrcp.pop %v2471
  %v3376 = vmul.f32 %v2471, %v3375
  %v3377 = vsub.f32 1.0, %v3376
  %v3378 = vmul.f32 %v3375, %v3377
  %v3379 = vadd.f32 %v3375, %v3378
  %vm3380 = vweird.f32 %v2471
  %vm3381 = vweird.f32 %v3375
  %vm3382 = vmor %vm3380, %vm3381
  %v3383 = vsel %vm3382, %v3375, %v3379
  %v3384 = vand.u32 2147483647, %v2471
  %vm3385 = vcmp.eq.f32.partialorder %v3384, 8.507059e+37
  %v3386 = vand.u32 %v2471, 2147483648
  %v3387 = vor.u32 1.1754944e-38, %v3386
  %v3388 = vsel %vm3385, %v3387, %v3383
  %v3389 = vmul.f32 1.0, %v3388
  %v3390 = vrcp.pop %v2472
  %v3391 = vmul.f32 %v2472, %v3390
  %v3392 = vsub.f32 1.0, %v3391
  %v3393 = vmul.f32 %v3390, %v3392
  %v3394 = vadd.f32 %v3390, %v3393
  %vm3395 = vweird.f32 %v2472
  %vm3396 = vweird.f32 %v3390
  %vm3397 = vmor %vm3395, %vm3396
  %v3398 = vsel %vm3397, %v3390, %v3394
  %v3399 = vand.u32 2147483647, %v2472
  %vm3400 = vcmp.eq.f32.partialorder %v3399, 8.507059e+37
  %v3401 = vand.u32 %v2472, 2147483648
  %v3402 = vor.u32 1.1754944e-38, %v3401
  %v3403 = vsel %vm3400, %v3402, %v3398
  %v3404 = vmul.f32 1.0, %v3403
  %v3405 = vrcp.pop %v2473
  %v3406 = vmul.f32 %v2473, %v3405
  %v3407 = vsub.f32 1.0, %v3406
  %v3408 = vmul.f32 %v3405, %v3407
  %v3409 = vadd.f32 %v3405, %v3408
  %vm3410 = vweird.f32 %v2473
  %vm3411 = vweird.f32 %v3405
  %vm3412 = vmor %vm3410, %vm3411
  %v3413 = vsel %vm3412, %v3405, %v3409
  %v3414 = vand.u32 2147483647, %v2473
  %vm3415 = vcmp.eq.f32.partialorder %v3414, 8.507059e+37
  %v3416 = vand.u32 %v2473, 2147483648
  %v3417 = vor.u32 1.1754944e-38, %v3416
  %v3418 = vsel %vm3415, %v3417, %v3413
  %v3419 = vmul.f32 1.0, %v3418
  %v3420 = vrcp.pop %v2474
  %v3421 = vmul.f32 %v2474, %v3420
  %v3422 = vsub.f32 1.0, %v3421
  %v3423 = vmul.f32 %v3420, %v3422
  %v3424 = vadd.f32 %v3420, %v3423
  %vm3425 = vweird.f32 %v2474
  %vm3426 = vweird.f32 %v3420
  %vm3427 = vmor %vm3425, %vm3426
  %v3428 = vsel %vm3427, %v3420, %v3424
  %v3429 = vand.u32 2147483647, %v2474
  %vm3430 = vcmp.eq.f32.partialorder %v3429, 8.507059e+37
  %v3431 = vand.u32 %v2474, 2147483648
  %v3432 = vor.u32 1.1754944e-38, %v3431
  %v3433 = vsel %vm3430, %v3432, %v3428
  %v3434 = vmul.f32 1.0, %v3433
  %v3435 = vmul.f32 %v2155, %v2489
  %v3436 = vmul.f32 %v2156, %v2504
  %v3437 = vmul.f32 %v2157, %v2519
  %v3438 = vmul.f32 %v2158, %v2534
  %v3439 = vmul.f32 %v2159, %v2549
  %v3440 = vmul.f32 %v2160, %v2564
  %v3441 = vmul.f32 %v2161, %v2579
  %v3442 = vmul.f32 %v2162, %v2594
  %v3443 = vmul.f32 %v2163, %v2609
  %v3444 = vmul.f32 %v2164, %v2624
  %v3445 = vmul.f32 %v2165, %v2639
  %v3446 = vmul.f32 %v2166, %v2654
  %v3447 = vmul.f32 %v2167, %v2669
  %v3448 = vmul.f32 %v2168, %v2684
  %v3449 = vmul.f32 %v2169, %v2699
  %v3450 = vmul.f32 %v2170, %v2714
  %v3451 = vmul.f32 %v2171, %v2729
  %v3452 = vmul.f32 %v2172, %v2744
  %v3453 = vmul.f32 %v2173, %v2759
  %v3454 = vmul.f32 %v2174, %v2774
  %v3455 = vmul.f32 %v2175, %v2789
  %v3456 = vmul.f32 %v2176, %v2804
  %v3457 = vmul.f32 %v2177, %v2819
  %v3458 = vmul.f32 %v2178, %v2834
  %v3459 = vmul.f32 %v2179, %v2849
  %v3460 = vmul.f32 %v2180, %v2864
  %v3461 = vmul.f32 %v2181, %v2879
  %v3462 = vmul.f32 %v2182, %v2894
  %v3463 = vmul.f32 %v2183, %v2909
  %v3464 = vmul.f32 %v2184, %v2924
  %v3465 = vmul.f32 %v2185, %v2939
  %v3466 = vmul.f32 %v2186, %v2954
  %v3467 = vmul.f32 %v2187, %v2969
  %v3468 = vmul.f32 %v2188, %v2984
  %v3469 = vmul.f32 %v2189, %v2999
  %v3470 = vmul.f32 %v2190, %v3014
  %v3471 = vmul.f32 %v2191, %v3029
  %v3472 = vmul.f32 %v2192, %v3044
  %v3473 = vmul.f32 %v2193, %v3059
  %v3474 = vmul.f32 %v2194, %v3074
  %v3475 = vmul.f32 %v2195, %v3089
  %v3476 = vmul.f32 %v2196, %v3104
  %v3477 = vmul.f32 %v2197, %v3119
  %v3478 = vmul.f32 %v2198, %v3134
  %v3479 = vmul.f32 %v2199, %v3149
  %v3480 = vmul.f32 %v2200, %v3164
  %v3481 = vmul.f32 %v2201, %v3179
  %v3482 = vmul.f32 %v2202, %v3194
  %v3483 = vmul.f32 %v2203, %v3209
  %v3484 = vmul.f32 %v2204, %v3224
  %v3485 = vmul.f32 %v2205, %v3239
  %v3486 = vmul.f32 %v2206, %v3254
  %v3487 = vmul.f32 %v2207, %v3269
  %v3488 = vmul.f32 %v2208, %v3284
  %v3489 = vmul.f32 %v2209, %v3299
  %v3490 = vmul.f32 %v2210, %v3314
  %v3491 = vmul.f32 %v2211, %v3329
  %v3492 = vmul.f32 %v2212, %v3344
  %v3493 = vmul.f32 %v2213, %v3359
  %v3494 = vmul.f32 %v2214, %v3374
  %v3495 = vmul.f32 %v2215, %v3389
  %v3496 = vmul.f32 %v2216, %v3404
  %v3497 = vmul.f32 %v2217, %v3419
  %v3498 = vmul.f32 %v2218, %v3434
  %v3499 = vpack.c.bf16 %v3435, %v3435
  %v3500 = vpack.c.bf16 %v3436, %v3436
  %v3501 = vpack.c.bf16 %v3437, %v3437
  %v3502 = vpack.c.bf16 %v3438, %v3438
  %v3503 = vpack.c.bf16 %v3439, %v3439
  %v3504 = vpack.c.bf16 %v3440, %v3440
  %v3505 = vpack.c.bf16 %v3441, %v3441
  %v3506 = vpack.c.bf16 %v3442, %v3442
  %v3507 = vpack.c.bf16 %v3443, %v3443
  %v3508 = vpack.c.bf16 %v3444, %v3444
  %v3509 = vpack.c.bf16 %v3445, %v3445
  %v3510 = vpack.c.bf16 %v3446, %v3446
  %v3511 = vpack.c.bf16 %v3447, %v3447
  %v3512 = vpack.c.bf16 %v3448, %v3448
  %v3513 = vpack.c.bf16 %v3449, %v3449
  %v3514 = vpack.c.bf16 %v3450, %v3450
  %v3515 = vpack.c.bf16 %v3451, %v3451
  %v3516 = vpack.c.bf16 %v3452, %v3452
  %v3517 = vpack.c.bf16 %v3453, %v3453
  %v3518 = vpack.c.bf16 %v3454, %v3454
  %v3519 = vpack.c.bf16 %v3455, %v3455
  %v3520 = vpack.c.bf16 %v3456, %v3456
  %v3521 = vpack.c.bf16 %v3457, %v3457
  %v3522 = vpack.c.bf16 %v3458, %v3458
  %v3523 = vpack.c.bf16 %v3459, %v3459
  %v3524 = vpack.c.bf16 %v3460, %v3460
  %v3525 = vpack.c.bf16 %v3461, %v3461
  %v3526 = vpack.c.bf16 %v3462, %v3462
  %v3527 = vpack.c.bf16 %v3463, %v3463
  %v3528 = vpack.c.bf16 %v3464, %v3464
  %v3529 = vpack.c.bf16 %v3465, %v3465
  %v3530 = vpack.c.bf16 %v3466, %v3466
  %v3531 = vpack.c.bf16 %v3467, %v3467
  %v3532 = vpack.c.bf16 %v3468, %v3468
  %v3533 = vpack.c.bf16 %v3469, %v3469
  %v3534 = vpack.c.bf16 %v3470, %v3470
  %v3535 = vpack.c.bf16 %v3471, %v3471
  %v3536 = vpack.c.bf16 %v3472, %v3472
  %v3537 = vpack.c.bf16 %v3473, %v3473
  %v3538 = vpack.c.bf16 %v3474, %v3474
  %v3539 = vpack.c.bf16 %v3475, %v3475
  %v3540 = vpack.c.bf16 %v3476, %v3476
  %v3541 = vpack.c.bf16 %v3477, %v3477
  %v3542 = vpack.c.bf16 %v3478, %v3478
  %v3543 = vpack.c.bf16 %v3479, %v3479
  %v3544 = vpack.c.bf16 %v3480, %v3480
  %v3545 = vpack.c.bf16 %v3481, %v3481
  %v3546 = vpack.c.bf16 %v3482, %v3482
  %v3547 = vpack.c.bf16 %v3483, %v3483
  %v3548 = vpack.c.bf16 %v3484, %v3484
  %v3549 = vpack.c.bf16 %v3485, %v3485
  %v3550 = vpack.c.bf16 %v3486, %v3486
  %v3551 = vpack.c.bf16 %v3487, %v3487
  %v3552 = vpack.c.bf16 %v3488, %v3488
  %v3553 = vpack.c.bf16 %v3489, %v3489
  %v3554 = vpack.c.bf16 %v3490, %v3490
  %v3555 = vpack.c.bf16 %v3491, %v3491
  %v3556 = vpack.c.bf16 %v3492, %v3492
  %v3557 = vpack.c.bf16 %v3493, %v3493
  %v3558 = vpack.c.bf16 %v3494, %v3494
  %v3559 = vpack.c.bf16 %v3495, %v3495
  %v3560 = vpack.c.bf16 %v3496, %v3496
  %v3561 = vpack.c.bf16 %v3497, %v3497
  %v3562 = vpack.c.bf16 %v3498, %v3498
  %vm3563 = vcmask 257024
  %3564 = vst.msk [vmem:[%s7] sm:$0xf] %vm3563, %v3499
  %3565 = vst.msk [vmem:[%s7 + $0x4] sm:$0xf] %vm3563, %v3500
  %3566 = vst.msk [vmem:[%s7 + $0x8] sm:$0xf] %vm3563, %v3501
  %3567 = vst.msk [vmem:[%s7 + $0xc] sm:$0xf] %vm3563, %v3502
  %3568 = vst.msk [vmem:[%s7 + $0x10] sm:$0xf] %vm3563, %v3503
  %3569 = vst.msk [vmem:[%s7 + $0x14] sm:$0xf] %vm3563, %v3504
  %3570 = vst.msk [vmem:[%s7 + $0x18] sm:$0xf] %vm3563, %v3505
  %3571 = vst.msk [vmem:[%s7 + $0x1c] sm:$0xf] %vm3563, %v3506
  %3572 = vst.msk [vmem:[%s7 + $0x20] sm:$0xf] %vm3563, %v3507
  %3573 = vst.msk [vmem:[%s7 + $0x24] sm:$0xf] %vm3563, %v3508
  %3574 = vst.msk [vmem:[%s7 + $0x28] sm:$0xf] %vm3563, %v3509
  %3575 = vst.msk [vmem:[%s7 + $0x2c] sm:$0xf] %vm3563, %v3510
  %3576 = vst.msk [vmem:[%s7 + $0x30] sm:$0xf] %vm3563, %v3511
  %3577 = vst.msk [vmem:[%s7 + $0x34] sm:$0xf] %vm3563, %v3512
  %3578 = vst.msk [vmem:[%s7 + $0x38] sm:$0xf] %vm3563, %v3513
  %3579 = vst.msk [vmem:[%s7 + $0x3c] sm:$0xf] %vm3563, %v3514
  %3580 = vst.msk [vmem:[%s7 + $0x40] sm:$0xf] %vm3563, %v3515
  %3581 = vst.msk [vmem:[%s7 + $0x44] sm:$0xf] %vm3563, %v3516
  %3582 = vst.msk [vmem:[%s7 + $0x48] sm:$0xf] %vm3563, %v3517
  %3583 = vst.msk [vmem:[%s7 + $0x4c] sm:$0xf] %vm3563, %v3518
  %3584 = vst.msk [vmem:[%s7 + $0x50] sm:$0xf] %vm3563, %v3519
  %3585 = vst.msk [vmem:[%s7 + $0x54] sm:$0xf] %vm3563, %v3520
  %3586 = vst.msk [vmem:[%s7 + $0x58] sm:$0xf] %vm3563, %v3521
  %3587 = vst.msk [vmem:[%s7 + $0x5c] sm:$0xf] %vm3563, %v3522
  %3588 = vst.msk [vmem:[%s7 + $0x60] sm:$0xf] %vm3563, %v3523
  %3589 = vst.msk [vmem:[%s7 + $0x64] sm:$0xf] %vm3563, %v3524
  %3590 = vst.msk [vmem:[%s7 + $0x68] sm:$0xf] %vm3563, %v3525
  %3591 = vst.msk [vmem:[%s7 + $0x6c] sm:$0xf] %vm3563, %v3526
  %3592 = vst.msk [vmem:[%s7 + $0x70] sm:$0xf] %vm3563, %v3527
  %3593 = vst.msk [vmem:[%s7 + $0x74] sm:$0xf] %vm3563, %v3528
  %3594 = vst.msk [vmem:[%s7 + $0x78] sm:$0xf] %vm3563, %v3529
  %3595 = vst.msk [vmem:[%s7 + $0x7c] sm:$0xf] %vm3563, %v3530
  %3596 = vst.msk [vmem:[%s7 + $0x80] sm:$0xf] %vm3563, %v3531
  %3597 = vst.msk [vmem:[%s7 + $0x84] sm:$0xf] %vm3563, %v3532
  %3598 = vst.msk [vmem:[%s7 + $0x88] sm:$0xf] %vm3563, %v3533
  %3599 = vst.msk [vmem:[%s7 + $0x8c] sm:$0xf] %vm3563, %v3534
  %3600 = vst.msk [vmem:[%s7 + $0x90] sm:$0xf] %vm3563, %v3535
  %3601 = vst.msk [vmem:[%s7 + $0x94] sm:$0xf] %vm3563, %v3536
  %3602 = vst.msk [vmem:[%s7 + $0x98] sm:$0xf] %vm3563, %v3537
  %3603 = vst.msk [vmem:[%s7 + $0x9c] sm:$0xf] %vm3563, %v3538
  %3604 = vst.msk [vmem:[%s7 + $0xa0] sm:$0xf] %vm3563, %v3539
  %3605 = vst.msk [vmem:[%s7 + $0xa4] sm:$0xf] %vm3563, %v3540
  %3606 = vst.msk [vmem:[%s7 + $0xa8] sm:$0xf] %vm3563, %v3541
  %3607 = vst.msk [vmem:[%s7 + $0xac] sm:$0xf] %vm3563, %v3542
  %3608 = vst.msk [vmem:[%s7 + $0xb0] sm:$0xf] %vm3563, %v3543
  %3609 = vst.msk [vmem:[%s7 + $0xb4] sm:$0xf] %vm3563, %v3544
  %3610 = vst.msk [vmem:[%s7 + $0xb8] sm:$0xf] %vm3563, %v3545
  %3611 = vst.msk [vmem:[%s7 + $0xbc] sm:$0xf] %vm3563, %v3546
  %3612 = vst.msk [vmem:[%s7 + $0xc0] sm:$0xf] %vm3563, %v3547
  %3613 = vst.msk [vmem:[%s7 + $0xc4] sm:$0xf] %vm3563, %v3548
  %3614 = vst.msk [vmem:[%s7 + $0xc8] sm:$0xf] %vm3563, %v3549
  %3615 = vst.msk [vmem:[%s7 + $0xcc] sm:$0xf] %vm3563, %v3550
  %3616 = vst.msk [vmem:[%s7 + $0xd0] sm:$0xf] %vm3563, %v3551
  %3617 = vst.msk [vmem:[%s7 + $0xd4] sm:$0xf] %vm3563, %v3552
  %3618 = vst.msk [vmem:[%s7 + $0xd8] sm:$0xf] %vm3563, %v3553
  %3619 = vst.msk [vmem:[%s7 + $0xdc] sm:$0xf] %vm3563, %v3554
  %3620 = vst.msk [vmem:[%s7 + $0xe0] sm:$0xf] %vm3563, %v3555
  %3621 = vst.msk [vmem:[%s7 + $0xe4] sm:$0xf] %vm3563, %v3556
  %3622 = vst.msk [vmem:[%s7 + $0xe8] sm:$0xf] %vm3563, %v3557
  %3623 = vst.msk [vmem:[%s7 + $0xec] sm:$0xf] %vm3563, %v3558
  %3624 = vst.msk [vmem:[%s7 + $0xf0] sm:$0xf] %vm3563, %v3559
  %3625 = vst.msk [vmem:[%s7 + $0xf4] sm:$0xf] %vm3563, %v3560
  %3626 = vst.msk [vmem:[%s7 + $0xf8] sm:$0xf] %vm3563, %v3561
  %3627 = vst.msk [vmem:[%s7 + $0xfc] sm:$0xf] %vm3563, %v3562
  // Predicated region
  $region30: #{resnet_forward.10} parent=0 // pred_check
    _
  $region31: #{resnet_forward.10} parent=0 // pred_check_branch
    %3629 = sbr.rel (0) target = $region33
  $region32: #{resnet_forward.10} parent=0 // pred_region
    _
  $region33: #{resnet_forward.10} parent=0 // pred_fallthru
    _
  // Predicated region
  $region34: #{resnet_forward.10} parent=0 // pred_check
    _
  $region35: #{resnet_forward.10} parent=0 // pred_check_branch
    %3631 = sbr.rel (0) target = $region37
  $region36: #{resnet_forward.10} parent=0 // pred_region
    _
  $region37: #{resnet_forward.10} parent=0 // pred_fallthru
    _

// kernel: resnet_forward.12
$region0: #{resnet_forward.12}
  #allocation0 [shape = 'u32[]', space=smem, size = 0x4, offset = 0x4, fixed_abs, tag = 'smem constant byte address 0x4 - core index']
  #allocation1 [shape = 'u32[72,128]{1,0:T(1,128)}', space=vmem, size = 0x9000, scoped, tag = 'internal scratch']
  %s0 = inlined_call_operand.vmem [shape: bf16[128,576], index: 0, kind: input, shape index: {}]
  %s1 = inlined_call_operand.vmem [shape: bf16[128,32], index: 1, kind: input, shape index: {}]
  %s2 = inlined_call_operand.vmem [shape: bf16[128,32], index: 2, kind: input, shape index: {}]
  %s3 = inlined_call_operand.vmem [shape: bf16[128,32], index: 3, kind: input, shape index: {}]
  %s4 = inlined_call_operand.vmem [shape: bf16[128,32], index: 4, kind: input, shape index: {}]
  %s5 = inlined_call_operand.vmem [shape: bf16[576,64], index: 5, kind: input, shape index: {}]
  %s6 = inlined_call_operand.vmem [shape: f32[1,64], index: 6, kind: input, shape index: {}]
  %s7 = inlined_call_operand.vmem [shape: bf16[32,64], index: 7, kind: input, shape index: {}]
  %s8 = inlined_call_operand.vmem [shape: f32[1,64], index: 8, kind: input, shape index: {}]
  %s9 = inlined_call_operand.vmem [shape: bf16[128,64], index: 9, kind: output, shape index: {}]
  %s10 = sld [smem:[#allocation0]]
  $region46: #{resnet_forward.12} parent=0
    _
  %s12 = ssub.s32 1, %s10
  %s13 = scalar_select 0, %s12, %s10
  // Predicated region
  $region2: #{resnet_forward.12} parent=0 // pred_check
    _
  $region3: #{resnet_forward.12} parent=0 // pred_check_branch
    %15 = sbr.rel (0) target = $region5
  $region4: #{resnet_forward.12} parent=0 // pred_region
    _
  $region5: #{resnet_forward.12} parent=0 // pred_fallthru
    _
  // Predicated region
  $region6: #{resnet_forward.12} parent=0 // pred_check
    _
  $region7: #{resnet_forward.12} parent=0 // pred_check_branch
    %17 = sbr.rel (0) target = $region9
  $region8: #{resnet_forward.12} parent=0 // pred_region
    _
  $region9: #{resnet_forward.12} parent=0 // pred_fallthru
    _
  // Predicated region
  $region10: #{resnet_forward.12} parent=0 // pred_check
    _
  $region11: #{resnet_forward.12} parent=0 // pred_check_branch
    %19 = sbr.rel (0) target = $region13
  $region12: #{resnet_forward.12} parent=0 // pred_region
    _
  $region13: #{resnet_forward.12} parent=0 // pred_fallthru
    _
  // Predicated region
  $region14: #{resnet_forward.12} parent=0 // pred_check
    _
  $region15: #{resnet_forward.12} parent=0 // pred_check_branch
    %21 = sbr.rel (0) target = $region17
  $region16: #{resnet_forward.12} parent=0 // pred_region
    _
  $region17: #{resnet_forward.12} parent=0 // pred_fallthru
    _
  // Predicated region
  $region18: #{resnet_forward.12} parent=0 // pred_check
    _
  $region19: #{resnet_forward.12} parent=0 // pred_check_branch
    %23 = sbr.rel (0) target = $region21
  $region20: #{resnet_forward.12} parent=0 // pred_region
    _
  $region21: #{resnet_forward.12} parent=0 // pred_fallthru
    _
  // Predicated region
  $region22: #{resnet_forward.12} parent=0 // pred_check
    _
  $region23: #{resnet_forward.12} parent=0 // pred_check_branch
    %25 = sbr.rel (0) target = $region25
  $region24: #{resnet_forward.12} parent=0 // pred_region
    _
  $region25: #{resnet_forward.12} parent=0 // pred_fallthru
    _
  // Predicated region
  $region26: #{resnet_forward.12} parent=0 // pred_check
    _
  $region27: #{resnet_forward.12} parent=0 // pred_check_branch
    %27 = sbr.rel (0) target = $region29
  $region28: #{resnet_forward.12} parent=0 // pred_region
    _
  $region29: #{resnet_forward.12} parent=0 // pred_fallthru
    _
  // Predicated region
  $region30: #{resnet_forward.12} parent=0 // pred_check
    _
  $region31: #{resnet_forward.12} parent=0 // pred_check_branch
    %29 = sbr.rel (0) target = $region33
  $region32: #{resnet_forward.12} parent=0 // pred_region
    _
  $region33: #{resnet_forward.12} parent=0 // pred_fallthru
    _
  // Predicated region
  $region34: #{resnet_forward.12} parent=0 // pred_check
    _
  $region35: #{resnet_forward.12} parent=0 // pred_check_branch
    %31 = sbr.rel (0) target = $region37
  $region36: #{resnet_forward.12} parent=0 // pred_region
    _
  $region37: #{resnet_forward.12} parent=0 // pred_fallthru
    _
  %v33 = vld [vmem:[%s0] sm:$0xff]
  %v34 = vld [vmem:[%s0 + $0x8] sm:$0xff]
  %v35 = vld [vmem:[%s0 + $0x10] sm:$0xf]
  %v36 = vld [vmem:[%s0 + $0x14] sm:$0xff]
  %v37 = vld [vmem:[%s0 + $0x1c] sm:$0xff]
  %v38 = vld [vmem:[%s0 + $0x24] sm:$0xf]
  %v39 = vld [vmem:[%s0 + $0x28] sm:$0xff]
  %v40 = vld [vmem:[%s0 + $0x30] sm:$0xff]
  %v41 = vld [vmem:[%s0 + $0x38] sm:$0xf]
  %v42 = vld [vmem:[%s0 + $0x3c] sm:$0xff]
  %v43 = vld [vmem:[%s0 + $0x44] sm:$0xff]
  %v44 = vld [vmem:[%s0 + $0x4c] sm:$0xf]
  %v45 = vld [vmem:[%s0 + $0x50] sm:$0xff]
  %v46 = vld [vmem:[%s0 + $0x58] sm:$0xff]
  %v47 = vld [vmem:[%s0 + $0x60] sm:$0xf]
  %v48 = vld [vmem:[%s0 + $0x64] sm:$0xff]
  %v49 = vld [vmem:[%s0 + $0x6c] sm:$0xff]
  %v50 = vld [vmem:[%s0 + $0x74] sm:$0xf]
  %v51 = vld [vmem:[%s0 + $0x78] sm:$0xff]
  %v52 = vld [vmem:[%s0 + $0x80] sm:$0xff]
  %v53 = vld [vmem:[%s0 + $0x88] sm:$0xf]
  %v54 = vld [vmem:[%s0 + $0x8c] sm:$0xff]
  %v55 = vld [vmem:[%s0 + $0x94] sm:$0xff]
  %v56 = vld [vmem:[%s0 + $0x9c] sm:$0xf]
  %v57 = vld [vmem:[%s0 + $0xa0] sm:$0xff]
  %v58 = vld [vmem:[%s0 + $0xa8] sm:$0xff]
  %v59 = vld [vmem:[%s0 + $0xb0] sm:$0xf]
  %v60 = vld [vmem:[%s0 + $0xb4] sm:$0xff]
  %v61 = vld [vmem:[%s0 + $0xbc] sm:$0xff]
  %v62 = vld [vmem:[%s0 + $0xc4] sm:$0xf]
  %v63 = vld [vmem:[%s0 + $0xc8] sm:$0xff]
  %v64 = vld [vmem:[%s0 + $0xd0] sm:$0xff]
  %v65 = vld [vmem:[%s0 + $0xd8] sm:$0xf]
  %v66 = vld [vmem:[%s0 + $0xdc] sm:$0xff]
  %v67 = vld [vmem:[%s0 + $0xe4] sm:$0xff]
  %v68 = vld [vmem:[%s0 + $0xec] sm:$0xf]
  %v69 = vld [vmem:[%s0 + $0xf0] sm:$0xff]
  %v70 = vld [vmem:[%s0 + $0xf8] sm:$0xff]
  %v71 = vld [vmem:[%s0 + $0x100] sm:$0xf]
  %v72 = vld [vmem:[%s0 + $0x104] sm:$0xff]
  %v73 = vld [vmem:[%s0 + $0x10c] sm:$0xff]
  %v74 = vld [vmem:[%s0 + $0x114] sm:$0xf]
  %v75 = vld [vmem:[%s0 + $0x118] sm:$0xff]
  %v76 = vld [vmem:[%s0 + $0x120] sm:$0xff]
  %v77 = vld [vmem:[%s0 + $0x128] sm:$0xf]
  %v78 = vld [vmem:[%s0 + $0x12c] sm:$0xff]
  %v79 = vld [vmem:[%s0 + $0x134] sm:$0xff]
  %v80 = vld [vmem:[%s0 + $0x13c] sm:$0xf]
  %v81 = vld [vmem:[%s5] sm:$0xf]
  %v82 = vld [vmem:[%s5 + $0x4] sm:$0xf]
  %v83 = vld [vmem:[%s5 + $0x8] sm:$0xf]
  %v84 = vld [vmem:[%s5 + $0xc] sm:$0xf]
  %v85 = vld [vmem:[%s5 + $0x10] sm:$0xf]
  %v86 = vld [vmem:[%s5 + $0x14] sm:$0xf]
  %v87 = vld [vmem:[%s5 + $0x18] sm:$0xf]
  %v88 = vld [vmem:[%s5 + $0x1c] sm:$0xf]
  %v89 = vld [vmem:[%s5 + $0x20] sm:$0xf]
  %v90 = vld [vmem:[%s5 + $0x24] sm:$0xf]
  %v91 = vld [vmem:[%s5 + $0x28] sm:$0xf]
  %v92 = vld [vmem:[%s5 + $0x2c] sm:$0xf]
  %v93 = vld [vmem:[%s5 + $0x30] sm:$0xf]
  %v94 = vld [vmem:[%s5 + $0x34] sm:$0xf]
  %v95 = vld [vmem:[%s5 + $0x38] sm:$0xf]
  %v96 = vld [vmem:[%s5 + $0x3c] sm:$0xf]
  %v97 = vld [vmem:[%s5 + $0x40] sm:$0xf]
  %v98 = vld [vmem:[%s5 + $0x44] sm:$0xf]
  %v99 = vld [vmem:[%s5 + $0x48] sm:$0xf]
  %v100 = vld [vmem:[%s5 + $0x4c] sm:$0xf]
  %v101 = vld [vmem:[%s5 + $0x50] sm:$0xf]
  %v102 = vld [vmem:[%s5 + $0x54] sm:$0xf]
  %v103 = vld [vmem:[%s5 + $0x58] sm:$0xf]
  %v104 = vld [vmem:[%s5 + $0x5c] sm:$0xf]
  %v105 = vld [vmem:[%s5 + $0x60] sm:$0xf]
  %v106 = vld [vmem:[%s5 + $0x64] sm:$0xf]
  %v107 = vld [vmem:[%s5 + $0x68] sm:$0xf]
  %v108 = vld [vmem:[%s5 + $0x6c] sm:$0xf]
  %v109 = vld [vmem:[%s5 + $0x70] sm:$0xf]
  %v110 = vld [vmem:[%s5 + $0x74] sm:$0xf]
  %v111 = vld [vmem:[%s5 + $0x78] sm:$0xf]
  %v112 = vld [vmem:[%s5 + $0x7c] sm:$0xf]
  %v113 = vld [vmem:[%s5 + $0x80] sm:$0xf]
  %v114 = vld [vmem:[%s5 + $0x84] sm:$0xf]
  %v115 = vld [vmem:[%s5 + $0x88] sm:$0xf]
  %v116 = vld [vmem:[%s5 + $0x8c] sm:$0xf]
  %v117 = vld [vmem:[%s5 + $0x90] sm:$0xf]
  %v118 = vld [vmem:[%s5 + $0x94] sm:$0xf]
  %v119 = vld [vmem:[%s5 + $0x98] sm:$0xf]
  %v120 = vld [vmem:[%s5 + $0x9c] sm:$0xf]
  %v121 = vld [vmem:[%s5 + $0xa0] sm:$0xf]
  %v122 = vld [vmem:[%s5 + $0xa4] sm:$0xf]
  %v123 = vld [vmem:[%s5 + $0xa8] sm:$0xf]
  %v124 = vld [vmem:[%s5 + $0xac] sm:$0xf]
  %v125 = vld [vmem:[%s5 + $0xb0] sm:$0xf]
  %v126 = vld [vmem:[%s5 + $0xb4] sm:$0xf]
  %v127 = vld [vmem:[%s5 + $0xb8] sm:$0xf]
  %v128 = vld [vmem:[%s5 + $0xbc] sm:$0xf]
  %v129 = vld [vmem:[%s5 + $0xc0] sm:$0xf]
  %v130 = vld [vmem:[%s5 + $0xc4] sm:$0xf]
  %v131 = vld [vmem:[%s5 + $0xc8] sm:$0xf]
  %v132 = vld [vmem:[%s5 + $0xcc] sm:$0xf]
  %v133 = vld [vmem:[%s5 + $0xd0] sm:$0xf]
  %v134 = vld [vmem:[%s5 + $0xd4] sm:$0xf]
  %v135 = vld [vmem:[%s5 + $0xd8] sm:$0xf]
  %v136 = vld [vmem:[%s5 + $0xdc] sm:$0xf]
  %v137 = vld [vmem:[%s5 + $0xe0] sm:$0xf]
  %v138 = vld [vmem:[%s5 + $0xe4] sm:$0xf]
  %v139 = vld [vmem:[%s5 + $0xe8] sm:$0xf]
  %v140 = vld [vmem:[%s5 + $0xec] sm:$0xf]
  %v141 = vld [vmem:[%s5 + $0xf0] sm:$0xf]
  %v142 = vld [vmem:[%s5 + $0xf4] sm:$0xf]
  %v143 = vld [vmem:[%s5 + $0xf8] sm:$0xf]
  %v144 = vld [vmem:[%s5 + $0xfc] sm:$0xf]
  %v145 = vld [vmem:[%s5 + $0x100] sm:$0xf]
  %v146 = vld [vmem:[%s5 + $0x104] sm:$0xf]
  %v147 = vld [vmem:[%s5 + $0x108] sm:$0xf]
  %v148 = vld [vmem:[%s5 + $0x10c] sm:$0xf]
  %v149 = vld [vmem:[%s5 + $0x110] sm:$0xf]
  %v150 = vld [vmem:[%s5 + $0x114] sm:$0xf]
  %v151 = vld [vmem:[%s5 + $0x118] sm:$0xf]
  %v152 = vld [vmem:[%s5 + $0x11c] sm:$0xf]
  %v153 = vld [vmem:[%s6] sm:$0x1]
  %v155 = vperm.slane %v153, 0
  %v205 = vunpack.c.l.b16 %v33
  %v206 = vunpack.c.h.b16 %v33
  %v207 = vunpack.c.l.b16 %v34
  %v208 = vunpack.c.h.b16 %v34
  %v209 = vunpack.c.l.b16 %v35
  %v210 = vunpack.c.l.b16 %v36
  %v211 = vunpack.c.h.b16 %v36
  %v212 = vunpack.c.l.b16 %v37
  %v213 = vunpack.c.h.b16 %v37
  %v214 = vunpack.c.l.b16 %v38
  %v215 = vunpack.c.l.b16 %v39
  %v216 = vunpack.c.h.b16 %v39
  %v217 = vunpack.c.l.b16 %v40
  %v218 = vunpack.c.h.b16 %v40
  %v219 = vunpack.c.l.b16 %v41
  %v220 = vunpack.c.l.b16 %v42
  %v221 = vunpack.c.h.b16 %v42
  %v222 = vunpack.c.l.b16 %v43
  %v223 = vunpack.c.h.b16 %v43
  %v224 = vunpack.c.l.b16 %v44
  %v225 = vunpack.c.l.b16 %v45
  %v226 = vunpack.c.h.b16 %v45
  %v227 = vunpack.c.l.b16 %v46
  %v228 = vunpack.c.h.b16 %v46
  %v229 = vunpack.c.l.b16 %v47
  %v230 = vunpack.c.l.b16 %v48
  %v231 = vunpack.c.h.b16 %v48
  %v232 = vunpack.c.l.b16 %v49
  %v233 = vunpack.c.h.b16 %v49
  %v234 = vunpack.c.l.b16 %v50
  %v235 = vunpack.c.l.b16 %v51
  %v236 = vunpack.c.h.b16 %v51
  %v237 = vunpack.c.l.b16 %v52
  %v238 = vunpack.c.h.b16 %v52
  %v239 = vunpack.c.l.b16 %v53
  %v240 = vunpack.c.l.b16 %v54
  %v241 = vunpack.c.h.b16 %v54
  %v242 = vunpack.c.l.b16 %v55
  %v243 = vunpack.c.h.b16 %v55
  %v244 = vunpack.c.l.b16 %v56
  %v245 = vunpack.c.l.b16 %v57
  %v246 = vunpack.c.h.b16 %v57
  %v247 = vunpack.c.l.b16 %v58
  %v248 = vunpack.c.h.b16 %v58
  %v249 = vunpack.c.l.b16 %v59
  %v250 = vunpack.c.l.b16 %v60
  %v251 = vunpack.c.h.b16 %v60
  %v252 = vunpack.c.l.b16 %v61
  %v253 = vunpack.c.h.b16 %v61
  %v254 = vunpack.c.l.b16 %v62
  %v255 = vunpack.c.l.b16 %v63
  %v256 = vunpack.c.h.b16 %v63
  %v257 = vunpack.c.l.b16 %v64
  %v258 = vunpack.c.h.b16 %v64
  %v259 = vunpack.c.l.b16 %v65
  %v260 = vunpack.c.l.b16 %v66
  %v261 = vunpack.c.h.b16 %v66
  %v262 = vunpack.c.l.b16 %v67
  %v263 = vunpack.c.h.b16 %v67
  %v264 = vunpack.c.l.b16 %v68
  %v265 = vunpack.c.l.b16 %v69
  %v266 = vunpack.c.h.b16 %v69
  %v267 = vunpack.c.l.b16 %v70
  %v268 = vunpack.c.h.b16 %v70
  %v269 = vunpack.c.l.b16 %v71
  %v270 = vunpack.c.l.b16 %v72
  %v271 = vunpack.c.h.b16 %v72
  %v272 = vunpack.c.l.b16 %v73
  %v273 = vunpack.c.h.b16 %v73
  %v274 = vunpack.c.l.b16 %v74
  %v275 = vunpack.c.l.b16 %v75
  %v276 = vunpack.c.h.b16 %v75
  %v277 = vunpack.c.l.b16 %v76
  %v278 = vunpack.c.h.b16 %v76
  %v279 = vunpack.c.l.b16 %v77
  %v280 = vunpack.c.l.b16 %v78
  %v281 = vunpack.c.h.b16 %v78
  %v282 = vunpack.c.l.b16 %v79
  %v283 = vunpack.c.h.b16 %v79
  %v284 = vunpack.c.l.b16 %v80
  %v285 = vpack.c.b16 %v210, %v205
  %v286 = vpack.c.b16 %v211, %v206
  %v287 = vpack.c.b16 %v212, %v207
  %v288 = vpack.c.b16 %v213, %v208
  %v289 = vpack.c.b16 %v214, %v209
  %v290 = vpack.c.b16 %v220, %v215
  %v291 = vpack.c.b16 %v221, %v216
  %v292 = vpack.c.b16 %v222, %v217
  %v293 = vpack.c.b16 %v223, %v218
  %v294 = vpack.c.b16 %v224, %v219
  %v295 = vpack.c.b16 %v230, %v225
  %v296 = vpack.c.b16 %v231, %v226
  %v297 = vpack.c.b16 %v232, %v227
  %v298 = vpack.c.b16 %v233, %v228
  %v299 = vpack.c.b16 %v234, %v229
  %v300 = vpack.c.b16 %v240, %v235
  %v301 = vpack.c.b16 %v241, %v236
  %v302 = vpack.c.b16 %v242, %v237
  %v303 = vpack.c.b16 %v243, %v238
  %v304 = vpack.c.b16 %v244, %v239
  %v305 = vpack.c.b16 %v250, %v245
  %v306 = vpack.c.b16 %v251, %v246
  %v307 = vpack.c.b16 %v252, %v247
  %v308 = vpack.c.b16 %v253, %v248
  %v309 = vpack.c.b16 %v254, %v249
  %v310 = vpack.c.b16 %v260, %v255
  %v311 = vpack.c.b16 %v261, %v256
  %v312 = vpack.c.b16 %v262, %v257
  %v313 = vpack.c.b16 %v263, %v258
  %v314 = vpack.c.b16 %v264, %v259
  %v315 = vpack.c.b16 %v270, %v265
  %v316 = vpack.c.b16 %v271, %v266
  %v317 = vpack.c.b16 %v272, %v267
  %v318 = vpack.c.b16 %v273, %v268
  %v319 = vpack.c.b16 %v274, %v269
  %v320 = vpack.c.b16 %v280, %v275
  %v321 = vpack.c.b16 %v281, %v276
  %v322 = vpack.c.b16 %v282, %v277
  %v323 = vpack.c.b16 %v283, %v278
  %v324 = vpack.c.b16 %v284, %v279
  %v429 = vunpack.c.l.b16 %v81
  %v430 = vunpack.c.l.b16 %v82
  %v431 = vunpack.c.l.b16 %v83
  %v432 = vunpack.c.l.b16 %v84
  %v433 = vunpack.c.l.b16 %v85
  %v434 = vunpack.c.l.b16 %v86
  %v435 = vunpack.c.l.b16 %v87
  %v436 = vunpack.c.l.b16 %v88
  %v437 = vunpack.c.l.b16 %v89
  %v438 = vunpack.c.l.b16 %v90
  %v439 = vunpack.c.l.b16 %v91
  %v440 = vunpack.c.l.b16 %v92
  %v441 = vunpack.c.l.b16 %v93
  %v442 = vunpack.c.l.b16 %v94
  %v443 = vunpack.c.l.b16 %v95
  %v444 = vunpack.c.l.b16 %v96
  %v445 = vunpack.c.l.b16 %v97
  %v446 = vunpack.c.l.b16 %v98
  %v447 = vunpack.c.l.b16 %v99
  %v448 = vunpack.c.l.b16 %v100
  %v449 = vunpack.c.l.b16 %v101
  %v450 = vunpack.c.l.b16 %v102
  %v451 = vunpack.c.l.b16 %v103
  %v452 = vunpack.c.l.b16 %v104
  %v453 = vunpack.c.l.b16 %v105
  %v454 = vunpack.c.l.b16 %v106
  %v455 = vunpack.c.l.b16 %v107
  %v456 = vunpack.c.l.b16 %v108
  %v457 = vunpack.c.l.b16 %v109
  %v458 = vunpack.c.l.b16 %v110
  %v459 = vunpack.c.l.b16 %v111
  %v460 = vunpack.c.l.b16 %v112
  %v461 = vunpack.c.l.b16 %v113
  %v462 = vunpack.c.l.b16 %v114
  %v463 = vunpack.c.l.b16 %v115
  %v464 = vunpack.c.l.b16 %v116
  %v465 = vunpack.c.l.b16 %v117
  %v466 = vunpack.c.l.b16 %v118
  %v467 = vunpack.c.l.b16 %v119
  %v468 = vunpack.c.l.b16 %v120
  %v469 = vunpack.c.l.b16 %v121
  %v470 = vunpack.c.l.b16 %v122
  %v471 = vunpack.c.l.b16 %v123
  %v472 = vunpack.c.l.b16 %v124
  %v473 = vunpack.c.l.b16 %v125
  %v474 = vunpack.c.l.b16 %v126
  %v475 = vunpack.c.l.b16 %v127
  %v476 = vunpack.c.l.b16 %v128
  %v477 = vunpack.c.l.b16 %v129
  %v478 = vunpack.c.l.b16 %v130
  %v479 = vunpack.c.l.b16 %v131
  %v480 = vunpack.c.l.b16 %v132
  %v481 = vunpack.c.l.b16 %v133
  %v482 = vunpack.c.l.b16 %v134
  %v483 = vunpack.c.l.b16 %v135
  %v484 = vunpack.c.l.b16 %v136
  %v485 = vunpack.c.l.b16 %v137
  %v486 = vunpack.c.l.b16 %v138
  %v487 = vunpack.c.l.b16 %v139
  %v488 = vunpack.c.l.b16 %v140
  %v489 = vunpack.c.l.b16 %v141
  %v490 = vunpack.c.l.b16 %v142
  %v491 = vunpack.c.l.b16 %v143
  %v492 = vunpack.c.l.b16 %v144
  %v493 = vunpack.c.l.b16 %v145
  %v494 = vunpack.c.l.b16 %v146
  %v495 = vunpack.c.l.b16 %v147
  %v496 = vunpack.c.l.b16 %v148
  %v497 = vunpack.c.l.b16 %v149
  %v498 = vunpack.c.l.b16 %v150
  %v499 = vunpack.c.l.b16 %v151
  %v500 = vunpack.c.l.b16 %v152
  %v501 = vpack.c.b16 %v430, %v429
  %v502 = vpack.c.b16 %v432, %v431
  %v503 = vpack.c.b16 %v434, %v433
  %v504 = vpack.c.b16 %v436, %v435
  %v505 = vpack.c.b16 %v438, %v437
  %v506 = vpack.c.b16 %v440, %v439
  %v507 = vpack.c.b16 %v442, %v441
  %v508 = vpack.c.b16 %v444, %v443
  %v509 = vpack.c.b16 %v446, %v445
  %v510 = vpack.c.b16 %v448, %v447
  %v511 = vpack.c.b16 %v450, %v449
  %v512 = vpack.c.b16 %v452, %v451
  %v513 = vpack.c.b16 %v454, %v453
  %v514 = vpack.c.b16 %v456, %v455
  %v515 = vpack.c.b16 %v458, %v457
  %v516 = vpack.c.b16 %v460, %v459
  %v517 = vpack.c.b16 %v462, %v461
  %v518 = vpack.c.b16 %v464, %v463
  %v519 = vpack.c.b16 %v466, %v465
  %v520 = vpack.c.b16 %v468, %v467
  %v521 = vpack.c.b16 %v470, %v469
  %v522 = vpack.c.b16 %v472, %v471
  %v523 = vpack.c.b16 %v474, %v473
  %v524 = vpack.c.b16 %v476, %v475
  %v525 = vpack.c.b16 %v478, %v477
  %v526 = vpack.c.b16 %v480, %v479
  %v527 = vpack.c.b16 %v482, %v481
  %v528 = vpack.c.b16 %v484, %v483
  %v529 = vpack.c.b16 %v486, %v485
  %v530 = vpack.c.b16 %v488, %v487
  %v531 = vpack.c.b16 %v490, %v489
  %v532 = vpack.c.b16 %v492, %v491
  %v533 = vpack.c.b16 %v494, %v493
  %v534 = vpack.c.b16 %v496, %v495
  %v535 = vpack.c.b16 %v498, %v497
  %v536 = vpack.c.b16 %v500, %v499
  %vm573 = vcmask 523264
  %v575 = vsel %vm573, %v289, 0
  %v578 = vsel %vm573, %v294, 0
  %v581 = vsel %vm573, %v299, 0
  %v584 = vsel %vm573, %v304, 0
  %v587 = vsel %vm573, %v309, 0
  %v590 = vsel %vm573, %v314, 0
  %v593 = vsel %vm573, %v319, 0
  %v596 = vsel %vm573, %v324, 0
  %598 = vmatpush.bf16.msra.mxu0 %v508
  %599 = vmatpush.bf16.msra.mxu0 %v507
  %600 = vmatpush.bf16.msra.mxu0 %v506
  %601 = vmatpush.bf16.msra.mxu0 %v505
  %602 = vmatpush.bf16.msra.mxu0 %v504
  %603 = vmatpush.bf16.msra.mxu0 %v503
  %604 = vmatpush.bf16.msra.mxu0 %v502
  %605 = vmatpush.bf16.msra.mxu0 %v501
  %606 = vmatmul.bf16.gmra.mxu0 %v285
  %v607 = vpop.f32.mrf.mxu0
  %v608 = vadd.f32 %v155, %v607
  %v609 = vpop.f32.mrf.mxu0
  %v610 = vadd.f32 %v155, %v609
  %611 = vmatmul.bf16.gmra.mxu0 %v290
  %v612 = vpop.f32.mrf.mxu0
  %v613 = vadd.f32 %v155, %v612
  %v614 = vpop.f32.mrf.mxu0
  %v615 = vadd.f32 %v155, %v614
  %616 = vmatmul.bf16.gmra.mxu0 %v295
  %v617 = vpop.f32.mrf.mxu0
  %v618 = vadd.f32 %v155, %v617
  %v619 = vpop.f32.mrf.mxu0
  %v620 = vadd.f32 %v155, %v619
  %621 = vmatmul.bf16.gmra.mxu0 %v300
  %v622 = vpop.f32.mrf.mxu0
  %v623 = vadd.f32 %v155, %v622
  %v624 = vpop.f32.mrf.mxu0
  %v625 = vadd.f32 %v155, %v624
  %626 = vmatmul.bf16.gmra.mxu0 %v305
  %v627 = vpop.f32.mrf.mxu0
  %v628 = vadd.f32 %v155, %v627
  %v629 = vpop.f32.mrf.mxu0
  %v630 = vadd.f32 %v155, %v629
  %631 = vmatmul.bf16.gmra.mxu0 %v310
  %v632 = vpop.f32.mrf.mxu0
  %v633 = vadd.f32 %v155, %v632
  %v634 = vpop.f32.mrf.mxu0
  %v635 = vadd.f32 %v155, %v634
  %636 = vmatmul.bf16.gmra.mxu0 %v315
  %v637 = vpop.f32.mrf.mxu0
  %v638 = vadd.f32 %v155, %v637
  %v639 = vpop.f32.mrf.mxu0
  %v640 = vadd.f32 %v155, %v639
  %641 = vmatmul.bf16.gmra.mxu0 %v320
  %v642 = vpop.f32.mrf.mxu0
  %v643 = vadd.f32 %v155, %v642
  %v644 = vpop.f32.mrf.mxu0
  %v645 = vadd.f32 %v155, %v644
  %646 = vdwg.mxu0
  %647 = vmatpush.bf16.msra.mxu0 %v516
  %648 = vmatpush.bf16.msra.mxu0 %v515
  %649 = vmatpush.bf16.msra.mxu0 %v514
  %650 = vmatpush.bf16.msra.mxu0 %v513
  %651 = vmatpush.bf16.msra.mxu0 %v512
  %652 = vmatpush.bf16.msra.mxu0 %v511
  %653 = vmatpush.bf16.msra.mxu0 %v510
  %654 = vmatpush.bf16.msra.mxu0 %v509
  %655 = vmatmul.bf16.gmra.mxu0 %v286
  %v656 = vpop.f32.mrf.mxu0
  %v657 = vadd.f32 %v608, %v656
  %v658 = vpop.f32.mrf.mxu0
  %v659 = vadd.f32 %v610, %v658
  %660 = vmatmul.bf16.gmra.mxu0 %v291
  %v661 = vpop.f32.mrf.mxu0
  %v662 = vadd.f32 %v613, %v661
  %v663 = vpop.f32.mrf.mxu0
  %v664 = vadd.f32 %v615, %v663
  %665 = vmatmul.bf16.gmra.mxu0 %v296
  %v666 = vpop.f32.mrf.mxu0
  %v667 = vadd.f32 %v618, %v666
  %v668 = vpop.f32.mrf.mxu0
  %v669 = vadd.f32 %v620, %v668
  %670 = vmatmul.bf16.gmra.mxu0 %v301
  %v671 = vpop.f32.mrf.mxu0
  %v672 = vadd.f32 %v623, %v671
  %v673 = vpop.f32.mrf.mxu0
  %v674 = vadd.f32 %v625, %v673
  %675 = vmatmul.bf16.gmra.mxu0 %v306
  %v676 = vpop.f32.mrf.mxu0
  %v677 = vadd.f32 %v628, %v676
  %v678 = vpop.f32.mrf.mxu0
  %v679 = vadd.f32 %v630, %v678
  %680 = vmatmul.bf16.gmra.mxu0 %v311
  %v681 = vpop.f32.mrf.mxu0
  %v682 = vadd.f32 %v633, %v681
  %v683 = vpop.f32.mrf.mxu0
  %v684 = vadd.f32 %v635, %v683
  %685 = vmatmul.bf16.gmra.mxu0 %v316
  %v686 = vpop.f32.mrf.mxu0
  %v687 = vadd.f32 %v638, %v686
  %v688 = vpop.f32.mrf.mxu0
  %v689 = vadd.f32 %v640, %v688
  %690 = vmatmul.bf16.gmra.mxu0 %v321
  %v691 = vpop.f32.mrf.mxu0
  %v692 = vadd.f32 %v643, %v691
  %v693 = vpop.f32.mrf.mxu0
  %v694 = vadd.f32 %v645, %v693
  %695 = vdwg.mxu0
  %696 = vmatpush.bf16.msra.mxu0 %v524
  %697 = vmatpush.bf16.msra.mxu0 %v523
  %698 = vmatpush.bf16.msra.mxu0 %v522
  %699 = vmatpush.bf16.msra.mxu0 %v521
  %700 = vmatpush.bf16.msra.mxu0 %v520
  %701 = vmatpush.bf16.msra.mxu0 %v519
  %702 = vmatpush.bf16.msra.mxu0 %v518
  %703 = vmatpush.bf16.msra.mxu0 %v517
  %704 = vmatmul.bf16.gmra.mxu0 %v287
  %v705 = vpop.f32.mrf.mxu0
  %v706 = vadd.f32 %v657, %v705
  %v707 = vpop.f32.mrf.mxu0
  %v708 = vadd.f32 %v659, %v707
  %709 = vmatmul.bf16.gmra.mxu0 %v292
  %v710 = vpop.f32.mrf.mxu0
  %v711 = vadd.f32 %v662, %v710
  %v712 = vpop.f32.mrf.mxu0
  %v713 = vadd.f32 %v664, %v712
  %714 = vmatmul.bf16.gmra.mxu0 %v297
  %v715 = vpop.f32.mrf.mxu0
  %v716 = vadd.f32 %v667, %v715
  %v717 = vpop.f32.mrf.mxu0
  %v718 = vadd.f32 %v669, %v717
  %719 = vmatmul.bf16.gmra.mxu0 %v302
  %v720 = vpop.f32.mrf.mxu0
  %v721 = vadd.f32 %v672, %v720
  %v722 = vpop.f32.mrf.mxu0
  %v723 = vadd.f32 %v674, %v722
  %724 = vmatmul.bf16.gmra.mxu0 %v307
  %v725 = vpop.f32.mrf.mxu0
  %v726 = vadd.f32 %v677, %v725
  %v727 = vpop.f32.mrf.mxu0
  %v728 = vadd.f32 %v679, %v727
  %729 = vmatmul.bf16.gmra.mxu0 %v312
  %v730 = vpop.f32.mrf.mxu0
  %v731 = vadd.f32 %v682, %v730
  %v732 = vpop.f32.mrf.mxu0
  %v733 = vadd.f32 %v684, %v732
  %734 = vmatmul.bf16.gmra.mxu0 %v317
  %v735 = vpop.f32.mrf.mxu0
  %v736 = vadd.f32 %v687, %v735
  %v737 = vpop.f32.mrf.mxu0
  %v738 = vadd.f32 %v689, %v737
  %739 = vmatmul.bf16.gmra.mxu0 %v322
  %v740 = vpop.f32.mrf.mxu0
  %v741 = vadd.f32 %v692, %v740
  %v742 = vpop.f32.mrf.mxu0
  %v743 = vadd.f32 %v694, %v742
  %744 = vdwg.mxu0
  %745 = vmatpush.bf16.msra.mxu0 %v532
  %746 = vmatpush.bf16.msra.mxu0 %v531
  %747 = vmatpush.bf16.msra.mxu0 %v530
  %748 = vmatpush.bf16.msra.mxu0 %v529
  %749 = vmatpush.bf16.msra.mxu0 %v528
  %750 = vmatpush.bf16.msra.mxu0 %v527
  %751 = vmatpush.bf16.msra.mxu0 %v526
  %752 = vmatpush.bf16.msra.mxu0 %v525
  %753 = vmatmul.bf16.gmra.mxu0 %v288
  %v754 = vpop.f32.mrf.mxu0
  %v755 = vadd.f32 %v706, %v754
  %v756 = vpop.f32.mrf.mxu0
  %v757 = vadd.f32 %v708, %v756
  %758 = vmatmul.bf16.gmra.mxu0 %v293
  %v759 = vpop.f32.mrf.mxu0
  %v760 = vadd.f32 %v711, %v759
  %v761 = vpop.f32.mrf.mxu0
  %v762 = vadd.f32 %v713, %v761
  %763 = vmatmul.bf16.gmra.mxu0 %v298
  %v764 = vpop.f32.mrf.mxu0
  %v765 = vadd.f32 %v716, %v764
  %v766 = vpop.f32.mrf.mxu0
  %v767 = vadd.f32 %v718, %v766
  %768 = vmatmul.bf16.gmra.mxu0 %v303
  %v769 = vpop.f32.mrf.mxu0
  %v770 = vadd.f32 %v721, %v769
  %v771 = vpop.f32.mrf.mxu0
  %v772 = vadd.f32 %v723, %v771
  %773 = vmatmul.bf16.gmra.mxu0 %v308
  %v774 = vpop.f32.mrf.mxu0
  %v775 = vadd.f32 %v726, %v774
  %v776 = vpop.f32.mrf.mxu0
  %v777 = vadd.f32 %v728, %v776
  %778 = vmatmul.bf16.gmra.mxu0 %v313
  %v779 = vpop.f32.mrf.mxu0
  %v780 = vadd.f32 %v731, %v779
  %v781 = vpop.f32.mrf.mxu0
  %v782 = vadd.f32 %v733, %v781
  %783 = vmatmul.bf16.gmra.mxu0 %v318
  %v784 = vpop.f32.mrf.mxu0
  %v785 = vadd.f32 %v736, %v784
  %v786 = vpop.f32.mrf.mxu0
  %v787 = vadd.f32 %v738, %v786
  %788 = vmatmul.bf16.gmra.mxu0 %v323
  %v789 = vpop.f32.mrf.mxu0
  %v790 = vadd.f32 %v741, %v789
  %v791 = vpop.f32.mrf.mxu0
  %v792 = vadd.f32 %v743, %v791
  %793 = vdwg.mxu0
  %794 = vmatpush.bf16.msra.mxu0 0
  %795 = vmatpush.bf16.msra.mxu0 0
  %796 = vmatpush.bf16.msra.mxu0 0
  %797 = vmatpush.bf16.msra.mxu0 0
  %798 = vmatpush.bf16.msra.mxu0 %v536
  %799 = vmatpush.bf16.msra.mxu0 %v535
  %800 = vmatpush.bf16.msra.mxu0 %v534
  %801 = vmatpush.bf16.msra.mxu0 %v533
  %802 = vmatmul.bf16.gmra.mxu0 %v575
  %v803 = vpop.f32.mrf.mxu0
  %v804 = vadd.f32 %v755, %v803
  %v805 = vpop.f32.mrf.mxu0
  %v806 = vadd.f32 %v757, %v805
  %807 = vmatmul.bf16.gmra.mxu0 %v578
  %v808 = vpop.f32.mrf.mxu0
  %v809 = vadd.f32 %v760, %v808
  %v810 = vpop.f32.mrf.mxu0
  %v811 = vadd.f32 %v762, %v810
  %812 = vmatmul.bf16.gmra.mxu0 %v581
  %v813 = vpop.f32.mrf.mxu0
  %v814 = vadd.f32 %v765, %v813
  %v815 = vpop.f32.mrf.mxu0
  %v816 = vadd.f32 %v767, %v815
  %817 = vmatmul.bf16.gmra.mxu0 %v584
  %v818 = vpop.f32.mrf.mxu0
  %v819 = vadd.f32 %v770, %v818
  %v820 = vpop.f32.mrf.mxu0
  %v821 = vadd.f32 %v772, %v820
  %822 = vmatmul.bf16.gmra.mxu0 %v587
  %v823 = vpop.f32.mrf.mxu0
  %v824 = vadd.f32 %v775, %v823
  %v825 = vpop.f32.mrf.mxu0
  %v826 = vadd.f32 %v777, %v825
  %827 = vmatmul.bf16.gmra.mxu0 %v590
  %v828 = vpop.f32.mrf.mxu0
  %v829 = vadd.f32 %v780, %v828
  %v830 = vpop.f32.mrf.mxu0
  %v831 = vadd.f32 %v782, %v830
  %832 = vmatmul.bf16.gmra.mxu0 %v593
  %v833 = vpop.f32.mrf.mxu0
  %v834 = vadd.f32 %v785, %v833
  %v835 = vpop.f32.mrf.mxu0
  %v836 = vadd.f32 %v787, %v835
  %837 = vmatmul.bf16.gmra.mxu0 %v596
  %v838 = vpop.f32.mrf.mxu0
  %v839 = vadd.f32 %v790, %v838
  %v840 = vpop.f32.mrf.mxu0
  %v841 = vadd.f32 %v792, %v840
  %842 = vdwg.mxu0
  %v843 = vld [vmem:[%s1] sm:$0xf]
  %v844 = vld [vmem:[%s1 + $0x4] sm:$0xf]
  %v845 = vld [vmem:[%s1 + $0x8] sm:$0xf]
  %v846 = vld [vmem:[%s1 + $0xc] sm:$0xf]
  %v847 = vld [vmem:[%s1 + $0x10] sm:$0xf]
  %v848 = vld [vmem:[%s1 + $0x14] sm:$0xf]
  %v849 = vld [vmem:[%s1 + $0x18] sm:$0xf]
  %v850 = vld [vmem:[%s1 + $0x1c] sm:$0xf]
  %v851 = vld [vmem:[%s1 + $0x20] sm:$0xf]
  %v852 = vld [vmem:[%s1 + $0x24] sm:$0xf]
  %v853 = vld [vmem:[%s1 + $0x28] sm:$0xf]
  %v854 = vld [vmem:[%s1 + $0x2c] sm:$0xf]
  %v855 = vld [vmem:[%s1 + $0x30] sm:$0xf]
  %v856 = vld [vmem:[%s1 + $0x34] sm:$0xf]
  %v857 = vld [vmem:[%s1 + $0x38] sm:$0xf]
  %v858 = vld [vmem:[%s1 + $0x3c] sm:$0xf]
  %v859 = vunpack.c.l.bf16 %v843
  %v860 = vunpack.c.l.bf16 %v844
  %v861 = vunpack.c.l.bf16 %v845
  %v862 = vunpack.c.l.bf16 %v846
  %v863 = vunpack.c.l.bf16 %v847
  %v864 = vunpack.c.l.bf16 %v848
  %v865 = vunpack.c.l.bf16 %v849
  %v866 = vunpack.c.l.bf16 %v850
  %v867 = vunpack.c.l.bf16 %v851
  %v868 = vunpack.c.l.bf16 %v852
  %v869 = vunpack.c.l.bf16 %v853
  %v870 = vunpack.c.l.bf16 %v854
  %v871 = vunpack.c.l.bf16 %v855
  %v872 = vunpack.c.l.bf16 %v856
  %v873 = vunpack.c.l.bf16 %v857
  %v874 = vunpack.c.l.bf16 %v858
  %v875 = vld [vmem:[%s2] sm:$0xf]
  %v876 = vld [vmem:[%s2 + $0x4] sm:$0xf]
  %v877 = vld [vmem:[%s2 + $0x8] sm:$0xf]
  %v878 = vld [vmem:[%s2 + $0xc] sm:$0xf]
  %v879 = vld [vmem:[%s2 + $0x10] sm:$0xf]
  %v880 = vld [vmem:[%s2 + $0x14] sm:$0xf]
  %v881 = vld [vmem:[%s2 + $0x18] sm:$0xf]
  %v882 = vld [vmem:[%s2 + $0x1c] sm:$0xf]
  %v883 = vld [vmem:[%s2 + $0x20] sm:$0xf]
  %v884 = vld [vmem:[%s2 + $0x24] sm:$0xf]
  %v885 = vld [vmem:[%s2 + $0x28] sm:$0xf]
  %v886 = vld [vmem:[%s2 + $0x2c] sm:$0xf]
  %v887 = vld [vmem:[%s2 + $0x30] sm:$0xf]
  %v888 = vld [vmem:[%s2 + $0x34] sm:$0xf]
  %v889 = vld [vmem:[%s2 + $0x38] sm:$0xf]
  %v890 = vld [vmem:[%s2 + $0x3c] sm:$0xf]
  %v891 = vunpack.c.l.bf16 %v875
  %v892 = vunpack.c.l.bf16 %v876
  %v893 = vunpack.c.l.bf16 %v877
  %v894 = vunpack.c.l.bf16 %v878
  %v895 = vunpack.c.l.bf16 %v879
  %v896 = vunpack.c.l.bf16 %v880
  %v897 = vunpack.c.l.bf16 %v881
  %v898 = vunpack.c.l.bf16 %v882
  %v899 = vunpack.c.l.bf16 %v883
  %v900 = vunpack.c.l.bf16 %v884
  %v901 = vunpack.c.l.bf16 %v885
  %v902 = vunpack.c.l.bf16 %v886
  %v903 = vunpack.c.l.bf16 %v887
  %v904 = vunpack.c.l.bf16 %v888
  %v905 = vunpack.c.l.bf16 %v889
  %v906 = vunpack.c.l.bf16 %v890
  %v907 = vadd.f32 %v859, %v891
  %v908 = vadd.f32 %v860, %v892
  %v909 = vadd.f32 %v861, %v893
  %v910 = vadd.f32 %v862, %v894
  %v911 = vadd.f32 %v863, %v895
  %v912 = vadd.f32 %v864, %v896
  %v913 = vadd.f32 %v865, %v897
  %v914 = vadd.f32 %v866, %v898
  %v915 = vadd.f32 %v867, %v899
  %v916 = vadd.f32 %v868, %v900
  %v917 = vadd.f32 %v869, %v901
  %v918 = vadd.f32 %v870, %v902
  %v919 = vadd.f32 %v871, %v903
  %v920 = vadd.f32 %v872, %v904
  %v921 = vadd.f32 %v873, %v905
  %v922 = vadd.f32 %v874, %v906
  %v923 = vld [vmem:[%s3] sm:$0xf]
  %v924 = vld [vmem:[%s3 + $0x4] sm:$0xf]
  %v925 = vld [vmem:[%s3 + $0x8] sm:$0xf]
  %v926 = vld [vmem:[%s3 + $0xc] sm:$0xf]
  %v927 = vld [vmem:[%s3 + $0x10] sm:$0xf]
  %v928 = vld [vmem:[%s3 + $0x14] sm:$0xf]
  %v929 = vld [vmem:[%s3 + $0x18] sm:$0xf]
  %v930 = vld [vmem:[%s3 + $0x1c] sm:$0xf]
  %v931 = vld [vmem:[%s3 + $0x20] sm:$0xf]
  %v932 = vld [vmem:[%s3 + $0x24] sm:$0xf]
  %v933 = vld [vmem:[%s3 + $0x28] sm:$0xf]
  %v934 = vld [vmem:[%s3 + $0x2c] sm:$0xf]
  %v935 = vld [vmem:[%s3 + $0x30] sm:$0xf]
  %v936 = vld [vmem:[%s3 + $0x34] sm:$0xf]
  %v937 = vld [vmem:[%s3 + $0x38] sm:$0xf]
  %v938 = vld [vmem:[%s3 + $0x3c] sm:$0xf]
  %v939 = vunpack.c.l.bf16 %v923
  %v940 = vunpack.c.l.bf16 %v924
  %v941 = vunpack.c.l.bf16 %v925
  %v942 = vunpack.c.l.bf16 %v926
  %v943 = vunpack.c.l.bf16 %v927
  %v944 = vunpack.c.l.bf16 %v928
  %v945 = vunpack.c.l.bf16 %v929
  %v946 = vunpack.c.l.bf16 %v930
  %v947 = vunpack.c.l.bf16 %v931
  %v948 = vunpack.c.l.bf16 %v932
  %v949 = vunpack.c.l.bf16 %v933
  %v950 = vunpack.c.l.bf16 %v934
  %v951 = vunpack.c.l.bf16 %v935
  %v952 = vunpack.c.l.bf16 %v936
  %v953 = vunpack.c.l.bf16 %v937
  %v954 = vunpack.c.l.bf16 %v938
  %v955 = vadd.f32 %v907, %v939
  %v956 = vadd.f32 %v908, %v940
  %v957 = vadd.f32 %v909, %v941
  %v958 = vadd.f32 %v910, %v942
  %v959 = vadd.f32 %v911, %v943
  %v960 = vadd.f32 %v912, %v944
  %v961 = vadd.f32 %v913, %v945
  %v962 = vadd.f32 %v914, %v946
  %v963 = vadd.f32 %v915, %v947
  %v964 = vadd.f32 %v916, %v948
  %v965 = vadd.f32 %v917, %v949
  %v966 = vadd.f32 %v918, %v950
  %v967 = vadd.f32 %v919, %v951
  %v968 = vadd.f32 %v920, %v952
  %v969 = vadd.f32 %v921, %v953
  %v970 = vadd.f32 %v922, %v954
  %v971 = vld [vmem:[%s4] sm:$0xf]
  %v972 = vld [vmem:[%s4 + $0x4] sm:$0xf]
  %v973 = vld [vmem:[%s4 + $0x8] sm:$0xf]
  %v974 = vld [vmem:[%s4 + $0xc] sm:$0xf]
  %v975 = vld [vmem:[%s4 + $0x10] sm:$0xf]
  %v976 = vld [vmem:[%s4 + $0x14] sm:$0xf]
  %v977 = vld [vmem:[%s4 + $0x18] sm:$0xf]
  %v978 = vld [vmem:[%s4 + $0x1c] sm:$0xf]
  %v979 = vld [vmem:[%s4 + $0x20] sm:$0xf]
  %v980 = vld [vmem:[%s4 + $0x24] sm:$0xf]
  %v981 = vld [vmem:[%s4 + $0x28] sm:$0xf]
  %v982 = vld [vmem:[%s4 + $0x2c] sm:$0xf]
  %v983 = vld [vmem:[%s4 + $0x30] sm:$0xf]
  %v984 = vld [vmem:[%s4 + $0x34] sm:$0xf]
  %v985 = vld [vmem:[%s4 + $0x38] sm:$0xf]
  %v986 = vld [vmem:[%s4 + $0x3c] sm:$0xf]
  %v987 = vunpack.c.l.bf16 %v971
  %v988 = vunpack.c.l.bf16 %v972
  %v989 = vunpack.c.l.bf16 %v973
  %v990 = vunpack.c.l.bf16 %v974
  %v991 = vunpack.c.l.bf16 %v975
  %v992 = vunpack.c.l.bf16 %v976
  %v993 = vunpack.c.l.bf16 %v977
  %v994 = vunpack.c.l.bf16 %v978
  %v995 = vunpack.c.l.bf16 %v979
  %v996 = vunpack.c.l.bf16 %v980
  %v997 = vunpack.c.l.bf16 %v981
  %v998 = vunpack.c.l.bf16 %v982
  %v999 = vunpack.c.l.bf16 %v983
  %v1000 = vunpack.c.l.bf16 %v984
  %v1001 = vunpack.c.l.bf16 %v985
  %v1002 = vunpack.c.l.bf16 %v986
  %v1003 = vadd.f32 %v955, %v987
  %v1004 = vadd.f32 %v956, %v988
  %v1005 = vadd.f32 %v957, %v989
  %v1006 = vadd.f32 %v958, %v990
  %v1007 = vadd.f32 %v959, %v991
  %v1008 = vadd.f32 %v960, %v992
  %v1009 = vadd.f32 %v961, %v993
  %v1010 = vadd.f32 %v962, %v994
  %v1011 = vadd.f32 %v963, %v995
  %v1012 = vadd.f32 %v964, %v996
  %v1013 = vadd.f32 %v965, %v997
  %v1014 = vadd.f32 %v966, %v998
  %v1015 = vadd.f32 %v967, %v999
  %v1016 = vadd.f32 %v968, %v1000
  %v1017 = vadd.f32 %v969, %v1001
  %v1018 = vadd.f32 %v970, %v1002
  %v1019 = vmul.f32 %v1003, 0.25
  %v1020 = vmul.f32 %v1004, 0.25
  %v1021 = vmul.f32 %v1005, 0.25
  %v1022 = vmul.f32 %v1006, 0.25
  %v1023 = vmul.f32 %v1007, 0.25
  %v1024 = vmul.f32 %v1008, 0.25
  %v1025 = vmul.f32 %v1009, 0.25
  %v1026 = vmul.f32 %v1010, 0.25
  %v1027 = vmul.f32 %v1011, 0.25
  %v1028 = vmul.f32 %v1012, 0.25
  %v1029 = vmul.f32 %v1013, 0.25
  %v1030 = vmul.f32 %v1014, 0.25
  %v1031 = vmul.f32 %v1015, 0.25
  %v1032 = vmul.f32 %v1016, 0.25
  %v1033 = vmul.f32 %v1017, 0.25
  %v1034 = vmul.f32 %v1018, 0.25
  %v1035 = vpack.c.bf16 %v1020, %v1019
  %v1036 = vpack.c.bf16 %v1022, %v1021
  %v1037 = vpack.c.bf16 %v1024, %v1023
  %v1038 = vpack.c.bf16 %v1026, %v1025
  %v1039 = vpack.c.bf16 %v1028, %v1027
  %v1040 = vpack.c.bf16 %v1030, %v1029
  %v1041 = vpack.c.bf16 %v1032, %v1031
  %v1042 = vpack.c.bf16 %v1034, %v1033
  %v1043 = vld [vmem:[%s7] sm:$0xf]
  %v1044 = vld [vmem:[%s7 + $0x4] sm:$0xf]
  %v1045 = vld [vmem:[%s7 + $0x8] sm:$0xf]
  %v1046 = vld [vmem:[%s7 + $0xc] sm:$0xf]
  %v1047 = vld [vmem:[%s8] sm:$0x1]
  %v1049 = vperm.slane %v1047, 0
  %v1055 = vunpack.c.l.b16 %v1043
  %v1056 = vunpack.c.l.b16 %v1044
  %v1057 = vunpack.c.l.b16 %v1045
  %v1058 = vunpack.c.l.b16 %v1046
  %v1059 = vpack.c.b16 %v1056, %v1055
  %v1060 = vpack.c.b16 %v1058, %v1057
  %vm1063 = vcmask 261120
  %v1065 = vsel %vm1063, %v1035, 0
  %v1068 = vsel %vm1063, %v1036, 0
  %v1071 = vsel %vm1063, %v1037, 0
  %v1074 = vsel %vm1063, %v1038, 0
  %v1077 = vsel %vm1063, %v1039, 0
  %v1080 = vsel %vm1063, %v1040, 0
  %v1083 = vsel %vm1063, %v1041, 0
  %v1086 = vsel %vm1063, %v1042, 0
  %1088 = vmatpush.bf16.msra.mxu0 0
  %1089 = vmatpush.bf16.msra.mxu0 0
  %1090 = vmatpush.bf16.msra.mxu0 0
  %1091 = vmatpush.bf16.msra.mxu0 0
  %1092 = vmatpush.bf16.msra.mxu0 0
  %1093 = vmatpush.bf16.msra.mxu0 0
  %1094 = vmatpush.bf16.msra.mxu0 %v1060
  %1095 = vmatpush.bf16.msra.mxu0 %v1059
  %1096 = vmatmul.bf16.gmra.mxu0 %v1065
  %v1097 = vpop.f32.mrf.mxu0
  %v1098 = vadd.f32 %v1049, %v1097
  %v1099 = vpop.f32.mrf.mxu0
  %v1100 = vadd.f32 %v1049, %v1099
  %1101 = vmatmul.bf16.gmra.mxu0 %v1068
  %v1102 = vpop.f32.mrf.mxu0
  %v1103 = vadd.f32 %v1049, %v1102
  %v1104 = vpop.f32.mrf.mxu0
  %v1105 = vadd.f32 %v1049, %v1104
  %1106 = vmatmul.bf16.gmra.mxu0 %v1071
  %v1107 = vpop.f32.mrf.mxu0
  %v1108 = vadd.f32 %v1049, %v1107
  %v1109 = vpop.f32.mrf.mxu0
  %v1110 = vadd.f32 %v1049, %v1109
  %1111 = vmatmul.bf16.gmra.mxu0 %v1074
  %v1112 = vpop.f32.mrf.mxu0
  %v1113 = vadd.f32 %v1049, %v1112
  %v1114 = vpop.f32.mrf.mxu0
  %v1115 = vadd.f32 %v1049, %v1114
  %1116 = vmatmul.bf16.gmra.mxu0 %v1077
  %v1117 = vpop.f32.mrf.mxu0
  %v1118 = vadd.f32 %v1049, %v1117
  %v1119 = vpop.f32.mrf.mxu0
  %v1120 = vadd.f32 %v1049, %v1119
  %1121 = vmatmul.bf16.gmra.mxu0 %v1080
  %v1122 = vpop.f32.mrf.mxu0
  %v1123 = vadd.f32 %v1049, %v1122
  %v1124 = vpop.f32.mrf.mxu0
  %v1125 = vadd.f32 %v1049, %v1124
  %1126 = vmatmul.bf16.gmra.mxu0 %v1083
  %v1127 = vpop.f32.mrf.mxu0
  %v1128 = vadd.f32 %v1049, %v1127
  %v1129 = vpop.f32.mrf.mxu0
  %v1130 = vadd.f32 %v1049, %v1129
  %1131 = vmatmul.bf16.gmra.mxu0 %v1086
  %v1132 = vpop.f32.mrf.mxu0
  %v1133 = vadd.f32 %v1049, %v1132
  %v1134 = vpop.f32.mrf.mxu0
  %v1135 = vadd.f32 %v1049, %v1134
  %1136 = vdwg.mxu0
  %v1137 = vadd.f32 %v804, %v1098
  %v1138 = vadd.f32 %v806, %v1100
  %v1139 = vadd.f32 %v809, %v1103
  %v1140 = vadd.f32 %v811, %v1105
  %v1141 = vadd.f32 %v814, %v1108
  %v1142 = vadd.f32 %v816, %v1110
  %v1143 = vadd.f32 %v819, %v1113
  %v1144 = vadd.f32 %v821, %v1115
  %v1145 = vadd.f32 %v824, %v1118
  %v1146 = vadd.f32 %v826, %v1120
  %v1147 = vadd.f32 %v829, %v1123
  %v1148 = vadd.f32 %v831, %v1125
  %v1149 = vadd.f32 %v834, %v1128
  %v1150 = vadd.f32 %v836, %v1130
  %v1151 = vadd.f32 %v839, %v1133
  %v1152 = vadd.f32 %v841, %v1135
  %v1153 = vxor.u32 %v1137, 2147483648
  %v1154 = vxor.u32 %v1138, 2147483648
  %v1155 = vxor.u32 %v1139, 2147483648
  %v1156 = vxor.u32 %v1140, 2147483648
  %v1157 = vxor.u32 %v1141, 2147483648
  %v1158 = vxor.u32 %v1142, 2147483648
  %v1159 = vxor.u32 %v1143, 2147483648
  %v1160 = vxor.u32 %v1144, 2147483648
  %v1161 = vxor.u32 %v1145, 2147483648
  %v1162 = vxor.u32 %v1146, 2147483648
  %v1163 = vxor.u32 %v1147, 2147483648
  %v1164 = vxor.u32 %v1148, 2147483648
  %v1165 = vxor.u32 %v1149, 2147483648
  %v1166 = vxor.u32 %v1150, 2147483648
  %v1167 = vxor.u32 %v1151, 2147483648
  %v1168 = vxor.u32 %v1152, 2147483648
  %v1169 = vmul.f32 %v1153, 1.442695
  %v1170 = vpow.pop %v1169
  %v1171 = vmul.f32 %v1154, 1.442695
  %v1172 = vpow.pop %v1171
  %v1173 = vmul.f32 %v1155, 1.442695
  %v1174 = vpow.pop %v1173
  %v1175 = vmul.f32 %v1156, 1.442695
  %v1176 = vpow.pop %v1175
  %v1177 = vmul.f32 %v1157, 1.442695
  %v1178 = vpow.pop %v1177
  %v1179 = vmul.f32 %v1158, 1.442695
  %v1180 = vpow.pop %v1179
  %v1181 = vmul.f32 %v1159, 1.442695
  %v1182 = vpow.pop %v1181
  %v1183 = vmul.f32 %v1160, 1.442695
  %v1184 = vpow.pop %v1183
  %v1185 = vmul.f32 %v1161, 1.442695
  %v1186 = vpow.pop %v1185
  %v1187 = vmul.f32 %v1162, 1.442695
  %v1188 = vpow.pop %v1187
  %v1189 = vmul.f32 %v1163, 1.442695
  %v1190 = vpow.pop %v1189
  %v1191 = vmul.f32 %v1164, 1.442695
  %v1192 = vpow.pop %v1191
  %v1193 = vmul.f32 %v1165, 1.442695
  %v1194 = vpow.pop %v1193
  %v1195 = vmul.f32 %v1166, 1.442695
  %v1196 = vpow.pop %v1195
  %v1197 = vmul.f32 %v1167, 1.442695
  %v1198 = vpow.pop %v1197
  %v1199 = vmul.f32 %v1168, 1.442695
  %v1200 = vpow.pop %v1199
  %v1201 = vadd.f32 %v1170, 1.0
  %v1202 = vadd.f32 %v1172, 1.0
  %v1203 = vadd.f32 %v1174, 1.0
  %v1204 = vadd.f32 %v1176, 1.0
  %v1205 = vadd.f32 %v1178, 1.0
  %v1206 = vadd.f32 %v1180, 1.0
  %v1207 = vadd.f32 %v1182, 1.0
  %v1208 = vadd.f32 %v1184, 1.0
  %v1209 = vadd.f32 %v1186, 1.0
  %v1210 = vadd.f32 %v1188, 1.0
  %v1211 = vadd.f32 %v1190, 1.0
  %v1212 = vadd.f32 %v1192, 1.0
  %v1213 = vadd.f32 %v1194, 1.0
  %v1214 = vadd.f32 %v1196, 1.0
  %v1215 = vadd.f32 %v1198, 1.0
  %v1216 = vadd.f32 %v1200, 1.0
  %v1217 = vrcp.pop %v1201
  %v1218 = vmul.f32 %v1201, %v1217
  %v1219 = vsub.f32 1.0, %v1218
  %v1220 = vmul.f32 %v1217, %v1219
  %v1221 = vadd.f32 %v1217, %v1220
  %vm1222 = vweird.f32 %v1201
  %vm1223 = vweird.f32 %v1217
  %vm1224 = vmor %vm1222, %vm1223
  %v1225 = vsel %vm1224, %v1217, %v1221
  %v1226 = vand.u32 2147483647, %v1201
  %vm1227 = vcmp.eq.f32.partialorder %v1226, 8.507059e+37
  %v1228 = vand.u32 %v1201, 2147483648
  %v1229 = vor.u32 1.1754944e-38, %v1228
  %v1230 = vsel %vm1227, %v1229, %v1225
  %v1231 = vmul.f32 1.0, %v1230
  %v1232 = vrcp.pop %v1202
  %v1233 = vmul.f32 %v1202, %v1232
  %v1234 = vsub.f32 1.0, %v1233
  %v1235 = vmul.f32 %v1232, %v1234
  %v1236 = vadd.f32 %v1232, %v1235
  %vm1237 = vweird.f32 %v1202
  %vm1238 = vweird.f32 %v1232
  %vm1239 = vmor %vm1237, %vm1238
  %v1240 = vsel %vm1239, %v1232, %v1236
  %v1241 = vand.u32 2147483647, %v1202
  %vm1242 = vcmp.eq.f32.partialorder %v1241, 8.507059e+37
  %v1243 = vand.u32 %v1202, 2147483648
  %v1244 = vor.u32 1.1754944e-38, %v1243
  %v1245 = vsel %vm1242, %v1244, %v1240
  %v1246 = vmul.f32 1.0, %v1245
  %v1247 = vrcp.pop %v1203
  %v1248 = vmul.f32 %v1203, %v1247
  %v1249 = vsub.f32 1.0, %v1248
  %v1250 = vmul.f32 %v1247, %v1249
  %v1251 = vadd.f32 %v1247, %v1250
  %vm1252 = vweird.f32 %v1203
  %vm1253 = vweird.f32 %v1247
  %vm1254 = vmor %vm1252, %vm1253
  %v1255 = vsel %vm1254, %v1247, %v1251
  %v1256 = vand.u32 2147483647, %v1203
  %vm1257 = vcmp.eq.f32.partialorder %v1256, 8.507059e+37
  %v1258 = vand.u32 %v1203, 2147483648
  %v1259 = vor.u32 1.1754944e-38, %v1258
  %v1260 = vsel %vm1257, %v1259, %v1255
  %v1261 = vmul.f32 1.0, %v1260
  %v1262 = vrcp.pop %v1204
  %v1263 = vmul.f32 %v1204, %v1262
  %v1264 = vsub.f32 1.0, %v1263
  %v1265 = vmul.f32 %v1262, %v1264
  %v1266 = vadd.f32 %v1262, %v1265
  %vm1267 = vweird.f32 %v1204
  %vm1268 = vweird.f32 %v1262
  %vm1269 = vmor %vm1267, %vm1268
  %v1270 = vsel %vm1269, %v1262, %v1266
  %v1271 = vand.u32 2147483647, %v1204
  %vm1272 = vcmp.eq.f32.partialorder %v1271, 8.507059e+37
  %v1273 = vand.u32 %v1204, 2147483648
  %v1274 = vor.u32 1.1754944e-38, %v1273
  %v1275 = vsel %vm1272, %v1274, %v1270
  %v1276 = vmul.f32 1.0, %v1275
  %v1277 = vrcp.pop %v1205
  %v1278 = vmul.f32 %v1205, %v1277
  %v1279 = vsub.f32 1.0, %v1278
  %v1280 = vmul.f32 %v1277, %v1279
  %v1281 = vadd.f32 %v1277, %v1280
  %vm1282 = vweird.f32 %v1205
  %vm1283 = vweird.f32 %v1277
  %vm1284 = vmor %vm1282, %vm1283
  %v1285 = vsel %vm1284, %v1277, %v1281
  %v1286 = vand.u32 2147483647, %v1205
  %vm1287 = vcmp.eq.f32.partialorder %v1286, 8.507059e+37
  %v1288 = vand.u32 %v1205, 2147483648
  %v1289 = vor.u32 1.1754944e-38, %v1288
  %v1290 = vsel %vm1287, %v1289, %v1285
  %v1291 = vmul.f32 1.0, %v1290
  %v1292 = vrcp.pop %v1206
  %v1293 = vmul.f32 %v1206, %v1292
  %v1294 = vsub.f32 1.0, %v1293
  %v1295 = vmul.f32 %v1292, %v1294
  %v1296 = vadd.f32 %v1292, %v1295
  %vm1297 = vweird.f32 %v1206
  %vm1298 = vweird.f32 %v1292
  %vm1299 = vmor %vm1297, %vm1298
  %v1300 = vsel %vm1299, %v1292, %v1296
  %v1301 = vand.u32 2147483647, %v1206
  %vm1302 = vcmp.eq.f32.partialorder %v1301, 8.507059e+37
  %v1303 = vand.u32 %v1206, 2147483648
  %v1304 = vor.u32 1.1754944e-38, %v1303
  %v1305 = vsel %vm1302, %v1304, %v1300
  %v1306 = vmul.f32 1.0, %v1305
  %v1307 = vrcp.pop %v1207
  %v1308 = vmul.f32 %v1207, %v1307
  %v1309 = vsub.f32 1.0, %v1308
  %v1310 = vmul.f32 %v1307, %v1309
  %v1311 = vadd.f32 %v1307, %v1310
  %vm1312 = vweird.f32 %v1207
  %vm1313 = vweird.f32 %v1307
  %vm1314 = vmor %vm1312, %vm1313
  %v1315 = vsel %vm1314, %v1307, %v1311
  %v1316 = vand.u32 2147483647, %v1207
  %vm1317 = vcmp.eq.f32.partialorder %v1316, 8.507059e+37
  %v1318 = vand.u32 %v1207, 2147483648
  %v1319 = vor.u32 1.1754944e-38, %v1318
  %v1320 = vsel %vm1317, %v1319, %v1315
  %v1321 = vmul.f32 1.0, %v1320
  %v1322 = vrcp.pop %v1208
  %v1323 = vmul.f32 %v1208, %v1322
  %v1324 = vsub.f32 1.0, %v1323
  %v1325 = vmul.f32 %v1322, %v1324
  %v1326 = vadd.f32 %v1322, %v1325
  %vm1327 = vweird.f32 %v1208
  %vm1328 = vweird.f32 %v1322
  %vm1329 = vmor %vm1327, %vm1328
  %v1330 = vsel %vm1329, %v1322, %v1326
  %v1331 = vand.u32 2147483647, %v1208
  %vm1332 = vcmp.eq.f32.partialorder %v1331, 8.507059e+37
  %v1333 = vand.u32 %v1208, 2147483648
  %v1334 = vor.u32 1.1754944e-38, %v1333
  %v1335 = vsel %vm1332, %v1334, %v1330
  %v1336 = vmul.f32 1.0, %v1335
  %v1337 = vrcp.pop %v1209
  %v1338 = vmul.f32 %v1209, %v1337
  %v1339 = vsub.f32 1.0, %v1338
  %v1340 = vmul.f32 %v1337, %v1339
  %v1341 = vadd.f32 %v1337, %v1340
  %vm1342 = vweird.f32 %v1209
  %vm1343 = vweird.f32 %v1337
  %vm1344 = vmor %vm1342, %vm1343
  %v1345 = vsel %vm1344, %v1337, %v1341
  %v1346 = vand.u32 2147483647, %v1209
  %vm1347 = vcmp.eq.f32.partialorder %v1346, 8.507059e+37
  %v1348 = vand.u32 %v1209, 2147483648
  %v1349 = vor.u32 1.1754944e-38, %v1348
  %v1350 = vsel %vm1347, %v1349, %v1345
  %v1351 = vmul.f32 1.0, %v1350
  %v1352 = vrcp.pop %v1210
  %v1353 = vmul.f32 %v1210, %v1352
  %v1354 = vsub.f32 1.0, %v1353
  %v1355 = vmul.f32 %v1352, %v1354
  %v1356 = vadd.f32 %v1352, %v1355
  %vm1357 = vweird.f32 %v1210
  %vm1358 = vweird.f32 %v1352
  %vm1359 = vmor %vm1357, %vm1358
  %v1360 = vsel %vm1359, %v1352, %v1356
  %v1361 = vand.u32 2147483647, %v1210
  %vm1362 = vcmp.eq.f32.partialorder %v1361, 8.507059e+37
  %v1363 = vand.u32 %v1210, 2147483648
  %v1364 = vor.u32 1.1754944e-38, %v1363
  %v1365 = vsel %vm1362, %v1364, %v1360
  %v1366 = vmul.f32 1.0, %v1365
  %v1367 = vrcp.pop %v1211
  %v1368 = vmul.f32 %v1211, %v1367
  %v1369 = vsub.f32 1.0, %v1368
  %v1370 = vmul.f32 %v1367, %v1369
  %v1371 = vadd.f32 %v1367, %v1370
  %vm1372 = vweird.f32 %v1211
  %vm1373 = vweird.f32 %v1367
  %vm1374 = vmor %vm1372, %vm1373
  %v1375 = vsel %vm1374, %v1367, %v1371
  %v1376 = vand.u32 2147483647, %v1211
  %vm1377 = vcmp.eq.f32.partialorder %v1376, 8.507059e+37
  %v1378 = vand.u32 %v1211, 2147483648
  %v1379 = vor.u32 1.1754944e-38, %v1378
  %v1380 = vsel %vm1377, %v1379, %v1375
  %v1381 = vmul.f32 1.0, %v1380
  %v1382 = vrcp.pop %v1212
  %v1383 = vmul.f32 %v1212, %v1382
  %v1384 = vsub.f32 1.0, %v1383
  %v1385 = vmul.f32 %v1382, %v1384
  %v1386 = vadd.f32 %v1382, %v1385
  %vm1387 = vweird.f32 %v1212
  %vm1388 = vweird.f32 %v1382
  %vm1389 = vmor %vm1387, %vm1388
  %v1390 = vsel %vm1389, %v1382, %v1386
  %v1391 = vand.u32 2147483647, %v1212
  %vm1392 = vcmp.eq.f32.partialorder %v1391, 8.507059e+37
  %v1393 = vand.u32 %v1212, 2147483648
  %v1394 = vor.u32 1.1754944e-38, %v1393
  %v1395 = vsel %vm1392, %v1394, %v1390
  %v1396 = vmul.f32 1.0, %v1395
  %v1397 = vrcp.pop %v1213
  %v1398 = vmul.f32 %v1213, %v1397
  %v1399 = vsub.f32 1.0, %v1398
  %v1400 = vmul.f32 %v1397, %v1399
  %v1401 = vadd.f32 %v1397, %v1400
  %vm1402 = vweird.f32 %v1213
  %vm1403 = vweird.f32 %v1397
  %vm1404 = vmor %vm1402, %vm1403
  %v1405 = vsel %vm1404, %v1397, %v1401
  %v1406 = vand.u32 2147483647, %v1213
  %vm1407 = vcmp.eq.f32.partialorder %v1406, 8.507059e+37
  %v1408 = vand.u32 %v1213, 2147483648
  %v1409 = vor.u32 1.1754944e-38, %v1408
  %v1410 = vsel %vm1407, %v1409, %v1405
  %v1411 = vmul.f32 1.0, %v1410
  %v1412 = vrcp.pop %v1214
  %v1413 = vmul.f32 %v1214, %v1412
  %v1414 = vsub.f32 1.0, %v1413
  %v1415 = vmul.f32 %v1412, %v1414
  %v1416 = vadd.f32 %v1412, %v1415
  %vm1417 = vweird.f32 %v1214
  %vm1418 = vweird.f32 %v1412
  %vm1419 = vmor %vm1417, %vm1418
  %v1420 = vsel %vm1419, %v1412, %v1416
  %v1421 = vand.u32 2147483647, %v1214
  %vm1422 = vcmp.eq.f32.partialorder %v1421, 8.507059e+37
  %v1423 = vand.u32 %v1214, 2147483648
  %v1424 = vor.u32 1.1754944e-38, %v1423
  %v1425 = vsel %vm1422, %v1424, %v1420
  %v1426 = vmul.f32 1.0, %v1425
  %v1427 = vrcp.pop %v1215
  %v1428 = vmul.f32 %v1215, %v1427
  %v1429 = vsub.f32 1.0, %v1428
  %v1430 = vmul.f32 %v1427, %v1429
  %v1431 = vadd.f32 %v1427, %v1430
  %vm1432 = vweird.f32 %v1215
  %vm1433 = vweird.f32 %v1427
  %vm1434 = vmor %vm1432, %vm1433
  %v1435 = vsel %vm1434, %v1427, %v1431
  %v1436 = vand.u32 2147483647, %v1215
  %vm1437 = vcmp.eq.f32.partialorder %v1436, 8.507059e+37
  %v1438 = vand.u32 %v1215, 2147483648
  %v1439 = vor.u32 1.1754944e-38, %v1438
  %v1440 = vsel %vm1437, %v1439, %v1435
  %v1441 = vmul.f32 1.0, %v1440
  %v1442 = vrcp.pop %v1216
  %v1443 = vmul.f32 %v1216, %v1442
  %v1444 = vsub.f32 1.0, %v1443
  %v1445 = vmul.f32 %v1442, %v1444
  %v1446 = vadd.f32 %v1442, %v1445
  %vm1447 = vweird.f32 %v1216
  %vm1448 = vweird.f32 %v1442
  %vm1449 = vmor %vm1447, %vm1448
  %v1450 = vsel %vm1449, %v1442, %v1446
  %v1451 = vand.u32 2147483647, %v1216
  %vm1452 = vcmp.eq.f32.partialorder %v1451, 8.507059e+37
  %v1453 = vand.u32 %v1216, 2147483648
  %v1454 = vor.u32 1.1754944e-38, %v1453
  %v1455 = vsel %vm1452, %v1454, %v1450
  %v1456 = vmul.f32 1.0, %v1455
  %v1457 = vmul.f32 %v1137, %v1231
  %v1458 = vmul.f32 %v1138, %v1246
  %v1459 = vmul.f32 %v1139, %v1261
  %v1460 = vmul.f32 %v1140, %v1276
  %v1461 = vmul.f32 %v1141, %v1291
  %v1462 = vmul.f32 %v1142, %v1306
  %v1463 = vmul.f32 %v1143, %v1321
  %v1464 = vmul.f32 %v1144, %v1336
  %v1465 = vmul.f32 %v1145, %v1351
  %v1466 = vmul.f32 %v1146, %v1366
  %v1467 = vmul.f32 %v1147, %v1381
  %v1468 = vmul.f32 %v1148, %v1396
  %v1469 = vmul.f32 %v1149, %v1411
  %v1470 = vmul.f32 %v1150, %v1426
  %v1471 = vmul.f32 %v1151, %v1441
  %v1472 = vmul.f32 %v1152, %v1456
  %v1473 = vpack.c.bf16 %v1457, %v1457
  %v1474 = vpack.c.bf16 %v1458, %v1458
  %v1475 = vpack.c.bf16 %v1459, %v1459
  %v1476 = vpack.c.bf16 %v1460, %v1460
  %v1477 = vpack.c.bf16 %v1461, %v1461
  %v1478 = vpack.c.bf16 %v1462, %v1462
  %v1479 = vpack.c.bf16 %v1463, %v1463
  %v1480 = vpack.c.bf16 %v1464, %v1464
  %v1481 = vpack.c.bf16 %v1465, %v1465
  %v1482 = vpack.c.bf16 %v1466, %v1466
  %v1483 = vpack.c.bf16 %v1467, %v1467
  %v1484 = vpack.c.bf16 %v1468, %v1468
  %v1485 = vpack.c.bf16 %v1469, %v1469
  %v1486 = vpack.c.bf16 %v1470, %v1470
  %v1487 = vpack.c.bf16 %v1471, %v1471
  %v1488 = vpack.c.bf16 %v1472, %v1472
  %vm1489 = vcmask 519168
  %1490 = vst.msk [vmem:[%s9] sm:$0xf] %vm1489, %v1473
  %1491 = vst.msk [vmem:[%s9 + $0x4] sm:$0xf] %vm1489, %v1474
  %1492 = vst.msk [vmem:[%s9 + $0x8] sm:$0xf] %vm1489, %v1475
  %1493 = vst.msk [vmem:[%s9 + $0xc] sm:$0xf] %vm1489, %v1476
  %1494 = vst.msk [vmem:[%s9 + $0x10] sm:$0xf] %vm1489, %v1477
  %1495 = vst.msk [vmem:[%s9 + $0x14] sm:$0xf] %vm1489, %v1478
  %1496 = vst.msk [vmem:[%s9 + $0x18] sm:$0xf] %vm1489, %v1479
  %1497 = vst.msk [vmem:[%s9 + $0x1c] sm:$0xf] %vm1489, %v1480
  %1498 = vst.msk [vmem:[%s9 + $0x20] sm:$0xf] %vm1489, %v1481
  %1499 = vst.msk [vmem:[%s9 + $0x24] sm:$0xf] %vm1489, %v1482
  %1500 = vst.msk [vmem:[%s9 + $0x28] sm:$0xf] %vm1489, %v1483
  %1501 = vst.msk [vmem:[%s9 + $0x2c] sm:$0xf] %vm1489, %v1484
  %1502 = vst.msk [vmem:[%s9 + $0x30] sm:$0xf] %vm1489, %v1485
  %1503 = vst.msk [vmem:[%s9 + $0x34] sm:$0xf] %vm1489, %v1486
  %1504 = vst.msk [vmem:[%s9 + $0x38] sm:$0xf] %vm1489, %v1487
  %1505 = vst.msk [vmem:[%s9 + $0x3c] sm:$0xf] %vm1489, %v1488
  // Predicated region
  $region38: #{resnet_forward.12} parent=0 // pred_check
    _
  $region39: #{resnet_forward.12} parent=0 // pred_check_branch
    %1507 = sbr.rel (0) target = $region41
  $region40: #{resnet_forward.12} parent=0 // pred_region
    _
  $region41: #{resnet_forward.12} parent=0 // pred_fallthru
    _
  // Predicated region
  $region42: #{resnet_forward.12} parent=0 // pred_check
    _
  $region43: #{resnet_forward.12} parent=0 // pred_check_branch
    %1509 = sbr.rel (0) target = $region45
  $region44: #{resnet_forward.12} parent=0 // pred_region
    _
  $region45: #{resnet_forward.12} parent=0 // pred_fallthru
    _

// kernel: resnet_forward.13
$region0: #{resnet_forward.13}
  #allocation0 [shape = 'u32[]', space=smem, size = 0x4, offset = 0x4, fixed_abs, tag = 'smem constant byte address 0x4 - core index']
  #allocation1 [shape = 'u32[72,128]{1,0:T(1,128)}', space=vmem, size = 0x9000, scoped, tag = 'internal scratch']
  %s0 = inlined_call_operand.vmem [shape: bf16[32,576], index: 0, kind: input, shape index: {}]
  %s1 = inlined_call_operand.vmem [shape: bf16[576,64], index: 1, kind: input, shape index: {}]
  %s2 = inlined_call_operand.vmem [shape: f32[1,64], index: 2, kind: input, shape index: {}]
  %s3 = inlined_call_operand.vmem [shape: bf16[32,64], index: 3, kind: output, shape index: {}]
  %s4 = sld [smem:[#allocation0]]
  $region22: #{resnet_forward.13} parent=0
    _
  %s6 = ssub.s32 1, %s4
  %s7 = scalar_select 0, %s6, %s4
  // Predicated region
  $region2: #{resnet_forward.13} parent=0 // pred_check
    _
  $region3: #{resnet_forward.13} parent=0 // pred_check_branch
    %9 = sbr.rel (0) target = $region5
  $region4: #{resnet_forward.13} parent=0 // pred_region
    _
  $region5: #{resnet_forward.13} parent=0 // pred_fallthru
    _
  // Predicated region
  $region6: #{resnet_forward.13} parent=0 // pred_check
    _
  $region7: #{resnet_forward.13} parent=0 // pred_check_branch
    %11 = sbr.rel (0) target = $region9
  $region8: #{resnet_forward.13} parent=0 // pred_region
    _
  $region9: #{resnet_forward.13} parent=0 // pred_fallthru
    _
  // Predicated region
  $region10: #{resnet_forward.13} parent=0 // pred_check
    _
  $region11: #{resnet_forward.13} parent=0 // pred_check_branch
    %13 = sbr.rel (0) target = $region13
  $region12: #{resnet_forward.13} parent=0 // pred_region
    _
  $region13: #{resnet_forward.13} parent=0 // pred_fallthru
    _
  %v15 = vld [vmem:[%s0] sm:$0xff]
  %v16 = vld [vmem:[%s0 + $0x8] sm:$0xff]
  %v17 = vld [vmem:[%s0 + $0x10] sm:$0xf]
  %v18 = vld [vmem:[%s0 + $0x14] sm:$0xff]
  %v19 = vld [vmem:[%s0 + $0x1c] sm:$0xff]
  %v20 = vld [vmem:[%s0 + $0x24] sm:$0xf]
  %v21 = vld [vmem:[%s0 + $0x28] sm:$0xff]
  %v22 = vld [vmem:[%s0 + $0x30] sm:$0xff]
  %v23 = vld [vmem:[%s0 + $0x38] sm:$0xf]
  %v24 = vld [vmem:[%s0 + $0x3c] sm:$0xff]
  %v25 = vld [vmem:[%s0 + $0x44] sm:$0xff]
  %v26 = vld [vmem:[%s0 + $0x4c] sm:$0xf]
  %v27 = vld [vmem:[%s1] sm:$0xf]
  %v28 = vld [vmem:[%s1 + $0x4] sm:$0xf]
  %v29 = vld [vmem:[%s1 + $0x8] sm:$0xf]
  %v30 = vld [vmem:[%s1 + $0xc] sm:$0xf]
  %v31 = vld [vmem:[%s1 + $0x10] sm:$0xf]
  %v32 = vld [vmem:[%s1 + $0x14] sm:$0xf]
  %v33 = vld [vmem:[%s1 + $0x18] sm:$0xf]
  %v34 = vld [vmem:[%s1 + $0x1c] sm:$0xf]
  %v35 = vld [vmem:[%s1 + $0x20] sm:$0xf]
  %v36 = vld [vmem:[%s1 + $0x24] sm:$0xf]
  %v37 = vld [vmem:[%s1 + $0x28] sm:$0xf]
  %v38 = vld [vmem:[%s1 + $0x2c] sm:$0xf]
  %v39 = vld [vmem:[%s1 + $0x30] sm:$0xf]
  %v40 = vld [vmem:[%s1 + $0x34] sm:$0xf]
  %v41 = vld [vmem:[%s1 + $0x38] sm:$0xf]
  %v42 = vld [vmem:[%s1 + $0x3c] sm:$0xf]
  %v43 = vld [vmem:[%s1 + $0x40] sm:$0xf]
  %v44 = vld [vmem:[%s1 + $0x44] sm:$0xf]
  %v45 = vld [vmem:[%s1 + $0x48] sm:$0xf]
  %v46 = vld [vmem:[%s1 + $0x4c] sm:$0xf]
  %v47 = vld [vmem:[%s1 + $0x50] sm:$0xf]
  %v48 = vld [vmem:[%s1 + $0x54] sm:$0xf]
  %v49 = vld [vmem:[%s1 + $0x58] sm:$0xf]
  %v50 = vld [vmem:[%s1 + $0x5c] sm:$0xf]
  %v51 = vld [vmem:[%s1 + $0x60] sm:$0xf]
  %v52 = vld [vmem:[%s1 + $0x64] sm:$0xf]
  %v53 = vld [vmem:[%s1 + $0x68] sm:$0xf]
  %v54 = vld [vmem:[%s1 + $0x6c] sm:$0xf]
  %v55 = vld [vmem:[%s1 + $0x70] sm:$0xf]
  %v56 = vld [vmem:[%s1 + $0x74] sm:$0xf]
  %v57 = vld [vmem:[%s1 + $0x78] sm:$0xf]
  %v58 = vld [vmem:[%s1 + $0x7c] sm:$0xf]
  %v59 = vld [vmem:[%s1 + $0x80] sm:$0xf]
  %v60 = vld [vmem:[%s1 + $0x84] sm:$0xf]
  %v61 = vld [vmem:[%s1 + $0x88] sm:$0xf]
  %v62 = vld [vmem:[%s1 + $0x8c] sm:$0xf]
  %v63 = vld [vmem:[%s1 + $0x90] sm:$0xf]
  %v64 = vld [vmem:[%s1 + $0x94] sm:$0xf]
  %v65 = vld [vmem:[%s1 + $0x98] sm:$0xf]
  %v66 = vld [vmem:[%s1 + $0x9c] sm:$0xf]
  %v67 = vld [vmem:[%s1 + $0xa0] sm:$0xf]
  %v68 = vld [vmem:[%s1 + $0xa4] sm:$0xf]
  %v69 = vld [vmem:[%s1 + $0xa8] sm:$0xf]
  %v70 = vld [vmem:[%s1 + $0xac] sm:$0xf]
  %v71 = vld [vmem:[%s1 + $0xb0] sm:$0xf]
  %v72 = vld [vmem:[%s1 + $0xb4] sm:$0xf]
  %v73 = vld [vmem:[%s1 + $0xb8] sm:$0xf]
  %v74 = vld [vmem:[%s1 + $0xbc] sm:$0xf]
  %v75 = vld [vmem:[%s1 + $0xc0] sm:$0xf]
  %v76 = vld [vmem:[%s1 + $0xc4] sm:$0xf]
  %v77 = vld [vmem:[%s1 + $0xc8] sm:$0xf]
  %v78 = vld [vmem:[%s1 + $0xcc] sm:$0xf]
  %v79 = vld [vmem:[%s1 + $0xd0] sm:$0xf]
  %v80 = vld [vmem:[%s1 + $0xd4] sm:$0xf]
  %v81 = vld [vmem:[%s1 + $0xd8] sm:$0xf]
  %v82 = vld [vmem:[%s1 + $0xdc] sm:$0xf]
  %v83 = vld [vmem:[%s1 + $0xe0] sm:$0xf]
  %v84 = vld [vmem:[%s1 + $0xe4] sm:$0xf]
  %v85 = vld [vmem:[%s1 + $0xe8] sm:$0xf]
  %v86 = vld [vmem:[%s1 + $0xec] sm:$0xf]
  %v87 = vld [vmem:[%s1 + $0xf0] sm:$0xf]
  %v88 = vld [vmem:[%s1 + $0xf4] sm:$0xf]
  %v89 = vld [vmem:[%s1 + $0xf8] sm:$0xf]
  %v90 = vld [vmem:[%s1 + $0xfc] sm:$0xf]
  %v91 = vld [vmem:[%s1 + $0x100] sm:$0xf]
  %v92 = vld [vmem:[%s1 + $0x104] sm:$0xf]
  %v93 = vld [vmem:[%s1 + $0x108] sm:$0xf]
  %v94 = vld [vmem:[%s1 + $0x10c] sm:$0xf]
  %v95 = vld [vmem:[%s1 + $0x110] sm:$0xf]
  %v96 = vld [vmem:[%s1 + $0x114] sm:$0xf]
  %v97 = vld [vmem:[%s1 + $0x118] sm:$0xf]
  %v98 = vld [vmem:[%s1 + $0x11c] sm:$0xf]
  %v99 = vld [vmem:[%s2] sm:$0x1]
  %v101 = vperm.slane %v99, 0
  %v115 = vunpack.c.l.b16 %v15
  %v116 = vunpack.c.h.b16 %v15
  %v117 = vunpack.c.l.b16 %v16
  %v118 = vunpack.c.h.b16 %v16
  %v119 = vunpack.c.l.b16 %v17
  %v120 = vunpack.c.l.b16 %v18
  %v121 = vunpack.c.h.b16 %v18
  %v122 = vunpack.c.l.b16 %v19
  %v123 = vunpack.c.h.b16 %v19
  %v124 = vunpack.c.l.b16 %v20
  %v125 = vunpack.c.l.b16 %v21
  %v126 = vunpack.c.h.b16 %v21
  %v127 = vunpack.c.l.b16 %v22
  %v128 = vunpack.c.h.b16 %v22
  %v129 = vunpack.c.l.b16 %v23
  %v130 = vunpack.c.l.b16 %v24
  %v131 = vunpack.c.h.b16 %v24
  %v132 = vunpack.c.l.b16 %v25
  %v133 = vunpack.c.h.b16 %v25
  %v134 = vunpack.c.l.b16 %v26
  %v135 = vpack.c.b16 %v120, %v115
  %v136 = vpack.c.b16 %v121, %v116
  %v137 = vpack.c.b16 %v122, %v117
  %v138 = vpack.c.b16 %v123, %v118
  %v139 = vpack.c.b16 %v124, %v119
  %v140 = vpack.c.b16 %v130, %v125
  %v141 = vpack.c.b16 %v131, %v126
  %v142 = vpack.c.b16 %v132, %v127
  %v143 = vpack.c.b16 %v133, %v128
  %v144 = vpack.c.b16 %v134, %v129
  %v225 = vunpack.c.l.b16 %v27
  %v226 = vunpack.c.l.b16 %v28
  %v227 = vunpack.c.l.b16 %v29
  %v228 = vunpack.c.l.b16 %v30
  %v229 = vunpack.c.l.b16 %v31
  %v230 = vunpack.c.l.b16 %v32
  %v231 = vunpack.c.l.b16 %v33
  %v232 = vunpack.c.l.b16 %v34
  %v233 = vunpack.c.l.b16 %v35
  %v234 = vunpack.c.l.b16 %v36
  %v235 = vunpack.c.l.b16 %v37
  %v236 = vunpack.c.l.b16 %v38
  %v237 = vunpack.c.l.b16 %v39
  %v238 = vunpack.c.l.b16 %v40
  %v239 = vunpack.c.l.b16 %v41
  %v240 = vunpack.c.l.b16 %v42
  %v241 = vunpack.c.l.b16 %v43
  %v242 = vunpack.c.l.b16 %v44
  %v243 = vunpack.c.l.b16 %v45
  %v244 = vunpack.c.l.b16 %v46
  %v245 = vunpack.c.l.b16 %v47
  %v246 = vunpack.c.l.b16 %v48
  %v247 = vunpack.c.l.b16 %v49
  %v248 = vunpack.c.l.b16 %v50
  %v249 = vunpack.c.l.b16 %v51
  %v250 = vunpack.c.l.b16 %v52
  %v251 = vunpack.c.l.b16 %v53
  %v252 = vunpack.c.l.b16 %v54
  %v253 = vunpack.c.l.b16 %v55
  %v254 = vunpack.c.l.b16 %v56
  %v255 = vunpack.c.l.b16 %v57
  %v256 = vunpack.c.l.b16 %v58
  %v257 = vunpack.c.l.b16 %v59
  %v258 = vunpack.c.l.b16 %v60
  %v259 = vunpack.c.l.b16 %v61
  %v260 = vunpack.c.l.b16 %v62
  %v261 = vunpack.c.l.b16 %v63
  %v262 = vunpack.c.l.b16 %v64
  %v263 = vunpack.c.l.b16 %v65
  %v264 = vunpack.c.l.b16 %v66
  %v265 = vunpack.c.l.b16 %v67
  %v266 = vunpack.c.l.b16 %v68
  %v267 = vunpack.c.l.b16 %v69
  %v268 = vunpack.c.l.b16 %v70
  %v269 = vunpack.c.l.b16 %v71
  %v270 = vunpack.c.l.b16 %v72
  %v271 = vunpack.c.l.b16 %v73
  %v272 = vunpack.c.l.b16 %v74
  %v273 = vunpack.c.l.b16 %v75
  %v274 = vunpack.c.l.b16 %v76
  %v275 = vunpack.c.l.b16 %v77
  %v276 = vunpack.c.l.b16 %v78
  %v277 = vunpack.c.l.b16 %v79
  %v278 = vunpack.c.l.b16 %v80
  %v279 = vunpack.c.l.b16 %v81
  %v280 = vunpack.c.l.b16 %v82
  %v281 = vunpack.c.l.b16 %v83
  %v282 = vunpack.c.l.b16 %v84
  %v283 = vunpack.c.l.b16 %v85
  %v284 = vunpack.c.l.b16 %v86
  %v285 = vunpack.c.l.b16 %v87
  %v286 = vunpack.c.l.b16 %v88
  %v287 = vunpack.c.l.b16 %v89
  %v288 = vunpack.c.l.b16 %v90
  %v289 = vunpack.c.l.b16 %v91
  %v290 = vunpack.c.l.b16 %v92
  %v291 = vunpack.c.l.b16 %v93
  %v292 = vunpack.c.l.b16 %v94
  %v293 = vunpack.c.l.b16 %v95
  %v294 = vunpack.c.l.b16 %v96
  %v295 = vunpack.c.l.b16 %v97
  %v296 = vunpack.c.l.b16 %v98
  %v297 = vpack.c.b16 %v226, %v225
  %v298 = vpack.c.b16 %v228, %v227
  %v299 = vpack.c.b16 %v230, %v229
  %v300 = vpack.c.b16 %v232, %v231
  %v301 = vpack.c.b16 %v234, %v233
  %v302 = vpack.c.b16 %v236, %v235
  %v303 = vpack.c.b16 %v238, %v237
  %v304 = vpack.c.b16 %v240, %v239
  %v305 = vpack.c.b16 %v242, %v241
  %v306 = vpack.c.b16 %v244, %v243
  %v307 = vpack.c.b16 %v246, %v245
  %v308 = vpack.c.b16 %v248, %v247
  %v309 = vpack.c.b16 %v250, %v249
  %v310 = vpack.c.b16 %v252, %v251
  %v311 = vpack.c.b16 %v254, %v253
  %v312 = vpack.c.b16 %v256, %v255
  %v313 = vpack.c.b16 %v258, %v257
  %v314 = vpack.c.b16 %v260, %v259
  %v315 = vpack.c.b16 %v262, %v261
  %v316 = vpack.c.b16 %v264, %v263
  %v317 = vpack.c.b16 %v266, %v265
  %v318 = vpack.c.b16 %v268, %v267
  %v319 = vpack.c.b16 %v270, %v269
  %v320 = vpack.c.b16 %v272, %v271
  %v321 = vpack.c.b16 %v274, %v273
  %v322 = vpack.c.b16 %v276, %v275
  %v323 = vpack.c.b16 %v278, %v277
  %v324 = vpack.c.b16 %v280, %v279
  %v325 = vpack.c.b16 %v282, %v281
  %v326 = vpack.c.b16 %v284, %v283
  %v327 = vpack.c.b16 %v286, %v285
  %v328 = vpack.c.b16 %v288, %v287
  %v329 = vpack.c.b16 %v290, %v289
  %v330 = vpack.c.b16 %v292, %v291
  %v331 = vpack.c.b16 %v294, %v293
  %v332 = vpack.c.b16 %v296, %v295
  %vm369 = vcmask 523264
  %v371 = vsel %vm369, %v139, 0
  %v374 = vsel %vm369, %v144, 0
  %376 = vmatpush.bf16.msra.mxu0 %v304
  %377 = vmatpush.bf16.msra.mxu0 %v303
  %378 = vmatpush.bf16.msra.mxu0 %v302
  %379 = vmatpush.bf16.msra.mxu0 %v301
  %380 = vmatpush.bf16.msra.mxu0 %v300
  %381 = vmatpush.bf16.msra.mxu0 %v299
  %382 = vmatpush.bf16.msra.mxu0 %v298
  %383 = vmatpush.bf16.msra.mxu0 %v297
  %384 = vmatmul.bf16.gmra.mxu0 %v135
  %v385 = vpop.f32.mrf.mxu0
  %v386 = vadd.f32 %v101, %v385
  %v387 = vpop.f32.mrf.mxu0
  %v388 = vadd.f32 %v101, %v387
  %389 = vmatmul.bf16.gmra.mxu0 %v140
  %v390 = vpop.f32.mrf.mxu0
  %v391 = vadd.f32 %v101, %v390
  %v392 = vpop.f32.mrf.mxu0
  %v393 = vadd.f32 %v101, %v392
  %394 = vdwg.mxu0
  %395 = vmatpush.bf16.msra.mxu0 %v312
  %396 = vmatpush.bf16.msra.mxu0 %v311
  %397 = vmatpush.bf16.msra.mxu0 %v310
  %398 = vmatpush.bf16.msra.mxu0 %v309
  %399 = vmatpush.bf16.msra.mxu0 %v308
  %400 = vmatpush.bf16.msra.mxu0 %v307
  %401 = vmatpush.bf16.msra.mxu0 %v306
  %402 = vmatpush.bf16.msra.mxu0 %v305
  %403 = vmatmul.bf16.gmra.mxu0 %v136
  %v404 = vpop.f32.mrf.mxu0
  %v405 = vadd.f32 %v386, %v404
  %v406 = vpop.f32.mrf.mxu0
  %v407 = vadd.f32 %v388, %v406
  %408 = vmatmul.bf16.gmra.mxu0 %v141
  %v409 = vpop.f32.mrf.mxu0
  %v410 = vadd.f32 %v391, %v409
  %v411 = vpop.f32.mrf.mxu0
  %v412 = vadd.f32 %v393, %v411
  %413 = vdwg.mxu0
  %414 = vmatpush.bf16.msra.mxu0 %v320
  %415 = vmatpush.bf16.msra.mxu0 %v319
  %416 = vmatpush.bf16.msra.mxu0 %v318
  %417 = vmatpush.bf16.msra.mxu0 %v317
  %418 = vmatpush.bf16.msra.mxu0 %v316
  %419 = vmatpush.bf16.msra.mxu0 %v315
  %420 = vmatpush.bf16.msra.mxu0 %v314
  %421 = vmatpush.bf16.msra.mxu0 %v313
  %422 = vmatmul.bf16.gmra.mxu0 %v137
  %v423 = vpop.f32.mrf.mxu0
  %v424 = vadd.f32 %v405, %v423
  %v425 = vpop.f32.mrf.mxu0
  %v426 = vadd.f32 %v407, %v425
  %427 = vmatmul.bf16.gmra.mxu0 %v142
  %v428 = vpop.f32.mrf.mxu0
  %v429 = vadd.f32 %v410, %v428
  %v430 = vpop.f32.mrf.mxu0
  %v431 = vadd.f32 %v412, %v430
  %432 = vdwg.mxu0
  %433 = vmatpush.bf16.msra.mxu0 %v328
  %434 = vmatpush.bf16.msra.mxu0 %v327
  %435 = vmatpush.bf16.msra.mxu0 %v326
  %436 = vmatpush.bf16.msra.mxu0 %v325
  %437 = vmatpush.bf16.msra.mxu0 %v324
  %438 = vmatpush.bf16.msra.mxu0 %v323
  %439 = vmatpush.bf16.msra.mxu0 %v322
  %440 = vmatpush.bf16.msra.mxu0 %v321
  %441 = vmatmul.bf16.gmra.mxu0 %v138
  %v442 = vpop.f32.mrf.mxu0
  %v443 = vadd.f32 %v424, %v442
  %v444 = vpop.f32.mrf.mxu0
  %v445 = vadd.f32 %v426, %v444
  %446 = vmatmul.bf16.gmra.mxu0 %v143
  %v447 = vpop.f32.mrf.mxu0
  %v448 = vadd.f32 %v429, %v447
  %v449 = vpop.f32.mrf.mxu0
  %v450 = vadd.f32 %v431, %v449
  %451 = vdwg.mxu0
  %452 = vmatpush.bf16.msra.mxu0 0
  %453 = vmatpush.bf16.msra.mxu0 0
  %454 = vmatpush.bf16.msra.mxu0 0
  %455 = vmatpush.bf16.msra.mxu0 0
  %456 = vmatpush.bf16.msra.mxu0 %v332
  %457 = vmatpush.bf16.msra.mxu0 %v331
  %458 = vmatpush.bf16.msra.mxu0 %v330
  %459 = vmatpush.bf16.msra.mxu0 %v329
  %460 = vmatmul.bf16.gmra.mxu0 %v371
  %v461 = vpop.f32.mrf.mxu0
  %v462 = vadd.f32 %v443, %v461
  %v463 = vpop.f32.mrf.mxu0
  %v464 = vadd.f32 %v445, %v463
  %465 = vmatmul.bf16.gmra.mxu0 %v374
  %v466 = vpop.f32.mrf.mxu0
  %v467 = vadd.f32 %v448, %v466
  %v468 = vpop.f32.mrf.mxu0
  %v469 = vadd.f32 %v450, %v468
  %470 = vdwg.mxu0
  %v471 = vxor.u32 %v462, 2147483648
  %v472 = vxor.u32 %v464, 2147483648
  %v473 = vxor.u32 %v467, 2147483648
  %v474 = vxor.u32 %v469, 2147483648
  %v475 = vmul.f32 %v471, 1.442695
  %v476 = vpow.pop %v475
  %v477 = vmul.f32 %v472, 1.442695
  %v478 = vpow.pop %v477
  %v479 = vmul.f32 %v473, 1.442695
  %v480 = vpow.pop %v479
  %v481 = vmul.f32 %v474, 1.442695
  %v482 = vpow.pop %v481
  %v483 = vadd.f32 %v476, 1.0
  %v484 = vadd.f32 %v478, 1.0
  %v485 = vadd.f32 %v480, 1.0
  %v486 = vadd.f32 %v482, 1.0
  %v487 = vrcp.pop %v483
  %v488 = vmul.f32 %v483, %v487
  %v489 = vsub.f32 1.0, %v488
  %v490 = vmul.f32 %v487, %v489
  %v491 = vadd.f32 %v487, %v490
  %vm492 = vweird.f32 %v483
  %vm493 = vweird.f32 %v487
  %vm494 = vmor %vm492, %vm493
  %v495 = vsel %vm494, %v487, %v491
  %v496 = vand.u32 2147483647, %v483
  %vm497 = vcmp.eq.f32.partialorder %v496, 8.507059e+37
  %v498 = vand.u32 %v483, 2147483648
  %v499 = vor.u32 1.1754944e-38, %v498
  %v500 = vsel %vm497, %v499, %v495
  %v501 = vmul.f32 1.0, %v500
  %v502 = vrcp.pop %v484
  %v503 = vmul.f32 %v484, %v502
  %v504 = vsub.f32 1.0, %v503
  %v505 = vmul.f32 %v502, %v504
  %v506 = vadd.f32 %v502, %v505
  %vm507 = vweird.f32 %v484
  %vm508 = vweird.f32 %v502
  %vm509 = vmor %vm507, %vm508
  %v510 = vsel %vm509, %v502, %v506
  %v511 = vand.u32 2147483647, %v484
  %vm512 = vcmp.eq.f32.partialorder %v511, 8.507059e+37
  %v513 = vand.u32 %v484, 2147483648
  %v514 = vor.u32 1.1754944e-38, %v513
  %v515 = vsel %vm512, %v514, %v510
  %v516 = vmul.f32 1.0, %v515
  %v517 = vrcp.pop %v485
  %v518 = vmul.f32 %v485, %v517
  %v519 = vsub.f32 1.0, %v518
  %v520 = vmul.f32 %v517, %v519
  %v521 = vadd.f32 %v517, %v520
  %vm522 = vweird.f32 %v485
  %vm523 = vweird.f32 %v517
  %vm524 = vmor %vm522, %vm523
  %v525 = vsel %vm524, %v517, %v521
  %v526 = vand.u32 2147483647, %v485
  %vm527 = vcmp.eq.f32.partialorder %v526, 8.507059e+37
  %v528 = vand.u32 %v485, 2147483648
  %v529 = vor.u32 1.1754944e-38, %v528
  %v530 = vsel %vm527, %v529, %v525
  %v531 = vmul.f32 1.0, %v530
  %v532 = vrcp.pop %v486
  %v533 = vmul.f32 %v486, %v532
  %v534 = vsub.f32 1.0, %v533
  %v535 = vmul.f32 %v532, %v534
  %v536 = vadd.f32 %v532, %v535
  %vm537 = vweird.f32 %v486
  %vm538 = vweird.f32 %v532
  %vm539 = vmor %vm537, %vm538
  %v540 = vsel %vm539, %v532, %v536
  %v541 = vand.u32 2147483647, %v486
  %vm542 = vcmp.eq.f32.partialorder %v541, 8.507059e+37
  %v543 = vand.u32 %v486, 2147483648
  %v544 = vor.u32 1.1754944e-38, %v543
  %v545 = vsel %vm542, %v544, %v540
  %v546 = vmul.f32 1.0, %v545
  %v547 = vmul.f32 %v462, %v501
  %v548 = vmul.f32 %v464, %v516
  %v549 = vmul.f32 %v467, %v531
  %v550 = vmul.f32 %v469, %v546
  %v551 = vpack.c.bf16 %v547, %v547
  %v552 = vpack.c.bf16 %v548, %v548
  %v553 = vpack.c.bf16 %v549, %v549
  %v554 = vpack.c.bf16 %v550, %v550
  %vm555 = vcmask 519168
  %556 = vst.msk [vmem:[%s3] sm:$0xf] %vm555, %v551
  %557 = vst.msk [vmem:[%s3 + $0x4] sm:$0xf] %vm555, %v552
  %558 = vst.msk [vmem:[%s3 + $0x8] sm:$0xf] %vm555, %v553
  %559 = vst.msk [vmem:[%s3 + $0xc] sm:$0xf] %vm555, %v554
  // Predicated region
  $region14: #{resnet_forward.13} parent=0 // pred_check
    _
  $region15: #{resnet_forward.13} parent=0 // pred_check_branch
    %561 = sbr.rel (0) target = $region17
  $region16: #{resnet_forward.13} parent=0 // pred_region
    _
  $region17: #{resnet_forward.13} parent=0 // pred_fallthru
    _
  // Predicated region
  $region18: #{resnet_forward.13} parent=0 // pred_check
    _
  $region19: #{resnet_forward.13} parent=0 // pred_check_branch
    %563 = sbr.rel (0) target = $region21
  $region20: #{resnet_forward.13} parent=0 // pred_region
    _
  $region21: #{resnet_forward.13} parent=0 // pred_fallthru
    _

// kernel: resnet_forward.14
$region0: #{resnet_forward.14}
  #allocation0 [shape = 'u32[]', space=smem, size = 0x4, offset = 0x4, fixed_abs, tag = 'smem constant byte address 0x4 - core index']
  #allocation1 [shape = 'u32[72,128]{1,0:T(1,128)}', space=vmem, size = 0x9000, scoped, tag = 'internal scratch']
  %s0 = inlined_call_operand.vmem [shape: bf16[32,576], index: 0, kind: input, shape index: {}]
  %s1 = inlined_call_operand.vmem [shape: bf16[32,64], index: 1, kind: input, shape index: {}]
  %s2 = inlined_call_operand.vmem [shape: bf16[32,64], index: 2, kind: input, shape index: {}]
  %s3 = inlined_call_operand.vmem [shape: bf16[32,64], index: 3, kind: input, shape index: {}]
  %s4 = inlined_call_operand.vmem [shape: bf16[32,64], index: 4, kind: input, shape index: {}]
  %s5 = inlined_call_operand.vmem [shape: bf16[576,64], index: 5, kind: input, shape index: {}]
  %s6 = inlined_call_operand.vmem [shape: f32[1,64], index: 6, kind: input, shape index: {}]
  %s7 = inlined_call_operand.vmem [shape: bf16[32,64], index: 7, kind: output, shape index: {}]
  %s8 = sld [smem:[#allocation0]]
  $region38: #{resnet_forward.14} parent=0
    _
  %s10 = ssub.s32 1, %s8
  %s11 = scalar_select 0, %s10, %s8
  // Predicated region
  $region2: #{resnet_forward.14} parent=0 // pred_check
    _
  $region3: #{resnet_forward.14} parent=0 // pred_check_branch
    %13 = sbr.rel (0) target = $region5
  $region4: #{resnet_forward.14} parent=0 // pred_region
    _
  $region5: #{resnet_forward.14} parent=0 // pred_fallthru
    _
  // Predicated region
  $region6: #{resnet_forward.14} parent=0 // pred_check
    _
  $region7: #{resnet_forward.14} parent=0 // pred_check_branch
    %15 = sbr.rel (0) target = $region9
  $region8: #{resnet_forward.14} parent=0 // pred_region
    _
  $region9: #{resnet_forward.14} parent=0 // pred_fallthru
    _
  // Predicated region
  $region10: #{resnet_forward.14} parent=0 // pred_check
    _
  $region11: #{resnet_forward.14} parent=0 // pred_check_branch
    %17 = sbr.rel (0) target = $region13
  $region12: #{resnet_forward.14} parent=0 // pred_region
    _
  $region13: #{resnet_forward.14} parent=0 // pred_fallthru
    _
  // Predicated region
  $region14: #{resnet_forward.14} parent=0 // pred_check
    _
  $region15: #{resnet_forward.14} parent=0 // pred_check_branch
    %19 = sbr.rel (0) target = $region17
  $region16: #{resnet_forward.14} parent=0 // pred_region
    _
  $region17: #{resnet_forward.14} parent=0 // pred_fallthru
    _
  // Predicated region
  $region18: #{resnet_forward.14} parent=0 // pred_check
    _
  $region19: #{resnet_forward.14} parent=0 // pred_check_branch
    %21 = sbr.rel (0) target = $region21
  $region20: #{resnet_forward.14} parent=0 // pred_region
    _
  $region21: #{resnet_forward.14} parent=0 // pred_fallthru
    _
  // Predicated region
  $region22: #{resnet_forward.14} parent=0 // pred_check
    _
  $region23: #{resnet_forward.14} parent=0 // pred_check_branch
    %23 = sbr.rel (0) target = $region25
  $region24: #{resnet_forward.14} parent=0 // pred_region
    _
  $region25: #{resnet_forward.14} parent=0 // pred_fallthru
    _
  // Predicated region
  $region26: #{resnet_forward.14} parent=0 // pred_check
    _
  $region27: #{resnet_forward.14} parent=0 // pred_check_branch
    %25 = sbr.rel (0) target = $region29
  $region28: #{resnet_forward.14} parent=0 // pred_region
    _
  $region29: #{resnet_forward.14} parent=0 // pred_fallthru
    _
  %v27 = vld [vmem:[%s0] sm:$0xff]
  %v28 = vld [vmem:[%s0 + $0x8] sm:$0xff]
  %v29 = vld [vmem:[%s0 + $0x10] sm:$0xf]
  %v30 = vld [vmem:[%s0 + $0x14] sm:$0xff]
  %v31 = vld [vmem:[%s0 + $0x1c] sm:$0xff]
  %v32 = vld [vmem:[%s0 + $0x24] sm:$0xf]
  %v33 = vld [vmem:[%s0 + $0x28] sm:$0xff]
  %v34 = vld [vmem:[%s0 + $0x30] sm:$0xff]
  %v35 = vld [vmem:[%s0 + $0x38] sm:$0xf]
  %v36 = vld [vmem:[%s0 + $0x3c] sm:$0xff]
  %v37 = vld [vmem:[%s0 + $0x44] sm:$0xff]
  %v38 = vld [vmem:[%s0 + $0x4c] sm:$0xf]
  %v39 = vld [vmem:[%s5] sm:$0xf]
  %v40 = vld [vmem:[%s5 + $0x4] sm:$0xf]
  %v41 = vld [vmem:[%s5 + $0x8] sm:$0xf]
  %v42 = vld [vmem:[%s5 + $0xc] sm:$0xf]
  %v43 = vld [vmem:[%s5 + $0x10] sm:$0xf]
  %v44 = vld [vmem:[%s5 + $0x14] sm:$0xf]
  %v45 = vld [vmem:[%s5 + $0x18] sm:$0xf]
  %v46 = vld [vmem:[%s5 + $0x1c] sm:$0xf]
  %v47 = vld [vmem:[%s5 + $0x20] sm:$0xf]
  %v48 = vld [vmem:[%s5 + $0x24] sm:$0xf]
  %v49 = vld [vmem:[%s5 + $0x28] sm:$0xf]
  %v50 = vld [vmem:[%s5 + $0x2c] sm:$0xf]
  %v51 = vld [vmem:[%s5 + $0x30] sm:$0xf]
  %v52 = vld [vmem:[%s5 + $0x34] sm:$0xf]
  %v53 = vld [vmem:[%s5 + $0x38] sm:$0xf]
  %v54 = vld [vmem:[%s5 + $0x3c] sm:$0xf]
  %v55 = vld [vmem:[%s5 + $0x40] sm:$0xf]
  %v56 = vld [vmem:[%s5 + $0x44] sm:$0xf]
  %v57 = vld [vmem:[%s5 + $0x48] sm:$0xf]
  %v58 = vld [vmem:[%s5 + $0x4c] sm:$0xf]
  %v59 = vld [vmem:[%s5 + $0x50] sm:$0xf]
  %v60 = vld [vmem:[%s5 + $0x54] sm:$0xf]
  %v61 = vld [vmem:[%s5 + $0x58] sm:$0xf]
  %v62 = vld [vmem:[%s5 + $0x5c] sm:$0xf]
  %v63 = vld [vmem:[%s5 + $0x60] sm:$0xf]
  %v64 = vld [vmem:[%s5 + $0x64] sm:$0xf]
  %v65 = vld [vmem:[%s5 + $0x68] sm:$0xf]
  %v66 = vld [vmem:[%s5 + $0x6c] sm:$0xf]
  %v67 = vld [vmem:[%s5 + $0x70] sm:$0xf]
  %v68 = vld [vmem:[%s5 + $0x74] sm:$0xf]
  %v69 = vld [vmem:[%s5 + $0x78] sm:$0xf]
  %v70 = vld [vmem:[%s5 + $0x7c] sm:$0xf]
  %v71 = vld [vmem:[%s5 + $0x80] sm:$0xf]
  %v72 = vld [vmem:[%s5 + $0x84] sm:$0xf]
  %v73 = vld [vmem:[%s5 + $0x88] sm:$0xf]
  %v74 = vld [vmem:[%s5 + $0x8c] sm:$0xf]
  %v75 = vld [vmem:[%s5 + $0x90] sm:$0xf]
  %v76 = vld [vmem:[%s5 + $0x94] sm:$0xf]
  %v77 = vld [vmem:[%s5 + $0x98] sm:$0xf]
  %v78 = vld [vmem:[%s5 + $0x9c] sm:$0xf]
  %v79 = vld [vmem:[%s5 + $0xa0] sm:$0xf]
  %v80 = vld [vmem:[%s5 + $0xa4] sm:$0xf]
  %v81 = vld [vmem:[%s5 + $0xa8] sm:$0xf]
  %v82 = vld [vmem:[%s5 + $0xac] sm:$0xf]
  %v83 = vld [vmem:[%s5 + $0xb0] sm:$0xf]
  %v84 = vld [vmem:[%s5 + $0xb4] sm:$0xf]
  %v85 = vld [vmem:[%s5 + $0xb8] sm:$0xf]
  %v86 = vld [vmem:[%s5 + $0xbc] sm:$0xf]
  %v87 = vld [vmem:[%s5 + $0xc0] sm:$0xf]
  %v88 = vld [vmem:[%s5 + $0xc4] sm:$0xf]
  %v89 = vld [vmem:[%s5 + $0xc8] sm:$0xf]
  %v90 = vld [vmem:[%s5 + $0xcc] sm:$0xf]
  %v91 = vld [vmem:[%s5 + $0xd0] sm:$0xf]
  %v92 = vld [vmem:[%s5 + $0xd4] sm:$0xf]
  %v93 = vld [vmem:[%s5 + $0xd8] sm:$0xf]
  %v94 = vld [vmem:[%s5 + $0xdc] sm:$0xf]
  %v95 = vld [vmem:[%s5 + $0xe0] sm:$0xf]
  %v96 = vld [vmem:[%s5 + $0xe4] sm:$0xf]
  %v97 = vld [vmem:[%s5 + $0xe8] sm:$0xf]
  %v98 = vld [vmem:[%s5 + $0xec] sm:$0xf]
  %v99 = vld [vmem:[%s5 + $0xf0] sm:$0xf]
  %v100 = vld [vmem:[%s5 + $0xf4] sm:$0xf]
  %v101 = vld [vmem:[%s5 + $0xf8] sm:$0xf]
  %v102 = vld [vmem:[%s5 + $0xfc] sm:$0xf]
  %v103 = vld [vmem:[%s5 + $0x100] sm:$0xf]
  %v104 = vld [vmem:[%s5 + $0x104] sm:$0xf]
  %v105 = vld [vmem:[%s5 + $0x108] sm:$0xf]
  %v106 = vld [vmem:[%s5 + $0x10c] sm:$0xf]
  %v107 = vld [vmem:[%s5 + $0x110] sm:$0xf]
  %v108 = vld [vmem:[%s5 + $0x114] sm:$0xf]
  %v109 = vld [vmem:[%s5 + $0x118] sm:$0xf]
  %v110 = vld [vmem:[%s5 + $0x11c] sm:$0xf]
  %v111 = vld [vmem:[%s6] sm:$0x1]
  %v113 = vperm.slane %v111, 0
  %v127 = vunpack.c.l.b16 %v27
  %v128 = vunpack.c.h.b16 %v27
  %v129 = vunpack.c.l.b16 %v28
  %v130 = vunpack.c.h.b16 %v28
  %v131 = vunpack.c.l.b16 %v29
  %v132 = vunpack.c.l.b16 %v30
  %v133 = vunpack.c.h.b16 %v30
  %v134 = vunpack.c.l.b16 %v31
  %v135 = vunpack.c.h.b16 %v31
  %v136 = vunpack.c.l.b16 %v32
  %v137 = vunpack.c.l.b16 %v33
  %v138 = vunpack.c.h.b16 %v33
  %v139 = vunpack.c.l.b16 %v34
  %v140 = vunpack.c.h.b16 %v34
  %v141 = vunpack.c.l.b16 %v35
  %v142 = vunpack.c.l.b16 %v36
  %v143 = vunpack.c.h.b16 %v36
  %v144 = vunpack.c.l.b16 %v37
  %v145 = vunpack.c.h.b16 %v37
  %v146 = vunpack.c.l.b16 %v38
  %v147 = vpack.c.b16 %v132, %v127
  %v148 = vpack.c.b16 %v133, %v128
  %v149 = vpack.c.b16 %v134, %v129
  %v150 = vpack.c.b16 %v135, %v130
  %v151 = vpack.c.b16 %v136, %v131
  %v152 = vpack.c.b16 %v142, %v137
  %v153 = vpack.c.b16 %v143, %v138
  %v154 = vpack.c.b16 %v144, %v139
  %v155 = vpack.c.b16 %v145, %v140
  %v156 = vpack.c.b16 %v146, %v141
  %v237 = vunpack.c.l.b16 %v39
  %v238 = vunpack.c.l.b16 %v40
  %v239 = vunpack.c.l.b16 %v41
  %v240 = vunpack.c.l.b16 %v42
  %v241 = vunpack.c.l.b16 %v43
  %v242 = vunpack.c.l.b16 %v44
  %v243 = vunpack.c.l.b16 %v45
  %v244 = vunpack.c.l.b16 %v46
  %v245 = vunpack.c.l.b16 %v47
  %v246 = vunpack.c.l.b16 %v48
  %v247 = vunpack.c.l.b16 %v49
  %v248 = vunpack.c.l.b16 %v50
  %v249 = vunpack.c.l.b16 %v51
  %v250 = vunpack.c.l.b16 %v52
  %v251 = vunpack.c.l.b16 %v53
  %v252 = vunpack.c.l.b16 %v54
  %v253 = vunpack.c.l.b16 %v55
  %v254 = vunpack.c.l.b16 %v56
  %v255 = vunpack.c.l.b16 %v57
  %v256 = vunpack.c.l.b16 %v58
  %v257 = vunpack.c.l.b16 %v59
  %v258 = vunpack.c.l.b16 %v60
  %v259 = vunpack.c.l.b16 %v61
  %v260 = vunpack.c.l.b16 %v62
  %v261 = vunpack.c.l.b16 %v63
  %v262 = vunpack.c.l.b16 %v64
  %v263 = vunpack.c.l.b16 %v65
  %v264 = vunpack.c.l.b16 %v66
  %v265 = vunpack.c.l.b16 %v67
  %v266 = vunpack.c.l.b16 %v68
  %v267 = vunpack.c.l.b16 %v69
  %v268 = vunpack.c.l.b16 %v70
  %v269 = vunpack.c.l.b16 %v71
  %v270 = vunpack.c.l.b16 %v72
  %v271 = vunpack.c.l.b16 %v73
  %v272 = vunpack.c.l.b16 %v74
  %v273 = vunpack.c.l.b16 %v75
  %v274 = vunpack.c.l.b16 %v76
  %v275 = vunpack.c.l.b16 %v77
  %v276 = vunpack.c.l.b16 %v78
  %v277 = vunpack.c.l.b16 %v79
  %v278 = vunpack.c.l.b16 %v80
  %v279 = vunpack.c.l.b16 %v81
  %v280 = vunpack.c.l.b16 %v82
  %v281 = vunpack.c.l.b16 %v83
  %v282 = vunpack.c.l.b16 %v84
  %v283 = vunpack.c.l.b16 %v85
  %v284 = vunpack.c.l.b16 %v86
  %v285 = vunpack.c.l.b16 %v87
  %v286 = vunpack.c.l.b16 %v88
  %v287 = vunpack.c.l.b16 %v89
  %v288 = vunpack.c.l.b16 %v90
  %v289 = vunpack.c.l.b16 %v91
  %v290 = vunpack.c.l.b16 %v92
  %v291 = vunpack.c.l.b16 %v93
  %v292 = vunpack.c.l.b16 %v94
  %v293 = vunpack.c.l.b16 %v95
  %v294 = vunpack.c.l.b16 %v96
  %v295 = vunpack.c.l.b16 %v97
  %v296 = vunpack.c.l.b16 %v98
  %v297 = vunpack.c.l.b16 %v99
  %v298 = vunpack.c.l.b16 %v100
  %v299 = vunpack.c.l.b16 %v101
  %v300 = vunpack.c.l.b16 %v102
  %v301 = vunpack.c.l.b16 %v103
  %v302 = vunpack.c.l.b16 %v104
  %v303 = vunpack.c.l.b16 %v105
  %v304 = vunpack.c.l.b16 %v106
  %v305 = vunpack.c.l.b16 %v107
  %v306 = vunpack.c.l.b16 %v108
  %v307 = vunpack.c.l.b16 %v109
  %v308 = vunpack.c.l.b16 %v110
  %v309 = vpack.c.b16 %v238, %v237
  %v310 = vpack.c.b16 %v240, %v239
  %v311 = vpack.c.b16 %v242, %v241
  %v312 = vpack.c.b16 %v244, %v243
  %v313 = vpack.c.b16 %v246, %v245
  %v314 = vpack.c.b16 %v248, %v247
  %v315 = vpack.c.b16 %v250, %v249
  %v316 = vpack.c.b16 %v252, %v251
  %v317 = vpack.c.b16 %v254, %v253
  %v318 = vpack.c.b16 %v256, %v255
  %v319 = vpack.c.b16 %v258, %v257
  %v320 = vpack.c.b16 %v260, %v259
  %v321 = vpack.c.b16 %v262, %v261
  %v322 = vpack.c.b16 %v264, %v263
  %v323 = vpack.c.b16 %v266, %v265
  %v324 = vpack.c.b16 %v268, %v267
  %v325 = vpack.c.b16 %v270, %v269
  %v326 = vpack.c.b16 %v272, %v271
  %v327 = vpack.c.b16 %v274, %v273
  %v328 = vpack.c.b16 %v276, %v275
  %v329 = vpack.c.b16 %v278, %v277
  %v330 = vpack.c.b16 %v280, %v279
  %v331 = vpack.c.b16 %v282, %v281
  %v332 = vpack.c.b16 %v284, %v283
  %v333 = vpack.c.b16 %v286, %v285
  %v334 = vpack.c.b16 %v288, %v287
  %v335 = vpack.c.b16 %v290, %v289
  %v336 = vpack.c.b16 %v292, %v291
  %v337 = vpack.c.b16 %v294, %v293
  %v338 = vpack.c.b16 %v296, %v295
  %v339 = vpack.c.b16 %v298, %v297
  %v340 = vpack.c.b16 %v300, %v299
  %v341 = vpack.c.b16 %v302, %v301
  %v342 = vpack.c.b16 %v304, %v303
  %v343 = vpack.c.b16 %v306, %v305
  %v344 = vpack.c.b16 %v308, %v307
  %vm381 = vcmask 523264
  %v383 = vsel %vm381, %v151, 0
  %v386 = vsel %vm381, %v156, 0
  %388 = vmatpush.bf16.msra.mxu0 %v316
  %389 = vmatpush.bf16.msra.mxu0 %v315
  %390 = vmatpush.bf16.msra.mxu0 %v314
  %391 = vmatpush.bf16.msra.mxu0 %v313
  %392 = vmatpush.bf16.msra.mxu0 %v312
  %393 = vmatpush.bf16.msra.mxu0 %v311
  %394 = vmatpush.bf16.msra.mxu0 %v310
  %395 = vmatpush.bf16.msra.mxu0 %v309
  %396 = vmatmul.bf16.gmra.mxu0 %v147
  %v397 = vpop.f32.mrf.mxu0
  %v398 = vadd.f32 %v113, %v397
  %v399 = vpop.f32.mrf.mxu0
  %v400 = vadd.f32 %v113, %v399
  %401 = vmatmul.bf16.gmra.mxu0 %v152
  %v402 = vpop.f32.mrf.mxu0
  %v403 = vadd.f32 %v113, %v402
  %v404 = vpop.f32.mrf.mxu0
  %v405 = vadd.f32 %v113, %v404
  %406 = vdwg.mxu0
  %407 = vmatpush.bf16.msra.mxu0 %v324
  %408 = vmatpush.bf16.msra.mxu0 %v323
  %409 = vmatpush.bf16.msra.mxu0 %v322
  %410 = vmatpush.bf16.msra.mxu0 %v321
  %411 = vmatpush.bf16.msra.mxu0 %v320
  %412 = vmatpush.bf16.msra.mxu0 %v319
  %413 = vmatpush.bf16.msra.mxu0 %v318
  %414 = vmatpush.bf16.msra.mxu0 %v317
  %415 = vmatmul.bf16.gmra.mxu0 %v148
  %v416 = vpop.f32.mrf.mxu0
  %v417 = vadd.f32 %v398, %v416
  %v418 = vpop.f32.mrf.mxu0
  %v419 = vadd.f32 %v400, %v418
  %420 = vmatmul.bf16.gmra.mxu0 %v153
  %v421 = vpop.f32.mrf.mxu0
  %v422 = vadd.f32 %v403, %v421
  %v423 = vpop.f32.mrf.mxu0
  %v424 = vadd.f32 %v405, %v423
  %425 = vdwg.mxu0
  %426 = vmatpush.bf16.msra.mxu0 %v332
  %427 = vmatpush.bf16.msra.mxu0 %v331
  %428 = vmatpush.bf16.msra.mxu0 %v330
  %429 = vmatpush.bf16.msra.mxu0 %v329
  %430 = vmatpush.bf16.msra.mxu0 %v328
  %431 = vmatpush.bf16.msra.mxu0 %v327
  %432 = vmatpush.bf16.msra.mxu0 %v326
  %433 = vmatpush.bf16.msra.mxu0 %v325
  %434 = vmatmul.bf16.gmra.mxu0 %v149
  %v435 = vpop.f32.mrf.mxu0
  %v436 = vadd.f32 %v417, %v435
  %v437 = vpop.f32.mrf.mxu0
  %v438 = vadd.f32 %v419, %v437
  %439 = vmatmul.bf16.gmra.mxu0 %v154
  %v440 = vpop.f32.mrf.mxu0
  %v441 = vadd.f32 %v422, %v440
  %v442 = vpop.f32.mrf.mxu0
  %v443 = vadd.f32 %v424, %v442
  %444 = vdwg.mxu0
  %445 = vmatpush.bf16.msra.mxu0 %v340
  %446 = vmatpush.bf16.msra.mxu0 %v339
  %447 = vmatpush.bf16.msra.mxu0 %v338
  %448 = vmatpush.bf16.msra.mxu0 %v337
  %449 = vmatpush.bf16.msra.mxu0 %v336
  %450 = vmatpush.bf16.msra.mxu0 %v335
  %451 = vmatpush.bf16.msra.mxu0 %v334
  %452 = vmatpush.bf16.msra.mxu0 %v333
  %453 = vmatmul.bf16.gmra.mxu0 %v150
  %v454 = vpop.f32.mrf.mxu0
  %v455 = vadd.f32 %v436, %v454
  %v456 = vpop.f32.mrf.mxu0
  %v457 = vadd.f32 %v438, %v456
  %458 = vmatmul.bf16.gmra.mxu0 %v155
  %v459 = vpop.f32.mrf.mxu0
  %v460 = vadd.f32 %v441, %v459
  %v461 = vpop.f32.mrf.mxu0
  %v462 = vadd.f32 %v443, %v461
  %463 = vdwg.mxu0
  %464 = vmatpush.bf16.msra.mxu0 0
  %465 = vmatpush.bf16.msra.mxu0 0
  %466 = vmatpush.bf16.msra.mxu0 0
  %467 = vmatpush.bf16.msra.mxu0 0
  %468 = vmatpush.bf16.msra.mxu0 %v344
  %469 = vmatpush.bf16.msra.mxu0 %v343
  %470 = vmatpush.bf16.msra.mxu0 %v342
  %471 = vmatpush.bf16.msra.mxu0 %v341
  %472 = vmatmul.bf16.gmra.mxu0 %v383
  %v473 = vpop.f32.mrf.mxu0
  %v474 = vadd.f32 %v455, %v473
  %v475 = vpop.f32.mrf.mxu0
  %v476 = vadd.f32 %v457, %v475
  %477 = vmatmul.bf16.gmra.mxu0 %v386
  %v478 = vpop.f32.mrf.mxu0
  %v479 = vadd.f32 %v460, %v478
  %v480 = vpop.f32.mrf.mxu0
  %v481 = vadd.f32 %v462, %v480
  %482 = vdwg.mxu0
  %v483 = vld [vmem:[%s1] sm:$0xf]
  %v484 = vld [vmem:[%s1 + $0x4] sm:$0xf]
  %v485 = vld [vmem:[%s1 + $0x8] sm:$0xf]
  %v486 = vld [vmem:[%s1 + $0xc] sm:$0xf]
  %v487 = vunpack.c.l.bf16 %v483
  %v488 = vunpack.c.l.bf16 %v484
  %v489 = vunpack.c.l.bf16 %v485
  %v490 = vunpack.c.l.bf16 %v486
  %v491 = vld [vmem:[%s2] sm:$0xf]
  %v492 = vld [vmem:[%s2 + $0x4] sm:$0xf]
  %v493 = vld [vmem:[%s2 + $0x8] sm:$0xf]
  %v494 = vld [vmem:[%s2 + $0xc] sm:$0xf]
  %v495 = vunpack.c.l.bf16 %v491
  %v496 = vunpack.c.l.bf16 %v492
  %v497 = vunpack.c.l.bf16 %v493
  %v498 = vunpack.c.l.bf16 %v494
  %v499 = vadd.f32 %v487, %v495
  %v500 = vadd.f32 %v488, %v496
  %v501 = vadd.f32 %v489, %v497
  %v502 = vadd.f32 %v490, %v498
  %v503 = vld [vmem:[%s3] sm:$0xf]
  %v504 = vld [vmem:[%s3 + $0x4] sm:$0xf]
  %v505 = vld [vmem:[%s3 + $0x8] sm:$0xf]
  %v506 = vld [vmem:[%s3 + $0xc] sm:$0xf]
  %v507 = vunpack.c.l.bf16 %v503
  %v508 = vunpack.c.l.bf16 %v504
  %v509 = vunpack.c.l.bf16 %v505
  %v510 = vunpack.c.l.bf16 %v506
  %v511 = vadd.f32 %v499, %v507
  %v512 = vadd.f32 %v500, %v508
  %v513 = vadd.f32 %v501, %v509
  %v514 = vadd.f32 %v502, %v510
  %v515 = vld [vmem:[%s4] sm:$0xf]
  %v516 = vld [vmem:[%s4 + $0x4] sm:$0xf]
  %v517 = vld [vmem:[%s4 + $0x8] sm:$0xf]
  %v518 = vld [vmem:[%s4 + $0xc] sm:$0xf]
  %v519 = vunpack.c.l.bf16 %v515
  %v520 = vunpack.c.l.bf16 %v516
  %v521 = vunpack.c.l.bf16 %v517
  %v522 = vunpack.c.l.bf16 %v518
  %v523 = vadd.f32 %v511, %v519
  %v524 = vadd.f32 %v512, %v520
  %v525 = vadd.f32 %v513, %v521
  %v526 = vadd.f32 %v514, %v522
  %v527 = vmul.f32 %v523, 0.25
  %v528 = vmul.f32 %v524, 0.25
  %v529 = vmul.f32 %v525, 0.25
  %v530 = vmul.f32 %v526, 0.25
  %v531 = vadd.f32 %v474, %v527
  %v532 = vadd.f32 %v476, %v528
  %v533 = vadd.f32 %v479, %v529
  %v534 = vadd.f32 %v481, %v530
  %v535 = vxor.u32 %v531, 2147483648
  %v536 = vxor.u32 %v532, 2147483648
  %v537 = vxor.u32 %v533, 2147483648
  %v538 = vxor.u32 %v534, 2147483648
  %v539 = vmul.f32 %v535, 1.442695
  %v540 = vpow.pop %v539
  %v541 = vmul.f32 %v536, 1.442695
  %v542 = vpow.pop %v541
  %v543 = vmul.f32 %v537, 1.442695
  %v544 = vpow.pop %v543
  %v545 = vmul.f32 %v538, 1.442695
  %v546 = vpow.pop %v545
  %v547 = vadd.f32 %v540, 1.0
  %v548 = vadd.f32 %v542, 1.0
  %v549 = vadd.f32 %v544, 1.0
  %v550 = vadd.f32 %v546, 1.0
  %v551 = vrcp.pop %v547
  %v552 = vmul.f32 %v547, %v551
  %v553 = vsub.f32 1.0, %v552
  %v554 = vmul.f32 %v551, %v553
  %v555 = vadd.f32 %v551, %v554
  %vm556 = vweird.f32 %v547
  %vm557 = vweird.f32 %v551
  %vm558 = vmor %vm556, %vm557
  %v559 = vsel %vm558, %v551, %v555
  %v560 = vand.u32 2147483647, %v547
  %vm561 = vcmp.eq.f32.partialorder %v560, 8.507059e+37
  %v562 = vand.u32 %v547, 2147483648
  %v563 = vor.u32 1.1754944e-38, %v562
  %v564 = vsel %vm561, %v563, %v559
  %v565 = vmul.f32 1.0, %v564
  %v566 = vrcp.pop %v548
  %v567 = vmul.f32 %v548, %v566
  %v568 = vsub.f32 1.0, %v567
  %v569 = vmul.f32 %v566, %v568
  %v570 = vadd.f32 %v566, %v569
  %vm571 = vweird.f32 %v548
  %vm572 = vweird.f32 %v566
  %vm573 = vmor %vm571, %vm572
  %v574 = vsel %vm573, %v566, %v570
  %v575 = vand.u32 2147483647, %v548
  %vm576 = vcmp.eq.f32.partialorder %v575, 8.507059e+37
  %v577 = vand.u32 %v548, 2147483648
  %v578 = vor.u32 1.1754944e-38, %v577
  %v579 = vsel %vm576, %v578, %v574
  %v580 = vmul.f32 1.0, %v579
  %v581 = vrcp.pop %v549
  %v582 = vmul.f32 %v549, %v581
  %v583 = vsub.f32 1.0, %v582
  %v584 = vmul.f32 %v581, %v583
  %v585 = vadd.f32 %v581, %v584
  %vm586 = vweird.f32 %v549
  %vm587 = vweird.f32 %v581
  %vm588 = vmor %vm586, %vm587
  %v589 = vsel %vm588, %v581, %v585
  %v590 = vand.u32 2147483647, %v549
  %vm591 = vcmp.eq.f32.partialorder %v590, 8.507059e+37
  %v592 = vand.u32 %v549, 2147483648
  %v593 = vor.u32 1.1754944e-38, %v592
  %v594 = vsel %vm591, %v593, %v589
  %v595 = vmul.f32 1.0, %v594
  %v596 = vrcp.pop %v550
  %v597 = vmul.f32 %v550, %v596
  %v598 = vsub.f32 1.0, %v597
  %v599 = vmul.f32 %v596, %v598
  %v600 = vadd.f32 %v596, %v599
  %vm601 = vweird.f32 %v550
  %vm602 = vweird.f32 %v596
  %vm603 = vmor %vm601, %vm602
  %v604 = vsel %vm603, %v596, %v600
  %v605 = vand.u32 2147483647, %v550
  %vm606 = vcmp.eq.f32.partialorder %v605, 8.507059e+37
  %v607 = vand.u32 %v550, 2147483648
  %v608 = vor.u32 1.1754944e-38, %v607
  %v609 = vsel %vm606, %v608, %v604
  %v610 = vmul.f32 1.0, %v609
  %v611 = vmul.f32 %v531, %v565
  %v612 = vmul.f32 %v532, %v580
  %v613 = vmul.f32 %v533, %v595
  %v614 = vmul.f32 %v534, %v610
  %v615 = vpack.c.bf16 %v611, %v611
  %v616 = vpack.c.bf16 %v612, %v612
  %v617 = vpack.c.bf16 %v613, %v613
  %v618 = vpack.c.bf16 %v614, %v614
  %vm619 = vcmask 519168
  %620 = vst.msk [vmem:[%s7] sm:$0xf] %vm619, %v615
  %621 = vst.msk [vmem:[%s7 + $0x4] sm:$0xf] %vm619, %v616
  %622 = vst.msk [vmem:[%s7 + $0x8] sm:$0xf] %vm619, %v617
  %623 = vst.msk [vmem:[%s7 + $0xc] sm:$0xf] %vm619, %v618
  // Predicated region
  $region30: #{resnet_forward.14} parent=0 // pred_check
    _
  $region31: #{resnet_forward.14} parent=0 // pred_check_branch
    %625 = sbr.rel (0) target = $region33
  $region32: #{resnet_forward.14} parent=0 // pred_region
    _
  $region33: #{resnet_forward.14} parent=0 // pred_fallthru
    _
  // Predicated region
  $region34: #{resnet_forward.14} parent=0 // pred_check
    _
  $region35: #{resnet_forward.14} parent=0 // pred_check_branch
    %627 = sbr.rel (0) target = $region37
  $region36: #{resnet_forward.14} parent=0 // pred_region
    _
  $region37: #{resnet_forward.14} parent=0 // pred_fallthru
    _

// kernel: resnet_forward.15
$region0: #{resnet_forward.15}
  #allocation0 [shape = 'u32[]', space=smem, size = 0x4, offset = 0x4, fixed_abs, tag = 'smem constant byte address 0x4 - core index']
  #allocation1 [shape = 'u32[72,128]{1,0:T(1,128)}', space=vmem, size = 0x9000, scoped, tag = 'internal scratch']
  %s0 = inlined_call_operand.vmem [shape: bf16[2,1024], index: 0, kind: input, shape index: {}]
  %s1 = inlined_call_operand.vmem [shape: bf16[1024,256], index: 1, kind: input, shape index: {}]
  %s2 = inlined_call_operand.vmem [shape: f32[1,256], index: 2, kind: input, shape index: {}]
  %s3 = inlined_call_operand.hbm [shape: f32[2,256], index: 3, kind: output, shape index: {}]
  %s4 = sld [smem:[#allocation0]]
  $region22: #{resnet_forward.15} parent=0
    _
  %s6 = ssub.s32 1, %s4
  %s7 = scalar_select 0, %s6, %s4
  $region1: #{resnet_forward.15} parent=0
    #allocation2 [shape = 'u8[2048]{0}', space=vmem, size = 0x800, scoped, tag = 'output window, operand 0, single buffered']
    #allocation3 [shape = 's32[1]{0}', space=sflag, size = 0x4, scoped, tag = 'scoped memory for resnet_forward.15']
    %8 = vsyncpa [#allocation3], 0
    // Predicated region
    $region2: #{resnet_forward.15} parent=1 // pred_check
      _
    $region3: #{resnet_forward.15} parent=1 // pred_check_branch
      %10 = sbr.rel (0) target = $region5
    $region4: #{resnet_forward.15} parent=1 // pred_region
      _
    $region5: #{resnet_forward.15} parent=1 // pred_fallthru
      _
    // Predicated region
    $region6: #{resnet_forward.15} parent=1 // pred_check
      _
    $region7: #{resnet_forward.15} parent=1 // pred_check_branch
      %12 = sbr.rel (0) target = $region9
    $region8: #{resnet_forward.15} parent=1 // pred_region
      _
    $region9: #{resnet_forward.15} parent=1 // pred_fallthru
      _
    // Predicated region
    $region10: #{resnet_forward.15} parent=1 // pred_check
      _
    $region11: #{resnet_forward.15} parent=1 // pred_check_branch
      %14 = sbr.rel (0) target = $region13
    $region12: #{resnet_forward.15} parent=1 // pred_region
      _
    $region13: #{resnet_forward.15} parent=1 // pred_fallthru
      _
    %v15 = vld [vmem:[%s0] sm:$0xff]
    %v16 = vld [vmem:[%s1] sm:$0xff]
    %v17 = vld [vmem:[%s1 + $0x8] sm:$0xff]
    %v18 = vld [vmem:[%s1 + $0x10] sm:$0xff]
    %v19 = vld [vmem:[%s1 + $0x18] sm:$0xff]
    %v20 = vld [vmem:[%s1 + $0x20] sm:$0xff]
    %v21 = vld [vmem:[%s1 + $0x28] sm:$0xff]
    %v22 = vld [vmem:[%s1 + $0x30] sm:$0xff]
    %v23 = vld [vmem:[%s1 + $0x38] sm:$0xff]
    %v24 = vld [vmem:[%s1 + $0x40] sm:$0xff]
    %v25 = vld [vmem:[%s1 + $0x48] sm:$0xff]
    %v26 = vld [vmem:[%s1 + $0x50] sm:$0xff]
    %v27 = vld [vmem:[%s1 + $0x58] sm:$0xff]
    %v28 = vld [vmem:[%s1 + $0x60] sm:$0xff]
    %v29 = vld [vmem:[%s1 + $0x68] sm:$0xff]
    %v30 = vld [vmem:[%s1 + $0x70] sm:$0xff]
    %v31 = vld [vmem:[%s1 + $0x78] sm:$0xff]
    %v32 = vld [vmem:[%s1 + $0x80] sm:$0xff]
    %v33 = vld [vmem:[%s1 + $0x88] sm:$0xff]
    %v34 = vld [vmem:[%s1 + $0x90] sm:$0xff]
    %v35 = vld [vmem:[%s1 + $0x98] sm:$0xff]
    %v36 = vld [vmem:[%s1 + $0xa0] sm:$0xff]
    %v37 = vld [vmem:[%s1 + $0xa8] sm:$0xff]
    %v38 = vld [vmem:[%s1 + $0xb0] sm:$0xff]
    %v39 = vld [vmem:[%s1 + $0xb8] sm:$0xff]
    %v40 = vld [vmem:[%s1 + $0xc0] sm:$0xff]
    %v41 = vld [vmem:[%s1 + $0xc8] sm:$0xff]
    %v42 = vld [vmem:[%s1 + $0xd0] sm:$0xff]
    %v43 = vld [vmem:[%s1 + $0xd8] sm:$0xff]
    %v44 = vld [vmem:[%s1 + $0xe0] sm:$0xff]
    %v45 = vld [vmem:[%s1 + $0xe8] sm:$0xff]
    %v46 = vld [vmem:[%s1 + $0xf0] sm:$0xff]
    %v47 = vld [vmem:[%s1 + $0xf8] sm:$0xff]
    %v48 = vld [vmem:[%s1 + $0x100] sm:$0xff]
    %v49 = vld [vmem:[%s1 + $0x108] sm:$0xff]
    %v50 = vld [vmem:[%s1 + $0x110] sm:$0xff]
    %v51 = vld [vmem:[%s1 + $0x118] sm:$0xff]
    %v52 = vld [vmem:[%s1 + $0x120] sm:$0xff]
    %v53 = vld [vmem:[%s1 + $0x128] sm:$0xff]
    %v54 = vld [vmem:[%s1 + $0x130] sm:$0xff]
    %v55 = vld [vmem:[%s1 + $0x138] sm:$0xff]
    %v56 = vld [vmem:[%s1 + $0x140] sm:$0xff]
    %v57 = vld [vmem:[%s1 + $0x148] sm:$0xff]
    %v58 = vld [vmem:[%s1 + $0x150] sm:$0xff]
    %v59 = vld [vmem:[%s1 + $0x158] sm:$0xff]
    %v60 = vld [vmem:[%s1 + $0x160] sm:$0xff]
    %v61 = vld [vmem:[%s1 + $0x168] sm:$0xff]
    %v62 = vld [vmem:[%s1 + $0x170] sm:$0xff]
    %v63 = vld [vmem:[%s1 + $0x178] sm:$0xff]
    %v64 = vld [vmem:[%s1 + $0x180] sm:$0xff]
    %v65 = vld [vmem:[%s1 + $0x188] sm:$0xff]
    %v66 = vld [vmem:[%s1 + $0x190] sm:$0xff]
    %v67 = vld [vmem:[%s1 + $0x198] sm:$0xff]
    %v68 = vld [vmem:[%s1 + $0x1a0] sm:$0xff]
    %v69 = vld [vmem:[%s1 + $0x1a8] sm:$0xff]
    %v70 = vld [vmem:[%s1 + $0x1b0] sm:$0xff]
    %v71 = vld [vmem:[%s1 + $0x1b8] sm:$0xff]
    %v72 = vld [vmem:[%s1 + $0x1c0] sm:$0xff]
    %v73 = vld [vmem:[%s1 + $0x1c8] sm:$0xff]
    %v74 = vld [vmem:[%s1 + $0x1d0] sm:$0xff]
    %v75 = vld [vmem:[%s1 + $0x1d8] sm:$0xff]
    %v76 = vld [vmem:[%s1 + $0x1e0] sm:$0xff]
    %v77 = vld [vmem:[%s1 + $0x1e8] sm:$0xff]
    %v78 = vld [vmem:[%s1 + $0x1f0] sm:$0xff]
    %v79 = vld [vmem:[%s1 + $0x1f8] sm:$0xff]
    %v80 = vld [vmem:[%s1 + $0x200] sm:$0xff]
    %v81 = vld [vmem:[%s1 + $0x208] sm:$0xff]
    %v82 = vld [vmem:[%s1 + $0x210] sm:$0xff]
    %v83 = vld [vmem:[%s1 + $0x218] sm:$0xff]
    %v84 = vld [vmem:[%s1 + $0x220] sm:$0xff]
    %v85 = vld [vmem:[%s1 + $0x228] sm:$0xff]
    %v86 = vld [vmem:[%s1 + $0x230] sm:$0xff]
    %v87 = vld [vmem:[%s1 + $0x238] sm:$0xff]
    %v88 = vld [vmem:[%s1 + $0x240] sm:$0xff]
    %v89 = vld [vmem:[%s1 + $0x248] sm:$0xff]
    %v90 = vld [vmem:[%s1 + $0x250] sm:$0xff]
    %v91 = vld [vmem:[%s1 + $0x258] sm:$0xff]
    %v92 = vld [vmem:[%s1 + $0x260] sm:$0xff]
    %v93 = vld [vmem:[%s1 + $0x268] sm:$0xff]
    %v94 = vld [vmem:[%s1 + $0x270] sm:$0xff]
    %v95 = vld [vmem:[%s1 + $0x278] sm:$0xff]
    %v96 = vld [vmem:[%s1 + $0x280] sm:$0xff]
    %v97 = vld [vmem:[%s1 + $0x288] sm:$0xff]
    %v98 = vld [vmem:[%s1 + $0x290] sm:$0xff]
    %v99 = vld [vmem:[%s1 + $0x298] sm:$0xff]
    %v100 = vld [vmem:[%s1 + $0x2a0] sm:$0xff]
    %v101 = vld [vmem:[%s1 + $0x2a8] sm:$0xff]
    %v102 = vld [vmem:[%s1 + $0x2b0] sm:$0xff]
    %v103 = vld [vmem:[%s1 + $0x2b8] sm:$0xff]
    %v104 = vld [vmem:[%s1 + $0x2c0] sm:$0xff]
    %v105 = vld [vmem:[%s1 + $0x2c8] sm:$0xff]
    %v106 = vld [vmem:[%s1 + $0x2d0] sm:$0xff]
    %v107 = vld [vmem:[%s1 + $0x2d8] sm:$0xff]
    %v108 = vld [vmem:[%s1 + $0x2e0] sm:$0xff]
    %v109 = vld [vmem:[%s1 + $0x2e8] sm:$0xff]
    %v110 = vld [vmem:[%s1 + $0x2f0] sm:$0xff]
    %v111 = vld [vmem:[%s1 + $0x2f8] sm:$0xff]
    %v112 = vld [vmem:[%s1 + $0x300] sm:$0xff]
    %v113 = vld [vmem:[%s1 + $0x308] sm:$0xff]
    %v114 = vld [vmem:[%s1 + $0x310] sm:$0xff]
    %v115 = vld [vmem:[%s1 + $0x318] sm:$0xff]
    %v116 = vld [vmem:[%s1 + $0x320] sm:$0xff]
    %v117 = vld [vmem:[%s1 + $0x328] sm:$0xff]
    %v118 = vld [vmem:[%s1 + $0x330] sm:$0xff]
    %v119 = vld [vmem:[%s1 + $0x338] sm:$0xff]
    %v120 = vld [vmem:[%s1 + $0x340] sm:$0xff]
    %v121 = vld [vmem:[%s1 + $0x348] sm:$0xff]
    %v122 = vld [vmem:[%s1 + $0x350] sm:$0xff]
    %v123 = vld [vmem:[%s1 + $0x358] sm:$0xff]
    %v124 = vld [vmem:[%s1 + $0x360] sm:$0xff]
    %v125 = vld [vmem:[%s1 + $0x368] sm:$0xff]
    %v126 = vld [vmem:[%s1 + $0x370] sm:$0xff]
    %v127 = vld [vmem:[%s1 + $0x378] sm:$0xff]
    %v128 = vld [vmem:[%s1 + $0x380] sm:$0xff]
    %v129 = vld [vmem:[%s1 + $0x388] sm:$0xff]
    %v130 = vld [vmem:[%s1 + $0x390] sm:$0xff]
    %v131 = vld [vmem:[%s1 + $0x398] sm:$0xff]
    %v132 = vld [vmem:[%s1 + $0x3a0] sm:$0xff]
    %v133 = vld [vmem:[%s1 + $0x3a8] sm:$0xff]
    %v134 = vld [vmem:[%s1 + $0x3b0] sm:$0xff]
    %v135 = vld [vmem:[%s1 + $0x3b8] sm:$0xff]
    %v136 = vld [vmem:[%s1 + $0x3c0] sm:$0xff]
    %v137 = vld [vmem:[%s1 + $0x3c8] sm:$0xff]
    %v138 = vld [vmem:[%s1 + $0x3d0] sm:$0xff]
    %v139 = vld [vmem:[%s1 + $0x3d8] sm:$0xff]
    %v140 = vld [vmem:[%s1 + $0x3e0] sm:$0xff]
    %v141 = vld [vmem:[%s1 + $0x3e8] sm:$0xff]
    %v142 = vld [vmem:[%s1 + $0x3f0] sm:$0xff]
    %v143 = vld [vmem:[%s1 + $0x3f8] sm:$0xff]
    %v144 = vld [vmem:[%s2] sm:$0x3]
    %v146 = vperm.slane %v144, 0
    %v147 = vperm.slane %v144, 1
    %151 = vst [vmem:[#allocation1] ss:$9 sm:$0xff] %v15
    %v152 = vld [vmem:[#allocation1] sm:$0xff]
    %v153 = vld [vmem:[#allocation1 + $0x9] sm:$0xff]
    %v154 = vld [vmem:[#allocation1 + $0x12] sm:$0xff]
    %v155 = vld [vmem:[#allocation1 + $0x1b] sm:$0xff]
    %v156 = vld [vmem:[#allocation1 + $0x24] sm:$0xff]
    %v157 = vld [vmem:[#allocation1 + $0x2d] sm:$0xff]
    %v158 = vld [vmem:[#allocation1 + $0x36] sm:$0xff]
    %v159 = vld [vmem:[#allocation1 + $0x3f] sm:$0xff]
    %v296 = vunpack.c.l.b16 %v16
    %v297 = vunpack.c.h.b16 %v16
    %v298 = vunpack.c.l.b16 %v17
    %v299 = vunpack.c.h.b16 %v17
    %v300 = vunpack.c.l.b16 %v18
    %v301 = vunpack.c.h.b16 %v18
    %v302 = vunpack.c.l.b16 %v19
    %v303 = vunpack.c.h.b16 %v19
    %v304 = vunpack.c.l.b16 %v20
    %v305 = vunpack.c.h.b16 %v20
    %v306 = vunpack.c.l.b16 %v21
    %v307 = vunpack.c.h.b16 %v21
    %v308 = vunpack.c.l.b16 %v22
    %v309 = vunpack.c.h.b16 %v22
    %v310 = vunpack.c.l.b16 %v23
    %v311 = vunpack.c.h.b16 %v23
    %v312 = vunpack.c.l.b16 %v24
    %v313 = vunpack.c.h.b16 %v24
    %v314 = vunpack.c.l.b16 %v25
    %v315 = vunpack.c.h.b16 %v25
    %v316 = vunpack.c.l.b16 %v26
    %v317 = vunpack.c.h.b16 %v26
    %v318 = vunpack.c.l.b16 %v27
    %v319 = vunpack.c.h.b16 %v27
    %v320 = vunpack.c.l.b16 %v28
    %v321 = vunpack.c.h.b16 %v28
    %v322 = vunpack.c.l.b16 %v29
    %v323 = vunpack.c.h.b16 %v29
    %v324 = vunpack.c.l.b16 %v30
    %v325 = vunpack.c.h.b16 %v30
    %v326 = vunpack.c.l.b16 %v31
    %v327 = vunpack.c.h.b16 %v31
    %v328 = vunpack.c.l.b16 %v32
    %v329 = vunpack.c.h.b16 %v32
    %v330 = vunpack.c.l.b16 %v33
    %v331 = vunpack.c.h.b16 %v33
    %v332 = vunpack.c.l.b16 %v34
    %v333 = vunpack.c.h.b16 %v34
    %v334 = vunpack.c.l.b16 %v35
    %v335 = vunpack.c.h.b16 %v35
    %v336 = vunpack.c.l.b16 %v36
    %v337 = vunpack.c.h.b16 %v36
    %v338 = vunpack.c.l.b16 %v37
    %v339 = vunpack.c.h.b16 %v37
    %v340 = vunpack.c.l.b16 %v38
    %v341 = vunpack.c.h.b16 %v38
    %v342 = vunpack.c.l.b16 %v39
    %v343 = vunpack.c.h.b16 %v39
    %v344 = vunpack.c.l.b16 %v40
    %v345 = vunpack.c.h.b16 %v40
    %v346 = vunpack.c.l.b16 %v41
    %v347 = vunpack.c.h.b16 %v41
    %v348 = vunpack.c.l.b16 %v42
    %v349 = vunpack.c.h.b16 %v42
    %v350 = vunpack.c.l.b16 %v43
    %v351 = vunpack.c.h.b16 %v43
    %v352 = vunpack.c.l.b16 %v44
    %v353 = vunpack.c.h.b16 %v44
    %v354 = vunpack.c.l.b16 %v45
    %v355 = vunpack.c.h.b16 %v45
    %v356 = vunpack.c.l.b16 %v46
    %v357 = vunpack.c.h.b16 %v46
    %v358 = vunpack.c.l.b16 %v47
    %v359 = vunpack.c.h.b16 %v47
    %v360 = vunpack.c.l.b16 %v48
    %v361 = vunpack.c.h.b16 %v48
    %v362 = vunpack.c.l.b16 %v49
    %v363 = vunpack.c.h.b16 %v49
    %v364 = vunpack.c.l.b16 %v50
    %v365 = vunpack.c.h.b16 %v50
    %v366 = vunpack.c.l.b16 %v51
    %v367 = vunpack.c.h.b16 %v51
    %v368 = vunpack.c.l.b16 %v52
    %v369 = vunpack.c.h.b16 %v52
    %v370 = vunpack.c.l.b16 %v53
    %v371 = vunpack.c.h.b16 %v53
    %v372 = vunpack.c.l.b16 %v54
    %v373 = vunpack.c.h.b16 %v54
    %v374 = vunpack.c.l.b16 %v55
    %v375 = vunpack.c.h.b16 %v55
    %v376 = vunpack.c.l.b16 %v56
    %v377 = vunpack.c.h.b16 %v56
    %v378 = vunpack.c.l.b16 %v57
    %v379 = vunpack.c.h.b16 %v57
    %v380 = vunpack.c.l.b16 %v58
    %v381 = vunpack.c.h.b16 %v58
    %v382 = vunpack.c.l.b16 %v59
    %v383 = vunpack.c.h.b16 %v59
    %v384 = vunpack.c.l.b16 %v60
    %v385 = vunpack.c.h.b16 %v60
    %v386 = vunpack.c.l.b16 %v61
    %v387 = vunpack.c.h.b16 %v61
    %v388 = vunpack.c.l.b16 %v62
    %v389 = vunpack.c.h.b16 %v62
    %v390 = vunpack.c.l.b16 %v63
    %v391 = vunpack.c.h.b16 %v63
    %v392 = vunpack.c.l.b16 %v64
    %v393 = vunpack.c.h.b16 %v64
    %v394 = vunpack.c.l.b16 %v65
    %v395 = vunpack.c.h.b16 %v65
    %v396 = vunpack.c.l.b16 %v66
    %v397 = vunpack.c.h.b16 %v66
    %v398 = vunpack.c.l.b16 %v67
    %v399 = vunpack.c.h.b16 %v67
    %v400 = vunpack.c.l.b16 %v68
    %v401 = vunpack.c.h.b16 %v68
    %v402 = vunpack.c.l.b16 %v69
    %v403 = vunpack.c.h.b16 %v69
    %v404 = vunpack.c.l.b16 %v70
    %v405 = vunpack.c.h.b16 %v70
    %v406 = vunpack.c.l.b16 %v71
    %v407 = vunpack.c.h.b16 %v71
    %v408 = vunpack.c.l.b16 %v72
    %v409 = vunpack.c.h.b16 %v72
    %v410 = vunpack.c.l.b16 %v73
    %v411 = vunpack.c.h.b16 %v73
    %v412 = vunpack.c.l.b16 %v74
    %v413 = vunpack.c.h.b16 %v74
    %v414 = vunpack.c.l.b16 %v75
    %v415 = vunpack.c.h.b16 %v75
    %v416 = vunpack.c.l.b16 %v76
    %v417 = vunpack.c.h.b16 %v76
    %v418 = vunpack.c.l.b16 %v77
    %v419 = vunpack.c.h.b16 %v77
    %v420 = vunpack.c.l.b16 %v78
    %v421 = vunpack.c.h.b16 %v78
    %v422 = vunpack.c.l.b16 %v79
    %v423 = vunpack.c.h.b16 %v79
    %v424 = vunpack.c.l.b16 %v80
    %v425 = vunpack.c.h.b16 %v80
    %v426 = vunpack.c.l.b16 %v81
    %v427 = vunpack.c.h.b16 %v81
    %v428 = vunpack.c.l.b16 %v82
    %v429 = vunpack.c.h.b16 %v82
    %v430 = vunpack.c.l.b16 %v83
    %v431 = vunpack.c.h.b16 %v83
    %v432 = vunpack.c.l.b16 %v84
    %v433 = vunpack.c.h.b16 %v84
    %v434 = vunpack.c.l.b16 %v85
    %v435 = vunpack.c.h.b16 %v85
    %v436 = vunpack.c.l.b16 %v86
    %v437 = vunpack.c.h.b16 %v86
    %v438 = vunpack.c.l.b16 %v87
    %v439 = vunpack.c.h.b16 %v87
    %v440 = vunpack.c.l.b16 %v88
    %v441 = vunpack.c.h.b16 %v88
    %v442 = vunpack.c.l.b16 %v89
    %v443 = vunpack.c.h.b16 %v89
    %v444 = vunpack.c.l.b16 %v90
    %v445 = vunpack.c.h.b16 %v90
    %v446 = vunpack.c.l.b16 %v91
    %v447 = vunpack.c.h.b16 %v91
    %v448 = vunpack.c.l.b16 %v92
    %v449 = vunpack.c.h.b16 %v92
    %v450 = vunpack.c.l.b16 %v93
    %v451 = vunpack.c.h.b16 %v93
    %v452 = vunpack.c.l.b16 %v94
    %v453 = vunpack.c.h.b16 %v94
    %v454 = vunpack.c.l.b16 %v95
    %v455 = vunpack.c.h.b16 %v95
    %v456 = vunpack.c.l.b16 %v96
    %v457 = vunpack.c.h.b16 %v96
    %v458 = vunpack.c.l.b16 %v97
    %v459 = vunpack.c.h.b16 %v97
    %v460 = vunpack.c.l.b16 %v98
    %v461 = vunpack.c.h.b16 %v98
    %v462 = vunpack.c.l.b16 %v99
    %v463 = vunpack.c.h.b16 %v99
    %v464 = vunpack.c.l.b16 %v100
    %v465 = vunpack.c.h.b16 %v100
    %v466 = vunpack.c.l.b16 %v101
    %v467 = vunpack.c.h.b16 %v101
    %v468 = vunpack.c.l.b16 %v102
    %v469 = vunpack.c.h.b16 %v102
    %v470 = vunpack.c.l.b16 %v103
    %v471 = vunpack.c.h.b16 %v103
    %v472 = vunpack.c.l.b16 %v104
    %v473 = vunpack.c.h.b16 %v104
    %v474 = vunpack.c.l.b16 %v105
    %v475 = vunpack.c.h.b16 %v105
    %v476 = vunpack.c.l.b16 %v106
    %v477 = vunpack.c.h.b16 %v106
    %v478 = vunpack.c.l.b16 %v107
    %v479 = vunpack.c.h.b16 %v107
    %v480 = vunpack.c.l.b16 %v108
    %v481 = vunpack.c.h.b16 %v108
    %v482 = vunpack.c.l.b16 %v109
    %v483 = vunpack.c.h.b16 %v109
    %v484 = vunpack.c.l.b16 %v110
    %v485 = vunpack.c.h.b16 %v110
    %v486 = vunpack.c.l.b16 %v111
    %v487 = vunpack.c.h.b16 %v111
    %v488 = vunpack.c.l.b16 %v112
    %v489 = vunpack.c.h.b16 %v112
    %v490 = vunpack.c.l.b16 %v113
    %v491 = vunpack.c.h.b16 %v113
    %v492 = vunpack.c.l.b16 %v114
    %v493 = vunpack.c.h.b16 %v114
    %v494 = vunpack.c.l.b16 %v115
    %v495 = vunpack.c.h.b16 %v115
    %v496 = vunpack.c.l.b16 %v116
    %v497 = vunpack.c.h.b16 %v116
    %v498 = vunpack.c.l.b16 %v117
    %v499 = vunpack.c.h.b16 %v117
    %v500 = vunpack.c.l.b16 %v118
    %v501 = vunpack.c.h.b16 %v118
    %v502 = vunpack.c.l.b16 %v119
    %v503 = vunpack.c.h.b16 %v119
    %v504 = vunpack.c.l.b16 %v120
    %v505 = vunpack.c.h.b16 %v120
    %v506 = vunpack.c.l.b16 %v121
    %v507 = vunpack.c.h.b16 %v121
    %v508 = vunpack.c.l.b16 %v122
    %v509 = vunpack.c.h.b16 %v122
    %v510 = vunpack.c.l.b16 %v123
    %v511 = vunpack.c.h.b16 %v123
    %v512 = vunpack.c.l.b16 %v124
    %v513 = vunpack.c.h.b16 %v124
    %v514 = vunpack.c.l.b16 %v125
    %v515 = vunpack.c.h.b16 %v125
    %v516 = vunpack.c.l.b16 %v126
    %v517 = vunpack.c.h.b16 %v126
    %v518 = vunpack.c.l.b16 %v127
    %v519 = vunpack.c.h.b16 %v127
    %v520 = vunpack.c.l.b16 %v128
    %v521 = vunpack.c.h.b16 %v128
    %v522 = vunpack.c.l.b16 %v129
    %v523 = vunpack.c.h.b16 %v129
    %v524 = vunpack.c.l.b16 %v130
    %v525 = vunpack.c.h.b16 %v130
    %v526 = vunpack.c.l.b16 %v131
    %v527 = vunpack.c.h.b16 %v131
    %v528 = vunpack.c.l.b16 %v132
    %v529 = vunpack.c.h.b16 %v132
    %v530 = vunpack.c.l.b16 %v133
    %v531 = vunpack.c.h.b16 %v133
    %v532 = vunpack.c.l.b16 %v134
    %v533 = vunpack.c.h.b16 %v134
    %v534 = vunpack.c.l.b16 %v135
    %v535 = vunpack.c.h.b16 %v135
    %v536 = vunpack.c.l.b16 %v136
    %v537 = vunpack.c.h.b16 %v136
    %v538 = vunpack.c.l.b16 %v137
    %v539 = vunpack.c.h.b16 %v137
    %v540 = vunpack.c.l.b16 %v138
    %v541 = vunpack.c.h.b16 %v138
    %v542 = vunpack.c.l.b16 %v139
    %v543 = vunpack.c.h.b16 %v139
    %v544 = vunpack.c.l.b16 %v140
    %v545 = vunpack.c.h.b16 %v140
    %v546 = vunpack.c.l.b16 %v141
    %v547 = vunpack.c.h.b16 %v141
    %v548 = vunpack.c.l.b16 %v142
    %v549 = vunpack.c.h.b16 %v142
    %v550 = vunpack.c.l.b16 %v143
    %v551 = vunpack.c.h.b16 %v143
    %v552 = vpack.c.b16 %v298, %v296
    %v553 = vpack.c.b16 %v299, %v297
    %v554 = vpack.c.b16 %v302, %v300
    %v555 = vpack.c.b16 %v303, %v301
    %v556 = vpack.c.b16 %v306, %v304
    %v557 = vpack.c.b16 %v307, %v305
    %v558 = vpack.c.b16 %v310, %v308
    %v559 = vpack.c.b16 %v311, %v309
    %v560 = vpack.c.b16 %v314, %v312
    %v561 = vpack.c.b16 %v315, %v313
    %v562 = vpack.c.b16 %v318, %v316
    %v563 = vpack.c.b16 %v319, %v317
    %v564 = vpack.c.b16 %v322, %v320
    %v565 = vpack.c.b16 %v323, %v321
    %v566 = vpack.c.b16 %v326, %v324
    %v567 = vpack.c.b16 %v327, %v325
    %v568 = vpack.c.b16 %v330, %v328
    %v569 = vpack.c.b16 %v331, %v329
    %v570 = vpack.c.b16 %v334, %v332
    %v571 = vpack.c.b16 %v335, %v333
    %v572 = vpack.c.b16 %v338, %v336
    %v573 = vpack.c.b16 %v339, %v337
    %v574 = vpack.c.b16 %v342, %v340
    %v575 = vpack.c.b16 %v343, %v341
    %v576 = vpack.c.b16 %v346, %v344
    %v577 = vpack.c.b16 %v347, %v345
    %v578 = vpack.c.b16 %v350, %v348
    %v579 = vpack.c.b16 %v351, %v349
    %v580 = vpack.c.b16 %v354, %v352
    %v581 = vpack.c.b16 %v355, %v353
    %v582 = vpack.c.b16 %v358, %v356
    %v583 = vpack.c.b16 %v359, %v357
    %v584 = vpack.c.b16 %v362, %v360
    %v585 = vpack.c.b16 %v363, %v361
    %v586 = vpack.c.b16 %v366, %v364
    %v587 = vpack.c.b16 %v367, %v365
    %v588 = vpack.c.b16 %v370, %v368
    %v589 = vpack.c.b16 %v371, %v369
    %v590 = vpack.c.b16 %v374, %v372
    %v591 = vpack.c.b16 %v375, %v373
    %v592 = vpack.c.b16 %v378, %v376
    %v593 = vpack.c.b16 %v379, %v377
    %v594 = vpack.c.b16 %v382, %v380
    %v595 = vpack.c.b16 %v383, %v381
    %v596 = vpack.c.b16 %v386, %v384
    %v597 = vpack.c.b16 %v387, %v385
    %v598 = vpack.c.b16 %v390, %v388
    %v599 = vpack.c.b16 %v391, %v389
    %v600 = vpack.c.b16 %v394, %v392
    %v601 = vpack.c.b16 %v395, %v393
    %v602 = vpack.c.b16 %v398, %v396
    %v603 = vpack.c.b16 %v399, %v397
    %v604 = vpack.c.b16 %v402, %v400
    %v605 = vpack.c.b16 %v403, %v401
    %v606 = vpack.c.b16 %v406, %v404
    %v607 = vpack.c.b16 %v407, %v405
    %v608 = vpack.c.b16 %v410, %v408
    %v609 = vpack.c.b16 %v411, %v409
    %v610 = vpack.c.b16 %v414, %v412
    %v611 = vpack.c.b16 %v415, %v413
    %v612 = vpack.c.b16 %v418, %v416
    %v613 = vpack.c.b16 %v419, %v417
    %v614 = vpack.c.b16 %v422, %v420
    %v615 = vpack.c.b16 %v423, %v421
    %v616 = vpack.c.b16 %v426, %v424
    %v617 = vpack.c.b16 %v427, %v425
    %v618 = vpack.c.b16 %v430, %v428
    %v619 = vpack.c.b16 %v431, %v429
    %v620 = vpack.c.b16 %v434, %v432
    %v621 = vpack.c.b16 %v435, %v433
    %v622 = vpack.c.b16 %v438, %v436
    %v623 = vpack.c.b16 %v439, %v437
    %v624 = vpack.c.b16 %v442, %v440
    %v625 = vpack.c.b16 %v443, %v441
    %v626 = vpack.c.b16 %v446, %v444
    %v627 = vpack.c.b16 %v447, %v445
    %v628 = vpack.c.b16 %v450, %v448
    %v629 = vpack.c.b16 %v451, %v449
    %v630 = vpack.c.b16 %v454, %v452
    %v631 = vpack.c.b16 %v455, %v453
    %v632 = vpack.c.b16 %v458, %v456
    %v633 = vpack.c.b16 %v459, %v457
    %v634 = vpack.c.b16 %v462, %v460
    %v635 = vpack.c.b16 %v463, %v461
    %v636 = vpack.c.b16 %v466, %v464
    %v637 = vpack.c.b16 %v467, %v465
    %v638 = vpack.c.b16 %v470, %v468
    %v639 = vpack.c.b16 %v471, %v469
    %v640 = vpack.c.b16 %v474, %v472
    %v641 = vpack.c.b16 %v475, %v473
    %v642 = vpack.c.b16 %v478, %v476
    %v643 = vpack.c.b16 %v479, %v477
    %v644 = vpack.c.b16 %v482, %v480
    %v645 = vpack.c.b16 %v483, %v481
    %v646 = vpack.c.b16 %v486, %v484
    %v647 = vpack.c.b16 %v487, %v485
    %v648 = vpack.c.b16 %v490, %v488
    %v649 = vpack.c.b16 %v491, %v489
    %v650 = vpack.c.b16 %v494, %v492
    %v651 = vpack.c.b16 %v495, %v493
    %v652 = vpack.c.b16 %v498, %v496
    %v653 = vpack.c.b16 %v499, %v497
    %v654 = vpack.c.b16 %v502, %v500
    %v655 = vpack.c.b16 %v503, %v501
    %v656 = vpack.c.b16 %v506, %v504
    %v657 = vpack.c.b16 %v507, %v505
    %v658 = vpack.c.b16 %v510, %v508
    %v659 = vpack.c.b16 %v511, %v509
    %v660 = vpack.c.b16 %v514, %v512
    %v661 = vpack.c.b16 %v515, %v513
    %v662 = vpack.c.b16 %v518, %v516
    %v663 = vpack.c.b16 %v519, %v517
    %v664 = vpack.c.b16 %v522, %v520
    %v665 = vpack.c.b16 %v523, %v521
    %v666 = vpack.c.b16 %v526, %v524
    %v667 = vpack.c.b16 %v527, %v525
    %v668 = vpack.c.b16 %v530, %v528
    %v669 = vpack.c.b16 %v531, %v529
    %v670 = vpack.c.b16 %v534, %v532
    %v671 = vpack.c.b16 %v535, %v533
    %v672 = vpack.c.b16 %v538, %v536
    %v673 = vpack.c.b16 %v539, %v537
    %v674 = vpack.c.b16 %v542, %v540
    %v675 = vpack.c.b16 %v543, %v541
    %v676 = vpack.c.b16 %v546, %v544
    %v677 = vpack.c.b16 %v547, %v545
    %v678 = vpack.c.b16 %v550, %v548
    %v679 = vpack.c.b16 %v551, %v549
    %808 = vmatpush.bf16.msra.mxu0 %v566
    %809 = vmatpush.bf16.msra.mxu0 %v564
    %810 = vmatpush.bf16.msra.mxu0 %v562
    %811 = vmatpush.bf16.msra.mxu0 %v560
    %812 = vmatpush.bf16.msra.mxu0 %v558
    %813 = vmatpush.bf16.msra.mxu0 %v556
    %814 = vmatpush.bf16.msra.mxu0 %v554
    %815 = vmatpush.bf16.msra.mxu0 %v552
    %816 = vmatmul.bf16.gmra.mxu0 %v152
    %v817 = vpop.f32.mrf.mxu0
    %v818 = vadd.f32 %v146, %v817
    %v819 = vpop.f32.mrf.mxu0
    %820 = vdwg.mxu0
    %821 = vmatpush.bf16.msra.mxu0 %v582
    %822 = vmatpush.bf16.msra.mxu0 %v580
    %823 = vmatpush.bf16.msra.mxu0 %v578
    %824 = vmatpush.bf16.msra.mxu0 %v576
    %825 = vmatpush.bf16.msra.mxu0 %v574
    %826 = vmatpush.bf16.msra.mxu0 %v572
    %827 = vmatpush.bf16.msra.mxu0 %v570
    %828 = vmatpush.bf16.msra.mxu0 %v568
    %829 = vmatmul.bf16.gmra.mxu0 %v153
    %v830 = vpop.f32.mrf.mxu0
    %v831 = vadd.f32 %v818, %v830
    %v832 = vpop.f32.mrf.mxu0
    %833 = vdwg.mxu0
    %834 = vmatpush.bf16.msra.mxu0 %v598
    %835 = vmatpush.bf16.msra.mxu0 %v596
    %836 = vmatpush.bf16.msra.mxu0 %v594
    %837 = vmatpush.bf16.msra.mxu0 %v592
    %838 = vmatpush.bf16.msra.mxu0 %v590
    %839 = vmatpush.bf16.msra.mxu0 %v588
    %840 = vmatpush.bf16.msra.mxu0 %v586
    %841 = vmatpush.bf16.msra.mxu0 %v584
    %842 = vmatmul.bf16.gmra.mxu0 %v154
    %v843 = vpop.f32.mrf.mxu0
    %v844 = vadd.f32 %v831, %v843
    %v845 = vpop.f32.mrf.mxu0
    %846 = vdwg.mxu0
    %847 = vmatpush.bf16.msra.mxu0 %v614
    %848 = vmatpush.bf16.msra.mxu0 %v612
    %849 = vmatpush.bf16.msra.mxu0 %v610
    %850 = vmatpush.bf16.msra.mxu0 %v608
    %851 = vmatpush.bf16.msra.mxu0 %v606
    %852 = vmatpush.bf16.msra.mxu0 %v604
    %853 = vmatpush.bf16.msra.mxu0 %v602
    %854 = vmatpush.bf16.msra.mxu0 %v600
    %855 = vmatmul.bf16.gmra.mxu0 %v155
    %v856 = vpop.f32.mrf.mxu0
    %v857 = vadd.f32 %v844, %v856
    %v858 = vpop.f32.mrf.mxu0
    %859 = vdwg.mxu0
    %860 = vmatpush.bf16.msra.mxu0 %v630
    %861 = vmatpush.bf16.msra.mxu0 %v628
    %862 = vmatpush.bf16.msra.mxu0 %v626
    %863 = vmatpush.bf16.msra.mxu0 %v624
    %864 = vmatpush.bf16.msra.mxu0 %v622
    %865 = vmatpush.bf16.msra.mxu0 %v620
    %866 = vmatpush.bf16.msra.mxu0 %v618
    %867 = vmatpush.bf16.msra.mxu0 %v616
    %868 = vmatmul.bf16.gmra.mxu0 %v156
    %v869 = vpop.f32.mrf.mxu0
    %v870 = vadd.f32 %v857, %v869
    %v871 = vpop.f32.mrf.mxu0
    %872 = vdwg.mxu0
    %873 = vmatpush.bf16.msra.mxu0 %v646
    %874 = vmatpush.bf16.msra.mxu0 %v644
    %875 = vmatpush.bf16.msra.mxu0 %v642
    %876 = vmatpush.bf16.msra.mxu0 %v640
    %877 = vmatpush.bf16.msra.mxu0 %v638
    %878 = vmatpush.bf16.msra.mxu0 %v636
    %879 = vmatpush.bf16.msra.mxu0 %v634
    %880 = vmatpush.bf16.msra.mxu0 %v632
    %881 = vmatmul.bf16.gmra.mxu0 %v157
    %v882 = vpop.f32.mrf.mxu0
    %v883 = vadd.f32 %v870, %v882
    %v884 = vpop.f32.mrf.mxu0
    %885 = vdwg.mxu0
    %886 = vmatpush.bf16.msra.mxu0 %v662
    %887 = vmatpush.bf16.msra.mxu0 %v660
    %888 = vmatpush.bf16.msra.mxu0 %v658
    %889 = vmatpush.bf16.msra.mxu0 %v656
    %890 = vmatpush.bf16.msra.mxu0 %v654
    %891 = vmatpush.bf16.msra.mxu0 %v652
    %892 = vmatpush.bf16.msra.mxu0 %v650
    %893 = vmatpush.bf16.msra.mxu0 %v648
    %894 = vmatmul.bf16.gmra.mxu0 %v158
    %v895 = vpop.f32.mrf.mxu0
    %v896 = vadd.f32 %v883, %v895
    %v897 = vpop.f32.mrf.mxu0
    %898 = vdwg.mxu0
    %899 = vmatpush.bf16.msra.mxu0 %v678
    %900 = vmatpush.bf16.msra.mxu0 %v676
    %901 = vmatpush.bf16.msra.mxu0 %v674
    %902 = vmatpush.bf16.msra.mxu0 %v672
    %903 = vmatpush.bf16.msra.mxu0 %v670
    %904 = vmatpush.bf16.msra.mxu0 %v668
    %905 = vmatpush.bf16.msra.mxu0 %v666
    %906 = vmatpush.bf16.msra.mxu0 %v664
    %907 = vmatmul.bf16.gmra.mxu0 %v159
    %v908 = vpop.f32.mrf.mxu0
    %v909 = vadd.f32 %v896, %v908
    %v910 = vpop.f32.mrf.mxu0
    %911 = vdwg.mxu0
    %912 = vmatpush.bf16.msra.mxu0 %v567
    %913 = vmatpush.bf16.msra.mxu0 %v565
    %914 = vmatpush.bf16.msra.mxu0 %v563
    %915 = vmatpush.bf16.msra.mxu0 %v561
    %916 = vmatpush.bf16.msra.mxu0 %v559
    %917 = vmatpush.bf16.msra.mxu0 %v557
    %918 = vmatpush.bf16.msra.mxu0 %v555
    %919 = vmatpush.bf16.msra.mxu0 %v553
    %920 = vmatmul.bf16.gmra.mxu0 %v152
    %v921 = vpop.f32.mrf.mxu0
    %v922 = vadd.f32 %v147, %v921
    %v923 = vpop.f32.mrf.mxu0
    %924 = vdwg.mxu0
    %925 = vmatpush.bf16.msra.mxu0 %v583
    %926 = vmatpush.bf16.msra.mxu0 %v581
    %927 = vmatpush.bf16.msra.mxu0 %v579
    %928 = vmatpush.bf16.msra.mxu0 %v577
    %929 = vmatpush.bf16.msra.mxu0 %v575
    %930 = vmatpush.bf16.msra.mxu0 %v573
    %931 = vmatpush.bf16.msra.mxu0 %v571
    %932 = vmatpush.bf16.msra.mxu0 %v569
    %933 = vmatmul.bf16.gmra.mxu0 %v153
    %v934 = vpop.f32.mrf.mxu0
    %v935 = vadd.f32 %v922, %v934
    %v936 = vpop.f32.mrf.mxu0
    %937 = vdwg.mxu0
    %938 = vmatpush.bf16.msra.mxu0 %v599
    %939 = vmatpush.bf16.msra.mxu0 %v597
    %940 = vmatpush.bf16.msra.mxu0 %v595
    %941 = vmatpush.bf16.msra.mxu0 %v593
    %942 = vmatpush.bf16.msra.mxu0 %v591
    %943 = vmatpush.bf16.msra.mxu0 %v589
    %944 = vmatpush.bf16.msra.mxu0 %v587
    %945 = vmatpush.bf16.msra.mxu0 %v585
    %946 = vmatmul.bf16.gmra.mxu0 %v154
    %v947 = vpop.f32.mrf.mxu0
    %v948 = vadd.f32 %v935, %v947
    %v949 = vpop.f32.mrf.mxu0
    %950 = vdwg.mxu0
    %951 = vmatpush.bf16.msra.mxu0 %v615
    %952 = vmatpush.bf16.msra.mxu0 %v613
    %953 = vmatpush.bf16.msra.mxu0 %v611
    %954 = vmatpush.bf16.msra.mxu0 %v609
    %955 = vmatpush.bf16.msra.mxu0 %v607
    %956 = vmatpush.bf16.msra.mxu0 %v605
    %957 = vmatpush.bf16.msra.mxu0 %v603
    %958 = vmatpush.bf16.msra.mxu0 %v601
    %959 = vmatmul.bf16.gmra.mxu0 %v155
    %v960 = vpop.f32.mrf.mxu0
    %v961 = vadd.f32 %v948, %v960
    %v962 = vpop.f32.mrf.mxu0
    %963 = vdwg.mxu0
    %964 = vmatpush.bf16.msra.mxu0 %v631
    %965 = vmatpush.bf16.msra.mxu0 %v629
    %966 = vmatpush.bf16.msra.mxu0 %v627
    %967 = vmatpush.bf16.msra.mxu0 %v625
    %968 = vmatpush.bf16.msra.mxu0 %v623
    %969 = vmatpush.bf16.msra.mxu0 %v621
    %970 = vmatpush.bf16.msra.mxu0 %v619
    %971 = vmatpush.bf16.msra.mxu0 %v617
    %972 = vmatmul.bf16.gmra.mxu0 %v156
    %v973 = vpop.f32.mrf.mxu0
    %v974 = vadd.f32 %v961, %v973
    %v975 = vpop.f32.mrf.mxu0
    %976 = vdwg.mxu0
    %977 = vmatpush.bf16.msra.mxu0 %v647
    %978 = vmatpush.bf16.msra.mxu0 %v645
    %979 = vmatpush.bf16.msra.mxu0 %v643
    %980 = vmatpush.bf16.msra.mxu0 %v641
    %981 = vmatpush.bf16.msra.mxu0 %v639
    %982 = vmatpush.bf16.msra.mxu0 %v637
    %983 = vmatpush.bf16.msra.mxu0 %v635
    %984 = vmatpush.bf16.msra.mxu0 %v633
    %985 = vmatmul.bf16.gmra.mxu0 %v157
    %v986 = vpop.f32.mrf.mxu0
    %v987 = vadd.f32 %v974, %v986
    %v988 = vpop.f32.mrf.mxu0
    %989 = vdwg.mxu0
    %990 = vmatpush.bf16.msra.mxu0 %v663
    %991 = vmatpush.bf16.msra.mxu0 %v661
    %992 = vmatpush.bf16.msra.mxu0 %v659
    %993 = vmatpush.bf16.msra.mxu0 %v657
    %994 = vmatpush.bf16.msra.mxu0 %v655
    %995 = vmatpush.bf16.msra.mxu0 %v653
    %996 = vmatpush.bf16.msra.mxu0 %v651
    %997 = vmatpush.bf16.msra.mxu0 %v649
    %998 = vmatmul.bf16.gmra.mxu0 %v158
    %v999 = vpop.f32.mrf.mxu0
    %v1000 = vadd.f32 %v987, %v999
    %v1001 = vpop.f32.mrf.mxu0
    %1002 = vdwg.mxu0
    %1003 = vmatpush.bf16.msra.mxu0 %v679
    %1004 = vmatpush.bf16.msra.mxu0 %v677
    %1005 = vmatpush.bf16.msra.mxu0 %v675
    %1006 = vmatpush.bf16.msra.mxu0 %v673
    %1007 = vmatpush.bf16.msra.mxu0 %v671
    %1008 = vmatpush.bf16.msra.mxu0 %v669
    %1009 = vmatpush.bf16.msra.mxu0 %v667
    %1010 = vmatpush.bf16.msra.mxu0 %v665
    %1011 = vmatmul.bf16.gmra.mxu0 %v159
    %v1012 = vpop.f32.mrf.mxu0
    %v1013 = vadd.f32 %v1000, %v1012
    %v1014 = vpop.f32.mrf.mxu0
    %1015 = vdwg.mxu0
    %v1016 = vxor.u32 %v909, 2147483648
    %v1017 = vxor.u32 %v1013, 2147483648
    %v1018 = vmul.f32 %v1016, 1.442695
    %v1019 = vpow.pop %v1018
    %v1020 = vmul.f32 %v1017, 1.442695
    %v1021 = vpow.pop %v1020
    %v1022 = vadd.f32 %v1019, 1.0
    %v1023 = vadd.f32 %v1021, 1.0
    %v1024 = vrcp.pop %v1022
    %v1025 = vmul.f32 %v1022, %v1024
    %v1026 = vsub.f32 1.0, %v1025
    %v1027 = vmul.f32 %v1024, %v1026
    %v1028 = vadd.f32 %v1024, %v1027
    %vm1029 = vweird.f32 %v1022
    %vm1030 = vweird.f32 %v1024
    %vm1031 = vmor %vm1029, %vm1030
    %v1032 = vsel %vm1031, %v1024, %v1028
    %v1033 = vand.u32 2147483647, %v1022
    %vm1034 = vcmp.eq.f32.partialorder %v1033, 8.507059e+37
    %v1035 = vand.u32 %v1022, 2147483648
    %v1036 = vor.u32 1.1754944e-38, %v1035
    %v1037 = vsel %vm1034, %v1036, %v1032
    %v1038 = vmul.f32 1.0, %v1037
    %v1039 = vrcp.pop %v1023
    %v1040 = vmul.f32 %v1023, %v1039
    %v1041 = vsub.f32 1.0, %v1040
    %v1042 = vmul.f32 %v1039, %v1041
    %v1043 = vadd.f32 %v1039, %v1042
    %vm1044 = vweird.f32 %v1023
    %vm1045 = vweird.f32 %v1039
    %vm1046 = vmor %vm1044, %vm1045
    %v1047 = vsel %vm1046, %v1039, %v1043
    %v1048 = vand.u32 2147483647, %v1023
    %vm1049 = vcmp.eq.f32.partialorder %v1048, 8.507059e+37
    %v1050 = vand.u32 %v1023, 2147483648
    %v1051 = vor.u32 1.1754944e-38, %v1050
    %v1052 = vsel %vm1049, %v1051, %v1047
    %v1053 = vmul.f32 1.0, %v1052
    %v1054 = vmul.f32 %v909, %v1038
    %v1055 = vmul.f32 %v1013, %v1053
    %v1058 = vrot.slane %v1055, 6
    %vm1059 = vcmask 1041408
    %v1060 = vsel %vm1059, %v1054, %v1058
    %1062 = vst [vmem:[#allocation2] sm:$0xf] %v1060
    // Predicated region
    $region14: #{resnet_forward.15} parent=1 // pred_check
      _
    $region15: #{resnet_forward.15} parent=1 // pred_check_branch
      %1064 = sbr.rel (0) target = $region17
    $region16: #{resnet_forward.15} parent=1 // pred_region
      %1066 = vsyncadd [#allocation3], 0
      %s1068 = sshll.u32 [#allocation2], 4
      %s1069 = int_to_ptr.vmem [resolvable:$true] %s1068
      %s1070 = sshll.u32 %s3, 4
      %s1071 = int_to_ptr.hbm [resolvable:$true] %s1070
      %1073 = dma.vmem_to_hbm [thread:$0]  %s1069, 64, %s1071, [#allocation3]
    $region17: #{resnet_forward.15} parent=1 // pred_fallthru
      _
    // Predicated region
    $region18: #{resnet_forward.15} parent=1 // pred_check
      _
    $region19: #{resnet_forward.15} parent=1 // pred_check_branch
      %1075 = sbr.rel (0) target = $region21
    $region20: #{resnet_forward.15} parent=1 // pred_region
      %1077 = dma.done [#allocation3], 64
    $region21: #{resnet_forward.15} parent=1 // pred_fallthru
      _
    %1078 = vsyncpa [#allocation3], 1

</llo_original>
